<compile_context>
chip_gen: v5e
topology: v5e:2x2
jax: 0.10.0
libtpu: 0.0.40
codegen_flags: <defaults>
</compile_context>

<pallas_src>
import functools

import jax
import jax.numpy as jnp
from jax.experimental import pallas as pl
from jax.experimental.pallas import tpu as pltpu

S = 34                   # lane stride of one image row for the 34x34 / 28x28 stages
LM1 = 3 * 16 + 3         # 51  : left margin for ct1 taps (compact stride-16 layout)
W1 = LM1 + 16 * 16       # 307 : spread-1 output width (covers every ct1 tap slice)
LM2 = 3 * S + 3          # 105 : left margin for ct2 taps (stride-34 layout)
A2W = 34 * S + 8         # 1164: ct2 output width (+8 so conv taps never read OOB)
W2 = LM2 + A2W           # 1269: spread-2 output width
COUT_PAD = 8             # final conv Cout=1 padded to 8 sublanes for a clean tile


# --------------------------- Pallas kernels -----------------------------------
def _linear_kernel(x_ref, w_ref, b_ref, o_ref, *, relu):
    acc = jnp.dot(x_ref[...], w_ref[...], preferred_element_type=jnp.float32)
    acc = acc + b_ref[...]
    if relu:
        acc = jnp.maximum(acc, 0.0)
    o_ref[...] = acc.astype(o_ref.dtype)


def linear_bias_act(x, w, b, *, relu=False, out_dtype=jnp.float32, block_m=256):
    """(M, K) @ (K, N) + b (+ReLU).  M tiled over a 'parallel' grid; bf16 in, f32 acc."""
    M, K = x.shape
    N = w.shape[1]
    bm = min(block_m, M)
    return pl.pallas_call(
        functools.partial(_linear_kernel, relu=relu),
        out_shape=jax.ShapeDtypeStruct((M, N), out_dtype),
        grid_spec=pl.GridSpec(
            grid=(pl.cdiv(M, bm),),
            in_specs=[
                pl.BlockSpec((bm, K), lambda i: (i, 0)),
                pl.BlockSpec((K, N), lambda i: (0, 0)),
                pl.BlockSpec((1, N), lambda i: (0, 0)),
            ],
            out_specs=pl.BlockSpec((bm, N), lambda i: (i, 0)),
        ),
        compiler_params=pltpu.CompilerParams(dimension_semantics=("parallel",)),
    )(x.astype(jnp.bfloat16), w.astype(jnp.bfloat16),
      b.reshape(1, N).astype(jnp.float32))


def _gen_convs_kernel(a0_ref, sp1_ref, sp2_ref,
                      w1_ref, b1_ref,
                      w2_ref, b2_ref,
                      w3_ref, b3_ref,
                      out_ref):
    """ct1(64->32,k4,s2) -> ct2(32->16,k4,s2) -> conv(16->1,k7), one batch element.

    Activations are (C, lanes) with channels on sublanes and the flattened image
    on lanes.  For a stride-2 transposed conv the contribution of input q to
    output (2iy+kh, 2ix+kw) sits at flat lane 2q + (kh*stride + kw), so after one
    0/1 "spread" matmul (margins + validity mask folded into the matrix) every
    tap is a uniformly shifted MXU matmul accumulated in f32.
    """
    f32, bf16 = jnp.float32, jnp.bfloat16

    # ---- ct1: ConvTranspose2d(64->32, k=4, s=2): 7x7 -> 16x16 (compact stride-16) ----
    a0 = a0_ref[0]                                                      # (64, 49) bf16
    u1 = jnp.dot(a0, sp1_ref[...], preferred_element_type=f32).astype(bf16)  # (64, W1)
    acc1 = jnp.zeros((32, 256), f32)
    for kh in range(4):
        base = LM1 - kh * 16
        patch = jnp.concatenate(
            [u1[:, base - kw: base - kw + 256] for kw in range(4)], axis=0)   # (256, 256)
        acc1 += jnp.dot(w1_ref[kh], patch, preferred_element_type=f32)
    a1 = jnp.maximum(acc1 + b1_ref[...], 0.0)                           # (32, 256) f32

    # ---- ct2: ConvTranspose2d(32->16, k=4, s=2): 16x16 -> 34x34 (stride-34 flat) ----
    u2 = jnp.dot(a1.astype(bf16), sp2_ref[...],
                 preferred_element_type=f32).astype(bf16)                # (32, W2)
    acc2 = jnp.zeros((16, A2W), f32)
    for kh in range(4):
        base = LM2 - kh * S
        patch = jnp.concatenate(
            [u2[:, base - kw: base - kw + A2W] for kw in range(4)], axis=0)   # (128, A2W)
        acc2 += jnp.dot(w2_ref[kh], patch, preferred_element_type=f32)
    # lanes >= 34*S only ever feed junk output lanes (ox >= 28), so no masking needed
    a2 = jnp.maximum(acc2 + b2_ref[...], 0.0).astype(bf16)               # (16, A2W)

    # ---- conv: Conv2d(16->1, k=7, valid): 34x34 -> 28x28 ----
    acc3 = jnp.zeros((COUT_PAD, 28 * S), f32)
    for kh in range(7):
        patch = jnp.concatenate(
            [a2[:, kh * S + kw: kh * S + kw + 28 * S] for kw in range(7)], axis=0)  # (112, 28*S)
        acc3 += jnp.dot(w3_ref[kh], patch, preferred_element_type=f32)
    out_ref[0] = (acc3 + b3_ref[...]).astype(out_ref.dtype)              # (8, 28*S)


# --------------------------- weight / constant prep ---------------------------
def _ct_taps(w, dtype):
    # w: (Cin, Cout, k, k) -> taps[kh]: (Cout, k*Cin), col kw*Cin+ci = w[ci, co, kh, kw]
    cin, cout, k, _ = w.shape
    return jnp.transpose(w, (2, 1, 3, 0)).reshape(k, cout, k * cin).astype(dtype)


def _conv_taps(w, cout_pad, dtype):
    # w: (Cout, Cin, k, k) -> taps[kh]: (cout_pad, k*Cin), col kw*Cin+ci = w[co, ci, kh, kw]
    cout, cin, k, _ = w.shape
    t = jnp.transpose(w, (2, 0, 3, 1)).reshape(k, cout, k * cin)
    return jnp.pad(t, ((0, 0), (0, cout_pad - cout), (0, 0))).astype(dtype)


def _spread1(dtype):
    # row q = iy*7 + ix (compact 7x7 input) -> column LM1 + 2*(iy*16 + ix)
    q = jnp.arange(49)
    col = LM1 + 2 * ((q // 7) * 16 + (q % 7))
    return (jnp.arange(W1)[None, :] == col[:, None]).astype(dtype)


def _spread2(dtype):
    # row q = oy*16 + ox (compact 16x16 input) -> column LM2 + 2*(oy*S + ox)
    q = jnp.arange(256)
    col = LM2 + 2 * ((q // 16) * S + (q % 16))
    return (jnp.arange(W2)[None, :] == col[:, None]).astype(dtype)


# ------------------------------- Generator ------------------------------------
def init_params(key, latent_dim):
    ks = jax.random.split(key, 8)

    def u(k, shape, fan_in):
        bound = 1.0 / jnp.sqrt(jnp.float32(fan_in))
        return jax.random.uniform(k, shape, jnp.float32, -bound, bound)

    return {
        # nn.Linear(latent_dim, 7*7*64): weight stored transposed as (in, out)
        "lin1_w": u(ks[0], (latent_dim, 7 * 7 * 64), latent_dim),
        "lin1_b": u(ks[1], (7 * 7 * 64,), latent_dim),
        # nn.ConvTranspose2d(64, 32, 4, stride=2): weight (in=64, out=32, 4, 4)
        "ct1_w": u(ks[2], (64, 32, 4, 4), 64 * 4 * 4),
        "ct1_b": u(ks[3], (32,), 64 * 4 * 4),
        # nn.ConvTranspose2d(32, 16, 4, stride=2): weight (in=32, out=16, 4, 4)
        "ct2_w": u(ks[4], (32, 16, 4, 4), 32 * 4 * 4),
        "ct2_b": u(ks[5], (16,), 32 * 4 * 4),
        # nn.Conv2d(16, 1, kernel_size=7): weight (out=1, in=16, 7, 7)
        "conv_w": u(ks[6], (1, 16, 7, 7), 16 * 7 * 7),
        "conv_b": u(ks[7], (1,), 16 * 7 * 7),
    }


def generator_forward(params, x):
    B = x.shape[0]
    bf16, f32 = jnp.bfloat16, jnp.float32

    # ---- lin1 + ReLU (Pallas fused matmul), emits bf16 directly ----
    h = linear_bias_act(x, params["lin1_w"], params["lin1_b"],
                        relu=True, out_dtype=bf16)                       # (B, 3136)

    # view(-1, 64, 7, 7) flattened to the fused kernel's compact (C, 49) layout
    a0 = h.reshape(B, 64, 49)

    # kernel-ready constants (<0.7 MB total; resident in VMEM across the batch grid)
    sp1 = _spread1(bf16)                                   # (49, 307)
    sp2 = _spread2(bf16)                                   # (256, 1269)
    w1 = _ct_taps(params["ct1_w"], bf16)                   # (4, 32, 256)
    b1 = params["ct1_b"].reshape(32, 1).astype(f32)
    w2 = _ct_taps(params["ct2_w"], bf16)                   # (4, 16, 128)
    b2 = params["ct2_b"].reshape(16, 1).astype(f32)
    w3 = _conv_taps(params["conv_w"], COUT_PAD, bf16)      # (7, 8, 112)
    b3 = jnp.pad(params["conv_b"], (0, COUT_PAD - 1)).reshape(COUT_PAD, 1).astype(f32)

    out_flat = pl.pallas_call(
        _gen_convs_kernel,
        out_shape=jax.ShapeDtypeStruct((B, COUT_PAD, 28 * S), f32),
        grid_spec=pl.GridSpec(
            grid=(B,),
            in_specs=[
                pl.BlockSpec((1, 64, 49), lambda b: (b, 0, 0)),
                pl.BlockSpec((49, W1), lambda b: (0, 0)),
                pl.BlockSpec((256, W2), lambda b: (0, 0)),
                pl.BlockSpec((4, 32, 256), lambda b: (0, 0, 0)),
                pl.BlockSpec((32, 1), lambda b: (0, 0)),
                pl.BlockSpec((4, 16, 128), lambda b: (0, 0, 0)),
                pl.BlockSpec((16, 1), lambda b: (0, 0)),
                pl.BlockSpec((7, COUT_PAD, 112), lambda b: (0, 0, 0)),
                pl.BlockSpec((COUT_PAD, 1), lambda b: (0, 0)),
            ],
            out_specs=pl.BlockSpec((1, COUT_PAD, 28 * S), lambda b: (b, 0, 0)),
        ),
        compiler_params=pltpu.CompilerParams(dimension_semantics=("parallel",)),
    )(a0, sp1, sp2, w1, b1, w2, b2, w3, b3)

    # channel 0, drop the per-row stride padding -> (B, 1, 28, 28), NCHW like PyTorch
    out = out_flat[:, 0, :].reshape(B, 28, S)[:, :, :28]
    return out[:, None, :, :]


# -------------------------- pure-JAX reference (f32) --------------------------
def _ref_conv_transpose(x, w, b, stride):
    k = w.shape[2]
    w_conv = jnp.flip(w, (2, 3)).transpose(1, 0, 2, 3)   # (Cout, Cin, k, k)
    y = jax.lax.conv_general_dilated(
        x, w_conv, window_strides=(1, 1),
        padding=[(k - 1, k - 1), (k - 1, k - 1)],
        lhs_dilation=(stride, stride),
        dimension_numbers=("NCHW", "OIHW", "NCHW"))
    return y + b[None, :, None, None]


def _ref_conv(x, w, b):
    y = jax.lax.conv_general_dilated(
        x, w, window_strides=(1, 1), padding="VALID",
        dimension_numbers=("NCHW", "OIHW", "NCHW"))
    return y + b[None, :, None, None]


def generator_reference(params, x):
    h = jnp.maximum(x @ params["lin1_w"] + params["lin1_b"], 0.0)
    h = h.reshape(-1, 64, 7, 7)
    h = jnp.maximum(_ref_conv_transpose(h, params["ct1_w"], params["ct1_b"], 2), 0.0)
    h = jnp.maximum(_ref_conv_transpose(h, params["ct2_w"], params["ct2_b"], 2), 0.0)
    return _ref_conv(h, params["conv_w"], params["conv_b"])


if __name__ == "__main__":
    latent_dim = 32
    batch = 2
    key = jax.random.PRNGKey(0)
    pkey, xkey = jax.random.split(key)
    params = init_params(pkey, latent_dim)
    x = jax.random.normal(xkey, (batch, latent_dim), jnp.float32)

    out = jax.block_until_ready(jax.jit(generator_forward)(params, x))
    assert out.shape == (batch, 1, 28, 28), out.shape
    assert out.dtype == jnp.float32

    # tolerance check vs f32 reference (bf16 matmul operands, f32 accumulation)
    ref = jax.block_until_ready(generator_reference(params, x))
    max_err = float(jnp.max(jnp.abs(out - ref)))
    scale = float(jnp.max(jnp.abs(ref)))
    assert max_err <= 5e-2 * scale + 5e-3, (max_err, scale)

    print("KERNEL_OK")
</pallas_src>

<mosaic_0001>
module attributes {stable_mosaic.version = 11 : i64} {
  func.func @_linear_kernel(%arg0: i32, %arg1: memref<2x32xbf16, #tpu.memory_space<vmem>>, %arg2: memref<32x3136xbf16, #tpu.memory_space<vmem>>, %arg3: memref<1x3136xf32, #tpu.memory_space<vmem>>, %arg4: memref<2x3136xbf16, #tpu.memory_space<vmem>>) attributes {dimension_semantics = [#tpu.dimension_semantics<parallel>], iteration_bounds = array<i64: 1>, scalar_prefetch = 0 : i64, scratch_operands = 0 : i64, tpu.core_type = #tpu.core_type<tc>, window_params = [{transform_indices = @transform_0, window_bounds = array<i64: 2, 32>}, {pipeline_mode = #tpu.pipeline_mode<synchronous>, transform_indices = @transform_1, window_bounds = array<i64: 32, 3136>}, {pipeline_mode = #tpu.pipeline_mode<synchronous>, transform_indices = @transform_2, window_bounds = array<i64: 1, 3136>}, {transform_indices = @transform_3, window_bounds = array<i64: 2, 3136>}]} {
    %c0 = arith.constant 0 : index
    %c0_0 = arith.constant 0 : index
    %0 = vector.load %arg1[%c0, %c0_0] : memref<2x32xbf16, #tpu.memory_space<vmem>>, vector<2x32xbf16>
    %c0_1 = arith.constant 0 : index
    %c0_2 = arith.constant 0 : index
    %1 = vector.load %arg2[%c0_1, %c0_2] : memref<32x3136xbf16, #tpu.memory_space<vmem>>, vector<32x3136xbf16>
    %cst = arith.constant dense<0.000000e+00> : vector<2x3136xf32>
    %2 = tpu.matmul %0, %1, %cst {dimension_numbers = #tpu.dot_dimension_numbers<[1], [0], [0], [1], [0, 0, 1, 1], [], []>} : vector<2x32xbf16>, vector<32x3136xbf16>, vector<2x3136xf32> -> vector<2x3136xf32>
    %c0_3 = arith.constant 0 : index
    %c0_4 = arith.constant 0 : index
    %3 = vector.load %arg3[%c0_3, %c0_4] : memref<1x3136xf32, #tpu.memory_space<vmem>>, vector<1x3136xf32>
    %4 = vector.broadcast %3 : vector<1x3136xf32> to vector<2x3136xf32>
    %5 = arith.addf %2, %4 : vector<2x3136xf32>
    %cst_5 = arith.constant 0.000000e+00 : f32
    %6 = vector.broadcast %cst_5 : f32 to vector<2x3136xf32>
    %7 = arith.maximumf %5, %6 : vector<2x3136xf32>
    %8 = arith.truncf %7 : vector<2x3136xf32> to vector<2x3136xbf16>
    %c0_6 = arith.constant 0 : index
    %c0_7 = arith.constant 0 : index
    %9 = vector.load %arg4[%c0_6, %c0_7] : memref<2x3136xbf16, #tpu.memory_space<vmem>>, vector<2x3136xbf16>
    tpu.vector_store %arg4[%c0_6, %c0_7], %8 {strides = array<i32>} : memref<2x3136xbf16, #tpu.memory_space<vmem>>, vector<2x3136xbf16>,
    return
  }
  func.func @transform_0(%arg0: i32) -> (i32, i32) {
    %c0_i32 = arith.constant 0 : i32
    %c0_i32_0 = arith.constant 0 : i32
    return %arg0, %c0_i32 : i32, i32
  }
  func.func @transform_1(%arg0: i32) -> (i32, i32) {
    %c0_i32 = arith.constant 0 : i32
    %c0_i32_0 = arith.constant 0 : i32
    %c0_i32_1 = arith.constant 0 : i32
    return %c0_i32, %c0_i32_0 : i32, i32
  }
  func.func @transform_2(%arg0: i32) -> (i32, i32) {
    %c0_i32 = arith.constant 0 : i32
    %c0_i32_0 = arith.constant 0 : i32
    %c0_i32_1 = arith.constant 0 : i32
    return %c0_i32, %c0_i32_0 : i32, i32
  }
  func.func @transform_3(%arg0: i32) -> (i32, i32) {
    %c0_i32 = arith.constant 0 : i32
    %c0_i32_0 = arith.constant 0 : i32
    return %arg0, %c0_i32 : i32, i32
  }
}

module attributes {stable_mosaic.version = 11 : i64} {
  func.func @_gen_convs_kernel(%arg0: i32, %arg1: memref<1x64x49xbf16, #tpu.memory_space<vmem>>, %arg2: memref<49x307xbf16, #tpu.memory_space<vmem>>, %arg3: memref<256x1269xbf16, #tpu.memory_space<vmem>>, %arg4: memref<4x32x256xbf16, #tpu.memory_space<vmem>>, %arg5: memref<32x1xf32, #tpu.memory_space<vmem>>, %arg6: memref<4x16x128xbf16, #tpu.memory_space<vmem>>, %arg7: memref<16x1xf32, #tpu.memory_space<vmem>>, %arg8: memref<7x8x112xbf16, #tpu.memory_space<vmem>>, %arg9: memref<8x1xf32, #tpu.memory_space<vmem>>, %arg10: memref<1x8x952xf32, #tpu.memory_space<vmem>>) attributes {dimension_semantics = [#tpu.dimension_semantics<parallel>], iteration_bounds = array<i64: 2>, scalar_prefetch = 0 : i64, scratch_operands = 0 : i64, tpu.core_type = #tpu.core_type<tc>, window_params = [{transform_indices = @transform_0, window_bounds = array<i64: 1, 64, 49>}, {pipeline_mode = #tpu.pipeline_mode<synchronous>, transform_indices = @transform_1, window_bounds = array<i64: 49, 307>}, {pipeline_mode = #tpu.pipeline_mode<synchronous>, transform_indices = @transform_2, window_bounds = array<i64: 256, 1269>}, {pipeline_mode = #tpu.pipeline_mode<synchronous>, transform_indices = @transform_3, window_bounds = array<i64: 4, 32, 256>}, {pipeline_mode = #tpu.pipeline_mode<synchronous>, transform_indices = @transform_4, window_bounds = array<i64: 32, 1>}, {pipeline_mode = #tpu.pipeline_mode<synchronous>, transform_indices = @transform_5, window_bounds = array<i64: 4, 16, 128>}, {pipeline_mode = #tpu.pipeline_mode<synchronous>, transform_indices = @transform_6, window_bounds = array<i64: 16, 1>}, {pipeline_mode = #tpu.pipeline_mode<synchronous>, transform_indices = @transform_7, window_bounds = array<i64: 7, 8, 112>}, {pipeline_mode = #tpu.pipeline_mode<synchronous>, transform_indices = @transform_8, window_bounds = array<i64: 8, 1>}, {transform_indices = @transform_9, window_bounds = array<i64: 1, 8, 952>}]} {
    %c0 = arith.constant 0 : index
    %c0_0 = arith.constant 0 : index
    %c0_1 = arith.constant 0 : index
    %0 = vector.load %arg1[%c0, %c0_0, %c0_1] : memref<1x64x49xbf16, #tpu.memory_space<vmem>>, vector<1x64x49xbf16>
    %1 = vector.shape_cast %0 : vector<1x64x49xbf16> to vector<64x49xbf16>
    %c0_2 = arith.constant 0 : index
    %c0_3 = arith.constant 0 : index
    %2 = vector.load %arg2[%c0_2, %c0_3] : memref<49x307xbf16, #tpu.memory_space<vmem>>, vector<49x307xbf16>
    %cst = arith.constant dense<0.000000e+00> : vector<64x307xf32>
    %3 = tpu.matmul %1, %2, %cst {dimension_numbers = #tpu.dot_dimension_numbers<[1], [0], [0], [1], [0, 0, 1, 1], [], []>} : vector<64x49xbf16>, vector<49x307xbf16>, vector<64x307xf32> -> vector<64x307xf32>
    %4 = arith.truncf %3 : vector<64x307xf32> to vector<64x307xbf16>
    %cst_4 = arith.constant 0.000000e+00 : f32
    %5 = vector.broadcast %cst_4 : f32 to vector<32x256xf32>
    %6 = vector.extract_strided_slice %4 {offsets = [0, 51], sizes = [64, 256], strides = [1, 1]} : vector<64x307xbf16> to vector<64x256xbf16>
    %7 = vector.extract_strided_slice %4 {offsets = [0, 50], sizes = [64, 256], strides = [1, 1]} : vector<64x307xbf16> to vector<64x256xbf16>
    %8 = vector.extract_strided_slice %4 {offsets = [0, 49], sizes = [64, 256], strides = [1, 1]} : vector<64x307xbf16> to vector<64x256xbf16>
    %9 = vector.extract_strided_slice %4 {offsets = [0, 48], sizes = [64, 256], strides = [1, 1]} : vector<64x307xbf16> to vector<64x256xbf16>
    %10 = tpu.concatenate %6, %7, %8, %9 in 0 : vector<64x256xbf16>, vector<64x256xbf16>, vector<64x256xbf16>, vector<64x256xbf16> -> vector<256x256xbf16>
    %c0_5 = arith.constant 0 : index
    %c0_6 = arith.constant 0 : index
    %c0_7 = arith.constant 0 : index
    %11 = vector.load %arg4[%c0_5, %c0_6, %c0_7] : memref<4x32x256xbf16, #tpu.memory_space<vmem>>, vector<1x32x256xbf16>
    %12 = vector.shape_cast %11 : vector<1x32x256xbf16> to vector<32x256xbf16>
    %cst_8 = arith.constant dense<0.000000e+00> : vector<32x256xf32>
    %13 = tpu.matmul %12, %10, %cst_8 {dimension_numbers = #tpu.dot_dimension_numbers<[1], [0], [0], [1], [0, 0, 1, 1], [], []>} : vector<32x256xbf16>, vector<256x256xbf16>, vector<32x256xf32> -> vector<32x256xf32>
    %14 = arith.addf %5, %13 : vector<32x256xf32>
    %15 = vector.extract_strided_slice %4 {offsets = [0, 35], sizes = [64, 256], strides = [1, 1]} : vector<64x307xbf16> to vector<64x256xbf16>
    %16 = vector.extract_strided_slice %4 {offsets = [0, 34], sizes = [64, 256], strides = [1, 1]} : vector<64x307xbf16> to vector<64x256xbf16>
    %17 = vector.extract_strided_slice %4 {offsets = [0, 33], sizes = [64, 256], strides = [1, 1]} : vector<64x307xbf16> to vector<64x256xbf16>
    %18 = vector.extract_strided_slice %4 {offsets = [0, 32], sizes = [64, 256], strides = [1, 1]} : vector<64x307xbf16> to vector<64x256xbf16>
    %19 = tpu.concatenate %15, %16, %17, %18 in 0 : vector<64x256xbf16>, vector<64x256xbf16>, vector<64x256xbf16>, vector<64x256xbf16> -> vector<256x256xbf16>
    %c1 = arith.constant 1 : index
    %c0_9 = arith.constant 0 : index
    %c0_10 = arith.constant 0 : index
    %20 = vector.load %arg4[%c1, %c0_9, %c0_10] : memref<4x32x256xbf16, #tpu.memory_space<vmem>>, vector<1x32x256xbf16>
    %21 = vector.shape_cast %20 : vector<1x32x256xbf16> to vector<32x256xbf16>
    %cst_11 = arith.constant dense<0.000000e+00> : vector<32x256xf32>
    %22 = tpu.matmul %21, %19, %cst_11 {dimension_numbers = #tpu.dot_dimension_numbers<[1], [0], [0], [1], [0, 0, 1, 1], [], []>} : vector<32x256xbf16>, vector<256x256xbf16>, vector<32x256xf32> -> vector<32x256xf32>
    %23 = arith.addf %14, %22 : vector<32x256xf32>
    %24 = vector.extract_strided_slice %4 {offsets = [0, 19], sizes = [64, 256], strides = [1, 1]} : vector<64x307xbf16> to vector<64x256xbf16>
    %25 = vector.extract_strided_slice %4 {offsets = [0, 18], sizes = [64, 256], strides = [1, 1]} : vector<64x307xbf16> to vector<64x256xbf16>
    %26 = vector.extract_strided_slice %4 {offsets = [0, 17], sizes = [64, 256], strides = [1, 1]} : vector<64x307xbf16> to vector<64x256xbf16>
    %27 = vector.extract_strided_slice %4 {offsets = [0, 16], sizes = [64, 256], strides = [1, 1]} : vector<64x307xbf16> to vector<64x256xbf16>
    %28 = tpu.concatenate %24, %25, %26, %27 in 0 : vector<64x256xbf16>, vector<64x256xbf16>, vector<64x256xbf16>, vector<64x256xbf16> -> vector<256x256xbf16>
    %c2 = arith.constant 2 : index
    %c0_12 = arith.constant 0 : index
    %c0_13 = arith.constant 0 : index
    %29 = vector.load %arg4[%c2, %c0_12, %c0_13] : memref<4x32x256xbf16, #tpu.memory_space<vmem>>, vector<1x32x256xbf16>
    %30 = vector.shape_cast %29 : vector<1x32x256xbf16> to vector<32x256xbf16>
    %cst_14 = arith.constant dense<0.000000e+00> : vector<32x256xf32>
    %31 = tpu.matmul %30, %28, %cst_14 {dimension_numbers = #tpu.dot_dimension_numbers<[1], [0], [0], [1], [0, 0, 1, 1], [], []>} : vector<32x256xbf16>, vector<256x256xbf16>, vector<32x256xf32> -> vector<32x256xf32>
    %32 = arith.addf %23, %31 : vector<32x256xf32>
    %33 = vector.extract_strided_slice %4 {offsets = [0, 3], sizes = [64, 256], strides = [1, 1]} : vector<64x307xbf16> to vector<64x256xbf16>
    %34 = vector.extract_strided_slice %4 {offsets = [0, 2], sizes = [64, 256], strides = [1, 1]} : vector<64x307xbf16> to vector<64x256xbf16>
    %35 = vector.extract_strided_slice %4 {offsets = [0, 1], sizes = [64, 256], strides = [1, 1]} : vector<64x307xbf16> to vector<64x256xbf16>
    %36 = vector.extract_strided_slice %4 {offsets = [0, 0], sizes = [64, 256], strides = [1, 1]} : vector<64x307xbf16> to vector<64x256xbf16>
    %37 = tpu.concatenate %33, %34, %35, %36 in 0 : vector<64x256xbf16>, vector<64x256xbf16>, vector<64x256xbf16>, vector<64x256xbf16> -> vector<256x256xbf16>
    %c3 = arith.constant 3 : index
    %c0_15 = arith.constant 0 : index
    %c0_16 = arith.constant 0 : index
    %38 = vector.load %arg4[%c3, %c0_15, %c0_16] : memref<4x32x256xbf16, #tpu.memory_space<vmem>>, vector<1x32x256xbf16>
    %39 = vector.shape_cast %38 : vector<1x32x256xbf16> to vector<32x256xbf16>
    %cst_17 = arith.constant dense<0.000000e+00> : vector<32x256xf32>
    %40 = tpu.matmul %39, %37, %cst_17 {dimension_numbers = #tpu.dot_dimension_numbers<[1], [0], [0], [1], [0, 0, 1, 1], [], []>} : vector<32x256xbf16>, vector<256x256xbf16>, vector<32x256xf32> -> vector<32x256xf32>
    %41 = arith.addf %32, %40 : vector<32x256xf32>
    %c0_18 = arith.constant 0 : index
    %c0_19 = arith.constant 0 : index
    %42 = vector.load %arg5[%c0_18, %c0_19] : memref<32x1xf32, #tpu.memory_space<vmem>>, vector<32x1xf32>
    %43 = vector.broadcast %42 : vector<32x1xf32> to vector<32x256xf32>
    %44 = arith.addf %41, %43 : vector<32x256xf32>
    %cst_20 = arith.constant 0.000000e+00 : f32
    %45 = vector.broadcast %cst_20 : f32 to vector<32x256xf32>
    %46 = arith.maximumf %44, %45 : vector<32x256xf32>
    %47 = arith.truncf %46 : vector<32x256xf32> to vector<32x256xbf16>
    %c0_21 = arith.constant 0 : index
    %c0_22 = arith.constant 0 : index
    %48 = vector.load %arg3[%c0_21, %c0_22] : memref<256x1269xbf16, #tpu.memory_space<vmem>>, vector<256x1269xbf16>
    %cst_23 = arith.constant dense<0.000000e+00> : vector<32x1269xf32>
    %49 = tpu.matmul %47, %48, %cst_23 {dimension_numbers = #tpu.dot_dimension_numbers<[1], [0], [0], [1], [0, 0, 1, 1], [], []>} : vector<32x256xbf16>, vector<256x1269xbf16>, vector<32x1269xf32> -> vector<32x1269xf32>
    %50 = arith.truncf %49 : vector<32x1269xf32> to vector<32x1269xbf16>
    %cst_24 = arith.constant 0.000000e+00 : f32
    %51 = vector.broadcast %cst_24 : f32 to vector<16x1164xf32>
    %52 = vector.extract_strided_slice %50 {offsets = [0, 105], sizes = [32, 1164], strides = [1, 1]} : vector<32x1269xbf16> to vector<32x1164xbf16>
    %53 = vector.extract_strided_slice %50 {offsets = [0, 104], sizes = [32, 1164], strides = [1, 1]} : vector<32x1269xbf16> to vector<32x1164xbf16>
    %54 = vector.extract_strided_slice %50 {offsets = [0, 103], sizes = [32, 1164], strides = [1, 1]} : vector<32x1269xbf16> to vector<32x1164xbf16>
    %55 = vector.extract_strided_slice %50 {offsets = [0, 102], sizes = [32, 1164], strides = [1, 1]} : vector<32x1269xbf16> to vector<32x1164xbf16>
    %56 = tpu.concatenate %52, %53, %54, %55 in 0 : vector<32x1164xbf16>, vector<32x1164xbf16>, vector<32x1164xbf16>, vector<32x1164xbf16> -> vector<128x1164xbf16>
    %c0_25 = arith.constant 0 : index
    %c0_26 = arith.constant 0 : index
    %c0_27 = arith.constant 0 : index
    %57 = vector.load %arg6[%c0_25, %c0_26, %c0_27] : memref<4x16x128xbf16, #tpu.memory_space<vmem>>, vector<1x16x128xbf16>
    %58 = vector.shape_cast %57 : vector<1x16x128xbf16> to vector<16x128xbf16>
    %cst_28 = arith.constant dense<0.000000e+00> : vector<16x1164xf32>
    %59 = tpu.matmul %58, %56, %cst_28 {dimension_numbers = #tpu.dot_dimension_numbers<[1], [0], [0], [1], [0, 0, 1, 1], [], []>} : vector<16x128xbf16>, vector<128x1164xbf16>, vector<16x1164xf32> -> vector<16x1164xf32>
    %60 = arith.addf %51, %59 : vector<16x1164xf32>
    %61 = vector.extract_strided_slice %50 {offsets = [0, 71], sizes = [32, 1164], strides = [1, 1]} : vector<32x1269xbf16> to vector<32x1164xbf16>
    %62 = vector.extract_strided_slice %50 {offsets = [0, 70], sizes = [32, 1164], strides = [1, 1]} : vector<32x1269xbf16> to vector<32x1164xbf16>
    %63 = vector.extract_strided_slice %50 {offsets = [0, 69], sizes = [32, 1164], strides = [1, 1]} : vector<32x1269xbf16> to vector<32x1164xbf16>
    %64 = vector.extract_strided_slice %50 {offsets = [0, 68], sizes = [32, 1164], strides = [1, 1]} : vector<32x1269xbf16> to vector<32x1164xbf16>
    %65 = tpu.concatenate %61, %62, %63, %64 in 0 : vector<32x1164xbf16>, vector<32x1164xbf16>, vector<32x1164xbf16>, vector<32x1164xbf16> -> vector<128x1164xbf16>
    %c1_29 = arith.constant 1 : index
    %c0_30 = arith.constant 0 : index
    %c0_31 = arith.constant 0 : index
    %66 = vector.load %arg6[%c1_29, %c0_30, %c0_31] : memref<4x16x128xbf16, #tpu.memory_space<vmem>>, vector<1x16x128xbf16>
    %67 = vector.shape_cast %66 : vector<1x16x128xbf16> to vector<16x128xbf16>
    %cst_32 = arith.constant dense<0.000000e+00> : vector<16x1164xf32>
    %68 = tpu.matmul %67, %65, %cst_32 {dimension_numbers = #tpu.dot_dimension_numbers<[1], [0], [0], [1], [0, 0, 1, 1], [], []>} : vector<16x128xbf16>, vector<128x1164xbf16>, vector<16x1164xf32> -> vector<16x1164xf32>
    %69 = arith.addf %60, %68 : vector<16x1164xf32>
    %70 = vector.extract_strided_slice %50 {offsets = [0, 37], sizes = [32, 1164], strides = [1, 1]} : vector<32x1269xbf16> to vector<32x1164xbf16>
    %71 = vector.extract_strided_slice %50 {offsets = [0, 36], sizes = [32, 1164], strides = [1, 1]} : vector<32x1269xbf16> to vector<32x1164xbf16>
    %72 = vector.extract_strided_slice %50 {offsets = [0, 35], sizes = [32, 1164], strides = [1, 1]} : vector<32x1269xbf16> to vector<32x1164xbf16>
    %73 = vector.extract_strided_slice %50 {offsets = [0, 34], sizes = [32, 1164], strides = [1, 1]} : vector<32x1269xbf16> to vector<32x1164xbf16>
    %74 = tpu.concatenate %70, %71, %72, %73 in 0 : vector<32x1164xbf16>, vector<32x1164xbf16>, vector<32x1164xbf16>, vector<32x1164xbf16> -> vector<128x1164xbf16>
    %c2_33 = arith.constant 2 : index
    %c0_34 = arith.constant 0 : index
    %c0_35 = arith.constant 0 : index
    %75 = vector.load %arg6[%c2_33, %c0_34, %c0_35] : memref<4x16x128xbf16, #tpu.memory_space<vmem>>, vector<1x16x128xbf16>
    %76 = vector.shape_cast %75 : vector<1x16x128xbf16> to vector<16x128xbf16>
    %cst_36 = arith.constant dense<0.000000e+00> : vector<16x1164xf32>
    %77 = tpu.matmul %76, %74, %cst_36 {dimension_numbers = #tpu.dot_dimension_numbers<[1], [0], [0], [1], [0, 0, 1, 1], [], []>} : vector<16x128xbf16>, vector<128x1164xbf16>, vector<16x1164xf32> -> vector<16x1164xf32>
    %78 = arith.addf %69, %77 : vector<16x1164xf32>
    %79 = vector.extract_strided_slice %50 {offsets = [0, 3], sizes = [32, 1164], strides = [1, 1]} : vector<32x1269xbf16> to vector<32x1164xbf16>
    %80 = vector.extract_strided_slice %50 {offsets = [0, 2], sizes = [32, 1164], strides = [1, 1]} : vector<32x1269xbf16> to vector<32x1164xbf16>
    %81 = vector.extract_strided_slice %50 {offsets = [0, 1], sizes = [32, 1164], strides = [1, 1]} : vector<32x1269xbf16> to vector<32x1164xbf16>
    %82 = vector.extract_strided_slice %50 {offsets = [0, 0], sizes = [32, 1164], strides = [1, 1]} : vector<32x1269xbf16> to vector<32x1164xbf16>
    %83 = tpu.concatenate %79, %80, %81, %82 in 0 : vector<32x1164xbf16>, vector<32x1164xbf16>, vector<32x1164xbf16>, vector<32x1164xbf16> -> vector<128x1164xbf16>
    %c3_37 = arith.constant 3 : index
    %c0_38 = arith.constant 0 : index
    %c0_39 = arith.constant 0 : index
    %84 = vector.load %arg6[%c3_37, %c0_38, %c0_39] : memref<4x16x128xbf16, #tpu.memory_space<vmem>>, vector<1x16x128xbf16>
    %85 = vector.shape_cast %84 : vector<1x16x128xbf16> to vector<16x128xbf16>
    %cst_40 = arith.constant dense<0.000000e+00> : vector<16x1164xf32>
    %86 = tpu.matmul %85, %83, %cst_40 {dimension_numbers = #tpu.dot_dimension_numbers<[1], [0], [0], [1], [0, 0, 1, 1], [], []>} : vector<16x128xbf16>, vector<128x1164xbf16>, vector<16x1164xf32> -> vector<16x1164xf32>
    %87 = arith.addf %78, %86 : vector<16x1164xf32>
    %c0_41 = arith.constant 0 : index
    %c0_42 = arith.constant 0 : index
    %88 = vector.load %arg7[%c0_41, %c0_42] : memref<16x1xf32, #tpu.memory_space<vmem>>, vector<16x1xf32>
    %89 = vector.broadcast %88 : vector<16x1xf32> to vector<16x1164xf32>
    %90 = arith.addf %87, %89 : vector<16x1164xf32>
    %cst_43 = arith.constant 0.000000e+00 : f32
    %91 = vector.broadcast %cst_43 : f32 to vector<16x1164xf32>
    %92 = arith.maximumf %90, %91 : vector<16x1164xf32>
    %93 = arith.truncf %92 : vector<16x1164xf32> to vector<16x1164xbf16>
    %cst_44 = arith.constant 0.000000e+00 : f32
    %94 = vector.broadcast %cst_44 : f32 to vector<8x952xf32>
    %95 = vector.extract_strided_slice %93 {offsets = [0, 0], sizes = [16, 952], strides = [1, 1]} : vector<16x1164xbf16> to vector<16x952xbf16>
    %96 = vector.extract_strided_slice %93 {offsets = [0, 1], sizes = [16, 952], strides = [1, 1]} : vector<16x1164xbf16> to vector<16x952xbf16>
    %97 = vector.extract_strided_slice %93 {offsets = [0, 2], sizes = [16, 952], strides = [1, 1]} : vector<16x1164xbf16> to vector<16x952xbf16>
    %98 = vector.extract_strided_slice %93 {offsets = [0, 3], sizes = [16, 952], strides = [1, 1]} : vector<16x1164xbf16> to vector<16x952xbf16>
    %99 = vector.extract_strided_slice %93 {offsets = [0, 4], sizes = [16, 952], strides = [1, 1]} : vector<16x1164xbf16> to vector<16x952xbf16>
    %100 = vector.extract_strided_slice %93 {offsets = [0, 5], sizes = [16, 952], strides = [1, 1]} : vector<16x1164xbf16> to vector<16x952xbf16>
    %101 = vector.extract_strided_slice %93 {offsets = [0, 6], sizes = [16, 952], strides = [1, 1]} : vector<16x1164xbf16> to vector<16x952xbf16>
    %102 = tpu.concatenate %95, %96, %97, %98, %99, %100, %101 in 0 : vector<16x952xbf16>, vector<16x952xbf16>, vector<16x952xbf16>, vector<16x952xbf16>, vector<16x952xbf16>, vector<16x952xbf16>, vector<16x952xbf16> -> vector<112x952xbf16>
    %c0_45 = arith.constant 0 : index
    %c0_46 = arith.constant 0 : index
    %c0_47 = arith.constant 0 : index
    %103 = vector.load %arg8[%c0_45, %c0_46, %c0_47] : memref<7x8x112xbf16, #tpu.memory_space<vmem>>, vector<1x8x112xbf16>
    %104 = vector.shape_cast %103 : vector<1x8x112xbf16> to vector<8x112xbf16>
    %cst_48 = arith.constant dense<0.000000e+00> : vector<8x952xf32>
    %105 = tpu.matmul %104, %102, %cst_48 {dimension_numbers = #tpu.dot_dimension_numbers<[1], [0], [0], [1], [0, 0, 1, 1], [], []>} : vector<8x112xbf16>, vector<112x952xbf16>, vector<8x952xf32> -> vector<8x952xf32>
    %106 = arith.addf %94, %105 : vector<8x952xf32>
    %107 = vector.extract_strided_slice %93 {offsets = [0, 34], sizes = [16, 952], strides = [1, 1]} : vector<16x1164xbf16> to vector<16x952xbf16>
    %108 = vector.extract_strided_slice %93 {offsets = [0, 35], sizes = [16, 952], strides = [1, 1]} : vector<16x1164xbf16> to vector<16x952xbf16>
    %109 = vector.extract_strided_slice %93 {offsets = [0, 36], sizes = [16, 952], strides = [1, 1]} : vector<16x1164xbf16> to vector<16x952xbf16>
    %110 = vector.extract_strided_slice %93 {offsets = [0, 37], sizes = [16, 952], strides = [1, 1]} : vector<16x1164xbf16> to vector<16x952xbf16>
    %111 = vector.extract_strided_slice %93 {offsets = [0, 38], sizes = [16, 952], strides = [1, 1]} : vector<16x1164xbf16> to vector<16x952xbf16>
    %112 = vector.extract_strided_slice %93 {offsets = [0, 39], sizes = [16, 952], strides = [1, 1]} : vector<16x1164xbf16> to vector<16x952xbf16>
    %113 = vector.extract_strided_slice %93 {offsets = [0, 40], sizes = [16, 952], strides = [1, 1]} : vector<16x1164xbf16> to vector<16x952xbf16>
    %114 = tpu.concatenate %107, %108, %109, %110, %111, %112, %113 in 0 : vector<16x952xbf16>, vector<16x952xbf16>, vector<16x952xbf16>, vector<16x952xbf16>, vector<16x952xbf16>, vector<16x952xbf16>, vector<16x952xbf16> -> vector<112x952xbf16>
    %c1_49 = arith.constant 1 : index
    %c0_50 = arith.constant 0 : index
    %c0_51 = arith.constant 0 : index
    %115 = vector.load %arg8[%c1_49, %c0_50, %c0_51] : memref<7x8x112xbf16, #tpu.memory_space<vmem>>, vector<1x8x112xbf16>
    %116 = vector.shape_cast %115 : vector<1x8x112xbf16> to vector<8x112xbf16>
    %cst_52 = arith.constant dense<0.000000e+00> : vector<8x952xf32>
    %117 = tpu.matmul %116, %114, %cst_52 {dimension_numbers = #tpu.dot_dimension_numbers<[1], [0], [0], [1], [0, 0, 1, 1], [], []>} : vector<8x112xbf16>, vector<112x952xbf16>, vector<8x952xf32> -> vector<8x952xf32>
    %118 = arith.addf %106, %117 : vector<8x952xf32>
    %119 = vector.extract_strided_slice %93 {offsets = [0, 68], sizes = [16, 952], strides = [1, 1]} : vector<16x1164xbf16> to vector<16x952xbf16>
    %120 = vector.extract_strided_slice %93 {offsets = [0, 69], sizes = [16, 952], strides = [1, 1]} : vector<16x1164xbf16> to vector<16x952xbf16>
    %121 = vector.extract_strided_slice %93 {offsets = [0, 70], sizes = [16, 952], strides = [1, 1]} : vector<16x1164xbf16> to vector<16x952xbf16>
    %122 = vector.extract_strided_slice %93 {offsets = [0, 71], sizes = [16, 952], strides = [1, 1]} : vector<16x1164xbf16> to vector<16x952xbf16>
    %123 = vector.extract_strided_slice %93 {offsets = [0, 72], sizes = [16, 952], strides = [1, 1]} : vector<16x1164xbf16> to vector<16x952xbf16>
    %124 = vector.extract_strided_slice %93 {offsets = [0, 73], sizes = [16, 952], strides = [1, 1]} : vector<16x1164xbf16> to vector<16x952xbf16>
    %125 = vector.extract_strided_slice %93 {offsets = [0, 74], sizes = [16, 952], strides = [1, 1]} : vector<16x1164xbf16> to vector<16x952xbf16>
    %126 = tpu.concatenate %119, %120, %121, %122, %123, %124, %125 in 0 : vector<16x952xbf16>, vector<16x952xbf16>, vector<16x952xbf16>, vector<16x952xbf16>, vector<16x952xbf16>, vector<16x952xbf16>, vector<16x952xbf16> -> vector<112x952xbf16>
    %c2_53 = arith.constant 2 : index
    %c0_54 = arith.constant 0 : index
    %c0_55 = arith.constant 0 : index
    %127 = vector.load %arg8[%c2_53, %c0_54, %c0_55] : memref<7x8x112xbf16, #tpu.memory_space<vmem>>, vector<1x8x112xbf16>
    %128 = vector.shape_cast %127 : vector<1x8x112xbf16> to vector<8x112xbf16>
    %cst_56 = arith.constant dense<0.000000e+00> : vector<8x952xf32>
    %129 = tpu.matmul %128, %126, %cst_56 {dimension_numbers = #tpu.dot_dimension_numbers<[1], [0], [0], [1], [0, 0, 1, 1], [], []>} : vector<8x112xbf16>, vector<112x952xbf16>, vector<8x952xf32> -> vector<8x952xf32>
    %130 = arith.addf %118, %129 : vector<8x952xf32>
    %131 = vector.extract_strided_slice %93 {offsets = [0, 102], sizes = [16, 952], strides = [1, 1]} : vector<16x1164xbf16> to vector<16x952xbf16>
    %132 = vector.extract_strided_slice %93 {offsets = [0, 103], sizes = [16, 952], strides = [1, 1]} : vector<16x1164xbf16> to vector<16x952xbf16>
    %133 = vector.extract_strided_slice %93 {offsets = [0, 104], sizes = [16, 952], strides = [1, 1]} : vector<16x1164xbf16> to vector<16x952xbf16>
    %134 = vector.extract_strided_slice %93 {offsets = [0, 105], sizes = [16, 952], strides = [1, 1]} : vector<16x1164xbf16> to vector<16x952xbf16>
    %135 = vector.extract_strided_slice %93 {offsets = [0, 106], sizes = [16, 952], strides = [1, 1]} : vector<16x1164xbf16> to vector<16x952xbf16>
    %136 = vector.extract_strided_slice %93 {offsets = [0, 107], sizes = [16, 952], strides = [1, 1]} : vector<16x1164xbf16> to vector<16x952xbf16>
    %137 = vector.extract_strided_slice %93 {offsets = [0, 108], sizes = [16, 952], strides = [1, 1]} : vector<16x1164xbf16> to vector<16x952xbf16>
    %138 = tpu.concatenate %131, %132, %133, %134, %135, %136, %137 in 0 : vector<16x952xbf16>, vector<16x952xbf16>, vector<16x952xbf16>, vector<16x952xbf16>, vector<16x952xbf16>, vector<16x952xbf16>, vector<16x952xbf16> -> vector<112x952xbf16>
    %c3_57 = arith.constant 3 : index
    %c0_58 = arith.constant 0 : index
    %c0_59 = arith.constant 0 : index
    %139 = vector.load %arg8[%c3_57, %c0_58, %c0_59] : memref<7x8x112xbf16, #tpu.memory_space<vmem>>, vector<1x8x112xbf16>
    %140 = vector.shape_cast %139 : vector<1x8x112xbf16> to vector<8x112xbf16>
    %cst_60 = arith.constant dense<0.000000e+00> : vector<8x952xf32>
    %141 = tpu.matmul %140, %138, %cst_60 {dimension_numbers = #tpu.dot_dimension_numbers<[1], [0], [0], [1], [0, 0, 1, 1], [], []>} : vector<8x112xbf16>, vector<112x952xbf16>, vector<8x952xf32> -> vector<8x952xf32>
    %142 = arith.addf %130, %141 : vector<8x952xf32>
    %143 = vector.extract_strided_slice %93 {offsets = [0, 136], sizes = [16, 952], strides = [1, 1]} : vector<16x1164xbf16> to vector<16x952xbf16>
    %144 = vector.extract_strided_slice %93 {offsets = [0, 137], sizes = [16, 952], strides = [1, 1]} : vector<16x1164xbf16> to vector<16x952xbf16>
    %145 = vector.extract_strided_slice %93 {offsets = [0, 138], sizes = [16, 952], strides = [1, 1]} : vector<16x1164xbf16> to vector<16x952xbf16>
    %146 = vector.extract_strided_slice %93 {offsets = [0, 139], sizes = [16, 952], strides = [1, 1]} : vector<16x1164xbf16> to vector<16x952xbf16>
    %147 = vector.extract_strided_slice %93 {offsets = [0, 140], sizes = [16, 952], strides = [1, 1]} : vector<16x1164xbf16> to vector<16x952xbf16>
    %148 = vector.extract_strided_slice %93 {offsets = [0, 141], sizes = [16, 952], strides = [1, 1]} : vector<16x1164xbf16> to vector<16x952xbf16>
    %149 = vector.extract_strided_slice %93 {offsets = [0, 142], sizes = [16, 952], strides = [1, 1]} : vector<16x1164xbf16> to vector<16x952xbf16>
    %150 = tpu.concatenate %143, %144, %145, %146, %147, %148, %149 in 0 : vector<16x952xbf16>, vector<16x952xbf16>, vector<16x952xbf16>, vector<16x952xbf16>, vector<16x952xbf16>, vector<16x952xbf16>, vector<16x952xbf16> -> vector<112x952xbf16>
    %c4 = arith.constant 4 : index
    %c0_61 = arith.constant 0 : index
    %c0_62 = arith.constant 0 : index
    %151 = vector.load %arg8[%c4, %c0_61, %c0_62] : memref<7x8x112xbf16, #tpu.memory_space<vmem>>, vector<1x8x112xbf16>
    %152 = vector.shape_cast %151 : vector<1x8x112xbf16> to vector<8x112xbf16>
    %cst_63 = arith.constant dense<0.000000e+00> : vector<8x952xf32>
    %153 = tpu.matmul %152, %150, %cst_63 {dimension_numbers = #tpu.dot_dimension_numbers<[1], [0], [0], [1], [0, 0, 1, 1], [], []>} : vector<8x112xbf16>, vector<112x952xbf16>, vector<8x952xf32> -> vector<8x952xf32>
    %154 = arith.addf %142, %153 : vector<8x952xf32>
    %155 = vector.extract_strided_slice %93 {offsets = [0, 170], sizes = [16, 952], strides = [1, 1]} : vector<16x1164xbf16> to vector<16x952xbf16>
    %156 = vector.extract_strided_slice %93 {offsets = [0, 171], sizes = [16, 952], strides = [1, 1]} : vector<16x1164xbf16> to vector<16x952xbf16>
    %157 = vector.extract_strided_slice %93 {offsets = [0, 172], sizes = [16, 952], strides = [1, 1]} : vector<16x1164xbf16> to vector<16x952xbf16>
    %158 = vector.extract_strided_slice %93 {offsets = [0, 173], sizes = [16, 952], strides = [1, 1]} : vector<16x1164xbf16> to vector<16x952xbf16>
    %159 = vector.extract_strided_slice %93 {offsets = [0, 174], sizes = [16, 952], strides = [1, 1]} : vector<16x1164xbf16> to vector<16x952xbf16>
    %160 = vector.extract_strided_slice %93 {offsets = [0, 175], sizes = [16, 952], strides = [1, 1]} : vector<16x1164xbf16> to vector<16x952xbf16>
    %161 = vector.extract_strided_slice %93 {offsets = [0, 176], sizes = [16, 952], strides = [1, 1]} : vector<16x1164xbf16> to vector<16x952xbf16>
    %162 = tpu.concatenate %155, %156, %157, %158, %159, %160, %161 in 0 : vector<16x952xbf16>, vector<16x952xbf16>, vector<16x952xbf16>, vector<16x952xbf16>, vector<16x952xbf16>, vector<16x952xbf16>, vector<16x952xbf16> -> vector<112x952xbf16>
    %c5 = arith.constant 5 : index
    %c0_64 = arith.constant 0 : index
    %c0_65 = arith.constant 0 : index
    %163 = vector.load %arg8[%c5, %c0_64, %c0_65] : memref<7x8x112xbf16, #tpu.memory_space<vmem>>, vector<1x8x112xbf16>
    %164 = vector.shape_cast %163 : vector<1x8x112xbf16> to vector<8x112xbf16>
    %cst_66 = arith.constant dense<0.000000e+00> : vector<8x952xf32>
    %165 = tpu.matmul %164, %162, %cst_66 {dimension_numbers = #tpu.dot_dimension_numbers<[1], [0], [0], [1], [0, 0, 1, 1], [], []>} : vector<8x112xbf16>, vector<112x952xbf16>, vector<8x952xf32> -> vector<8x952xf32>
    %166 = arith.addf %154, %165 : vector<8x952xf32>
    %167 = vector.extract_strided_slice %93 {offsets = [0, 204], sizes = [16, 952], strides = [1, 1]} : vector<16x1164xbf16> to vector<16x952xbf16>
    %168 = vector.extract_strided_slice %93 {offsets = [0, 205], sizes = [16, 952], strides = [1, 1]} : vector<16x1164xbf16> to vector<16x952xbf16>
    %169 = vector.extract_strided_slice %93 {offsets = [0, 206], sizes = [16, 952], strides = [1, 1]} : vector<16x1164xbf16> to vector<16x952xbf16>
    %170 = vector.extract_strided_slice %93 {offsets = [0, 207], sizes = [16, 952], strides = [1, 1]} : vector<16x1164xbf16> to vector<16x952xbf16>
    %171 = vector.extract_strided_slice %93 {offsets = [0, 208], sizes = [16, 952], strides = [1, 1]} : vector<16x1164xbf16> to vector<16x952xbf16>
    %172 = vector.extract_strided_slice %93 {offsets = [0, 209], sizes = [16, 952], strides = [1, 1]} : vector<16x1164xbf16> to vector<16x952xbf16>
    %173 = vector.extract_strided_slice %93 {offsets = [0, 210], sizes = [16, 952], strides = [1, 1]} : vector<16x1164xbf16> to vector<16x952xbf16>
    %174 = tpu.concatenate %167, %168, %169, %170, %171, %172, %173 in 0 : vector<16x952xbf16>, vector<16x952xbf16>, vector<16x952xbf16>, vector<16x952xbf16>, vector<16x952xbf16>, vector<16x952xbf16>, vector<16x952xbf16> -> vector<112x952xbf16>
    %c6 = arith.constant 6 : index
    %c0_67 = arith.constant 0 : index
    %c0_68 = arith.constant 0 : index
    %175 = vector.load %arg8[%c6, %c0_67, %c0_68] : memref<7x8x112xbf16, #tpu.memory_space<vmem>>, vector<1x8x112xbf16>
    %176 = vector.shape_cast %175 : vector<1x8x112xbf16> to vector<8x112xbf16>
    %cst_69 = arith.constant dense<0.000000e+00> : vector<8x952xf32>
    %177 = tpu.matmul %176, %174, %cst_69 {dimension_numbers = #tpu.dot_dimension_numbers<[1], [0], [0], [1], [0, 0, 1, 1], [], []>} : vector<8x112xbf16>, vector<112x952xbf16>, vector<8x952xf32> -> vector<8x952xf32>
    %178 = arith.addf %166, %177 : vector<8x952xf32>
    %c0_70 = arith.constant 0 : index
    %c0_71 = arith.constant 0 : index
    %179 = vector.load %arg9[%c0_70, %c0_71] : memref<8x1xf32, #tpu.memory_space<vmem>>, vector<8x1xf32>
    %180 = vector.broadcast %179 : vector<8x1xf32> to vector<8x952xf32>
    %181 = arith.addf %178, %180 : vector<8x952xf32>
    %c0_72 = arith.constant 0 : index
    %c0_73 = arith.constant 0 : index
    %c0_74 = arith.constant 0 : index
    %182 = vector.load %arg10[%c0_72, %c0_73, %c0_74] : memref<1x8x952xf32, #tpu.memory_space<vmem>>, vector<1x8x952xf32>
    %183 = vector.shape_cast %182 : vector<1x8x952xf32> to vector<8x952xf32>
    %184 = vector.shape_cast %181 : vector<8x952xf32> to vector<1x8x952xf32>
    tpu.vector_store %arg10[%c0_72, %c0_73, %c0_74], %184 {strides = array<i32>} : memref<1x8x952xf32, #tpu.memory_space<vmem>>, vector<1x8x952xf32>,
    return
  }
  func.func @transform_0(%arg0: i32) -> (i32, i32, i32) {
    %c0_i32 = arith.constant 0 : i32
    %c0_i32_0 = arith.constant 0 : i32
    %c0_i32_1 = arith.constant 0 : i32
    return %arg0, %c0_i32, %c0_i32_0 : i32, i32, i32
  }
  func.func @transform_1(%arg0: i32) -> (i32, i32) {
    %c0_i32 = arith.constant 0 : i32
    %c0_i32_0 = arith.constant 0 : i32
    %c0_i32_1 = arith.constant 0 : i32
    return %c0_i32, %c0_i32_0 : i32, i32
  }
  func.func @transform_2(%arg0: i32) -> (i32, i32) {
    %c0_i32 = arith.constant 0 : i32
    %c0_i32_0 = arith.constant 0 : i32
    %c0_i32_1 = arith.constant 0 : i32
    return %c0_i32, %c0_i32_0 : i32, i32
  }
  func.func @transform_3(%arg0: i32) -> (i32, i32, i32) {
    %c0_i32 = arith.constant 0 : i32
    %c0_i32_0 = arith.constant 0 : i32
    %c0_i32_1 = arith.constant 0 : i32
    %c0_i32_2 = arith.constant 0 : i32
    return %c0_i32, %c0_i32_0, %c0_i32_1 : i32, i32, i32
  }
  func.func @transform_4(%arg0: i32) -> (i32, i32) {
    %c0_i32 = arith.constant 0 : i32
    %c0_i32_0 = arith.constant 0 : i32
    %c0_i32_1 = arith.constant 0 : i32
    return %c0_i32, %c0_i32_0 : i32, i32
  }
  func.func @transform_5(%arg0: i32) -> (i32, i32, i32) {
    %c0_i32 = arith.constant 0 : i32
    %c0_i32_0 = arith.constant 0 : i32
    %c0_i32_1 = arith.constant 0 : i32
    %c0_i32_2 = arith.constant 0 : i32
    return %c0_i32, %c0_i32_0, %c0_i32_1 : i32, i32, i32
  }
  func.func @transform_6(%arg0: i32) -> (i32, i32) {
    %c0_i32 = arith.constant 0 : i32
    %c0_i32_0 = arith.constant 0 : i32
    %c0_i32_1 = arith.constant 0 : i32
    return %c0_i32, %c0_i32_0 : i32, i32
  }
  func.func @transform_7(%arg0: i32) -> (i32, i32, i32) {
    %c0_i32 = arith.constant 0 : i32
    %c0_i32_0 = arith.constant 0 : i32
    %c0_i32_1 = arith.constant 0 : i32
    %c0_i32_2 = arith.constant 0 : i32
    return %c0_i32, %c0_i32_0, %c0_i32_1 : i32, i32, i32
  }
  func.func @transform_8(%arg0: i32) -> (i32, i32) {
    %c0_i32 = arith.constant 0 : i32
    %c0_i32_0 = arith.constant 0 : i32
    %c0_i32_1 = arith.constant 0 : i32
    return %c0_i32, %c0_i32_0 : i32, i32
  }
  func.func @transform_9(%arg0: i32) -> (i32, i32, i32) {
    %c0_i32 = arith.constant 0 : i32
    %c0_i32_0 = arith.constant 0 : i32
    %c0_i32_1 = arith.constant 0 : i32
    return %arg0, %c0_i32, %c0_i32_0 : i32, i32, i32
  }
}

</mosaic_0001>

<llo_original>
// kernel: squeeze.1
$region0: #{squeeze.1}
  %s0 = inlined_call_operand.vmem [shape: f32[2,952], index: 0, kind: input, shape index: {}]
  %s1 = inlined_call_operand.vmem [shape: f32[2,28,34], index: 1, kind: output, shape index: {}]
  $region1: #{squeeze.1} parent=0
    #allocation0 [shape = 'u8[32768]{0}', space=vmem, size = 0x8000, scoped, tag = 'scoped mem for input reshape']
    %s3 = ssub.s32 4, 1
    %s4 = scalar_lea.vmem %s0, 14
    %v5 = vld [vmem:[%s4] sm:%s3]
    %s6 = scalar_lea.vmem [#allocation0], 56
    %7 = vst [vmem:[%s6] sm:%s3] %v5
    %s8 = scalar_lea.vmem %s0, 12
    %v9 = vld [vmem:[%s8] sm:%s3]
    %s10 = scalar_lea.vmem [#allocation0], 48
    %11 = vst [vmem:[%s10] sm:%s3] %v9
    %s12 = scalar_lea.vmem %s0, 10
    %v13 = vld [vmem:[%s12] sm:%s3]
    %s14 = scalar_lea.vmem [#allocation0], 40
    %15 = vst [vmem:[%s14] sm:%s3] %v13
    %s16 = scalar_lea.vmem %s0, 8
    %v17 = vld [vmem:[%s16] sm:%s3]
    %s18 = scalar_lea.vmem [#allocation0], 32
    %19 = vst [vmem:[%s18] sm:%s3] %v17
    %s20 = scalar_lea.vmem %s0, 6
    %v21 = vld [vmem:[%s20] sm:%s3]
    %s22 = scalar_lea.vmem [#allocation0], 24
    %23 = vst [vmem:[%s22] sm:%s3] %v21
    %s24 = scalar_lea.vmem %s0, 4
    %v25 = vld [vmem:[%s24] sm:%s3]
    %s26 = scalar_lea.vmem [#allocation0], 16
    %27 = vst [vmem:[%s26] sm:%s3] %v25
    %s28 = scalar_lea.vmem %s0, 2
    %v29 = vld [vmem:[%s28] sm:%s3]
    %s30 = scalar_lea.vmem [#allocation0], 8
    %31 = vst [vmem:[%s30] sm:%s3] %v29
    %v32 = vld [vmem:[%s0] sm:%s3]
    %33 = vst [vmem:[#allocation0] sm:%s3] %v32
    %v34 = vld [vmem:[#allocation0] sm:$0x3]
    %vm35 = vcmask 277504
    %36 = vst.msk [vmem:[%s1] sm:$0x1] %vm35, %v34
    %s37 = scalar_lea.vmem %s1, 31
    %38 = vst.msk [vmem:[%s37] sm:$0x2] %vm35, %v34
    %s39 = scalar_lea.vmem [#allocation0], 40
    %v40 = vld [vmem:[%s39] sm:$0x3]
    %41 = vrot.lane.b32.xlu0 %v40, 122
    %v42 = vpop.permute.xlu0 %41
    %vm43 = vcmask 277504
    %s44 = scalar_lea.vmem %s1, 19
    %45 = vst.msk [vmem:[%s44] sm:$0x1] %vm43, %v42
    %s46 = scalar_lea.vmem %s1, 50
    %47 = vst.msk [vmem:[%s46] sm:$0x2] %vm43, %v42
    %s48 = scalar_lea.vmem [#allocation0], 8
    %v49 = vld [vmem:[%s48] sm:$0x3]
    %50 = vrot.lane.b32.xlu0 %v49, 120
    %v51 = vpop.permute.xlu0 %50
    %vm52 = vcmask 277504
    %s53 = scalar_lea.vmem %s1, 4
    %54 = vst.msk [vmem:[%s53] sm:$0x1] %vm52, %v51
    %s55 = scalar_lea.vmem %s1, 35
    %56 = vst.msk [vmem:[%s55] sm:$0x2] %vm52, %v51
    %s57 = scalar_lea.vmem [#allocation0], 48
    %v58 = vld [vmem:[%s57] sm:$0x3]
    %59 = vrot.lane.b32.xlu0 %v58, 114
    %v60 = vpop.permute.xlu0 %59
    %vm61 = vcmask 277504
    %s62 = scalar_lea.vmem %s1, 23
    %63 = vst.msk [vmem:[%s62] sm:$0x1] %vm61, %v60
    %s64 = scalar_lea.vmem %s1, 54
    %65 = vst.msk [vmem:[%s64] sm:$0x2] %vm61, %v60
    %s66 = scalar_lea.vmem [#allocation0], 16
    %v67 = vld [vmem:[%s66] sm:$0x3]
    %68 = vrot.lane.b32.xlu0 %v67, 112
    %v69 = vpop.permute.xlu0 %68
    %vm70 = vcmask 277504
    %s71 = scalar_lea.vmem %s1, 8
    %72 = vst.msk [vmem:[%s71] sm:$0x1] %vm70, %v69
    %s73 = scalar_lea.vmem %s1, 39
    %74 = vst.msk [vmem:[%s73] sm:$0x2] %vm70, %v69
    %s75 = scalar_lea.vmem [#allocation0], 56
    %v76 = vld [vmem:[%s75] sm:$0x3]
    %77 = vrot.lane.b32.xlu0 %v76, 106
    %v78 = vpop.permute.xlu0 %77
    %vm79 = vcmask 277504
    %s80 = scalar_lea.vmem %s1, 27
    %81 = vst.msk [vmem:[%s80] sm:$0x1] %vm79, %v78
    %s82 = scalar_lea.vmem %s1, 58
    %83 = vst.msk [vmem:[%s82] sm:$0x2] %vm79, %v78
    %s84 = scalar_lea.vmem [#allocation0], 24
    %v85 = vld [vmem:[%s84] sm:$0x3]
    %86 = vrot.lane.b32.xlu0 %v85, 104
    %v87 = vpop.permute.xlu0 %86
    %vm88 = vcmask 277504
    %s89 = scalar_lea.vmem %s1, 12
    %90 = vst.msk [vmem:[%s89] sm:$0x1] %vm88, %v87
    %s91 = scalar_lea.vmem %s1, 43
    %92 = vst.msk [vmem:[%s91] sm:$0x2] %vm88, %v87
    %s93 = scalar_lea.vmem [#allocation0], 32
    %v94 = vld [vmem:[%s93] sm:$0x3]
    %95 = vrot.lane.b32.xlu0 %v94, 96
    %v96 = vpop.permute.xlu0 %95
    %vm97 = vcmask 277504
    %s98 = scalar_lea.vmem %s1, 16
    %99 = vst.msk [vmem:[%s98] sm:$0x1] %vm97, %v96
    %s100 = scalar_lea.vmem %s1, 47
    %101 = vst.msk [vmem:[%s100] sm:$0x2] %vm97, %v96
    %v102 = vld [vmem:[#allocation0] sm:$0x3]
    %103 = vrot.lane.b32.xlu0 %v102, 94
    %v104 = vpop.permute.xlu0 %103
    %vm105 = vcmask 277504
    %s106 = scalar_lea.vmem %s1, 1
    %107 = vst.msk [vmem:[%s106] sm:$0x1] %vm105, %v104
    %s108 = scalar_lea.vmem %s1, 32
    %109 = vst.msk [vmem:[%s108] sm:$0x2] %vm105, %v104
    %s110 = scalar_lea.vmem [#allocation0], 40
    %v111 = vld [vmem:[%s110] sm:$0x3]
    %112 = vrot.lane.b32.xlu0 %v111, 88
    %v113 = vpop.permute.xlu0 %112
    %vm114 = vcmask 277504
    %s115 = scalar_lea.vmem %s1, 20
    %116 = vst.msk [vmem:[%s115] sm:$0x1] %vm114, %v113
    %s117 = scalar_lea.vmem %s1, 51
    %118 = vst.msk [vmem:[%s117] sm:$0x2] %vm114, %v113
    %s119 = scalar_lea.vmem [#allocation0], 8
    %v120 = vld [vmem:[%s119] sm:$0x3]
    %121 = vrot.lane.b32.xlu0 %v120, 86
    %v122 = vpop.permute.xlu0 %121
    %vm123 = vcmask 277504
    %s124 = scalar_lea.vmem %s1, 5
    %125 = vst.msk [vmem:[%s124] sm:$0x1] %vm123, %v122
    %s126 = scalar_lea.vmem %s1, 36
    %127 = vst.msk [vmem:[%s126] sm:$0x2] %vm123, %v122
    %s128 = scalar_lea.vmem [#allocation0], 48
    %v129 = vld [vmem:[%s128] sm:$0x3]
    %130 = vrot.lane.b32.xlu0 %v129, 80
    %v131 = vpop.permute.xlu0 %130
    %vm132 = vcmask 277504
    %s133 = scalar_lea.vmem %s1, 24
    %134 = vst.msk [vmem:[%s133] sm:$0x1] %vm132, %v131
    %s135 = scalar_lea.vmem %s1, 55
    %136 = vst.msk [vmem:[%s135] sm:$0x2] %vm132, %v131
    %s137 = scalar_lea.vmem [#allocation0], 16
    %v138 = vld [vmem:[%s137] sm:$0x3]
    %139 = vrot.lane.b32.xlu0 %v138, 78
    %v140 = vpop.permute.xlu0 %139
    %vm141 = vcmask 277504
    %s142 = scalar_lea.vmem %s1, 9
    %143 = vst.msk [vmem:[%s142] sm:$0x1] %vm141, %v140
    %s144 = scalar_lea.vmem %s1, 40
    %145 = vst.msk [vmem:[%s144] sm:$0x2] %vm141, %v140
    %s146 = scalar_lea.vmem [#allocation0], 24
    %v147 = vld [vmem:[%s146] sm:$0x3]
    %148 = vrot.lane.b32.xlu0 %v147, 70
    %v149 = vpop.permute.xlu0 %148
    %vm150 = vcmask 277504
    %s151 = scalar_lea.vmem %s1, 13
    %152 = vst.msk [vmem:[%s151] sm:$0x1] %vm150, %v149
    %s153 = scalar_lea.vmem %s1, 44
    %154 = vst.msk [vmem:[%s153] sm:$0x2] %vm150, %v149
    %s155 = scalar_lea.vmem [#allocation0], 32
    %v156 = vld [vmem:[%s155] sm:$0x3]
    %157 = vrot.lane.b32.xlu0 %v156, 62
    %v158 = vpop.permute.xlu0 %157
    %vm159 = vcmask 277504
    %s160 = scalar_lea.vmem %s1, 17
    %161 = vst.msk [vmem:[%s160] sm:$0x1] %vm159, %v158
    %s162 = scalar_lea.vmem %s1, 48
    %163 = vst.msk [vmem:[%s162] sm:$0x2] %vm159, %v158
    %v164 = vld [vmem:[#allocation0] sm:$0x3]
    %165 = vrot.lane.b32.xlu0 %v164, 60
    %v166 = vpop.permute.xlu0 %165
    %vm167 = vcmask 277504
    %s168 = scalar_lea.vmem %s1, 2
    %169 = vst.msk [vmem:[%s168] sm:$0x1] %vm167, %v166
    %s170 = scalar_lea.vmem %s1, 33
    %171 = vst.msk [vmem:[%s170] sm:$0x2] %vm167, %v166
    %s172 = scalar_lea.vmem [#allocation0], 40
    %v173 = vld [vmem:[%s172] sm:$0x3]
    %174 = vrot.lane.b32.xlu0 %v173, 54
    %v175 = vpop.permute.xlu0 %174
    %vm176 = vcmask 277504
    %s177 = scalar_lea.vmem %s1, 21
    %178 = vst.msk [vmem:[%s177] sm:$0x1] %vm176, %v175
    %s179 = scalar_lea.vmem %s1, 52
    %180 = vst.msk [vmem:[%s179] sm:$0x2] %vm176, %v175
    %s181 = scalar_lea.vmem [#allocation0], 8
    %v182 = vld [vmem:[%s181] sm:$0x3]
    %183 = vrot.lane.b32.xlu0 %v182, 52
    %v184 = vpop.permute.xlu0 %183
    %vm185 = vcmask 277504
    %s186 = scalar_lea.vmem %s1, 6
    %187 = vst.msk [vmem:[%s186] sm:$0x1] %vm185, %v184
    %s188 = scalar_lea.vmem %s1, 37
    %189 = vst.msk [vmem:[%s188] sm:$0x2] %vm185, %v184
    %s190 = scalar_lea.vmem [#allocation0], 48
    %v191 = vld [vmem:[%s190] sm:$0x3]
    %192 = vrot.lane.b32.xlu0 %v191, 46
    %v193 = vpop.permute.xlu0 %192
    %vm194 = vcmask 277504
    %s195 = scalar_lea.vmem %s1, 25
    %196 = vst.msk [vmem:[%s195] sm:$0x1] %vm194, %v193
    %s197 = scalar_lea.vmem %s1, 56
    %198 = vst.msk [vmem:[%s197] sm:$0x2] %vm194, %v193
    %s199 = scalar_lea.vmem [#allocation0], 16
    %v200 = vld [vmem:[%s199] sm:$0x3]
    %201 = vrot.lane.b32.xlu0 %v200, 44
    %v202 = vpop.permute.xlu0 %201
    %vm203 = vcmask 277504
    %s204 = scalar_lea.vmem %s1, 10
    %205 = vst.msk [vmem:[%s204] sm:$0x1] %vm203, %v202
    %s206 = scalar_lea.vmem %s1, 41
    %207 = vst.msk [vmem:[%s206] sm:$0x2] %vm203, %v202
    %s208 = scalar_lea.vmem [#allocation0], 24
    %v209 = vld [vmem:[%s208] sm:$0x3]
    %210 = vrot.lane.b32.xlu0 %v209, 36
    %v211 = vpop.permute.xlu0 %210
    %vm212 = vcmask 277504
    %s213 = scalar_lea.vmem %s1, 14
    %214 = vst.msk [vmem:[%s213] sm:$0x1] %vm212, %v211
    %s215 = scalar_lea.vmem %s1, 45
    %216 = vst.msk [vmem:[%s215] sm:$0x2] %vm212, %v211
    %s217 = scalar_lea.vmem [#allocation0], 32
    %v218 = vld [vmem:[%s217] sm:$0x3]
    %s219 = scalar_lea.vmem [#allocation0], 40
    %v220 = vld [vmem:[%s219] sm:$0x3]
    %vm221 = vcmask 818176
    %v222 = vsel %vm221, %v220, %v218
    %223 = vrot.lane.b32.xlu0 %v222, 28
    %v224 = vpop.permute.xlu0 %223
    %vm225 = vcmask 228352
    %s226 = scalar_lea.vmem %s1, 18
    %227 = vst.msk [vmem:[%s226] sm:$0x1] %vm225, %v224
    %s228 = scalar_lea.vmem %s1, 49
    %229 = vst.msk [vmem:[%s228] sm:$0x2] %vm225, %v224
    %vm230 = vcmask 277728
    %s231 = scalar_lea.vmem %s1, 18
    %232 = vst.msk [vmem:[%s231] sm:$0x1] %vm230, %v224
    %s233 = scalar_lea.vmem %s1, 49
    %234 = vst.msk [vmem:[%s233] sm:$0x2] %vm230, %v224
    %v235 = vld [vmem:[#allocation0] sm:$0x3]
    %s236 = scalar_lea.vmem [#allocation0], 8
    %v237 = vld [vmem:[%s236] sm:$0x3]
    %vm238 = vcmask 834560
    %v239 = vsel %vm238, %v237, %v235
    %240 = vrot.lane.b32.xlu0 %v239, 26
    %v241 = vpop.permute.xlu0 %240
    %vm242 = vcmask 211968
    %s243 = scalar_lea.vmem %s1, 3
    %244 = vst.msk [vmem:[%s243] sm:$0x1] %vm242, %v241
    %s245 = scalar_lea.vmem %s1, 34
    %246 = vst.msk [vmem:[%s245] sm:$0x2] %vm242, %v241
    %vm247 = vcmask 277712
    %s248 = scalar_lea.vmem %s1, 3
    %249 = vst.msk [vmem:[%s248] sm:$0x1] %vm247, %v241
    %s250 = scalar_lea.vmem %s1, 34
    %251 = vst.msk [vmem:[%s250] sm:$0x2] %vm247, %v241
    %s252 = scalar_lea.vmem [#allocation0], 40
    %v253 = vld [vmem:[%s252] sm:$0x3]
    %s254 = scalar_lea.vmem [#allocation0], 48
    %v255 = vld [vmem:[%s254] sm:$0x3]
    %vm256 = vcmask 883712
    %v257 = vsel %vm256, %v255, %v253
    %258 = vrot.lane.b32.xlu0 %v257, 20
    %v259 = vpop.permute.xlu0 %258
    %vm260 = vcmask 162816
    %s261 = scalar_lea.vmem %s1, 22
    %262 = vst.msk [vmem:[%s261] sm:$0x1] %vm260, %v259
    %s263 = scalar_lea.vmem %s1, 53
    %264 = vst.msk [vmem:[%s263] sm:$0x2] %vm260, %v259
    %vm265 = vcmask 277664
    %s266 = scalar_lea.vmem %s1, 22
    %267 = vst.msk [vmem:[%s266] sm:$0x1] %vm265, %v259
    %s268 = scalar_lea.vmem %s1, 53
    %269 = vst.msk [vmem:[%s268] sm:$0x2] %vm265, %v259
    %s270 = scalar_lea.vmem [#allocation0], 8
    %v271 = vld [vmem:[%s270] sm:$0x3]
    %s272 = scalar_lea.vmem [#allocation0], 16
    %v273 = vld [vmem:[%s272] sm:$0x3]
    %vm274 = vcmask 900096
    %v275 = vsel %vm274, %v273, %v271
    %276 = vrot.lane.b32.xlu0 %v275, 18
    %v277 = vpop.permute.xlu0 %276
    %vm278 = vcmask 146432
    %s279 = scalar_lea.vmem %s1, 7
    %280 = vst.msk [vmem:[%s279] sm:$0x1] %vm278, %v277
    %s281 = scalar_lea.vmem %s1, 38
    %282 = vst.msk [vmem:[%s281] sm:$0x2] %vm278, %v277
    %vm283 = vcmask 277648
    %s284 = scalar_lea.vmem %s1, 7
    %285 = vst.msk [vmem:[%s284] sm:$0x1] %vm283, %v277
    %s286 = scalar_lea.vmem %s1, 38
    %287 = vst.msk [vmem:[%s286] sm:$0x2] %vm283, %v277
    %s288 = scalar_lea.vmem [#allocation0], 48
    %v289 = vld [vmem:[%s288] sm:$0x3]
    %s290 = scalar_lea.vmem [#allocation0], 56
    %v291 = vld [vmem:[%s290] sm:$0x3]
    %vm292 = vcmask 949248
    %v293 = vsel %vm292, %v291, %v289
    %294 = vrot.lane.b32.xlu0 %v293, 12
    %v295 = vpop.permute.xlu0 %294
    %vm296 = vcmask 97280
    %s297 = scalar_lea.vmem %s1, 26
    %298 = vst.msk [vmem:[%s297] sm:$0x1] %vm296, %v295
    %s299 = scalar_lea.vmem %s1, 57
    %300 = vst.msk [vmem:[%s299] sm:$0x2] %vm296, %v295
    %vm301 = vcmask 277600
    %s302 = scalar_lea.vmem %s1, 26
    %303 = vst.msk [vmem:[%s302] sm:$0x1] %vm301, %v295
    %s304 = scalar_lea.vmem %s1, 57
    %305 = vst.msk [vmem:[%s304] sm:$0x2] %vm301, %v295
    %s306 = scalar_lea.vmem [#allocation0], 16
    %v307 = vld [vmem:[%s306] sm:$0x3]
    %s308 = scalar_lea.vmem [#allocation0], 24
    %v309 = vld [vmem:[%s308] sm:$0x3]
    %vm310 = vcmask 965632
    %v311 = vsel %vm310, %v309, %v307
    %312 = vrot.lane.b32.xlu0 %v311, 10
    %v313 = vpop.permute.xlu0 %312
    %vm314 = vcmask 80896
    %s315 = scalar_lea.vmem %s1, 11
    %316 = vst.msk [vmem:[%s315] sm:$0x1] %vm314, %v313
    %s317 = scalar_lea.vmem %s1, 42
    %318 = vst.msk [vmem:[%s317] sm:$0x2] %vm314, %v313
    %vm319 = vcmask 277584
    %s320 = scalar_lea.vmem %s1, 11
    %321 = vst.msk [vmem:[%s320] sm:$0x1] %vm319, %v313
    %s322 = scalar_lea.vmem %s1, 42
    %323 = vst.msk [vmem:[%s322] sm:$0x2] %vm319, %v313
    %s324 = scalar_lea.vmem [#allocation0], 24
    %v325 = vld [vmem:[%s324] sm:$0x3]
    %s326 = scalar_lea.vmem [#allocation0], 32
    %v327 = vld [vmem:[%s326] sm:$0x3]
    %vm328 = vcmask 1031168
    %v329 = vsel %vm328, %v327, %v325
    %330 = vrot.lane.b32.xlu0 %v329, 2
    %v331 = vpop.permute.xlu0 %330
    %vm332 = vcmask 15360
    %s333 = scalar_lea.vmem %s1, 15
    %334 = vst.msk [vmem:[%s333] sm:$0x1] %vm332, %v331
    %s335 = scalar_lea.vmem %s1, 46
    %336 = vst.msk [vmem:[%s335] sm:$0x2] %vm332, %v331
    %vm337 = vcmask 277520
    %s338 = scalar_lea.vmem %s1, 15
    %339 = vst.msk [vmem:[%s338] sm:$0x1] %vm337, %v331
    %s340 = scalar_lea.vmem %s1, 46
    %341 = vst.msk [vmem:[%s340] sm:$0x2] %vm337, %v331

// kernel: generator_forward.2
$region0: #{generator_forward.2}
  #allocation0 [shape = 'u32[]', space=smem, size = 0x4, offset = 0x4, fixed_abs, tag = 'smem constant byte address 0x4 - core index']
  #allocation1 [shape = 'u32[72,128]{1,0:T(1,128)}', space=vmem, size = 0x9000, scoped, tag = 'internal scratch']
  %s0 = inlined_call_operand.vmem [shape: bf16[2,32], index: 0, kind: input, shape index: {}]
  %s1 = inlined_call_operand.vmem [shape: bf16[32,3136], index: 1, kind: input, shape index: {}]
  %s2 = inlined_call_operand.vmem [shape: f32[1,3136], index: 2, kind: input, shape index: {}]
  %s3 = inlined_call_operand.vmem [shape: bf16[2,3136], index: 3, kind: output, shape index: {}]
  %s4 = sld [smem:[#allocation0]]
  $region22: #{generator_forward.2} parent=0
    _
  %s6 = ssub.s32 1, %s4
  %s7 = scalar_select 0, %s6, %s4
  // Predicated region
  $region2: #{generator_forward.2} parent=0 // pred_check
    _
  $region3: #{generator_forward.2} parent=0 // pred_check_branch
    %9 = sbr.rel (0) target = $region5
  $region4: #{generator_forward.2} parent=0 // pred_region
    _
  $region5: #{generator_forward.2} parent=0 // pred_fallthru
    _
  // Predicated region
  $region6: #{generator_forward.2} parent=0 // pred_check
    _
  $region7: #{generator_forward.2} parent=0 // pred_check_branch
    %11 = sbr.rel (0) target = $region9
  $region8: #{generator_forward.2} parent=0 // pred_region
    _
  $region9: #{generator_forward.2} parent=0 // pred_fallthru
    _
  // Predicated region
  $region10: #{generator_forward.2} parent=0 // pred_check
    _
  $region11: #{generator_forward.2} parent=0 // pred_check_branch
    %13 = sbr.rel (0) target = $region13
  $region12: #{generator_forward.2} parent=0 // pred_region
    _
  $region13: #{generator_forward.2} parent=0 // pred_fallthru
    _
  %v15 = vld [vmem:[%s0] sm:$0x1]
  %v16 = vld [vmem:[%s1] sm:$0xff]
  %v17 = vld [vmem:[%s1 + $0x8] sm:$0xff]
  %v18 = vld [vmem:[%s1 + $0x10] sm:$0xff]
  %v19 = vld [vmem:[%s1 + $0x18] sm:$0xff]
  %v20 = vld [vmem:[%s1 + $0x20] sm:$0xff]
  %v21 = vld [vmem:[%s1 + $0x28] sm:$0xff]
  %v22 = vld [vmem:[%s1 + $0x30] sm:$0xff]
  %v23 = vld [vmem:[%s1 + $0x38] sm:$0xff]
  %v24 = vld [vmem:[%s1 + $0x40] sm:$0xff]
  %v25 = vld [vmem:[%s1 + $0x48] sm:$0xff]
  %v26 = vld [vmem:[%s1 + $0x50] sm:$0xff]
  %v27 = vld [vmem:[%s1 + $0x58] sm:$0xff]
  %v28 = vld [vmem:[%s1 + $0x60] sm:$0xf]
  %v29 = vld [vmem:[%s1 + $0x64] sm:$0xff]
  %v30 = vld [vmem:[%s1 + $0x6c] sm:$0xff]
  %v31 = vld [vmem:[%s1 + $0x74] sm:$0xff]
  %v32 = vld [vmem:[%s1 + $0x7c] sm:$0xff]
  %v33 = vld [vmem:[%s1 + $0x84] sm:$0xff]
  %v34 = vld [vmem:[%s1 + $0x8c] sm:$0xff]
  %v35 = vld [vmem:[%s1 + $0x94] sm:$0xff]
  %v36 = vld [vmem:[%s1 + $0x9c] sm:$0xff]
  %v37 = vld [vmem:[%s1 + $0xa4] sm:$0xff]
  %v38 = vld [vmem:[%s1 + $0xac] sm:$0xff]
  %v39 = vld [vmem:[%s1 + $0xb4] sm:$0xff]
  %v40 = vld [vmem:[%s1 + $0xbc] sm:$0xff]
  %v41 = vld [vmem:[%s1 + $0xc4] sm:$0xf]
  %v42 = vld [vmem:[%s1 + $0xc8] sm:$0xff]
  %v43 = vld [vmem:[%s1 + $0xd0] sm:$0xff]
  %v44 = vld [vmem:[%s1 + $0xd8] sm:$0xff]
  %v45 = vld [vmem:[%s1 + $0xe0] sm:$0xff]
  %v46 = vld [vmem:[%s1 + $0xe8] sm:$0xff]
  %v47 = vld [vmem:[%s1 + $0xf0] sm:$0xff]
  %v48 = vld [vmem:[%s1 + $0xf8] sm:$0xff]
  %v49 = vld [vmem:[%s1 + $0x100] sm:$0xff]
  %v50 = vld [vmem:[%s1 + $0x108] sm:$0xff]
  %v51 = vld [vmem:[%s1 + $0x110] sm:$0xff]
  %v52 = vld [vmem:[%s1 + $0x118] sm:$0xff]
  %v53 = vld [vmem:[%s1 + $0x120] sm:$0xff]
  %v54 = vld [vmem:[%s1 + $0x128] sm:$0xf]
  %v55 = vld [vmem:[%s1 + $0x12c] sm:$0xff]
  %v56 = vld [vmem:[%s1 + $0x134] sm:$0xff]
  %v57 = vld [vmem:[%s1 + $0x13c] sm:$0xff]
  %v58 = vld [vmem:[%s1 + $0x144] sm:$0xff]
  %v59 = vld [vmem:[%s1 + $0x14c] sm:$0xff]
  %v60 = vld [vmem:[%s1 + $0x154] sm:$0xff]
  %v61 = vld [vmem:[%s1 + $0x15c] sm:$0xff]
  %v62 = vld [vmem:[%s1 + $0x164] sm:$0xff]
  %v63 = vld [vmem:[%s1 + $0x16c] sm:$0xff]
  %v64 = vld [vmem:[%s1 + $0x174] sm:$0xff]
  %v65 = vld [vmem:[%s1 + $0x17c] sm:$0xff]
  %v66 = vld [vmem:[%s1 + $0x184] sm:$0xff]
  %v67 = vld [vmem:[%s1 + $0x18c] sm:$0xf]
  %v68 = vld [vmem:[%s2] sm:$0xff]
  %v69 = vld [vmem:[%s2 + $0x8] sm:$0xff]
  %v70 = vld [vmem:[%s2 + $0x10] sm:$0xff]
  %v71 = vld [vmem:[%s2 + $0x18] sm:$0x1]
  %v76 = vperm.slane %v68, 0
  %v77 = vperm.slane %v68, 1
  %v78 = vperm.slane %v68, 2
  %v79 = vperm.slane %v68, 3
  %v80 = vperm.slane %v68, 4
  %v81 = vperm.slane %v68, 5
  %v82 = vperm.slane %v68, 6
  %v83 = vperm.slane %v68, 7
  %v84 = vperm.slane %v69, 0
  %v85 = vperm.slane %v69, 1
  %v86 = vperm.slane %v69, 2
  %v87 = vperm.slane %v69, 3
  %v88 = vperm.slane %v69, 4
  %v89 = vperm.slane %v69, 5
  %v90 = vperm.slane %v69, 6
  %v91 = vperm.slane %v69, 7
  %v92 = vperm.slane %v70, 0
  %v93 = vperm.slane %v70, 1
  %v94 = vperm.slane %v70, 2
  %v95 = vperm.slane %v70, 3
  %v96 = vperm.slane %v70, 4
  %v97 = vperm.slane %v70, 5
  %v98 = vperm.slane %v70, 6
  %v99 = vperm.slane %v70, 7
  %v100 = vperm.slane %v71, 0
  %v178 = vunpack.c.l.b16 %v16
  %v179 = vunpack.c.h.b16 %v16
  %v180 = vunpack.c.l.b16 %v17
  %v181 = vunpack.c.h.b16 %v17
  %v182 = vunpack.c.l.b16 %v18
  %v183 = vunpack.c.h.b16 %v18
  %v184 = vunpack.c.l.b16 %v19
  %v185 = vunpack.c.h.b16 %v19
  %v186 = vunpack.c.l.b16 %v20
  %v187 = vunpack.c.h.b16 %v20
  %v188 = vunpack.c.l.b16 %v21
  %v189 = vunpack.c.h.b16 %v21
  %v190 = vunpack.c.l.b16 %v22
  %v191 = vunpack.c.h.b16 %v22
  %v192 = vunpack.c.l.b16 %v23
  %v193 = vunpack.c.h.b16 %v23
  %v194 = vunpack.c.l.b16 %v24
  %v195 = vunpack.c.h.b16 %v24
  %v196 = vunpack.c.l.b16 %v25
  %v197 = vunpack.c.h.b16 %v25
  %v198 = vunpack.c.l.b16 %v26
  %v199 = vunpack.c.h.b16 %v26
  %v200 = vunpack.c.l.b16 %v27
  %v201 = vunpack.c.h.b16 %v27
  %v202 = vunpack.c.l.b16 %v28
  %v203 = vunpack.c.l.b16 %v29
  %v204 = vunpack.c.h.b16 %v29
  %v205 = vunpack.c.l.b16 %v30
  %v206 = vunpack.c.h.b16 %v30
  %v207 = vunpack.c.l.b16 %v31
  %v208 = vunpack.c.h.b16 %v31
  %v209 = vunpack.c.l.b16 %v32
  %v210 = vunpack.c.h.b16 %v32
  %v211 = vunpack.c.l.b16 %v33
  %v212 = vunpack.c.h.b16 %v33
  %v213 = vunpack.c.l.b16 %v34
  %v214 = vunpack.c.h.b16 %v34
  %v215 = vunpack.c.l.b16 %v35
  %v216 = vunpack.c.h.b16 %v35
  %v217 = vunpack.c.l.b16 %v36
  %v218 = vunpack.c.h.b16 %v36
  %v219 = vunpack.c.l.b16 %v37
  %v220 = vunpack.c.h.b16 %v37
  %v221 = vunpack.c.l.b16 %v38
  %v222 = vunpack.c.h.b16 %v38
  %v223 = vunpack.c.l.b16 %v39
  %v224 = vunpack.c.h.b16 %v39
  %v225 = vunpack.c.l.b16 %v40
  %v226 = vunpack.c.h.b16 %v40
  %v227 = vunpack.c.l.b16 %v41
  %v228 = vunpack.c.l.b16 %v42
  %v229 = vunpack.c.h.b16 %v42
  %v230 = vunpack.c.l.b16 %v43
  %v231 = vunpack.c.h.b16 %v43
  %v232 = vunpack.c.l.b16 %v44
  %v233 = vunpack.c.h.b16 %v44
  %v234 = vunpack.c.l.b16 %v45
  %v235 = vunpack.c.h.b16 %v45
  %v236 = vunpack.c.l.b16 %v46
  %v237 = vunpack.c.h.b16 %v46
  %v238 = vunpack.c.l.b16 %v47
  %v239 = vunpack.c.h.b16 %v47
  %v240 = vunpack.c.l.b16 %v48
  %v241 = vunpack.c.h.b16 %v48
  %v242 = vunpack.c.l.b16 %v49
  %v243 = vunpack.c.h.b16 %v49
  %v244 = vunpack.c.l.b16 %v50
  %v245 = vunpack.c.h.b16 %v50
  %v246 = vunpack.c.l.b16 %v51
  %v247 = vunpack.c.h.b16 %v51
  %v248 = vunpack.c.l.b16 %v52
  %v249 = vunpack.c.h.b16 %v52
  %v250 = vunpack.c.l.b16 %v53
  %v251 = vunpack.c.h.b16 %v53
  %v252 = vunpack.c.l.b16 %v54
  %v253 = vunpack.c.l.b16 %v55
  %v254 = vunpack.c.h.b16 %v55
  %v255 = vunpack.c.l.b16 %v56
  %v256 = vunpack.c.h.b16 %v56
  %v257 = vunpack.c.l.b16 %v57
  %v258 = vunpack.c.h.b16 %v57
  %v259 = vunpack.c.l.b16 %v58
  %v260 = vunpack.c.h.b16 %v58
  %v261 = vunpack.c.l.b16 %v59
  %v262 = vunpack.c.h.b16 %v59
  %v263 = vunpack.c.l.b16 %v60
  %v264 = vunpack.c.h.b16 %v60
  %v265 = vunpack.c.l.b16 %v61
  %v266 = vunpack.c.h.b16 %v61
  %v267 = vunpack.c.l.b16 %v62
  %v268 = vunpack.c.h.b16 %v62
  %v269 = vunpack.c.l.b16 %v63
  %v270 = vunpack.c.h.b16 %v63
  %v271 = vunpack.c.l.b16 %v64
  %v272 = vunpack.c.h.b16 %v64
  %v273 = vunpack.c.l.b16 %v65
  %v274 = vunpack.c.h.b16 %v65
  %v275 = vunpack.c.l.b16 %v66
  %v276 = vunpack.c.h.b16 %v66
  %v277 = vunpack.c.l.b16 %v67
  %v278 = vpack.c.b16 %v203, %v178
  %v279 = vpack.c.b16 %v204, %v179
  %v280 = vpack.c.b16 %v205, %v180
  %v281 = vpack.c.b16 %v206, %v181
  %v282 = vpack.c.b16 %v207, %v182
  %v283 = vpack.c.b16 %v208, %v183
  %v284 = vpack.c.b16 %v209, %v184
  %v285 = vpack.c.b16 %v210, %v185
  %v286 = vpack.c.b16 %v211, %v186
  %v287 = vpack.c.b16 %v212, %v187
  %v288 = vpack.c.b16 %v213, %v188
  %v289 = vpack.c.b16 %v214, %v189
  %v290 = vpack.c.b16 %v215, %v190
  %v291 = vpack.c.b16 %v216, %v191
  %v292 = vpack.c.b16 %v217, %v192
  %v293 = vpack.c.b16 %v218, %v193
  %v294 = vpack.c.b16 %v219, %v194
  %v295 = vpack.c.b16 %v220, %v195
  %v296 = vpack.c.b16 %v221, %v196
  %v297 = vpack.c.b16 %v222, %v197
  %v298 = vpack.c.b16 %v223, %v198
  %v299 = vpack.c.b16 %v224, %v199
  %v300 = vpack.c.b16 %v225, %v200
  %v301 = vpack.c.b16 %v226, %v201
  %v302 = vpack.c.b16 %v227, %v202
  %v303 = vpack.c.b16 %v253, %v228
  %v304 = vpack.c.b16 %v254, %v229
  %v305 = vpack.c.b16 %v255, %v230
  %v306 = vpack.c.b16 %v256, %v231
  %v307 = vpack.c.b16 %v257, %v232
  %v308 = vpack.c.b16 %v258, %v233
  %v309 = vpack.c.b16 %v259, %v234
  %v310 = vpack.c.b16 %v260, %v235
  %v311 = vpack.c.b16 %v261, %v236
  %v312 = vpack.c.b16 %v262, %v237
  %v313 = vpack.c.b16 %v263, %v238
  %v314 = vpack.c.b16 %v264, %v239
  %v315 = vpack.c.b16 %v265, %v240
  %v316 = vpack.c.b16 %v266, %v241
  %v317 = vpack.c.b16 %v267, %v242
  %v318 = vpack.c.b16 %v268, %v243
  %v319 = vpack.c.b16 %v269, %v244
  %v320 = vpack.c.b16 %v270, %v245
  %v321 = vpack.c.b16 %v271, %v246
  %v322 = vpack.c.b16 %v272, %v247
  %v323 = vpack.c.b16 %v273, %v248
  %v324 = vpack.c.b16 %v274, %v249
  %v325 = vpack.c.b16 %v275, %v250
  %v326 = vpack.c.b16 %v276, %v251
  %v327 = vpack.c.b16 %v277, %v252
  %vm378 = vcmask 261120
  %v380 = vsel %vm378, %v15, 0
  %382 = vmatpush.bf16.msra.mxu0 0
  %383 = vmatpush.bf16.msra.mxu0 0
  %384 = vmatpush.bf16.msra.mxu0 0
  %385 = vmatpush.bf16.msra.mxu0 0
  %386 = vmatpush.bf16.msra.mxu0 0
  %387 = vmatpush.bf16.msra.mxu0 0
  %388 = vmatpush.bf16.msra.mxu0 %v303
  %389 = vmatpush.bf16.msra.mxu0 %v278
  %390 = vmatmul.bf16.gmra.mxu0 %v380
  %v391 = vpop.f32.mrf.mxu0
  %v392 = vadd.f32 %v76, %v391
  %v393 = vpop.f32.mrf.mxu0
  %394 = vdwg.mxu0
  %395 = vmatpush.bf16.msra.mxu0 0
  %396 = vmatpush.bf16.msra.mxu0 0
  %397 = vmatpush.bf16.msra.mxu0 0
  %398 = vmatpush.bf16.msra.mxu0 0
  %399 = vmatpush.bf16.msra.mxu0 0
  %400 = vmatpush.bf16.msra.mxu0 0
  %401 = vmatpush.bf16.msra.mxu0 %v304
  %402 = vmatpush.bf16.msra.mxu0 %v279
  %403 = vmatmul.bf16.gmra.mxu0 %v380
  %v404 = vpop.f32.mrf.mxu0
  %v405 = vadd.f32 %v77, %v404
  %v406 = vpop.f32.mrf.mxu0
  %407 = vdwg.mxu0
  %408 = vmatpush.bf16.msra.mxu0 0
  %409 = vmatpush.bf16.msra.mxu0 0
  %410 = vmatpush.bf16.msra.mxu0 0
  %411 = vmatpush.bf16.msra.mxu0 0
  %412 = vmatpush.bf16.msra.mxu0 0
  %413 = vmatpush.bf16.msra.mxu0 0
  %414 = vmatpush.bf16.msra.mxu0 %v305
  %415 = vmatpush.bf16.msra.mxu0 %v280
  %416 = vmatmul.bf16.gmra.mxu0 %v380
  %v417 = vpop.f32.mrf.mxu0
  %v418 = vadd.f32 %v78, %v417
  %v419 = vpop.f32.mrf.mxu0
  %420 = vdwg.mxu0
  %421 = vmatpush.bf16.msra.mxu0 0
  %422 = vmatpush.bf16.msra.mxu0 0
  %423 = vmatpush.bf16.msra.mxu0 0
  %424 = vmatpush.bf16.msra.mxu0 0
  %425 = vmatpush.bf16.msra.mxu0 0
  %426 = vmatpush.bf16.msra.mxu0 0
  %427 = vmatpush.bf16.msra.mxu0 %v306
  %428 = vmatpush.bf16.msra.mxu0 %v281
  %429 = vmatmul.bf16.gmra.mxu0 %v380
  %v430 = vpop.f32.mrf.mxu0
  %v431 = vadd.f32 %v79, %v430
  %v432 = vpop.f32.mrf.mxu0
  %433 = vdwg.mxu0
  %434 = vmatpush.bf16.msra.mxu0 0
  %435 = vmatpush.bf16.msra.mxu0 0
  %436 = vmatpush.bf16.msra.mxu0 0
  %437 = vmatpush.bf16.msra.mxu0 0
  %438 = vmatpush.bf16.msra.mxu0 0
  %439 = vmatpush.bf16.msra.mxu0 0
  %440 = vmatpush.bf16.msra.mxu0 %v307
  %441 = vmatpush.bf16.msra.mxu0 %v282
  %442 = vmatmul.bf16.gmra.mxu0 %v380
  %v443 = vpop.f32.mrf.mxu0
  %v444 = vadd.f32 %v80, %v443
  %v445 = vpop.f32.mrf.mxu0
  %446 = vdwg.mxu0
  %447 = vmatpush.bf16.msra.mxu0 0
  %448 = vmatpush.bf16.msra.mxu0 0
  %449 = vmatpush.bf16.msra.mxu0 0
  %450 = vmatpush.bf16.msra.mxu0 0
  %451 = vmatpush.bf16.msra.mxu0 0
  %452 = vmatpush.bf16.msra.mxu0 0
  %453 = vmatpush.bf16.msra.mxu0 %v308
  %454 = vmatpush.bf16.msra.mxu0 %v283
  %455 = vmatmul.bf16.gmra.mxu0 %v380
  %v456 = vpop.f32.mrf.mxu0
  %v457 = vadd.f32 %v81, %v456
  %v458 = vpop.f32.mrf.mxu0
  %459 = vdwg.mxu0
  %460 = vmatpush.bf16.msra.mxu0 0
  %461 = vmatpush.bf16.msra.mxu0 0
  %462 = vmatpush.bf16.msra.mxu0 0
  %463 = vmatpush.bf16.msra.mxu0 0
  %464 = vmatpush.bf16.msra.mxu0 0
  %465 = vmatpush.bf16.msra.mxu0 0
  %466 = vmatpush.bf16.msra.mxu0 %v309
  %467 = vmatpush.bf16.msra.mxu0 %v284
  %468 = vmatmul.bf16.gmra.mxu0 %v380
  %v469 = vpop.f32.mrf.mxu0
  %v470 = vadd.f32 %v82, %v469
  %v471 = vpop.f32.mrf.mxu0
  %472 = vdwg.mxu0
  %473 = vmatpush.bf16.msra.mxu0 0
  %474 = vmatpush.bf16.msra.mxu0 0
  %475 = vmatpush.bf16.msra.mxu0 0
  %476 = vmatpush.bf16.msra.mxu0 0
  %477 = vmatpush.bf16.msra.mxu0 0
  %478 = vmatpush.bf16.msra.mxu0 0
  %479 = vmatpush.bf16.msra.mxu0 %v310
  %480 = vmatpush.bf16.msra.mxu0 %v285
  %481 = vmatmul.bf16.gmra.mxu0 %v380
  %v482 = vpop.f32.mrf.mxu0
  %v483 = vadd.f32 %v83, %v482
  %v484 = vpop.f32.mrf.mxu0
  %485 = vdwg.mxu0
  %486 = vmatpush.bf16.msra.mxu0 0
  %487 = vmatpush.bf16.msra.mxu0 0
  %488 = vmatpush.bf16.msra.mxu0 0
  %489 = vmatpush.bf16.msra.mxu0 0
  %490 = vmatpush.bf16.msra.mxu0 0
  %491 = vmatpush.bf16.msra.mxu0 0
  %492 = vmatpush.bf16.msra.mxu0 %v311
  %493 = vmatpush.bf16.msra.mxu0 %v286
  %494 = vmatmul.bf16.gmra.mxu0 %v380
  %v495 = vpop.f32.mrf.mxu0
  %v496 = vadd.f32 %v84, %v495
  %v497 = vpop.f32.mrf.mxu0
  %498 = vdwg.mxu0
  %499 = vmatpush.bf16.msra.mxu0 0
  %500 = vmatpush.bf16.msra.mxu0 0
  %501 = vmatpush.bf16.msra.mxu0 0
  %502 = vmatpush.bf16.msra.mxu0 0
  %503 = vmatpush.bf16.msra.mxu0 0
  %504 = vmatpush.bf16.msra.mxu0 0
  %505 = vmatpush.bf16.msra.mxu0 %v312
  %506 = vmatpush.bf16.msra.mxu0 %v287
  %507 = vmatmul.bf16.gmra.mxu0 %v380
  %v508 = vpop.f32.mrf.mxu0
  %v509 = vadd.f32 %v85, %v508
  %v510 = vpop.f32.mrf.mxu0
  %511 = vdwg.mxu0
  %512 = vmatpush.bf16.msra.mxu0 0
  %513 = vmatpush.bf16.msra.mxu0 0
  %514 = vmatpush.bf16.msra.mxu0 0
  %515 = vmatpush.bf16.msra.mxu0 0
  %516 = vmatpush.bf16.msra.mxu0 0
  %517 = vmatpush.bf16.msra.mxu0 0
  %518 = vmatpush.bf16.msra.mxu0 %v313
  %519 = vmatpush.bf16.msra.mxu0 %v288
  %520 = vmatmul.bf16.gmra.mxu0 %v380
  %v521 = vpop.f32.mrf.mxu0
  %v522 = vadd.f32 %v86, %v521
  %v523 = vpop.f32.mrf.mxu0
  %524 = vdwg.mxu0
  %525 = vmatpush.bf16.msra.mxu0 0
  %526 = vmatpush.bf16.msra.mxu0 0
  %527 = vmatpush.bf16.msra.mxu0 0
  %528 = vmatpush.bf16.msra.mxu0 0
  %529 = vmatpush.bf16.msra.mxu0 0
  %530 = vmatpush.bf16.msra.mxu0 0
  %531 = vmatpush.bf16.msra.mxu0 %v314
  %532 = vmatpush.bf16.msra.mxu0 %v289
  %533 = vmatmul.bf16.gmra.mxu0 %v380
  %v534 = vpop.f32.mrf.mxu0
  %v535 = vadd.f32 %v87, %v534
  %v536 = vpop.f32.mrf.mxu0
  %537 = vdwg.mxu0
  %538 = vmatpush.bf16.msra.mxu0 0
  %539 = vmatpush.bf16.msra.mxu0 0
  %540 = vmatpush.bf16.msra.mxu0 0
  %541 = vmatpush.bf16.msra.mxu0 0
  %542 = vmatpush.bf16.msra.mxu0 0
  %543 = vmatpush.bf16.msra.mxu0 0
  %544 = vmatpush.bf16.msra.mxu0 %v315
  %545 = vmatpush.bf16.msra.mxu0 %v290
  %546 = vmatmul.bf16.gmra.mxu0 %v380
  %v547 = vpop.f32.mrf.mxu0
  %v548 = vadd.f32 %v88, %v547
  %v549 = vpop.f32.mrf.mxu0
  %550 = vdwg.mxu0
  %551 = vmatpush.bf16.msra.mxu0 0
  %552 = vmatpush.bf16.msra.mxu0 0
  %553 = vmatpush.bf16.msra.mxu0 0
  %554 = vmatpush.bf16.msra.mxu0 0
  %555 = vmatpush.bf16.msra.mxu0 0
  %556 = vmatpush.bf16.msra.mxu0 0
  %557 = vmatpush.bf16.msra.mxu0 %v316
  %558 = vmatpush.bf16.msra.mxu0 %v291
  %559 = vmatmul.bf16.gmra.mxu0 %v380
  %v560 = vpop.f32.mrf.mxu0
  %v561 = vadd.f32 %v89, %v560
  %v562 = vpop.f32.mrf.mxu0
  %563 = vdwg.mxu0
  %564 = vmatpush.bf16.msra.mxu0 0
  %565 = vmatpush.bf16.msra.mxu0 0
  %566 = vmatpush.bf16.msra.mxu0 0
  %567 = vmatpush.bf16.msra.mxu0 0
  %568 = vmatpush.bf16.msra.mxu0 0
  %569 = vmatpush.bf16.msra.mxu0 0
  %570 = vmatpush.bf16.msra.mxu0 %v317
  %571 = vmatpush.bf16.msra.mxu0 %v292
  %572 = vmatmul.bf16.gmra.mxu0 %v380
  %v573 = vpop.f32.mrf.mxu0
  %v574 = vadd.f32 %v90, %v573
  %v575 = vpop.f32.mrf.mxu0
  %576 = vdwg.mxu0
  %577 = vmatpush.bf16.msra.mxu0 0
  %578 = vmatpush.bf16.msra.mxu0 0
  %579 = vmatpush.bf16.msra.mxu0 0
  %580 = vmatpush.bf16.msra.mxu0 0
  %581 = vmatpush.bf16.msra.mxu0 0
  %582 = vmatpush.bf16.msra.mxu0 0
  %583 = vmatpush.bf16.msra.mxu0 %v318
  %584 = vmatpush.bf16.msra.mxu0 %v293
  %585 = vmatmul.bf16.gmra.mxu0 %v380
  %v586 = vpop.f32.mrf.mxu0
  %v587 = vadd.f32 %v91, %v586
  %v588 = vpop.f32.mrf.mxu0
  %589 = vdwg.mxu0
  %590 = vmatpush.bf16.msra.mxu0 0
  %591 = vmatpush.bf16.msra.mxu0 0
  %592 = vmatpush.bf16.msra.mxu0 0
  %593 = vmatpush.bf16.msra.mxu0 0
  %594 = vmatpush.bf16.msra.mxu0 0
  %595 = vmatpush.bf16.msra.mxu0 0
  %596 = vmatpush.bf16.msra.mxu0 %v319
  %597 = vmatpush.bf16.msra.mxu0 %v294
  %598 = vmatmul.bf16.gmra.mxu0 %v380
  %v599 = vpop.f32.mrf.mxu0
  %v600 = vadd.f32 %v92, %v599
  %v601 = vpop.f32.mrf.mxu0
  %602 = vdwg.mxu0
  %603 = vmatpush.bf16.msra.mxu0 0
  %604 = vmatpush.bf16.msra.mxu0 0
  %605 = vmatpush.bf16.msra.mxu0 0
  %606 = vmatpush.bf16.msra.mxu0 0
  %607 = vmatpush.bf16.msra.mxu0 0
  %608 = vmatpush.bf16.msra.mxu0 0
  %609 = vmatpush.bf16.msra.mxu0 %v320
  %610 = vmatpush.bf16.msra.mxu0 %v295
  %611 = vmatmul.bf16.gmra.mxu0 %v380
  %v612 = vpop.f32.mrf.mxu0
  %v613 = vadd.f32 %v93, %v612
  %v614 = vpop.f32.mrf.mxu0
  %615 = vdwg.mxu0
  %616 = vmatpush.bf16.msra.mxu0 0
  %617 = vmatpush.bf16.msra.mxu0 0
  %618 = vmatpush.bf16.msra.mxu0 0
  %619 = vmatpush.bf16.msra.mxu0 0
  %620 = vmatpush.bf16.msra.mxu0 0
  %621 = vmatpush.bf16.msra.mxu0 0
  %622 = vmatpush.bf16.msra.mxu0 %v321
  %623 = vmatpush.bf16.msra.mxu0 %v296
  %624 = vmatmul.bf16.gmra.mxu0 %v380
  %v625 = vpop.f32.mrf.mxu0
  %v626 = vadd.f32 %v94, %v625
  %v627 = vpop.f32.mrf.mxu0
  %628 = vdwg.mxu0
  %629 = vmatpush.bf16.msra.mxu0 0
  %630 = vmatpush.bf16.msra.mxu0 0
  %631 = vmatpush.bf16.msra.mxu0 0
  %632 = vmatpush.bf16.msra.mxu0 0
  %633 = vmatpush.bf16.msra.mxu0 0
  %634 = vmatpush.bf16.msra.mxu0 0
  %635 = vmatpush.bf16.msra.mxu0 %v322
  %636 = vmatpush.bf16.msra.mxu0 %v297
  %637 = vmatmul.bf16.gmra.mxu0 %v380
  %v638 = vpop.f32.mrf.mxu0
  %v639 = vadd.f32 %v95, %v638
  %v640 = vpop.f32.mrf.mxu0
  %641 = vdwg.mxu0
  %642 = vmatpush.bf16.msra.mxu0 0
  %643 = vmatpush.bf16.msra.mxu0 0
  %644 = vmatpush.bf16.msra.mxu0 0
  %645 = vmatpush.bf16.msra.mxu0 0
  %646 = vmatpush.bf16.msra.mxu0 0
  %647 = vmatpush.bf16.msra.mxu0 0
  %648 = vmatpush.bf16.msra.mxu0 %v323
  %649 = vmatpush.bf16.msra.mxu0 %v298
  %650 = vmatmul.bf16.gmra.mxu0 %v380
  %v651 = vpop.f32.mrf.mxu0
  %v652 = vadd.f32 %v96, %v651
  %v653 = vpop.f32.mrf.mxu0
  %654 = vdwg.mxu0
  %655 = vmatpush.bf16.msra.mxu0 0
  %656 = vmatpush.bf16.msra.mxu0 0
  %657 = vmatpush.bf16.msra.mxu0 0
  %658 = vmatpush.bf16.msra.mxu0 0
  %659 = vmatpush.bf16.msra.mxu0 0
  %660 = vmatpush.bf16.msra.mxu0 0
  %661 = vmatpush.bf16.msra.mxu0 %v324
  %662 = vmatpush.bf16.msra.mxu0 %v299
  %663 = vmatmul.bf16.gmra.mxu0 %v380
  %v664 = vpop.f32.mrf.mxu0
  %v665 = vadd.f32 %v97, %v664
  %v666 = vpop.f32.mrf.mxu0
  %667 = vdwg.mxu0
  %668 = vmatpush.bf16.msra.mxu0 0
  %669 = vmatpush.bf16.msra.mxu0 0
  %670 = vmatpush.bf16.msra.mxu0 0
  %671 = vmatpush.bf16.msra.mxu0 0
  %672 = vmatpush.bf16.msra.mxu0 0
  %673 = vmatpush.bf16.msra.mxu0 0
  %674 = vmatpush.bf16.msra.mxu0 %v325
  %675 = vmatpush.bf16.msra.mxu0 %v300
  %676 = vmatmul.bf16.gmra.mxu0 %v380
  %v677 = vpop.f32.mrf.mxu0
  %v678 = vadd.f32 %v98, %v677
  %v679 = vpop.f32.mrf.mxu0
  %680 = vdwg.mxu0
  %681 = vmatpush.bf16.msra.mxu0 0
  %682 = vmatpush.bf16.msra.mxu0 0
  %683 = vmatpush.bf16.msra.mxu0 0
  %684 = vmatpush.bf16.msra.mxu0 0
  %685 = vmatpush.bf16.msra.mxu0 0
  %686 = vmatpush.bf16.msra.mxu0 0
  %687 = vmatpush.bf16.msra.mxu0 %v326
  %688 = vmatpush.bf16.msra.mxu0 %v301
  %689 = vmatmul.bf16.gmra.mxu0 %v380
  %v690 = vpop.f32.mrf.mxu0
  %v691 = vadd.f32 %v99, %v690
  %v692 = vpop.f32.mrf.mxu0
  %693 = vdwg.mxu0
  %694 = vmatpush.bf16.msra.mxu0 0
  %695 = vmatpush.bf16.msra.mxu0 0
  %696 = vmatpush.bf16.msra.mxu0 0
  %697 = vmatpush.bf16.msra.mxu0 0
  %698 = vmatpush.bf16.msra.mxu0 0
  %699 = vmatpush.bf16.msra.mxu0 0
  %700 = vmatpush.bf16.msra.mxu0 %v327
  %701 = vmatpush.bf16.msra.mxu0 %v302
  %702 = vmatmul.bf16.gmra.mxu0 %v380
  %v703 = vpop.f32.mrf.mxu0
  %v704 = vadd.f32 %v100, %v703
  %v705 = vpop.f32.mrf.mxu0
  %706 = vdwg.mxu0
  %v707 = vmax.f32 %v392, 0.0
  %v708 = vmax.f32 %v405, 0.0
  %v709 = vmax.f32 %v418, 0.0
  %v710 = vmax.f32 %v431, 0.0
  %v711 = vmax.f32 %v444, 0.0
  %v712 = vmax.f32 %v457, 0.0
  %v713 = vmax.f32 %v470, 0.0
  %v714 = vmax.f32 %v483, 0.0
  %v715 = vmax.f32 %v496, 0.0
  %v716 = vmax.f32 %v509, 0.0
  %v717 = vmax.f32 %v522, 0.0
  %v718 = vmax.f32 %v535, 0.0
  %v719 = vmax.f32 %v548, 0.0
  %v720 = vmax.f32 %v561, 0.0
  %v721 = vmax.f32 %v574, 0.0
  %v722 = vmax.f32 %v587, 0.0
  %v723 = vmax.f32 %v600, 0.0
  %v724 = vmax.f32 %v613, 0.0
  %v725 = vmax.f32 %v626, 0.0
  %v726 = vmax.f32 %v639, 0.0
  %v727 = vmax.f32 %v652, 0.0
  %v728 = vmax.f32 %v665, 0.0
  %v729 = vmax.f32 %v678, 0.0
  %v730 = vmax.f32 %v691, 0.0
  %v731 = vmax.f32 %v704, 0.0
  %v732 = vpack.c.bf16 %v708, %v707
  %v733 = vpack.c.bf16 %v710, %v709
  %v734 = vpack.c.bf16 %v712, %v711
  %v735 = vpack.c.bf16 %v714, %v713
  %v736 = vpack.c.bf16 %v716, %v715
  %v737 = vpack.c.bf16 %v718, %v717
  %v738 = vpack.c.bf16 %v720, %v719
  %v739 = vpack.c.bf16 %v722, %v721
  %v740 = vpack.c.bf16 %v724, %v723
  %v741 = vpack.c.bf16 %v726, %v725
  %v742 = vpack.c.bf16 %v728, %v727
  %v743 = vpack.c.bf16 %v730, %v729
  %v744 = vpack.c.bf16 %v731, %v731
  %v758 = vrot.slane %v732, 3
  %v759 = vrot.slane %v733, 6
  %v760 = vrot.slane %v733, 1
  %v761 = vrot.slane %v734, 4
  %v762 = vrot.slane %v734, 7
  %v763 = vrot.slane %v735, 2
  %v764 = vrot.slane %v735, 5
  %v765 = vrot.slane %v736, 3
  %v766 = vrot.slane %v737, 6
  %v767 = vrot.slane %v737, 1
  %v768 = vrot.slane %v738, 4
  %v769 = vrot.slane %v738, 7
  %v770 = vrot.slane %v739, 2
  %v771 = vrot.slane %v739, 5
  %v772 = vrot.slane %v740, 3
  %v773 = vrot.slane %v741, 6
  %v774 = vrot.slane %v741, 1
  %v775 = vrot.slane %v742, 4
  %v776 = vrot.slane %v742, 7
  %v777 = vrot.slane %v743, 2
  %v778 = vrot.slane %v743, 5
  %v779 = vrot.slane %v744, 3
  %vm780 = vcmask 1040384
  %v783 = vsel %vm780, %v732, %v758
  %vm784 = vcmask 1042434
  %v787 = vsel %vm784, %v759, %v760
  %vm788 = vcmask 1041408
  %v789 = vsel %vm788, %v783, %v787
  %vm790 = vcmask 1044484
  %v793 = vsel %vm790, %v761, %v762
  %vm794 = vcmask 1046534
  %v797 = vsel %vm794, %v763, %v764
  %vm798 = vcmask 1045508
  %v799 = vsel %vm798, %v793, %v797
  %vm800 = vcmask 1043456
  %v801 = vsel %vm800, %v789, %v799
  %v804 = vsel %vm780, %v736, %v765
  %v807 = vsel %vm784, %v766, %v767
  %v808 = vsel %vm788, %v804, %v807
  %v811 = vsel %vm790, %v768, %v769
  %v814 = vsel %vm794, %v770, %v771
  %v815 = vsel %vm798, %v811, %v814
  %v816 = vsel %vm800, %v808, %v815
  %v819 = vsel %vm780, %v740, %v772
  %v822 = vsel %vm784, %v773, %v774
  %v823 = vsel %vm788, %v819, %v822
  %v826 = vsel %vm790, %v775, %v776
  %v829 = vsel %vm794, %v777, %v778
  %v830 = vsel %vm798, %v826, %v829
  %v831 = vsel %vm800, %v823, %v830
  %v834 = vsel %vm780, %v744, %v779
  %839 = vst [vmem:[%s3] sm:$0xff] %v801
  %840 = vst [vmem:[%s3 + $0x8] sm:$0xff] %v816
  %841 = vst [vmem:[%s3 + $0x10] sm:$0xff] %v831
  %vm842 = vcmask 516096
  %843 = vst.msk [vmem:[%s3 + $0x18] sm:$0x1] %vm842, %v834
  // Predicated region
  $region14: #{generator_forward.2} parent=0 // pred_check
    _
  $region15: #{generator_forward.2} parent=0 // pred_check_branch
    %845 = sbr.rel (0) target = $region17
  $region16: #{generator_forward.2} parent=0 // pred_region
    _
  $region17: #{generator_forward.2} parent=0 // pred_fallthru
    _
  // Predicated region
  $region18: #{generator_forward.2} parent=0 // pred_check
    _
  $region19: #{generator_forward.2} parent=0 // pred_check_branch
    %847 = sbr.rel (0) target = $region21
  $region20: #{generator_forward.2} parent=0 // pred_region
    _
  $region21: #{generator_forward.2} parent=0 // pred_fallthru
    _

// kernel: generator_forward.3
$region0: #{generator_forward.3}
  #allocation0 [shape = 'u32[]', space=smem, size = 0x4, offset = 0x4, fixed_abs, tag = 'smem constant byte address 0x4 - core index']
  #allocation1 [shape = 'u32[72,128]{1,0:T(1,128)}', space=vmem, size = 0x9000, scoped, tag = 'internal scratch']
  %s0 = inlined_call_operand.vmem [shape: bf16[2,64,49], index: 0, kind: input, shape index: {}]
  %s1 = inlined_call_operand.vmem [shape: bf16[49,307], index: 1, kind: input, shape index: {}]
  %s2 = inlined_call_operand.vmem [shape: bf16[256,1269], index: 2, kind: input, shape index: {}]
  %s3 = inlined_call_operand.vmem [shape: bf16[4,32,256], index: 3, kind: input, shape index: {}]
  %s4 = inlined_call_operand.vmem [shape: f32[32,1], index: 4, kind: input, shape index: {}]
  %s5 = inlined_call_operand.vmem [shape: bf16[4,16,128], index: 5, kind: input, shape index: {}]
  %s6 = inlined_call_operand.vmem [shape: f32[16,1], index: 6, kind: input, shape index: {}]
  %s7 = inlined_call_operand.vmem [shape: bf16[7,8,112], index: 7, kind: input, shape index: {}]
  %s8 = inlined_call_operand.vmem [shape: f32[8,1], index: 8, kind: input, shape index: {}]
  %s9 = inlined_call_operand.vmem [shape: f32[2,8,952], index: 9, kind: output, shape index: {}]
  %s10 = sld [smem:[#allocation0]]
  $region69: #{generator_forward.3} parent=0
    _
  %s12 = ssub.s32 1, %s10
  %s13 = scalar_select 0, %s12, %s10
  loop: start=0, step=1, limit=4
  $region2: #{generator_forward.3} parent=0 // loop_pre_header
    _
  $region3: #{generator_forward.3} parent=0 // loop_header
    %s15 = sphi 0, %s19
    %p16 = scmp.ge.s32.totalorder %s15, 4
    %s25 = sphi 0, %s27
    %s28 = sphi 0, %s25
    %s29 = sphi 0, %s28
    %s45 = sphi 0, %s29
    %s49 = sphi 0, %s49
    %s51 = sphi 0, %s49
    %s52 = sphi 0, %s51
    %s66 = sphi 0, %s52
    %s70 = sphi 0, %s70
    %s72 = sphi 0, %s70
    %s73 = sphi 0, %s72
    %s87 = sphi 0, %s73
    %s91 = sphi 0, %s91
    %s93 = sphi 0, %s91
    %s94 = sphi 0, %s93
    %s108 = sphi 0, %s94
    %s112 = sphi 0, %s112
    %s114 = sphi 0, %s112
    %s115 = sphi 0, %s114
    %s129 = sphi 0, %s115
    %s133 = sphi 0, %s133
    %s135 = sphi 0, %s133
    %s136 = sphi 0, %s135
    %s150 = sphi 0, %s136
    %s154 = sphi 0, %s154
    %s156 = sphi 0, %s154
    %s157 = sphi 0, %s156
    %s171 = sphi 0, %s157
    %s175 = sphi 0, %s175
    %s177 = sphi 0, %s175
    %s178 = sphi 0, %s177
    %s192 = sphi 0, %s178
    %s196 = sphi 0, %s196
    %s198 = sphi 0, %s196
    %s199 = sphi 0, %s198
    %s213 = sphi 0, %s199
    %s219 = sphi 0, %s221
    %s222 = sphi 0, %s219
    %s223 = sphi 0, %s222
    %s239 = sphi 0, %s223
  $region4: #{generator_forward.3} parent=0 // loop_header_branch
    %18 = sbr.rel (%p16) target = $region8
  $region5: #{generator_forward.3} parent=0 // loop_body
    %s20 = ssub.s32 %s15, 1
    %s21 = ssub.s32 %s15, 2
    %s22 = sadd.s32 %s15, 1
    %s23 = ssub.s32 %s15, %s22
    %p24 = scmp.eq.s32.totalorder %s23, 0
    %s26 = sadd.s32 %s25, 1
    %s27 = scalar_select %p24, %s25, %s26
    %p30 = pneg %p24
    %p31 = scmp.eq.s32.totalorder %s15, 1
    %p32 = por %p30, %p31
    %p33 = scmp.ne.s32.totalorder %s25, %s28
    %p34 = scmp.eq.s32.totalorder %s15, 0
    %p35 = por %p33, %p34
    %p36 = scmp.ne.s32.totalorder %s25, %s28
    %p37 = scmp.eq.s32.totalorder %s20, 1
    %p38 = por %p36, %p37
    %p39 = scmp.ne.s32.totalorder %s28, %s29
    %p40 = scmp.eq.s32.totalorder %s20, 0
    %p41 = por %p39, %p40
    %p42 = scmp.ne.s32.totalorder %s28, %s29
    %p43 = scmp.eq.s32.totalorder %s21, 1
    %p44 = por %p42, %p43
    %p46 = scmp.ne.s32.totalorder %s29, %s45
    %p47 = scmp.eq.s32.totalorder %s21, 0
    %p48 = por %p46, %p47
    %s50 = sadd.s32 %s49, 1
    %p53 = scmp.eq.s32.totalorder %s15, 1
    %p54 = scmp.ne.s32.totalorder %s49, %s51
    %p55 = scmp.eq.s32.totalorder %s15, 0
    %p56 = por %p54, %p55
    %p57 = scmp.ne.s32.totalorder %s49, %s51
    %p58 = scmp.eq.s32.totalorder %s20, 1
    %p59 = por %p57, %p58
    %p60 = scmp.ne.s32.totalorder %s51, %s52
    %p61 = scmp.eq.s32.totalorder %s20, 0
    %p62 = por %p60, %p61
    %p63 = scmp.ne.s32.totalorder %s51, %s52
    %p64 = scmp.eq.s32.totalorder %s21, 1
    %p65 = por %p63, %p64
    %p67 = scmp.ne.s32.totalorder %s52, %s66
    %p68 = scmp.eq.s32.totalorder %s21, 0
    %p69 = por %p67, %p68
    %s71 = sadd.s32 %s70, 1
    %p74 = scmp.eq.s32.totalorder %s15, 1
    %p75 = scmp.ne.s32.totalorder %s70, %s72
    %p76 = scmp.eq.s32.totalorder %s15, 0
    %p77 = por %p75, %p76
    %p78 = scmp.ne.s32.totalorder %s70, %s72
    %p79 = scmp.eq.s32.totalorder %s20, 1
    %p80 = por %p78, %p79
    %p81 = scmp.ne.s32.totalorder %s72, %s73
    %p82 = scmp.eq.s32.totalorder %s20, 0
    %p83 = por %p81, %p82
    %p84 = scmp.ne.s32.totalorder %s72, %s73
    %p85 = scmp.eq.s32.totalorder %s21, 1
    %p86 = por %p84, %p85
    %p88 = scmp.ne.s32.totalorder %s73, %s87
    %p89 = scmp.eq.s32.totalorder %s21, 0
    %p90 = por %p88, %p89
    %s92 = sadd.s32 %s91, 1
    %p95 = scmp.eq.s32.totalorder %s15, 1
    %p96 = scmp.ne.s32.totalorder %s91, %s93
    %p97 = scmp.eq.s32.totalorder %s15, 0
    %p98 = por %p96, %p97
    %p99 = scmp.ne.s32.totalorder %s91, %s93
    %p100 = scmp.eq.s32.totalorder %s20, 1
    %p101 = por %p99, %p100
    %p102 = scmp.ne.s32.totalorder %s93, %s94
    %p103 = scmp.eq.s32.totalorder %s20, 0
    %p104 = por %p102, %p103
    %p105 = scmp.ne.s32.totalorder %s93, %s94
    %p106 = scmp.eq.s32.totalorder %s21, 1
    %p107 = por %p105, %p106
    %p109 = scmp.ne.s32.totalorder %s94, %s108
    %p110 = scmp.eq.s32.totalorder %s21, 0
    %p111 = por %p109, %p110
    %s113 = sadd.s32 %s112, 1
    %p116 = scmp.eq.s32.totalorder %s15, 1
    %p117 = scmp.ne.s32.totalorder %s112, %s114
    %p118 = scmp.eq.s32.totalorder %s15, 0
    %p119 = por %p117, %p118
    %p120 = scmp.ne.s32.totalorder %s112, %s114
    %p121 = scmp.eq.s32.totalorder %s20, 1
    %p122 = por %p120, %p121
    %p123 = scmp.ne.s32.totalorder %s114, %s115
    %p124 = scmp.eq.s32.totalorder %s20, 0
    %p125 = por %p123, %p124
    %p126 = scmp.ne.s32.totalorder %s114, %s115
    %p127 = scmp.eq.s32.totalorder %s21, 1
    %p128 = por %p126, %p127
    %p130 = scmp.ne.s32.totalorder %s115, %s129
    %p131 = scmp.eq.s32.totalorder %s21, 0
    %p132 = por %p130, %p131
    %s134 = sadd.s32 %s133, 1
    %p137 = scmp.eq.s32.totalorder %s15, 1
    %p138 = scmp.ne.s32.totalorder %s133, %s135
    %p139 = scmp.eq.s32.totalorder %s15, 0
    %p140 = por %p138, %p139
    %p141 = scmp.ne.s32.totalorder %s133, %s135
    %p142 = scmp.eq.s32.totalorder %s20, 1
    %p143 = por %p141, %p142
    %p144 = scmp.ne.s32.totalorder %s135, %s136
    %p145 = scmp.eq.s32.totalorder %s20, 0
    %p146 = por %p144, %p145
    %p147 = scmp.ne.s32.totalorder %s135, %s136
    %p148 = scmp.eq.s32.totalorder %s21, 1
    %p149 = por %p147, %p148
    %p151 = scmp.ne.s32.totalorder %s136, %s150
    %p152 = scmp.eq.s32.totalorder %s21, 0
    %p153 = por %p151, %p152
    %s155 = sadd.s32 %s154, 1
    %p158 = scmp.eq.s32.totalorder %s15, 1
    %p159 = scmp.ne.s32.totalorder %s154, %s156
    %p160 = scmp.eq.s32.totalorder %s15, 0
    %p161 = por %p159, %p160
    %p162 = scmp.ne.s32.totalorder %s154, %s156
    %p163 = scmp.eq.s32.totalorder %s20, 1
    %p164 = por %p162, %p163
    %p165 = scmp.ne.s32.totalorder %s156, %s157
    %p166 = scmp.eq.s32.totalorder %s20, 0
    %p167 = por %p165, %p166
    %p168 = scmp.ne.s32.totalorder %s156, %s157
    %p169 = scmp.eq.s32.totalorder %s21, 1
    %p170 = por %p168, %p169
    %p172 = scmp.ne.s32.totalorder %s157, %s171
    %p173 = scmp.eq.s32.totalorder %s21, 0
    %p174 = por %p172, %p173
    %s176 = sadd.s32 %s175, 1
    %p179 = scmp.eq.s32.totalorder %s15, 1
    %p180 = scmp.ne.s32.totalorder %s175, %s177
    %p181 = scmp.eq.s32.totalorder %s15, 0
    %p182 = por %p180, %p181
    %p183 = scmp.ne.s32.totalorder %s175, %s177
    %p184 = scmp.eq.s32.totalorder %s20, 1
    %p185 = por %p183, %p184
    %p186 = scmp.ne.s32.totalorder %s177, %s178
    %p187 = scmp.eq.s32.totalorder %s20, 0
    %p188 = por %p186, %p187
    %p189 = scmp.ne.s32.totalorder %s177, %s178
    %p190 = scmp.eq.s32.totalorder %s21, 1
    %p191 = por %p189, %p190
    %p193 = scmp.ne.s32.totalorder %s178, %s192
    %p194 = scmp.eq.s32.totalorder %s21, 0
    %p195 = por %p193, %p194
    %s197 = sadd.s32 %s196, 1
    %p200 = scmp.eq.s32.totalorder %s15, 1
    %p201 = scmp.ne.s32.totalorder %s196, %s198
    %p202 = scmp.eq.s32.totalorder %s15, 0
    %p203 = por %p201, %p202
    %p204 = scmp.ne.s32.totalorder %s196, %s198
    %p205 = scmp.eq.s32.totalorder %s20, 1
    %p206 = por %p204, %p205
    %p207 = scmp.ne.s32.totalorder %s198, %s199
    %p208 = scmp.eq.s32.totalorder %s20, 0
    %p209 = por %p207, %p208
    %p210 = scmp.ne.s32.totalorder %s198, %s199
    %p211 = scmp.eq.s32.totalorder %s21, 1
    %p212 = por %p210, %p211
    %p214 = scmp.ne.s32.totalorder %s199, %s213
    %p215 = scmp.eq.s32.totalorder %s21, 0
    %p216 = por %p214, %p215
    %s217 = ssub.s32 %s15, %s22
    %p218 = scmp.eq.s32.totalorder %s217, 0
    %s220 = sadd.s32 %s219, 1
    %s221 = scalar_select %p218, %s219, %s220
    %p224 = pneg %p218
    %p225 = scmp.eq.s32.totalorder %s15, 1
    %p226 = por %p224, %p225
    %p227 = scmp.ne.s32.totalorder %s219, %s222
    %p228 = scmp.eq.s32.totalorder %s15, 0
    %p229 = por %p227, %p228
    %p230 = scmp.ne.s32.totalorder %s219, %s222
    %p231 = scmp.eq.s32.totalorder %s20, 1
    %p232 = por %p230, %p231
    %p233 = scmp.ne.s32.totalorder %s222, %s223
    %p234 = scmp.eq.s32.totalorder %s20, 0
    %p235 = por %p233, %p234
    %p236 = scmp.ne.s32.totalorder %s222, %s223
    %p237 = scmp.eq.s32.totalorder %s21, 1
    %p238 = por %p236, %p237
    %p240 = scmp.ne.s32.totalorder %s223, %s239
    %p241 = scmp.eq.s32.totalorder %s21, 0
    %p242 = por %p240, %p241
    %p243 = scmp.le.s32.totalorder 1, %s15
    %p244 = scmp.lt.s32.totalorder %s15, 3
    %p245 = pnand %p243, %p244
    %p246 = pneg %p245
    // Predicated region
    $region9: #{generator_forward.3} parent=5 // pred_check
      _
    $region10: #{generator_forward.3} parent=5 // pred_check_branch
      %248 = sbr.rel (%p245) target = $region12
    $region11: #{generator_forward.3} parent=5 // pred_region
      %s249 = ssub.s32 %s15, 1
      // Predicated region
      $region13: #{generator_forward.3} parent=11 // pred_check
        %p250 = pneg %p62
      $region14: #{generator_forward.3} parent=11 // pred_check_branch
        %252 = sbr.rel (%p250) target = $region16
      $region15: #{generator_forward.3} parent=11 // pred_region
        _
      $region16: #{generator_forward.3} parent=11 // pred_fallthru
        _
      // Predicated region
      $region17: #{generator_forward.3} parent=11 // pred_check
        %p253 = pneg %p83
      $region18: #{generator_forward.3} parent=11 // pred_check_branch
        %255 = sbr.rel (%p253) target = $region20
      $region19: #{generator_forward.3} parent=11 // pred_region
        _
      $region20: #{generator_forward.3} parent=11 // pred_fallthru
        _
      // Predicated region
      $region21: #{generator_forward.3} parent=11 // pred_check
        %p256 = pneg %p104
      $region22: #{generator_forward.3} parent=11 // pred_check_branch
        %258 = sbr.rel (%p256) target = $region24
      $region23: #{generator_forward.3} parent=11 // pred_region
        _
      $region24: #{generator_forward.3} parent=11 // pred_fallthru
        _
      // Predicated region
      $region25: #{generator_forward.3} parent=11 // pred_check
        %p259 = pneg %p125
      $region26: #{generator_forward.3} parent=11 // pred_check_branch
        %261 = sbr.rel (%p259) target = $region28
      $region27: #{generator_forward.3} parent=11 // pred_region
        _
      $region28: #{generator_forward.3} parent=11 // pred_fallthru
        _
      // Predicated region
      $region29: #{generator_forward.3} parent=11 // pred_check
        %p262 = pneg %p146
      $region30: #{generator_forward.3} parent=11 // pred_check_branch
        %264 = sbr.rel (%p262) target = $region32
      $region31: #{generator_forward.3} parent=11 // pred_region
        _
      $region32: #{generator_forward.3} parent=11 // pred_fallthru
        _
      // Predicated region
      $region33: #{generator_forward.3} parent=11 // pred_check
        %p265 = pneg %p167
      $region34: #{generator_forward.3} parent=11 // pred_check_branch
        %267 = sbr.rel (%p265) target = $region36
      $region35: #{generator_forward.3} parent=11 // pred_region
        _
      $region36: #{generator_forward.3} parent=11 // pred_fallthru
        _
      // Predicated region
      $region37: #{generator_forward.3} parent=11 // pred_check
        %p268 = pneg %p188
      $region38: #{generator_forward.3} parent=11 // pred_check_branch
        %270 = sbr.rel (%p268) target = $region40
      $region39: #{generator_forward.3} parent=11 // pred_region
        _
      $region40: #{generator_forward.3} parent=11 // pred_fallthru
        _
      // Predicated region
      $region41: #{generator_forward.3} parent=11 // pred_check
        %p271 = pneg %p209
      $region42: #{generator_forward.3} parent=11 // pred_check_branch
        %273 = sbr.rel (%p271) target = $region44
      $region43: #{generator_forward.3} parent=11 // pred_region
        _
      $region44: #{generator_forward.3} parent=11 // pred_fallthru
        _
    $region12: #{generator_forward.3} parent=5 // pred_fallthru
      _
    %p274 = scmp.lt.s32.totalorder %s15, 2
    // Predicated region
    $region45: #{generator_forward.3} parent=5 // pred_check
      %p275 = pneg %p274
    $region46: #{generator_forward.3} parent=5 // pred_check_branch
      %277 = sbr.rel (%p275) target = $region48
    $region47: #{generator_forward.3} parent=5 // pred_region
      // Predicated region
      $region49: #{generator_forward.3} parent=47 // pred_check
        %p278 = pneg %p35
      $region50: #{generator_forward.3} parent=47 // pred_check_branch
        %280 = sbr.rel (%p278) target = $region52
      $region51: #{generator_forward.3} parent=47 // pred_region
        %p281 = scmp.lt.s32.totalorder %s15, 1
        %s282 = scalar_select %p281, %s15, 1
        %s283 = smul.addr %s282, 8
        %s284 = smul.addr %s283, 4
        %s285 = scalar_lea.vmem %s0, %s284
      $region52: #{generator_forward.3} parent=47 // pred_fallthru
        _
    $region48: #{generator_forward.3} parent=5 // pred_fallthru
      _
    %p286 = scmp.le.s32.totalorder 1, %s15
    %p287 = scmp.lt.s32.totalorder %s15, 3
    %p288 = pnand %p286, %p287
    %p289 = pneg %p288
    // Predicated region
    $region53: #{generator_forward.3} parent=5 // pred_check
      _
    $region54: #{generator_forward.3} parent=5 // pred_check_branch
      %291 = sbr.rel (%p288) target = $region56
    $region55: #{generator_forward.3} parent=5 // pred_region
      %s292 = ssub.s32 %s15, 1
      %p293 = scmp.lt.s32.totalorder %s20, 1
      %s294 = scalar_select %p293, %s20, 1
      %s295 = smul.addr %s294, 8
      %s296 = smul.addr %s295, 4
      %s297 = scalar_lea.vmem %s0, %s296
      %p298 = pneg %p41
      %p299 = pneg %p38
      %p300 = pneg %p62
      %p301 = pneg %p59
      %p302 = pneg %p83
      %p303 = pneg %p80
      %p304 = pneg %p104
      %p305 = pneg %p101
      %p306 = pneg %p125
      %p307 = pneg %p122
      %p308 = pneg %p146
      %p309 = pneg %p143
      %p310 = pneg %p167
      %p311 = pneg %p164
      %p312 = pneg %p188
      %p313 = pneg %p185
      %p314 = pneg %p209
      %p315 = pneg %p206
      %p316 = pneg %p235
      %p317 = pneg %p232
      %p318 = scmp.lt.s32.totalorder %s20, 1
      %s319 = scalar_select %p318, %s20, 1
      %s320 = smul.addr %s319, 8
      %s321 = smul.addr %s320, 8
      %s322 = scalar_lea.vmem %s9, %s321
      %p323 = scmp.lt.s32.totalorder %s20, 1
      %s324 = scalar_select %p323, %s20, 1
      %s325 = smul.addr %s324, 8
      %s326 = smul.addr %s325, 4
      %s327 = scalar_lea.vmem %s0, %s326
      %p328 = scmp.lt.s32.totalorder %s20, 1
      %s329 = scalar_select %p328, %s20, 1
      %s330 = smul.addr %s329, 8
      %s331 = smul.addr %s330, 8
      %s332 = scalar_lea.vmem %s9, %s331
      %v334 = vld [vmem:[%s327] sm:$0xf]
      %v335 = vld [vmem:[%s327 + $0x4] sm:$0xf]
      %v336 = vld [vmem:[%s327 + $0x8] sm:$0xf]
      %v337 = vld [vmem:[%s327 + $0xc] sm:$0xf]
      %v338 = vld [vmem:[%s327 + $0x10] sm:$0xf]
      %v339 = vld [vmem:[%s327 + $0x14] sm:$0xf]
      %v340 = vld [vmem:[%s327 + $0x18] sm:$0xf]
      %v341 = vld [vmem:[%s327 + $0x1c] sm:$0xf]
      %v342 = vld [vmem:[%s1] sm:$0xff]
      %v343 = vld [vmem:[%s1 + $0x8] sm:$0xf]
      %v344 = vld [vmem:[%s1 + $0xc] sm:$0xff]
      %v345 = vld [vmem:[%s1 + $0x14] sm:$0xf]
      %v346 = vld [vmem:[%s1 + $0x18] sm:$0xff]
      %v347 = vld [vmem:[%s1 + $0x20] sm:$0xf]
      %v348 = vld [vmem:[%s1 + $0x24] sm:$0xff]
      %v349 = vld [vmem:[%s1 + $0x2c] sm:$0xf]
      %v350 = vld [vmem:[%s1 + $0x30] sm:$0xff]
      %v351 = vld [vmem:[%s1 + $0x38] sm:$0xf]
      %v352 = vld [vmem:[%s1 + $0x3c] sm:$0xff]
      %v353 = vld [vmem:[%s1 + $0x44] sm:$0xf]
      %v354 = vld [vmem:[%s1 + $0x48] sm:$0x11]
      %v355 = vld [vmem:[%s1 + $0x50] sm:$0x1]
      %v364 = vunpack.c.l.b16 %v334
      %v365 = vunpack.c.l.b16 %v335
      %v366 = vunpack.c.l.b16 %v336
      %v367 = vunpack.c.l.b16 %v337
      %v368 = vunpack.c.l.b16 %v338
      %v369 = vunpack.c.l.b16 %v339
      %v370 = vunpack.c.l.b16 %v340
      %v371 = vunpack.c.l.b16 %v341
      %v372 = vpack.c.b16 %v365, %v364
      %v373 = vpack.c.b16 %v367, %v366
      %v374 = vpack.c.b16 %v369, %v368
      %v375 = vpack.c.b16 %v371, %v370
      %v390 = vunpack.c.l.b16 %v342
      %v391 = vunpack.c.h.b16 %v342
      %v392 = vunpack.c.l.b16 %v343
      %v393 = vunpack.c.l.b16 %v344
      %v394 = vunpack.c.h.b16 %v344
      %v395 = vunpack.c.l.b16 %v345
      %v396 = vunpack.c.l.b16 %v346
      %v397 = vunpack.c.h.b16 %v346
      %v398 = vunpack.c.l.b16 %v347
      %v399 = vunpack.c.l.b16 %v348
      %v400 = vunpack.c.h.b16 %v348
      %v401 = vunpack.c.l.b16 %v349
      %v402 = vunpack.c.l.b16 %v350
      %v403 = vunpack.c.h.b16 %v350
      %v404 = vunpack.c.l.b16 %v351
      %v405 = vunpack.c.l.b16 %v352
      %v406 = vunpack.c.h.b16 %v352
      %v407 = vunpack.c.l.b16 %v353
      %v408 = vunpack.c.l.b16 %v354
      %v409 = vunpack.c.h.b16 %v354
      %v410 = vunpack.c.l.b16 %v355
      %v411 = vpack.c.b16 %v393, %v390
      %v412 = vpack.c.b16 %v394, %v391
      %v413 = vpack.c.b16 %v395, %v392
      %v414 = vpack.c.b16 %v399, %v396
      %v415 = vpack.c.b16 %v400, %v397
      %v416 = vpack.c.b16 %v401, %v398
      %v417 = vpack.c.b16 %v405, %v402
      %v418 = vpack.c.b16 %v406, %v403
      %v419 = vpack.c.b16 %v407, %v404
      %v420 = vpack.c.b16 %v408, %v408
      %v421 = vpack.c.b16 %v409, %v409
      %v422 = vpack.c.b16 %v410, %v410
      %vm432 = vcmask 400384
      %v434 = vsel %vm432, %v372, 0
      %v437 = vsel %vm432, %v373, 0
      %v440 = vsel %vm432, %v374, 0
      %v443 = vsel %vm432, %v375, 0
      %vm445 = vcmask 1040384
      %v446 = vsel 0, 4294967295, 65535
      %v447 = vsel %vm445, %v446, 0
      %v449 = vand.u32 %v420, %v447
      %v452 = vand.u32 %v421, %v447
      %v455 = vand.u32 %v422, %v447
      %457 = vmatpush.bf16.msra.mxu0 0
      %458 = vmatpush.bf16.msra.mxu0 0
      %459 = vmatpush.bf16.msra.mxu0 0
      %460 = vmatpush.bf16.msra.mxu0 0
      %461 = vmatpush.bf16.msra.mxu0 %v449
      %462 = vmatpush.bf16.msra.mxu0 %v417
      %463 = vmatpush.bf16.msra.mxu0 %v414
      %464 = vmatpush.bf16.msra.mxu0 %v411
      %465 = vmatmul.bf16.gmra.mxu0 %v434
      %v466 = vpop.f32.mrf.mxu0
      %v467 = vadd.f32 0.0, %v466
      %v468 = vpop.f32.mrf.mxu0
      %v469 = vadd.f32 0.0, %v468
      %470 = vmatmul.bf16.gmra.mxu0 %v437
      %v471 = vpop.f32.mrf.mxu0
      %v472 = vadd.f32 0.0, %v471
      %v473 = vpop.f32.mrf.mxu0
      %v474 = vadd.f32 0.0, %v473
      %475 = vmatmul.bf16.gmra.mxu0 %v440
      %v476 = vpop.f32.mrf.mxu0
      %v477 = vadd.f32 0.0, %v476
      %v478 = vpop.f32.mrf.mxu0
      %v479 = vadd.f32 0.0, %v478
      %480 = vmatmul.bf16.gmra.mxu0 %v443
      %v481 = vpop.f32.mrf.mxu0
      %v482 = vadd.f32 0.0, %v481
      %v483 = vpop.f32.mrf.mxu0
      %v484 = vadd.f32 0.0, %v483
      %485 = vdwg.mxu0
      %486 = vmatpush.bf16.msra.mxu0 0
      %487 = vmatpush.bf16.msra.mxu0 0
      %488 = vmatpush.bf16.msra.mxu0 0
      %489 = vmatpush.bf16.msra.mxu0 0
      %490 = vmatpush.bf16.msra.mxu0 %v452
      %491 = vmatpush.bf16.msra.mxu0 %v418
      %492 = vmatpush.bf16.msra.mxu0 %v415
      %493 = vmatpush.bf16.msra.mxu0 %v412
      %494 = vmatmul.bf16.gmra.mxu0 %v434
      %v495 = vpop.f32.mrf.mxu0
      %v496 = vadd.f32 0.0, %v495
      %v497 = vpop.f32.mrf.mxu0
      %v498 = vadd.f32 0.0, %v497
      %499 = vmatmul.bf16.gmra.mxu0 %v437
      %v500 = vpop.f32.mrf.mxu0
      %v501 = vadd.f32 0.0, %v500
      %v502 = vpop.f32.mrf.mxu0
      %v503 = vadd.f32 0.0, %v502
      %504 = vmatmul.bf16.gmra.mxu0 %v440
      %v505 = vpop.f32.mrf.mxu0
      %v506 = vadd.f32 0.0, %v505
      %v507 = vpop.f32.mrf.mxu0
      %v508 = vadd.f32 0.0, %v507
      %509 = vmatmul.bf16.gmra.mxu0 %v443
      %v510 = vpop.f32.mrf.mxu0
      %v511 = vadd.f32 0.0, %v510
      %v512 = vpop.f32.mrf.mxu0
      %v513 = vadd.f32 0.0, %v512
      %514 = vdwg.mxu0
      %515 = vmatpush.bf16.msra.mxu0 0
      %516 = vmatpush.bf16.msra.mxu0 0
      %517 = vmatpush.bf16.msra.mxu0 0
      %518 = vmatpush.bf16.msra.mxu0 0
      %519 = vmatpush.bf16.msra.mxu0 %v455
      %520 = vmatpush.bf16.msra.mxu0 %v419
      %521 = vmatpush.bf16.msra.mxu0 %v416
      %522 = vmatpush.bf16.msra.mxu0 %v413
      %523 = vmatmul.bf16.gmra.mxu0 %v434
      %v524 = vpop.f32.mrf.mxu0
      %v525 = vadd.f32 0.0, %v524
      %v526 = vpop.f32.mrf.mxu0
      %v527 = vadd.f32 0.0, %v526
      %528 = vmatmul.bf16.gmra.mxu0 %v437
      %v529 = vpop.f32.mrf.mxu0
      %v530 = vadd.f32 0.0, %v529
      %v531 = vpop.f32.mrf.mxu0
      %v532 = vadd.f32 0.0, %v531
      %533 = vmatmul.bf16.gmra.mxu0 %v440
      %v534 = vpop.f32.mrf.mxu0
      %v535 = vadd.f32 0.0, %v534
      %v536 = vpop.f32.mrf.mxu0
      %v537 = vadd.f32 0.0, %v536
      %538 = vmatmul.bf16.gmra.mxu0 %v443
      %v539 = vpop.f32.mrf.mxu0
      %v540 = vadd.f32 0.0, %v539
      %v541 = vpop.f32.mrf.mxu0
      %v542 = vadd.f32 0.0, %v541
      %543 = vdwg.mxu0
      %v544 = vpack.c.bf16 %v496, %v467
      %v545 = vpack.c.bf16 %v525, %v525
      %v546 = vpack.c.bf16 %v498, %v469
      %v547 = vpack.c.bf16 %v527, %v527
      %v548 = vpack.c.bf16 %v501, %v472
      %v549 = vpack.c.bf16 %v530, %v530
      %v550 = vpack.c.bf16 %v503, %v474
      %v551 = vpack.c.bf16 %v532, %v532
      %v552 = vpack.c.bf16 %v506, %v477
      %v553 = vpack.c.bf16 %v535, %v535
      %v554 = vpack.c.bf16 %v508, %v479
      %v555 = vpack.c.bf16 %v537, %v537
      %v556 = vpack.c.bf16 %v511, %v482
      %v557 = vpack.c.bf16 %v540, %v540
      %v558 = vpack.c.bf16 %v513, %v484
      %v559 = vpack.c.bf16 %v542, %v542
      %v576 = vunpack.c.l.b16 %v544
      %v577 = vunpack.c.h.b16 %v544
      %v578 = vunpack.c.l.b16 %v545
      %v579 = vunpack.c.l.b16 %v546
      %v580 = vunpack.c.h.b16 %v546
      %v581 = vunpack.c.l.b16 %v547
      %v582 = vunpack.c.l.b16 %v548
      %v583 = vunpack.c.h.b16 %v548
      %v584 = vunpack.c.l.b16 %v549
      %v585 = vunpack.c.l.b16 %v550
      %v586 = vunpack.c.h.b16 %v550
      %v587 = vunpack.c.l.b16 %v551
      %v588 = vunpack.c.l.b16 %v552
      %v589 = vunpack.c.h.b16 %v552
      %v590 = vunpack.c.l.b16 %v553
      %v591 = vunpack.c.l.b16 %v554
      %v592 = vunpack.c.h.b16 %v554
      %v593 = vunpack.c.l.b16 %v555
      %v594 = vunpack.c.l.b16 %v556
      %v595 = vunpack.c.h.b16 %v556
      %v596 = vunpack.c.l.b16 %v557
      %v597 = vunpack.c.l.b16 %v558
      %v598 = vunpack.c.h.b16 %v558
      %v599 = vunpack.c.l.b16 %v559
      %v600 = vpack.c.b16 %v579, %v576
      %v601 = vpack.c.b16 %v580, %v577
      %v602 = vpack.c.b16 %v581, %v578
      %v603 = vpack.c.b16 %v585, %v582
      %v604 = vpack.c.b16 %v586, %v583
      %v605 = vpack.c.b16 %v587, %v584
      %v606 = vpack.c.b16 %v591, %v588
      %v607 = vpack.c.b16 %v592, %v589
      %v608 = vpack.c.b16 %v593, %v590
      %v609 = vpack.c.b16 %v597, %v594
      %v610 = vpack.c.b16 %v598, %v595
      %v611 = vpack.c.b16 %v599, %v596
      %612 = vrot.lane.b32.xlu0 %v600, 1
      %v613 = vpop.permute.xlu0 %612
      %614 = vrot.lane.b32.xlu0 %v601, 1
      %v615 = vpop.permute.xlu0 %614
      %616 = vrot.lane.b32.xlu0 %v602, 1
      %v617 = vpop.permute.xlu0 %616
      %618 = vrot.lane.b32.xlu0 %v603, 1
      %v619 = vpop.permute.xlu0 %618
      %620 = vrot.lane.b32.xlu0 %v604, 1
      %v621 = vpop.permute.xlu0 %620
      %622 = vrot.lane.b32.xlu0 %v605, 1
      %v623 = vpop.permute.xlu0 %622
      %624 = vrot.lane.b32.xlu0 %v606, 1
      %v625 = vpop.permute.xlu0 %624
      %626 = vrot.lane.b32.xlu0 %v607, 1
      %v627 = vpop.permute.xlu0 %626
      %628 = vrot.lane.b32.xlu0 %v608, 1
      %v629 = vpop.permute.xlu0 %628
      %630 = vrot.lane.b32.xlu0 %v609, 1
      %v631 = vpop.permute.xlu0 %630
      %632 = vrot.lane.b32.xlu0 %v610, 1
      %v633 = vpop.permute.xlu0 %632
      %634 = vrot.lane.b32.xlu0 %v611, 1
      %v635 = vpop.permute.xlu0 %634
      %vm636 = vcmask 7168
      %v637 = vsel %vm636, %v613, %v615
      %v638 = vsel %vm636, %v615, %v617
      %v639 = vsel %vm636, %v619, %v621
      %v640 = vsel %vm636, %v621, %v623
      %v641 = vsel %vm636, %v625, %v627
      %v642 = vsel %vm636, %v627, %v629
      %v643 = vsel %vm636, %v631, %v633
      %v644 = vsel %vm636, %v633, %v635
      %645 = vrot.lane.b32.xlu0 %v600, 2
      %v646 = vpop.permute.xlu0 %645
      %647 = vrot.lane.b32.xlu0 %v601, 2
      %v648 = vpop.permute.xlu0 %647
      %649 = vrot.lane.b32.xlu0 %v602, 2
      %v650 = vpop.permute.xlu0 %649
      %651 = vrot.lane.b32.xlu0 %v603, 2
      %v652 = vpop.permute.xlu0 %651
      %653 = vrot.lane.b32.xlu0 %v604, 2
      %v654 = vpop.permute.xlu0 %653
      %655 = vrot.lane.b32.xlu0 %v605, 2
      %v656 = vpop.permute.xlu0 %655
      %657 = vrot.lane.b32.xlu0 %v606, 2
      %v658 = vpop.permute.xlu0 %657
      %659 = vrot.lane.b32.xlu0 %v607, 2
      %v660 = vpop.permute.xlu0 %659
      %661 = vrot.lane.b32.xlu0 %v608, 2
      %v662 = vpop.permute.xlu0 %661
      %663 = vrot.lane.b32.xlu0 %v609, 2
      %v664 = vpop.permute.xlu0 %663
      %665 = vrot.lane.b32.xlu0 %v610, 2
      %v666 = vpop.permute.xlu0 %665
      %667 = vrot.lane.b32.xlu0 %v611, 2
      %v668 = vpop.permute.xlu0 %667
      %vm669 = vcmask 15360
      %v670 = vsel %vm669, %v646, %v648
      %v671 = vsel %vm669, %v648, %v650
      %v672 = vsel %vm669, %v652, %v654
      %v673 = vsel %vm669, %v654, %v656
      %v674 = vsel %vm669, %v658, %v660
      %v675 = vsel %vm669, %v660, %v662
      %v676 = vsel %vm669, %v664, %v666
      %v677 = vsel %vm669, %v666, %v668
      %678 = vrot.lane.b32.xlu0 %v600, 3
      %v679 = vpop.permute.xlu0 %678
      %680 = vrot.lane.b32.xlu0 %v601, 3
      %v681 = vpop.permute.xlu0 %680
      %682 = vrot.lane.b32.xlu0 %v602, 3
      %v683 = vpop.permute.xlu0 %682
      %684 = vrot.lane.b32.xlu0 %v603, 3
      %v685 = vpop.permute.xlu0 %684
      %686 = vrot.lane.b32.xlu0 %v604, 3
      %v687 = vpop.permute.xlu0 %686
      %688 = vrot.lane.b32.xlu0 %v605, 3
      %v689 = vpop.permute.xlu0 %688
      %690 = vrot.lane.b32.xlu0 %v606, 3
      %v691 = vpop.permute.xlu0 %690
      %692 = vrot.lane.b32.xlu0 %v607, 3
      %v693 = vpop.permute.xlu0 %692
      %694 = vrot.lane.b32.xlu0 %v608, 3
      %v695 = vpop.permute.xlu0 %694
      %696 = vrot.lane.b32.xlu0 %v609, 3
      %v697 = vpop.permute.xlu0 %696
      %698 = vrot.lane.b32.xlu0 %v610, 3
      %v699 = vpop.permute.xlu0 %698
      %700 = vrot.lane.b32.xlu0 %v611, 3
      %v701 = vpop.permute.xlu0 %700
      %vm702 = vcmask 23552
      %v703 = vsel %vm702, %v679, %v681
      %v704 = vsel %vm702, %v681, %v683
      %v705 = vsel %vm702, %v685, %v687
      %v706 = vsel %vm702, %v687, %v689
      %v707 = vsel %vm702, %v691, %v693
      %v708 = vsel %vm702, %v693, %v695
      %v709 = vsel %vm702, %v697, %v699
      %v710 = vsel %vm702, %v699, %v701
      %v711 = vld [vmem:[%s3] sm:$0xff]
      %v712 = vld [vmem:[%s3 + $0x8] sm:$0xff]
      %v713 = vld [vmem:[%s3 + $0x10] sm:$0xff]
      %v714 = vld [vmem:[%s3 + $0x18] sm:$0xff]
      %s715 = scalar_lea.vmem %s3, 32
      %v716 = vld [vmem:[%s715] sm:$0xff]
      %v717 = vld [vmem:[%s715 + $0x8] sm:$0xff]
      %v718 = vld [vmem:[%s715 + $0x10] sm:$0xff]
      %v719 = vld [vmem:[%s715 + $0x18] sm:$0xff]
      %v724 = vunpack.c.l.b16 %v716
      %v725 = vunpack.c.h.b16 %v716
      %v726 = vunpack.c.l.b16 %v717
      %v727 = vunpack.c.h.b16 %v717
      %v728 = vunpack.c.l.b16 %v718
      %v729 = vunpack.c.h.b16 %v718
      %v730 = vunpack.c.l.b16 %v719
      %v731 = vunpack.c.h.b16 %v719
      %v732 = vpack.c.b16 %v726, %v724
      %v733 = vpack.c.b16 %v727, %v725
      %v734 = vpack.c.b16 %v730, %v728
      %v735 = vpack.c.b16 %v731, %v729
      %740 = vrot.lane.b32.xlu0 %v600, 93
      %v741 = vpop.permute.xlu0 %740
      %742 = vrot.lane.b32.xlu0 %v601, 93
      %v743 = vpop.permute.xlu0 %742
      %744 = vrot.lane.b32.xlu0 %v602, 93
      %v745 = vpop.permute.xlu0 %744
      %746 = vrot.lane.b32.xlu0 %v603, 93
      %v747 = vpop.permute.xlu0 %746
      %748 = vrot.lane.b32.xlu0 %v604, 93
      %v749 = vpop.permute.xlu0 %748
      %750 = vrot.lane.b32.xlu0 %v605, 93
      %v751 = vpop.permute.xlu0 %750
      %752 = vrot.lane.b32.xlu0 %v606, 93
      %v753 = vpop.permute.xlu0 %752
      %754 = vrot.lane.b32.xlu0 %v607, 93
      %v755 = vpop.permute.xlu0 %754
      %756 = vrot.lane.b32.xlu0 %v608, 93
      %v757 = vpop.permute.xlu0 %756
      %758 = vrot.lane.b32.xlu0 %v609, 93
      %v759 = vpop.permute.xlu0 %758
      %760 = vrot.lane.b32.xlu0 %v610, 93
      %v761 = vpop.permute.xlu0 %760
      %762 = vrot.lane.b32.xlu0 %v611, 93
      %v763 = vpop.permute.xlu0 %762
      %764 = vrot.lane.b32.xlu0 %v613, 93
      %v765 = vpop.permute.xlu0 %764
      %766 = vrot.lane.b32.xlu0 %v637, 93
      %v767 = vpop.permute.xlu0 %766
      %768 = vrot.lane.b32.xlu0 %v638, 93
      %v769 = vpop.permute.xlu0 %768
      %770 = vrot.lane.b32.xlu0 %v619, 93
      %v771 = vpop.permute.xlu0 %770
      %772 = vrot.lane.b32.xlu0 %v639, 93
      %v773 = vpop.permute.xlu0 %772
      %774 = vrot.lane.b32.xlu0 %v640, 93
      %v775 = vpop.permute.xlu0 %774
      %776 = vrot.lane.b32.xlu0 %v625, 93
      %v777 = vpop.permute.xlu0 %776
      %778 = vrot.lane.b32.xlu0 %v641, 93
      %v779 = vpop.permute.xlu0 %778
      %780 = vrot.lane.b32.xlu0 %v642, 93
      %v781 = vpop.permute.xlu0 %780
      %782 = vrot.lane.b32.xlu0 %v631, 93
      %v783 = vpop.permute.xlu0 %782
      %784 = vrot.lane.b32.xlu0 %v643, 93
      %v785 = vpop.permute.xlu0 %784
      %786 = vrot.lane.b32.xlu0 %v644, 93
      %v787 = vpop.permute.xlu0 %786
      %788 = vrot.lane.b32.xlu0 %v646, 93
      %v789 = vpop.permute.xlu0 %788
      %790 = vrot.lane.b32.xlu0 %v670, 93
      %v791 = vpop.permute.xlu0 %790
      %792 = vrot.lane.b32.xlu0 %v671, 93
      %v793 = vpop.permute.xlu0 %792
      %794 = vrot.lane.b32.xlu0 %v652, 93
      %v795 = vpop.permute.xlu0 %794
      %796 = vrot.lane.b32.xlu0 %v672, 93
      %v797 = vpop.permute.xlu0 %796
      %798 = vrot.lane.b32.xlu0 %v673, 93
      %v799 = vpop.permute.xlu0 %798
      %800 = vrot.lane.b32.xlu0 %v658, 93
      %v801 = vpop.permute.xlu0 %800
      %802 = vrot.lane.b32.xlu0 %v674, 93
      %v803 = vpop.permute.xlu0 %802
      %804 = vrot.lane.b32.xlu0 %v675, 93
      %v805 = vpop.permute.xlu0 %804
      %806 = vrot.lane.b32.xlu0 %v664, 93
      %v807 = vpop.permute.xlu0 %806
      %808 = vrot.lane.b32.xlu0 %v676, 93
      %v809 = vpop.permute.xlu0 %808
      %810 = vrot.lane.b32.xlu0 %v677, 93
      %v811 = vpop.permute.xlu0 %810
      %812 = vrot.lane.b32.xlu0 %v679, 93
      %v813 = vpop.permute.xlu0 %812
      %814 = vrot.lane.b32.xlu0 %v703, 93
      %v815 = vpop.permute.xlu0 %814
      %816 = vrot.lane.b32.xlu0 %v704, 93
      %v817 = vpop.permute.xlu0 %816
      %818 = vrot.lane.b32.xlu0 %v685, 93
      %v819 = vpop.permute.xlu0 %818
      %820 = vrot.lane.b32.xlu0 %v705, 93
      %v821 = vpop.permute.xlu0 %820
      %822 = vrot.lane.b32.xlu0 %v706, 93
      %v823 = vpop.permute.xlu0 %822
      %824 = vrot.lane.b32.xlu0 %v691, 93
      %v825 = vpop.permute.xlu0 %824
      %826 = vrot.lane.b32.xlu0 %v707, 93
      %v827 = vpop.permute.xlu0 %826
      %828 = vrot.lane.b32.xlu0 %v708, 93
      %v829 = vpop.permute.xlu0 %828
      %830 = vrot.lane.b32.xlu0 %v697, 93
      %v831 = vpop.permute.xlu0 %830
      %832 = vrot.lane.b32.xlu0 %v709, 93
      %v833 = vpop.permute.xlu0 %832
      %834 = vrot.lane.b32.xlu0 %v710, 93
      %v835 = vpop.permute.xlu0 %834
      %vm836 = vcmask 760832
      %v837 = vsel %vm836, %v741, %v743
      %v838 = vsel %vm836, %v743, %v745
      %v839 = vsel %vm836, %v747, %v749
      %v840 = vsel %vm836, %v749, %v751
      %v841 = vsel %vm836, %v753, %v755
      %v842 = vsel %vm836, %v755, %v757
      %v843 = vsel %vm836, %v759, %v761
      %v844 = vsel %vm836, %v761, %v763
      %v845 = vsel %vm836, %v765, %v767
      %v846 = vsel %vm836, %v767, %v769
      %v847 = vsel %vm836, %v771, %v773
      %v848 = vsel %vm836, %v773, %v775
      %v849 = vsel %vm836, %v777, %v779
      %v850 = vsel %vm836, %v779, %v781
      %v851 = vsel %vm836, %v783, %v785
      %v852 = vsel %vm836, %v785, %v787
      %v853 = vsel %vm836, %v789, %v791
      %v854 = vsel %vm836, %v791, %v793
      %v855 = vsel %vm836, %v795, %v797
      %v856 = vsel %vm836, %v797, %v799
      %v857 = vsel %vm836, %v801, %v803
      %v858 = vsel %vm836, %v803, %v805
      %v859 = vsel %vm836, %v807, %v809
      %v860 = vsel %vm836, %v809, %v811
      %v861 = vsel %vm836, %v813, %v815
      %v862 = vsel %vm836, %v815, %v817
      %v863 = vsel %vm836, %v819, %v821
      %v864 = vsel %vm836, %v821, %v823
      %v865 = vsel %vm836, %v825, %v827
      %v866 = vsel %vm836, %v827, %v829
      %v867 = vsel %vm836, %v831, %v833
      %v868 = vsel %vm836, %v833, %v835
      %901 = vmatpush.bf16.msra.mxu0 %v851
      %902 = vmatpush.bf16.msra.mxu0 %v849
      %903 = vmatpush.bf16.msra.mxu0 %v847
      %904 = vmatpush.bf16.msra.mxu0 %v845
      %905 = vmatpush.bf16.msra.mxu0 %v843
      %906 = vmatpush.bf16.msra.mxu0 %v841
      %907 = vmatpush.bf16.msra.mxu0 %v839
      %908 = vmatpush.bf16.msra.mxu0 %v837
      %909 = vmatmul.bf16.gmra.mxu0 %v732
      %v910 = vpop.f32.mrf.mxu0
      %v911 = vadd.f32 0.0, %v910
      %v912 = vpop.f32.mrf.mxu0
      %v913 = vadd.f32 0.0, %v912
      %914 = vmatmul.bf16.gmra.mxu0 %v734
      %v915 = vpop.f32.mrf.mxu0
      %v916 = vadd.f32 0.0, %v915
      %v917 = vpop.f32.mrf.mxu0
      %v918 = vadd.f32 0.0, %v917
      %919 = vdwg.mxu0
      %920 = vmatpush.bf16.msra.mxu0 %v867
      %921 = vmatpush.bf16.msra.mxu0 %v865
      %922 = vmatpush.bf16.msra.mxu0 %v863
      %923 = vmatpush.bf16.msra.mxu0 %v861
      %924 = vmatpush.bf16.msra.mxu0 %v859
      %925 = vmatpush.bf16.msra.mxu0 %v857
      %926 = vmatpush.bf16.msra.mxu0 %v855
      %927 = vmatpush.bf16.msra.mxu0 %v853
      %928 = vmatmul.bf16.gmra.mxu0 %v733
      %v929 = vpop.f32.mrf.mxu0
      %v930 = vadd.f32 %v911, %v929
      %v931 = vpop.f32.mrf.mxu0
      %v932 = vadd.f32 %v913, %v931
      %933 = vmatmul.bf16.gmra.mxu0 %v735
      %v934 = vpop.f32.mrf.mxu0
      %v935 = vadd.f32 %v916, %v934
      %v936 = vpop.f32.mrf.mxu0
      %v937 = vadd.f32 %v918, %v936
      %938 = vdwg.mxu0
      %939 = vmatpush.bf16.msra.mxu0 %v852
      %940 = vmatpush.bf16.msra.mxu0 %v850
      %941 = vmatpush.bf16.msra.mxu0 %v848
      %942 = vmatpush.bf16.msra.mxu0 %v846
      %943 = vmatpush.bf16.msra.mxu0 %v844
      %944 = vmatpush.bf16.msra.mxu0 %v842
      %945 = vmatpush.bf16.msra.mxu0 %v840
      %946 = vmatpush.bf16.msra.mxu0 %v838
      %947 = vmatmul.bf16.gmra.mxu0 %v732
      %v948 = vpop.f32.mrf.mxu0
      %v949 = vadd.f32 0.0, %v948
      %v950 = vpop.f32.mrf.mxu0
      %v951 = vadd.f32 0.0, %v950
      %952 = vmatmul.bf16.gmra.mxu0 %v734
      %v953 = vpop.f32.mrf.mxu0
      %v954 = vadd.f32 0.0, %v953
      %v955 = vpop.f32.mrf.mxu0
      %v956 = vadd.f32 0.0, %v955
      %957 = vdwg.mxu0
      %958 = vmatpush.bf16.msra.mxu0 %v868
      %959 = vmatpush.bf16.msra.mxu0 %v866
      %960 = vmatpush.bf16.msra.mxu0 %v864
      %961 = vmatpush.bf16.msra.mxu0 %v862
      %962 = vmatpush.bf16.msra.mxu0 %v860
      %963 = vmatpush.bf16.msra.mxu0 %v858
      %964 = vmatpush.bf16.msra.mxu0 %v856
      %965 = vmatpush.bf16.msra.mxu0 %v854
      %966 = vmatmul.bf16.gmra.mxu0 %v733
      %v967 = vpop.f32.mrf.mxu0
      %v968 = vadd.f32 %v949, %v967
      %v969 = vpop.f32.mrf.mxu0
      %v970 = vadd.f32 %v951, %v969
      %971 = vmatmul.bf16.gmra.mxu0 %v735
      %v972 = vpop.f32.mrf.mxu0
      %v973 = vadd.f32 %v954, %v972
      %v974 = vpop.f32.mrf.mxu0
      %v975 = vadd.f32 %v956, %v974
      %976 = vdwg.mxu0
      %v981 = vunpack.c.l.b16 %v711
      %v982 = vunpack.c.h.b16 %v711
      %v983 = vunpack.c.l.b16 %v712
      %v984 = vunpack.c.h.b16 %v712
      %v985 = vunpack.c.l.b16 %v713
      %v986 = vunpack.c.h.b16 %v713
      %v987 = vunpack.c.l.b16 %v714
      %v988 = vunpack.c.h.b16 %v714
      %v989 = vpack.c.b16 %v983, %v981
      %v990 = vpack.c.b16 %v984, %v982
      %v991 = vpack.c.b16 %v987, %v985
      %v992 = vpack.c.b16 %v988, %v986
      %997 = vrot.lane.b32.xlu0 %v600, 77
      %v998 = vpop.permute.xlu0 %997
      %999 = vrot.lane.b32.xlu0 %v601, 77
      %v1000 = vpop.permute.xlu0 %999
      %1001 = vrot.lane.b32.xlu0 %v602, 77
      %v1002 = vpop.permute.xlu0 %1001
      %1003 = vrot.lane.b32.xlu0 %v603, 77
      %v1004 = vpop.permute.xlu0 %1003
      %1005 = vrot.lane.b32.xlu0 %v604, 77
      %v1006 = vpop.permute.xlu0 %1005
      %1007 = vrot.lane.b32.xlu0 %v605, 77
      %v1008 = vpop.permute.xlu0 %1007
      %1009 = vrot.lane.b32.xlu0 %v606, 77
      %v1010 = vpop.permute.xlu0 %1009
      %1011 = vrot.lane.b32.xlu0 %v607, 77
      %v1012 = vpop.permute.xlu0 %1011
      %1013 = vrot.lane.b32.xlu0 %v608, 77
      %v1014 = vpop.permute.xlu0 %1013
      %1015 = vrot.lane.b32.xlu0 %v609, 77
      %v1016 = vpop.permute.xlu0 %1015
      %1017 = vrot.lane.b32.xlu0 %v610, 77
      %v1018 = vpop.permute.xlu0 %1017
      %1019 = vrot.lane.b32.xlu0 %v611, 77
      %v1020 = vpop.permute.xlu0 %1019
      %1021 = vrot.lane.b32.xlu0 %v613, 77
      %v1022 = vpop.permute.xlu0 %1021
      %1023 = vrot.lane.b32.xlu0 %v637, 77
      %v1024 = vpop.permute.xlu0 %1023
      %1025 = vrot.lane.b32.xlu0 %v638, 77
      %v1026 = vpop.permute.xlu0 %1025
      %1027 = vrot.lane.b32.xlu0 %v619, 77
      %v1028 = vpop.permute.xlu0 %1027
      %1029 = vrot.lane.b32.xlu0 %v639, 77
      %v1030 = vpop.permute.xlu0 %1029
      %1031 = vrot.lane.b32.xlu0 %v640, 77
      %v1032 = vpop.permute.xlu0 %1031
      %1033 = vrot.lane.b32.xlu0 %v625, 77
      %v1034 = vpop.permute.xlu0 %1033
      %1035 = vrot.lane.b32.xlu0 %v641, 77
      %v1036 = vpop.permute.xlu0 %1035
      %1037 = vrot.lane.b32.xlu0 %v642, 77
      %v1038 = vpop.permute.xlu0 %1037
      %1039 = vrot.lane.b32.xlu0 %v631, 77
      %v1040 = vpop.permute.xlu0 %1039
      %1041 = vrot.lane.b32.xlu0 %v643, 77
      %v1042 = vpop.permute.xlu0 %1041
      %1043 = vrot.lane.b32.xlu0 %v644, 77
      %v1044 = vpop.permute.xlu0 %1043
      %1045 = vrot.lane.b32.xlu0 %v646, 77
      %v1046 = vpop.permute.xlu0 %1045
      %1047 = vrot.lane.b32.xlu0 %v670, 77
      %v1048 = vpop.permute.xlu0 %1047
      %1049 = vrot.lane.b32.xlu0 %v671, 77
      %v1050 = vpop.permute.xlu0 %1049
      %1051 = vrot.lane.b32.xlu0 %v652, 77
      %v1052 = vpop.permute.xlu0 %1051
      %1053 = vrot.lane.b32.xlu0 %v672, 77
      %v1054 = vpop.permute.xlu0 %1053
      %1055 = vrot.lane.b32.xlu0 %v673, 77
      %v1056 = vpop.permute.xlu0 %1055
      %1057 = vrot.lane.b32.xlu0 %v658, 77
      %v1058 = vpop.permute.xlu0 %1057
      %1059 = vrot.lane.b32.xlu0 %v674, 77
      %v1060 = vpop.permute.xlu0 %1059
      %1061 = vrot.lane.b32.xlu0 %v675, 77
      %v1062 = vpop.permute.xlu0 %1061
      %1063 = vrot.lane.b32.xlu0 %v664, 77
      %v1064 = vpop.permute.xlu0 %1063
      %1065 = vrot.lane.b32.xlu0 %v676, 77
      %v1066 = vpop.permute.xlu0 %1065
      %1067 = vrot.lane.b32.xlu0 %v677, 77
      %v1068 = vpop.permute.xlu0 %1067
      %1069 = vrot.lane.b32.xlu0 %v679, 77
      %v1070 = vpop.permute.xlu0 %1069
      %1071 = vrot.lane.b32.xlu0 %v703, 77
      %v1072 = vpop.permute.xlu0 %1071
      %1073 = vrot.lane.b32.xlu0 %v704, 77
      %v1074 = vpop.permute.xlu0 %1073
      %1075 = vrot.lane.b32.xlu0 %v685, 77
      %v1076 = vpop.permute.xlu0 %1075
      %1077 = vrot.lane.b32.xlu0 %v705, 77
      %v1078 = vpop.permute.xlu0 %1077
      %1079 = vrot.lane.b32.xlu0 %v706, 77
      %v1080 = vpop.permute.xlu0 %1079
      %1081 = vrot.lane.b32.xlu0 %v691, 77
      %v1082 = vpop.permute.xlu0 %1081
      %1083 = vrot.lane.b32.xlu0 %v707, 77
      %v1084 = vpop.permute.xlu0 %1083
      %1085 = vrot.lane.b32.xlu0 %v708, 77
      %v1086 = vpop.permute.xlu0 %1085
      %1087 = vrot.lane.b32.xlu0 %v697, 77
      %v1088 = vpop.permute.xlu0 %1087
      %1089 = vrot.lane.b32.xlu0 %v709, 77
      %v1090 = vpop.permute.xlu0 %1089
      %1091 = vrot.lane.b32.xlu0 %v710, 77
      %v1092 = vpop.permute.xlu0 %1091
      %vm1093 = vcmask 629760
      %v1094 = vsel %vm1093, %v998, %v1000
      %v1095 = vsel %vm1093, %v1000, %v1002
      %v1096 = vsel %vm1093, %v1004, %v1006
      %v1097 = vsel %vm1093, %v1006, %v1008
      %v1098 = vsel %vm1093, %v1010, %v1012
      %v1099 = vsel %vm1093, %v1012, %v1014
      %v1100 = vsel %vm1093, %v1016, %v1018
      %v1101 = vsel %vm1093, %v1018, %v1020
      %v1102 = vsel %vm1093, %v1022, %v1024
      %v1103 = vsel %vm1093, %v1024, %v1026
      %v1104 = vsel %vm1093, %v1028, %v1030
      %v1105 = vsel %vm1093, %v1030, %v1032
      %v1106 = vsel %vm1093, %v1034, %v1036
      %v1107 = vsel %vm1093, %v1036, %v1038
      %v1108 = vsel %vm1093, %v1040, %v1042
      %v1109 = vsel %vm1093, %v1042, %v1044
      %v1110 = vsel %vm1093, %v1046, %v1048
      %v1111 = vsel %vm1093, %v1048, %v1050
      %v1112 = vsel %vm1093, %v1052, %v1054
      %v1113 = vsel %vm1093, %v1054, %v1056
      %v1114 = vsel %vm1093, %v1058, %v1060
      %v1115 = vsel %vm1093, %v1060, %v1062
      %v1116 = vsel %vm1093, %v1064, %v1066
      %v1117 = vsel %vm1093, %v1066, %v1068
      %v1118 = vsel %vm1093, %v1070, %v1072
      %v1119 = vsel %vm1093, %v1072, %v1074
      %v1120 = vsel %vm1093, %v1076, %v1078
      %v1121 = vsel %vm1093, %v1078, %v1080
      %v1122 = vsel %vm1093, %v1082, %v1084
      %v1123 = vsel %vm1093, %v1084, %v1086
      %v1124 = vsel %vm1093, %v1088, %v1090
      %v1125 = vsel %vm1093, %v1090, %v1092
      %1158 = vmatpush.bf16.msra.mxu0 %v1108
      %1159 = vmatpush.bf16.msra.mxu0 %v1106
      %1160 = vmatpush.bf16.msra.mxu0 %v1104
      %1161 = vmatpush.bf16.msra.mxu0 %v1102
      %1162 = vmatpush.bf16.msra.mxu0 %v1100
      %1163 = vmatpush.bf16.msra.mxu0 %v1098
      %1164 = vmatpush.bf16.msra.mxu0 %v1096
      %1165 = vmatpush.bf16.msra.mxu0 %v1094
      %1166 = vmatmul.bf16.gmra.mxu0 %v989
      %v1167 = vpop.f32.mrf.mxu0
      %v1168 = vadd.f32 %v930, %v1167
      %v1169 = vpop.f32.mrf.mxu0
      %v1170 = vadd.f32 %v932, %v1169
      %1171 = vmatmul.bf16.gmra.mxu0 %v991
      %v1172 = vpop.f32.mrf.mxu0
      %v1173 = vadd.f32 %v935, %v1172
      %v1174 = vpop.f32.mrf.mxu0
      %v1175 = vadd.f32 %v937, %v1174
      %1176 = vdwg.mxu0
      %1177 = vmatpush.bf16.msra.mxu0 %v1124
      %1178 = vmatpush.bf16.msra.mxu0 %v1122
      %1179 = vmatpush.bf16.msra.mxu0 %v1120
      %1180 = vmatpush.bf16.msra.mxu0 %v1118
      %1181 = vmatpush.bf16.msra.mxu0 %v1116
      %1182 = vmatpush.bf16.msra.mxu0 %v1114
      %1183 = vmatpush.bf16.msra.mxu0 %v1112
      %1184 = vmatpush.bf16.msra.mxu0 %v1110
      %1185 = vmatmul.bf16.gmra.mxu0 %v990
      %v1186 = vpop.f32.mrf.mxu0
      %v1187 = vadd.f32 %v1168, %v1186
      %v1188 = vpop.f32.mrf.mxu0
      %v1189 = vadd.f32 %v1170, %v1188
      %1190 = vmatmul.bf16.gmra.mxu0 %v992
      %v1191 = vpop.f32.mrf.mxu0
      %v1192 = vadd.f32 %v1173, %v1191
      %v1193 = vpop.f32.mrf.mxu0
      %v1194 = vadd.f32 %v1175, %v1193
      %1195 = vdwg.mxu0
      %1196 = vmatpush.bf16.msra.mxu0 %v1109
      %1197 = vmatpush.bf16.msra.mxu0 %v1107
      %1198 = vmatpush.bf16.msra.mxu0 %v1105
      %1199 = vmatpush.bf16.msra.mxu0 %v1103
      %1200 = vmatpush.bf16.msra.mxu0 %v1101
      %1201 = vmatpush.bf16.msra.mxu0 %v1099
      %1202 = vmatpush.bf16.msra.mxu0 %v1097
      %1203 = vmatpush.bf16.msra.mxu0 %v1095
      %1204 = vmatmul.bf16.gmra.mxu0 %v989
      %v1205 = vpop.f32.mrf.mxu0
      %v1206 = vadd.f32 %v968, %v1205
      %v1207 = vpop.f32.mrf.mxu0
      %v1208 = vadd.f32 %v970, %v1207
      %1209 = vmatmul.bf16.gmra.mxu0 %v991
      %v1210 = vpop.f32.mrf.mxu0
      %v1211 = vadd.f32 %v973, %v1210
      %v1212 = vpop.f32.mrf.mxu0
      %v1213 = vadd.f32 %v975, %v1212
      %1214 = vdwg.mxu0
      %1215 = vmatpush.bf16.msra.mxu0 %v1125
      %1216 = vmatpush.bf16.msra.mxu0 %v1123
      %1217 = vmatpush.bf16.msra.mxu0 %v1121
      %1218 = vmatpush.bf16.msra.mxu0 %v1119
      %1219 = vmatpush.bf16.msra.mxu0 %v1117
      %1220 = vmatpush.bf16.msra.mxu0 %v1115
      %1221 = vmatpush.bf16.msra.mxu0 %v1113
      %1222 = vmatpush.bf16.msra.mxu0 %v1111
      %1223 = vmatmul.bf16.gmra.mxu0 %v990
      %v1224 = vpop.f32.mrf.mxu0
      %v1225 = vadd.f32 %v1206, %v1224
      %v1226 = vpop.f32.mrf.mxu0
      %v1227 = vadd.f32 %v1208, %v1226
      %1228 = vmatmul.bf16.gmra.mxu0 %v992
      %v1229 = vpop.f32.mrf.mxu0
      %v1230 = vadd.f32 %v1211, %v1229
      %v1231 = vpop.f32.mrf.mxu0
      %v1232 = vadd.f32 %v1213, %v1231
      %1233 = vdwg.mxu0
      %s1234 = scalar_lea.vmem %s3, 64
      %v1235 = vld [vmem:[%s1234] sm:$0xff]
      %v1236 = vld [vmem:[%s1234 + $0x8] sm:$0xff]
      %v1237 = vld [vmem:[%s1234 + $0x10] sm:$0xff]
      %v1238 = vld [vmem:[%s1234 + $0x18] sm:$0xff]
      %v1243 = vunpack.c.l.b16 %v1235
      %v1244 = vunpack.c.h.b16 %v1235
      %v1245 = vunpack.c.l.b16 %v1236
      %v1246 = vunpack.c.h.b16 %v1236
      %v1247 = vunpack.c.l.b16 %v1237
      %v1248 = vunpack.c.h.b16 %v1237
      %v1249 = vunpack.c.l.b16 %v1238
      %v1250 = vunpack.c.h.b16 %v1238
      %v1251 = vpack.c.b16 %v1245, %v1243
      %v1252 = vpack.c.b16 %v1246, %v1244
      %v1253 = vpack.c.b16 %v1249, %v1247
      %v1254 = vpack.c.b16 %v1250, %v1248
      %1259 = vrot.lane.b32.xlu0 %v600, 109
      %v1260 = vpop.permute.xlu0 %1259
      %1261 = vrot.lane.b32.xlu0 %v601, 109
      %v1262 = vpop.permute.xlu0 %1261
      %1263 = vrot.lane.b32.xlu0 %v602, 109
      %v1264 = vpop.permute.xlu0 %1263
      %1265 = vrot.lane.b32.xlu0 %v603, 109
      %v1266 = vpop.permute.xlu0 %1265
      %1267 = vrot.lane.b32.xlu0 %v604, 109
      %v1268 = vpop.permute.xlu0 %1267
      %1269 = vrot.lane.b32.xlu0 %v605, 109
      %v1270 = vpop.permute.xlu0 %1269
      %1271 = vrot.lane.b32.xlu0 %v606, 109
      %v1272 = vpop.permute.xlu0 %1271
      %1273 = vrot.lane.b32.xlu0 %v607, 109
      %v1274 = vpop.permute.xlu0 %1273
      %1275 = vrot.lane.b32.xlu0 %v608, 109
      %v1276 = vpop.permute.xlu0 %1275
      %1277 = vrot.lane.b32.xlu0 %v609, 109
      %v1278 = vpop.permute.xlu0 %1277
      %1279 = vrot.lane.b32.xlu0 %v610, 109
      %v1280 = vpop.permute.xlu0 %1279
      %1281 = vrot.lane.b32.xlu0 %v611, 109
      %v1282 = vpop.permute.xlu0 %1281
      %1283 = vrot.lane.b32.xlu0 %v613, 109
      %v1284 = vpop.permute.xlu0 %1283
      %1285 = vrot.lane.b32.xlu0 %v637, 109
      %v1286 = vpop.permute.xlu0 %1285
      %1287 = vrot.lane.b32.xlu0 %v638, 109
      %v1288 = vpop.permute.xlu0 %1287
      %1289 = vrot.lane.b32.xlu0 %v619, 109
      %v1290 = vpop.permute.xlu0 %1289
      %1291 = vrot.lane.b32.xlu0 %v639, 109
      %v1292 = vpop.permute.xlu0 %1291
      %1293 = vrot.lane.b32.xlu0 %v640, 109
      %v1294 = vpop.permute.xlu0 %1293
      %1295 = vrot.lane.b32.xlu0 %v625, 109
      %v1296 = vpop.permute.xlu0 %1295
      %1297 = vrot.lane.b32.xlu0 %v641, 109
      %v1298 = vpop.permute.xlu0 %1297
      %1299 = vrot.lane.b32.xlu0 %v642, 109
      %v1300 = vpop.permute.xlu0 %1299
      %1301 = vrot.lane.b32.xlu0 %v631, 109
      %v1302 = vpop.permute.xlu0 %1301
      %1303 = vrot.lane.b32.xlu0 %v643, 109
      %v1304 = vpop.permute.xlu0 %1303
      %1305 = vrot.lane.b32.xlu0 %v644, 109
      %v1306 = vpop.permute.xlu0 %1305
      %1307 = vrot.lane.b32.xlu0 %v646, 109
      %v1308 = vpop.permute.xlu0 %1307
      %1309 = vrot.lane.b32.xlu0 %v670, 109
      %v1310 = vpop.permute.xlu0 %1309
      %1311 = vrot.lane.b32.xlu0 %v671, 109
      %v1312 = vpop.permute.xlu0 %1311
      %1313 = vrot.lane.b32.xlu0 %v652, 109
      %v1314 = vpop.permute.xlu0 %1313
      %1315 = vrot.lane.b32.xlu0 %v672, 109
      %v1316 = vpop.permute.xlu0 %1315
      %1317 = vrot.lane.b32.xlu0 %v673, 109
      %v1318 = vpop.permute.xlu0 %1317
      %1319 = vrot.lane.b32.xlu0 %v658, 109
      %v1320 = vpop.permute.xlu0 %1319
      %1321 = vrot.lane.b32.xlu0 %v674, 109
      %v1322 = vpop.permute.xlu0 %1321
      %1323 = vrot.lane.b32.xlu0 %v675, 109
      %v1324 = vpop.permute.xlu0 %1323
      %1325 = vrot.lane.b32.xlu0 %v664, 109
      %v1326 = vpop.permute.xlu0 %1325
      %1327 = vrot.lane.b32.xlu0 %v676, 109
      %v1328 = vpop.permute.xlu0 %1327
      %1329 = vrot.lane.b32.xlu0 %v677, 109
      %v1330 = vpop.permute.xlu0 %1329
      %1331 = vrot.lane.b32.xlu0 %v679, 109
      %v1332 = vpop.permute.xlu0 %1331
      %1333 = vrot.lane.b32.xlu0 %v703, 109
      %v1334 = vpop.permute.xlu0 %1333
      %1335 = vrot.lane.b32.xlu0 %v704, 109
      %v1336 = vpop.permute.xlu0 %1335
      %1337 = vrot.lane.b32.xlu0 %v685, 109
      %v1338 = vpop.permute.xlu0 %1337
      %1339 = vrot.lane.b32.xlu0 %v705, 109
      %v1340 = vpop.permute.xlu0 %1339
      %1341 = vrot.lane.b32.xlu0 %v706, 109
      %v1342 = vpop.permute.xlu0 %1341
      %1343 = vrot.lane.b32.xlu0 %v691, 109
      %v1344 = vpop.permute.xlu0 %1343
      %1345 = vrot.lane.b32.xlu0 %v707, 109
      %v1346 = vpop.permute.xlu0 %1345
      %1347 = vrot.lane.b32.xlu0 %v708, 109
      %v1348 = vpop.permute.xlu0 %1347
      %1349 = vrot.lane.b32.xlu0 %v697, 109
      %v1350 = vpop.permute.xlu0 %1349
      %1351 = vrot.lane.b32.xlu0 %v709, 109
      %v1352 = vpop.permute.xlu0 %1351
      %1353 = vrot.lane.b32.xlu0 %v710, 109
      %v1354 = vpop.permute.xlu0 %1353
      %vm1355 = vcmask 891904
      %v1356 = vsel %vm1355, %v1260, %v1262
      %v1357 = vsel %vm1355, %v1262, %v1264
      %v1358 = vsel %vm1355, %v1266, %v1268
      %v1359 = vsel %vm1355, %v1268, %v1270
      %v1360 = vsel %vm1355, %v1272, %v1274
      %v1361 = vsel %vm1355, %v1274, %v1276
      %v1362 = vsel %vm1355, %v1278, %v1280
      %v1363 = vsel %vm1355, %v1280, %v1282
      %v1364 = vsel %vm1355, %v1284, %v1286
      %v1365 = vsel %vm1355, %v1286, %v1288
      %v1366 = vsel %vm1355, %v1290, %v1292
      %v1367 = vsel %vm1355, %v1292, %v1294
      %v1368 = vsel %vm1355, %v1296, %v1298
      %v1369 = vsel %vm1355, %v1298, %v1300
      %v1370 = vsel %vm1355, %v1302, %v1304
      %v1371 = vsel %vm1355, %v1304, %v1306
      %v1372 = vsel %vm1355, %v1308, %v1310
      %v1373 = vsel %vm1355, %v1310, %v1312
      %v1374 = vsel %vm1355, %v1314, %v1316
      %v1375 = vsel %vm1355, %v1316, %v1318
      %v1376 = vsel %vm1355, %v1320, %v1322
      %v1377 = vsel %vm1355, %v1322, %v1324
      %v1378 = vsel %vm1355, %v1326, %v1328
      %v1379 = vsel %vm1355, %v1328, %v1330
      %v1380 = vsel %vm1355, %v1332, %v1334
      %v1381 = vsel %vm1355, %v1334, %v1336
      %v1382 = vsel %vm1355, %v1338, %v1340
      %v1383 = vsel %vm1355, %v1340, %v1342
      %v1384 = vsel %vm1355, %v1344, %v1346
      %v1385 = vsel %vm1355, %v1346, %v1348
      %v1386 = vsel %vm1355, %v1350, %v1352
      %v1387 = vsel %vm1355, %v1352, %v1354
      %1420 = vmatpush.bf16.msra.mxu0 %v1370
      %1421 = vmatpush.bf16.msra.mxu0 %v1368
      %1422 = vmatpush.bf16.msra.mxu0 %v1366
      %1423 = vmatpush.bf16.msra.mxu0 %v1364
      %1424 = vmatpush.bf16.msra.mxu0 %v1362
      %1425 = vmatpush.bf16.msra.mxu0 %v1360
      %1426 = vmatpush.bf16.msra.mxu0 %v1358
      %1427 = vmatpush.bf16.msra.mxu0 %v1356
      %1428 = vmatmul.bf16.gmra.mxu0 %v1251
      %v1429 = vpop.f32.mrf.mxu0
      %v1430 = vadd.f32 0.0, %v1429
      %v1431 = vpop.f32.mrf.mxu0
      %v1432 = vadd.f32 0.0, %v1431
      %1433 = vmatmul.bf16.gmra.mxu0 %v1253
      %v1434 = vpop.f32.mrf.mxu0
      %v1435 = vadd.f32 0.0, %v1434
      %v1436 = vpop.f32.mrf.mxu0
      %v1437 = vadd.f32 0.0, %v1436
      %1438 = vdwg.mxu0
      %1439 = vmatpush.bf16.msra.mxu0 %v1386
      %1440 = vmatpush.bf16.msra.mxu0 %v1384
      %1441 = vmatpush.bf16.msra.mxu0 %v1382
      %1442 = vmatpush.bf16.msra.mxu0 %v1380
      %1443 = vmatpush.bf16.msra.mxu0 %v1378
      %1444 = vmatpush.bf16.msra.mxu0 %v1376
      %1445 = vmatpush.bf16.msra.mxu0 %v1374
      %1446 = vmatpush.bf16.msra.mxu0 %v1372
      %1447 = vmatmul.bf16.gmra.mxu0 %v1252
      %v1448 = vpop.f32.mrf.mxu0
      %v1449 = vadd.f32 %v1430, %v1448
      %v1450 = vpop.f32.mrf.mxu0
      %v1451 = vadd.f32 %v1432, %v1450
      %1452 = vmatmul.bf16.gmra.mxu0 %v1254
      %v1453 = vpop.f32.mrf.mxu0
      %v1454 = vadd.f32 %v1435, %v1453
      %v1455 = vpop.f32.mrf.mxu0
      %v1456 = vadd.f32 %v1437, %v1455
      %1457 = vdwg.mxu0
      %1458 = vmatpush.bf16.msra.mxu0 %v1371
      %1459 = vmatpush.bf16.msra.mxu0 %v1369
      %1460 = vmatpush.bf16.msra.mxu0 %v1367
      %1461 = vmatpush.bf16.msra.mxu0 %v1365
      %1462 = vmatpush.bf16.msra.mxu0 %v1363
      %1463 = vmatpush.bf16.msra.mxu0 %v1361
      %1464 = vmatpush.bf16.msra.mxu0 %v1359
      %1465 = vmatpush.bf16.msra.mxu0 %v1357
      %1466 = vmatmul.bf16.gmra.mxu0 %v1251
      %v1467 = vpop.f32.mrf.mxu0
      %v1468 = vadd.f32 0.0, %v1467
      %v1469 = vpop.f32.mrf.mxu0
      %v1470 = vadd.f32 0.0, %v1469
      %1471 = vmatmul.bf16.gmra.mxu0 %v1253
      %v1472 = vpop.f32.mrf.mxu0
      %v1473 = vadd.f32 0.0, %v1472
      %v1474 = vpop.f32.mrf.mxu0
      %v1475 = vadd.f32 0.0, %v1474
      %1476 = vdwg.mxu0
      %1477 = vmatpush.bf16.msra.mxu0 %v1387
      %1478 = vmatpush.bf16.msra.mxu0 %v1385
      %1479 = vmatpush.bf16.msra.mxu0 %v1383
      %1480 = vmatpush.bf16.msra.mxu0 %v1381
      %1481 = vmatpush.bf16.msra.mxu0 %v1379
      %1482 = vmatpush.bf16.msra.mxu0 %v1377
      %1483 = vmatpush.bf16.msra.mxu0 %v1375
      %1484 = vmatpush.bf16.msra.mxu0 %v1373
      %1485 = vmatmul.bf16.gmra.mxu0 %v1252
      %v1486 = vpop.f32.mrf.mxu0
      %v1487 = vadd.f32 %v1468, %v1486
      %v1488 = vpop.f32.mrf.mxu0
      %v1489 = vadd.f32 %v1470, %v1488
      %1490 = vmatmul.bf16.gmra.mxu0 %v1254
      %v1491 = vpop.f32.mrf.mxu0
      %v1492 = vadd.f32 %v1473, %v1491
      %v1493 = vpop.f32.mrf.mxu0
      %v1494 = vadd.f32 %v1475, %v1493
      %1495 = vdwg.mxu0
      %v1496 = vadd.f32 %v1187, %v1449
      %v1497 = vadd.f32 %v1225, %v1487
      %v1498 = vadd.f32 %v1189, %v1451
      %v1499 = vadd.f32 %v1227, %v1489
      %v1500 = vadd.f32 %v1192, %v1454
      %v1501 = vadd.f32 %v1230, %v1492
      %v1502 = vadd.f32 %v1194, %v1456
      %v1503 = vadd.f32 %v1232, %v1494
      %s1504 = scalar_lea.vmem %s3, 96
      %v1505 = vld [vmem:[%s1504] sm:$0xff]
      %v1506 = vld [vmem:[%s1504 + $0x8] sm:$0xff]
      %v1507 = vld [vmem:[%s1504 + $0x10] sm:$0xff]
      %v1508 = vld [vmem:[%s1504 + $0x18] sm:$0xff]
      %v1513 = vunpack.c.l.b16 %v1505
      %v1514 = vunpack.c.h.b16 %v1505
      %v1515 = vunpack.c.l.b16 %v1506
      %v1516 = vunpack.c.h.b16 %v1506
      %v1517 = vunpack.c.l.b16 %v1507
      %v1518 = vunpack.c.h.b16 %v1507
      %v1519 = vunpack.c.l.b16 %v1508
      %v1520 = vunpack.c.h.b16 %v1508
      %v1521 = vpack.c.b16 %v1515, %v1513
      %v1522 = vpack.c.b16 %v1516, %v1514
      %v1523 = vpack.c.b16 %v1519, %v1517
      %v1524 = vpack.c.b16 %v1520, %v1518
      %1529 = vrot.lane.b32.xlu0 %v600, 125
      %v1530 = vpop.permute.xlu0 %1529
      %1531 = vrot.lane.b32.xlu0 %v601, 125
      %v1532 = vpop.permute.xlu0 %1531
      %1533 = vrot.lane.b32.xlu0 %v602, 125
      %v1534 = vpop.permute.xlu0 %1533
      %1535 = vrot.lane.b32.xlu0 %v603, 125
      %v1536 = vpop.permute.xlu0 %1535
      %1537 = vrot.lane.b32.xlu0 %v604, 125
      %v1538 = vpop.permute.xlu0 %1537
      %1539 = vrot.lane.b32.xlu0 %v605, 125
      %v1540 = vpop.permute.xlu0 %1539
      %1541 = vrot.lane.b32.xlu0 %v606, 125
      %v1542 = vpop.permute.xlu0 %1541
      %1543 = vrot.lane.b32.xlu0 %v607, 125
      %v1544 = vpop.permute.xlu0 %1543
      %1545 = vrot.lane.b32.xlu0 %v608, 125
      %v1546 = vpop.permute.xlu0 %1545
      %1547 = vrot.lane.b32.xlu0 %v609, 125
      %v1548 = vpop.permute.xlu0 %1547
      %1549 = vrot.lane.b32.xlu0 %v610, 125
      %v1550 = vpop.permute.xlu0 %1549
      %1551 = vrot.lane.b32.xlu0 %v611, 125
      %v1552 = vpop.permute.xlu0 %1551
      %1553 = vrot.lane.b32.xlu0 %v613, 125
      %v1554 = vpop.permute.xlu0 %1553
      %1555 = vrot.lane.b32.xlu0 %v637, 125
      %v1556 = vpop.permute.xlu0 %1555
      %1557 = vrot.lane.b32.xlu0 %v638, 125
      %v1558 = vpop.permute.xlu0 %1557
      %1559 = vrot.lane.b32.xlu0 %v619, 125
      %v1560 = vpop.permute.xlu0 %1559
      %1561 = vrot.lane.b32.xlu0 %v639, 125
      %v1562 = vpop.permute.xlu0 %1561
      %1563 = vrot.lane.b32.xlu0 %v640, 125
      %v1564 = vpop.permute.xlu0 %1563
      %1565 = vrot.lane.b32.xlu0 %v625, 125
      %v1566 = vpop.permute.xlu0 %1565
      %1567 = vrot.lane.b32.xlu0 %v641, 125
      %v1568 = vpop.permute.xlu0 %1567
      %1569 = vrot.lane.b32.xlu0 %v642, 125
      %v1570 = vpop.permute.xlu0 %1569
      %1571 = vrot.lane.b32.xlu0 %v631, 125
      %v1572 = vpop.permute.xlu0 %1571
      %1573 = vrot.lane.b32.xlu0 %v643, 125
      %v1574 = vpop.permute.xlu0 %1573
      %1575 = vrot.lane.b32.xlu0 %v644, 125
      %v1576 = vpop.permute.xlu0 %1575
      %1577 = vrot.lane.b32.xlu0 %v646, 125
      %v1578 = vpop.permute.xlu0 %1577
      %1579 = vrot.lane.b32.xlu0 %v670, 125
      %v1580 = vpop.permute.xlu0 %1579
      %1581 = vrot.lane.b32.xlu0 %v671, 125
      %v1582 = vpop.permute.xlu0 %1581
      %1583 = vrot.lane.b32.xlu0 %v652, 125
      %v1584 = vpop.permute.xlu0 %1583
      %1585 = vrot.lane.b32.xlu0 %v672, 125
      %v1586 = vpop.permute.xlu0 %1585
      %1587 = vrot.lane.b32.xlu0 %v673, 125
      %v1588 = vpop.permute.xlu0 %1587
      %1589 = vrot.lane.b32.xlu0 %v658, 125
      %v1590 = vpop.permute.xlu0 %1589
      %1591 = vrot.lane.b32.xlu0 %v674, 125
      %v1592 = vpop.permute.xlu0 %1591
      %1593 = vrot.lane.b32.xlu0 %v675, 125
      %v1594 = vpop.permute.xlu0 %1593
      %1595 = vrot.lane.b32.xlu0 %v664, 125
      %v1596 = vpop.permute.xlu0 %1595
      %1597 = vrot.lane.b32.xlu0 %v676, 125
      %v1598 = vpop.permute.xlu0 %1597
      %1599 = vrot.lane.b32.xlu0 %v677, 125
      %v1600 = vpop.permute.xlu0 %1599
      %1601 = vrot.lane.b32.xlu0 %v679, 125
      %v1602 = vpop.permute.xlu0 %1601
      %1603 = vrot.lane.b32.xlu0 %v703, 125
      %v1604 = vpop.permute.xlu0 %1603
      %1605 = vrot.lane.b32.xlu0 %v681, 125
      %v1606 = vpop.permute.xlu0 %1605
      %1607 = vrot.lane.b32.xlu0 %v685, 125
      %v1608 = vpop.permute.xlu0 %1607
      %1609 = vrot.lane.b32.xlu0 %v705, 125
      %v1610 = vpop.permute.xlu0 %1609
      %1611 = vrot.lane.b32.xlu0 %v687, 125
      %v1612 = vpop.permute.xlu0 %1611
      %1613 = vrot.lane.b32.xlu0 %v691, 125
      %v1614 = vpop.permute.xlu0 %1613
      %1615 = vrot.lane.b32.xlu0 %v707, 125
      %v1616 = vpop.permute.xlu0 %1615
      %1617 = vrot.lane.b32.xlu0 %v693, 125
      %v1618 = vpop.permute.xlu0 %1617
      %1619 = vrot.lane.b32.xlu0 %v697, 125
      %v1620 = vpop.permute.xlu0 %1619
      %1621 = vrot.lane.b32.xlu0 %v709, 125
      %v1622 = vpop.permute.xlu0 %1621
      %1623 = vrot.lane.b32.xlu0 %v699, 125
      %v1624 = vpop.permute.xlu0 %1623
      %vm1625 = vcmask 1022976
      %v1626 = vsel %vm1625, %v1530, %v1532
      %v1627 = vsel %vm1625, %v1532, %v1534
      %v1628 = vsel %vm1625, %v1536, %v1538
      %v1629 = vsel %vm1625, %v1538, %v1540
      %v1630 = vsel %vm1625, %v1542, %v1544
      %v1631 = vsel %vm1625, %v1544, %v1546
      %v1632 = vsel %vm1625, %v1548, %v1550
      %v1633 = vsel %vm1625, %v1550, %v1552
      %v1634 = vsel %vm1625, %v1554, %v1556
      %v1635 = vsel %vm1625, %v1556, %v1558
      %v1636 = vsel %vm1625, %v1560, %v1562
      %v1637 = vsel %vm1625, %v1562, %v1564
      %v1638 = vsel %vm1625, %v1566, %v1568
      %v1639 = vsel %vm1625, %v1568, %v1570
      %v1640 = vsel %vm1625, %v1572, %v1574
      %v1641 = vsel %vm1625, %v1574, %v1576
      %v1642 = vsel %vm1625, %v1578, %v1580
      %v1643 = vsel %vm1625, %v1580, %v1582
      %v1644 = vsel %vm1625, %v1584, %v1586
      %v1645 = vsel %vm1625, %v1586, %v1588
      %v1646 = vsel %vm1625, %v1590, %v1592
      %v1647 = vsel %vm1625, %v1592, %v1594
      %v1648 = vsel %vm1625, %v1596, %v1598
      %v1649 = vsel %vm1625, %v1598, %v1600
      %v1650 = vsel %vm1625, %v1602, %v1604
      %v1651 = vsel %vm1625, %v1604, %v1606
      %v1652 = vsel %vm1625, %v1608, %v1610
      %v1653 = vsel %vm1625, %v1610, %v1612
      %v1654 = vsel %vm1625, %v1614, %v1616
      %v1655 = vsel %vm1625, %v1616, %v1618
      %v1656 = vsel %vm1625, %v1620, %v1622
      %v1657 = vsel %vm1625, %v1622, %v1624
      %1690 = vmatpush.bf16.msra.mxu0 %v1640
      %1691 = vmatpush.bf16.msra.mxu0 %v1638
      %1692 = vmatpush.bf16.msra.mxu0 %v1636
      %1693 = vmatpush.bf16.msra.mxu0 %v1634
      %1694 = vmatpush.bf16.msra.mxu0 %v1632
      %1695 = vmatpush.bf16.msra.mxu0 %v1630
      %1696 = vmatpush.bf16.msra.mxu0 %v1628
      %1697 = vmatpush.bf16.msra.mxu0 %v1626
      %1698 = vmatmul.bf16.gmra.mxu0 %v1521
      %v1699 = vpop.f32.mrf.mxu0
      %v1700 = vadd.f32 0.0, %v1699
      %v1701 = vpop.f32.mrf.mxu0
      %v1702 = vadd.f32 0.0, %v1701
      %1703 = vmatmul.bf16.gmra.mxu0 %v1523
      %v1704 = vpop.f32.mrf.mxu0
      %v1705 = vadd.f32 0.0, %v1704
      %v1706 = vpop.f32.mrf.mxu0
      %v1707 = vadd.f32 0.0, %v1706
      %1708 = vdwg.mxu0
      %1709 = vmatpush.bf16.msra.mxu0 %v1656
      %1710 = vmatpush.bf16.msra.mxu0 %v1654
      %1711 = vmatpush.bf16.msra.mxu0 %v1652
      %1712 = vmatpush.bf16.msra.mxu0 %v1650
      %1713 = vmatpush.bf16.msra.mxu0 %v1648
      %1714 = vmatpush.bf16.msra.mxu0 %v1646
      %1715 = vmatpush.bf16.msra.mxu0 %v1644
      %1716 = vmatpush.bf16.msra.mxu0 %v1642
      %1717 = vmatmul.bf16.gmra.mxu0 %v1522
      %v1718 = vpop.f32.mrf.mxu0
      %v1719 = vadd.f32 %v1700, %v1718
      %v1720 = vpop.f32.mrf.mxu0
      %v1721 = vadd.f32 %v1702, %v1720
      %1722 = vmatmul.bf16.gmra.mxu0 %v1524
      %v1723 = vpop.f32.mrf.mxu0
      %v1724 = vadd.f32 %v1705, %v1723
      %v1725 = vpop.f32.mrf.mxu0
      %v1726 = vadd.f32 %v1707, %v1725
      %1727 = vdwg.mxu0
      %1728 = vmatpush.bf16.msra.mxu0 %v1641
      %1729 = vmatpush.bf16.msra.mxu0 %v1639
      %1730 = vmatpush.bf16.msra.mxu0 %v1637
      %1731 = vmatpush.bf16.msra.mxu0 %v1635
      %1732 = vmatpush.bf16.msra.mxu0 %v1633
      %1733 = vmatpush.bf16.msra.mxu0 %v1631
      %1734 = vmatpush.bf16.msra.mxu0 %v1629
      %1735 = vmatpush.bf16.msra.mxu0 %v1627
      %1736 = vmatmul.bf16.gmra.mxu0 %v1521
      %v1737 = vpop.f32.mrf.mxu0
      %v1738 = vadd.f32 0.0, %v1737
      %v1739 = vpop.f32.mrf.mxu0
      %v1740 = vadd.f32 0.0, %v1739
      %1741 = vmatmul.bf16.gmra.mxu0 %v1523
      %v1742 = vpop.f32.mrf.mxu0
      %v1743 = vadd.f32 0.0, %v1742
      %v1744 = vpop.f32.mrf.mxu0
      %v1745 = vadd.f32 0.0, %v1744
      %1746 = vdwg.mxu0
      %1747 = vmatpush.bf16.msra.mxu0 %v1657
      %1748 = vmatpush.bf16.msra.mxu0 %v1655
      %1749 = vmatpush.bf16.msra.mxu0 %v1653
      %1750 = vmatpush.bf16.msra.mxu0 %v1651
      %1751 = vmatpush.bf16.msra.mxu0 %v1649
      %1752 = vmatpush.bf16.msra.mxu0 %v1647
      %1753 = vmatpush.bf16.msra.mxu0 %v1645
      %1754 = vmatpush.bf16.msra.mxu0 %v1643
      %1755 = vmatmul.bf16.gmra.mxu0 %v1522
      %v1756 = vpop.f32.mrf.mxu0
      %v1757 = vadd.f32 %v1738, %v1756
      %v1758 = vpop.f32.mrf.mxu0
      %v1759 = vadd.f32 %v1740, %v1758
      %1760 = vmatmul.bf16.gmra.mxu0 %v1524
      %v1761 = vpop.f32.mrf.mxu0
      %v1762 = vadd.f32 %v1743, %v1761
      %v1763 = vpop.f32.mrf.mxu0
      %v1764 = vadd.f32 %v1745, %v1763
      %1765 = vdwg.mxu0
      %v1766 = vadd.f32 %v1496, %v1719
      %v1767 = vadd.f32 %v1497, %v1757
      %v1768 = vadd.f32 %v1498, %v1721
      %v1769 = vadd.f32 %v1499, %v1759
      %v1770 = vadd.f32 %v1500, %v1724
      %v1771 = vadd.f32 %v1501, %v1762
      %v1772 = vadd.f32 %v1502, %v1726
      %v1773 = vadd.f32 %v1503, %v1764
      %v1774 = vld [vmem:[%s4] sm:$0xff]
      %v1775 = vld [vmem:[%s4 + $0x8] sm:$0xff]
      %v1776 = vld [vmem:[%s4 + $0x10] sm:$0xff]
      %v1777 = vld [vmem:[%s4 + $0x18] sm:$0xff]
      %1779 = vset.pattern.permute.xlu0 0
      %1780 = vperm.xlu0 %1779, %v1774
      %v1781 = vpop.permute.xlu0 %1780
      %1784 = vset.pattern.permute.xlu0 0
      %1785 = vperm.xlu0 %1784, %v1775
      %v1786 = vpop.permute.xlu0 %1785
      %1789 = vset.pattern.permute.xlu0 0
      %1790 = vperm.xlu0 %1789, %v1776
      %v1791 = vpop.permute.xlu0 %1790
      %1794 = vset.pattern.permute.xlu0 0
      %1795 = vperm.xlu0 %1794, %v1777
      %v1796 = vpop.permute.xlu0 %1795
      %v1798 = vadd.f32 %v1766, %v1781
      %v1799 = vadd.f32 %v1767, %v1781
      %v1800 = vadd.f32 %v1768, %v1786
      %v1801 = vadd.f32 %v1769, %v1786
      %v1802 = vadd.f32 %v1770, %v1791
      %v1803 = vadd.f32 %v1771, %v1791
      %v1804 = vadd.f32 %v1772, %v1796
      %v1805 = vadd.f32 %v1773, %v1796
      %v1806 = vmax.f32 %v1798, 0.0
      %v1807 = vmax.f32 %v1799, 0.0
      %v1808 = vmax.f32 %v1800, 0.0
      %v1809 = vmax.f32 %v1801, 0.0
      %v1810 = vmax.f32 %v1802, 0.0
      %v1811 = vmax.f32 %v1803, 0.0
      %v1812 = vmax.f32 %v1804, 0.0
      %v1813 = vmax.f32 %v1805, 0.0
      %v1814 = vpack.c.bf16 %v1808, %v1806
      %v1815 = vpack.c.bf16 %v1809, %v1807
      %v1816 = vpack.c.bf16 %v1812, %v1810
      %v1817 = vpack.c.bf16 %v1813, %v1811
      %v1818 = vld [vmem:[%s2] sm:$0xff]
      %v1819 = vld [vmem:[%s2 + $0x8] sm:$0xff]
      %v1820 = vld [vmem:[%s2 + $0x10] sm:$0xff]
      %v1821 = vld [vmem:[%s2 + $0x18] sm:$0xff]
      %v1822 = vld [vmem:[%s2 + $0x20] sm:$0xff]
      %v1823 = vld [vmem:[%s2 + $0x28] sm:$0xff]
      %v1824 = vld [vmem:[%s2 + $0x30] sm:$0xff]
      %v1825 = vld [vmem:[%s2 + $0x38] sm:$0xff]
      %v1826 = vld [vmem:[%s2 + $0x40] sm:$0xff]
      %v1827 = vld [vmem:[%s2 + $0x48] sm:$0xff]
      %v1828 = vld [vmem:[%s2 + $0x50] sm:$0xff]
      %v1829 = vld [vmem:[%s2 + $0x58] sm:$0xff]
      %v1830 = vld [vmem:[%s2 + $0x60] sm:$0xff]
      %v1831 = vld [vmem:[%s2 + $0x68] sm:$0xff]
      %v1832 = vld [vmem:[%s2 + $0x70] sm:$0xff]
      %v1833 = vld [vmem:[%s2 + $0x78] sm:$0xff]
      %v1834 = vld [vmem:[%s2 + $0x80] sm:$0xff]
      %v1835 = vld [vmem:[%s2 + $0x88] sm:$0xff]
      %v1836 = vld [vmem:[%s2 + $0x90] sm:$0xff]
      %v1837 = vld [vmem:[%s2 + $0x98] sm:$0xff]
      %v1838 = vld [vmem:[%s2 + $0xa0] sm:$0xff]
      %v1839 = vld [vmem:[%s2 + $0xa8] sm:$0xff]
      %v1840 = vld [vmem:[%s2 + $0xb0] sm:$0xff]
      %v1841 = vld [vmem:[%s2 + $0xb8] sm:$0xff]
      %v1842 = vld [vmem:[%s2 + $0xc0] sm:$0xff]
      %v1843 = vld [vmem:[%s2 + $0xc8] sm:$0xff]
      %v1844 = vld [vmem:[%s2 + $0xd0] sm:$0xff]
      %v1845 = vld [vmem:[%s2 + $0xd8] sm:$0xff]
      %v1846 = vld [vmem:[%s2 + $0xe0] sm:$0xff]
      %v1847 = vld [vmem:[%s2 + $0xe8] sm:$0xff]
      %v1848 = vld [vmem:[%s2 + $0xf0] sm:$0xff]
      %v1849 = vld [vmem:[%s2 + $0xf8] sm:$0xff]
      %v1850 = vld [vmem:[%s2 + $0x100] sm:$0xff]
      %v1851 = vld [vmem:[%s2 + $0x108] sm:$0xff]
      %v1852 = vld [vmem:[%s2 + $0x110] sm:$0xff]
      %v1853 = vld [vmem:[%s2 + $0x118] sm:$0xff]
      %v1854 = vld [vmem:[%s2 + $0x120] sm:$0xff]
      %v1855 = vld [vmem:[%s2 + $0x128] sm:$0xff]
      %v1856 = vld [vmem:[%s2 + $0x130] sm:$0xff]
      %v1857 = vld [vmem:[%s2 + $0x138] sm:$0xff]
      %v1858 = vld [vmem:[%s2 + $0x140] sm:$0xff]
      %v1859 = vld [vmem:[%s2 + $0x148] sm:$0xff]
      %v1860 = vld [vmem:[%s2 + $0x150] sm:$0xff]
      %v1861 = vld [vmem:[%s2 + $0x158] sm:$0xff]
      %v1862 = vld [vmem:[%s2 + $0x160] sm:$0xff]
      %v1863 = vld [vmem:[%s2 + $0x168] sm:$0xff]
      %v1864 = vld [vmem:[%s2 + $0x170] sm:$0xff]
      %v1865 = vld [vmem:[%s2 + $0x178] sm:$0xff]
      %v1866 = vld [vmem:[%s2 + $0x180] sm:$0xff]
      %v1867 = vld [vmem:[%s2 + $0x188] sm:$0xff]
      %v1868 = vld [vmem:[%s2 + $0x190] sm:$0xff]
      %v1869 = vld [vmem:[%s2 + $0x198] sm:$0xff]
      %v1870 = vld [vmem:[%s2 + $0x1a0] sm:$0xff]
      %v1871 = vld [vmem:[%s2 + $0x1a8] sm:$0xff]
      %v1872 = vld [vmem:[%s2 + $0x1b0] sm:$0xff]
      %v1873 = vld [vmem:[%s2 + $0x1b8] sm:$0xff]
      %v1874 = vld [vmem:[%s2 + $0x1c0] sm:$0xff]
      %v1875 = vld [vmem:[%s2 + $0x1c8] sm:$0xff]
      %v1876 = vld [vmem:[%s2 + $0x1d0] sm:$0xff]
      %v1877 = vld [vmem:[%s2 + $0x1d8] sm:$0xff]
      %v1878 = vld [vmem:[%s2 + $0x1e0] sm:$0xff]
      %v1879 = vld [vmem:[%s2 + $0x1e8] sm:$0xff]
      %v1880 = vld [vmem:[%s2 + $0x1f0] sm:$0xff]
      %v1881 = vld [vmem:[%s2 + $0x1f8] sm:$0xff]
      %v1882 = vld [vmem:[%s2 + $0x200] sm:$0xff]
      %v1883 = vld [vmem:[%s2 + $0x208] sm:$0xff]
      %v1884 = vld [vmem:[%s2 + $0x210] sm:$0xff]
      %v1885 = vld [vmem:[%s2 + $0x218] sm:$0xff]
      %v1886 = vld [vmem:[%s2 + $0x220] sm:$0xff]
      %v1887 = vld [vmem:[%s2 + $0x228] sm:$0xff]
      %v1888 = vld [vmem:[%s2 + $0x230] sm:$0xff]
      %v1889 = vld [vmem:[%s2 + $0x238] sm:$0xff]
      %v1890 = vld [vmem:[%s2 + $0x240] sm:$0xff]
      %v1891 = vld [vmem:[%s2 + $0x248] sm:$0xff]
      %v1892 = vld [vmem:[%s2 + $0x250] sm:$0xff]
      %v1893 = vld [vmem:[%s2 + $0x258] sm:$0xff]
      %v1894 = vld [vmem:[%s2 + $0x260] sm:$0xff]
      %v1895 = vld [vmem:[%s2 + $0x268] sm:$0xff]
      %v1896 = vld [vmem:[%s2 + $0x270] sm:$0xff]
      %v1897 = vld [vmem:[%s2 + $0x278] sm:$0xff]
      %v1898 = vld [vmem:[%s2 + $0x280] sm:$0xff]
      %v1899 = vld [vmem:[%s2 + $0x288] sm:$0xff]
      %v1900 = vld [vmem:[%s2 + $0x290] sm:$0xff]
      %v1901 = vld [vmem:[%s2 + $0x298] sm:$0xff]
      %v1902 = vld [vmem:[%s2 + $0x2a0] sm:$0xff]
      %v1903 = vld [vmem:[%s2 + $0x2a8] sm:$0xff]
      %v1904 = vld [vmem:[%s2 + $0x2b0] sm:$0xff]
      %v1905 = vld [vmem:[%s2 + $0x2b8] sm:$0xff]
      %v1906 = vld [vmem:[%s2 + $0x2c0] sm:$0xff]
      %v1907 = vld [vmem:[%s2 + $0x2c8] sm:$0xff]
      %v1908 = vld [vmem:[%s2 + $0x2d0] sm:$0xff]
      %v1909 = vld [vmem:[%s2 + $0x2d8] sm:$0xff]
      %v1910 = vld [vmem:[%s2 + $0x2e0] sm:$0xff]
      %v1911 = vld [vmem:[%s2 + $0x2e8] sm:$0xff]
      %v1912 = vld [vmem:[%s2 + $0x2f0] sm:$0xff]
      %v1913 = vld [vmem:[%s2 + $0x2f8] sm:$0xff]
      %v1914 = vld [vmem:[%s2 + $0x300] sm:$0xff]
      %v1915 = vld [vmem:[%s2 + $0x308] sm:$0xff]
      %v1916 = vld [vmem:[%s2 + $0x310] sm:$0xff]
      %v1917 = vld [vmem:[%s2 + $0x318] sm:$0xff]
      %v1918 = vld [vmem:[%s2 + $0x320] sm:$0xff]
      %v1919 = vld [vmem:[%s2 + $0x328] sm:$0xff]
      %v1920 = vld [vmem:[%s2 + $0x330] sm:$0xff]
      %v1921 = vld [vmem:[%s2 + $0x338] sm:$0xff]
      %v1922 = vld [vmem:[%s2 + $0x340] sm:$0xff]
      %v1923 = vld [vmem:[%s2 + $0x348] sm:$0xff]
      %v1924 = vld [vmem:[%s2 + $0x350] sm:$0xff]
      %v1925 = vld [vmem:[%s2 + $0x358] sm:$0xff]
      %v1926 = vld [vmem:[%s2 + $0x360] sm:$0xff]
      %v1927 = vld [vmem:[%s2 + $0x368] sm:$0xff]
      %v1928 = vld [vmem:[%s2 + $0x370] sm:$0xff]
      %v1929 = vld [vmem:[%s2 + $0x378] sm:$0xff]
      %v1930 = vld [vmem:[%s2 + $0x380] sm:$0xff]
      %v1931 = vld [vmem:[%s2 + $0x388] sm:$0xff]
      %v1932 = vld [vmem:[%s2 + $0x390] sm:$0xff]
      %v1933 = vld [vmem:[%s2 + $0x398] sm:$0xff]
      %v1934 = vld [vmem:[%s2 + $0x3a0] sm:$0xff]
      %v1935 = vld [vmem:[%s2 + $0x3a8] sm:$0xff]
      %v1936 = vld [vmem:[%s2 + $0x3b0] sm:$0xff]
      %v1937 = vld [vmem:[%s2 + $0x3b8] sm:$0xff]
      %v1938 = vld [vmem:[%s2 + $0x3c0] sm:$0xff]
      %v1939 = vld [vmem:[%s2 + $0x3c8] sm:$0xff]
      %v1940 = vld [vmem:[%s2 + $0x3d0] sm:$0xff]
      %v1941 = vld [vmem:[%s2 + $0x3d8] sm:$0xff]
      %v1942 = vld [vmem:[%s2 + $0x3e0] sm:$0xff]
      %v1943 = vld [vmem:[%s2 + $0x3e8] sm:$0xff]
      %v1944 = vld [vmem:[%s2 + $0x3f0] sm:$0xff]
      %v1945 = vld [vmem:[%s2 + $0x3f8] sm:$0xff]
      %v1946 = vld [vmem:[%s2 + $0x400] sm:$0xff]
      %v1947 = vld [vmem:[%s2 + $0x408] sm:$0xff]
      %v1948 = vld [vmem:[%s2 + $0x410] sm:$0xff]
      %v1949 = vld [vmem:[%s2 + $0x418] sm:$0xff]
      %v1950 = vld [vmem:[%s2 + $0x420] sm:$0xff]
      %v1951 = vld [vmem:[%s2 + $0x428] sm:$0xff]
      %v1952 = vld [vmem:[%s2 + $0x430] sm:$0xff]
      %v1953 = vld [vmem:[%s2 + $0x438] sm:$0xff]
      %v1954 = vld [vmem:[%s2 + $0x440] sm:$0xff]
      %v1955 = vld [vmem:[%s2 + $0x448] sm:$0xff]
      %v1956 = vld [vmem:[%s2 + $0x450] sm:$0xff]
      %v1957 = vld [vmem:[%s2 + $0x458] sm:$0xff]
      %v1958 = vld [vmem:[%s2 + $0x460] sm:$0xff]
      %v1959 = vld [vmem:[%s2 + $0x468] sm:$0xff]
      %v1960 = vld [vmem:[%s2 + $0x470] sm:$0xff]
      %v1961 = vld [vmem:[%s2 + $0x478] sm:$0xff]
      %v1962 = vld [vmem:[%s2 + $0x480] sm:$0xff]
      %v1963 = vld [vmem:[%s2 + $0x488] sm:$0xff]
      %v1964 = vld [vmem:[%s2 + $0x490] sm:$0xff]
      %v1965 = vld [vmem:[%s2 + $0x498] sm:$0xff]
      %v1966 = vld [vmem:[%s2 + $0x4a0] sm:$0xff]
      %v1967 = vld [vmem:[%s2 + $0x4a8] sm:$0xff]
      %v1968 = vld [vmem:[%s2 + $0x4b0] sm:$0xff]
      %v1969 = vld [vmem:[%s2 + $0x4b8] sm:$0xff]
      %v1970 = vld [vmem:[%s2 + $0x4c0] sm:$0xff]
      %v1971 = vld [vmem:[%s2 + $0x4c8] sm:$0xff]
      %v1972 = vld [vmem:[%s2 + $0x4d0] sm:$0xff]
      %v1973 = vld [vmem:[%s2 + $0x4d8] sm:$0xff]
      %v1974 = vld [vmem:[%s2 + $0x4e0] sm:$0xff]
      %v1975 = vld [vmem:[%s2 + $0x4e8] sm:$0xff]
      %v1976 = vld [vmem:[%s2 + $0x4f0] sm:$0xff]
      %v1977 = vld [vmem:[%s2 + $0x4f8] sm:$0xff]
      %v2138 = vunpack.c.l.b16 %v1818
      %v2139 = vunpack.c.h.b16 %v1818
      %v2140 = vunpack.c.l.b16 %v1819
      %v2141 = vunpack.c.h.b16 %v1819
      %v2142 = vunpack.c.l.b16 %v1820
      %v2143 = vunpack.c.h.b16 %v1820
      %v2144 = vunpack.c.l.b16 %v1821
      %v2145 = vunpack.c.h.b16 %v1821
      %v2146 = vunpack.c.l.b16 %v1822
      %v2147 = vunpack.c.h.b16 %v1822
      %v2148 = vunpack.c.l.b16 %v1823
      %v2149 = vunpack.c.h.b16 %v1823
      %v2150 = vunpack.c.l.b16 %v1824
      %v2151 = vunpack.c.h.b16 %v1824
      %v2152 = vunpack.c.l.b16 %v1825
      %v2153 = vunpack.c.h.b16 %v1825
      %v2154 = vunpack.c.l.b16 %v1826
      %v2155 = vunpack.c.h.b16 %v1826
      %v2156 = vunpack.c.l.b16 %v1827
      %v2157 = vunpack.c.h.b16 %v1827
      %v2158 = vunpack.c.l.b16 %v1828
      %v2159 = vunpack.c.h.b16 %v1828
      %v2160 = vunpack.c.l.b16 %v1829
      %v2161 = vunpack.c.h.b16 %v1829
      %v2162 = vunpack.c.l.b16 %v1830
      %v2163 = vunpack.c.h.b16 %v1830
      %v2164 = vunpack.c.l.b16 %v1831
      %v2165 = vunpack.c.h.b16 %v1831
      %v2166 = vunpack.c.l.b16 %v1832
      %v2167 = vunpack.c.h.b16 %v1832
      %v2168 = vunpack.c.l.b16 %v1833
      %v2169 = vunpack.c.h.b16 %v1833
      %v2170 = vunpack.c.l.b16 %v1834
      %v2171 = vunpack.c.h.b16 %v1834
      %v2172 = vunpack.c.l.b16 %v1835
      %v2173 = vunpack.c.h.b16 %v1835
      %v2174 = vunpack.c.l.b16 %v1836
      %v2175 = vunpack.c.h.b16 %v1836
      %v2176 = vunpack.c.l.b16 %v1837
      %v2177 = vunpack.c.h.b16 %v1837
      %v2178 = vunpack.c.l.b16 %v1838
      %v2179 = vunpack.c.h.b16 %v1838
      %v2180 = vunpack.c.l.b16 %v1839
      %v2181 = vunpack.c.h.b16 %v1839
      %v2182 = vunpack.c.l.b16 %v1840
      %v2183 = vunpack.c.h.b16 %v1840
      %v2184 = vunpack.c.l.b16 %v1841
      %v2185 = vunpack.c.h.b16 %v1841
      %v2186 = vunpack.c.l.b16 %v1842
      %v2187 = vunpack.c.h.b16 %v1842
      %v2188 = vunpack.c.l.b16 %v1843
      %v2189 = vunpack.c.h.b16 %v1843
      %v2190 = vunpack.c.l.b16 %v1844
      %v2191 = vunpack.c.h.b16 %v1844
      %v2192 = vunpack.c.l.b16 %v1845
      %v2193 = vunpack.c.h.b16 %v1845
      %v2194 = vunpack.c.l.b16 %v1846
      %v2195 = vunpack.c.h.b16 %v1846
      %v2196 = vunpack.c.l.b16 %v1847
      %v2197 = vunpack.c.h.b16 %v1847
      %v2198 = vunpack.c.l.b16 %v1848
      %v2199 = vunpack.c.h.b16 %v1848
      %v2200 = vunpack.c.l.b16 %v1849
      %v2201 = vunpack.c.h.b16 %v1849
      %v2202 = vunpack.c.l.b16 %v1850
      %v2203 = vunpack.c.h.b16 %v1850
      %v2204 = vunpack.c.l.b16 %v1851
      %v2205 = vunpack.c.h.b16 %v1851
      %v2206 = vunpack.c.l.b16 %v1852
      %v2207 = vunpack.c.h.b16 %v1852
      %v2208 = vunpack.c.l.b16 %v1853
      %v2209 = vunpack.c.h.b16 %v1853
      %v2210 = vunpack.c.l.b16 %v1854
      %v2211 = vunpack.c.h.b16 %v1854
      %v2212 = vunpack.c.l.b16 %v1855
      %v2213 = vunpack.c.h.b16 %v1855
      %v2214 = vunpack.c.l.b16 %v1856
      %v2215 = vunpack.c.h.b16 %v1856
      %v2216 = vunpack.c.l.b16 %v1857
      %v2217 = vunpack.c.h.b16 %v1857
      %v2218 = vunpack.c.l.b16 %v1858
      %v2219 = vunpack.c.h.b16 %v1858
      %v2220 = vunpack.c.l.b16 %v1859
      %v2221 = vunpack.c.h.b16 %v1859
      %v2222 = vunpack.c.l.b16 %v1860
      %v2223 = vunpack.c.h.b16 %v1860
      %v2224 = vunpack.c.l.b16 %v1861
      %v2225 = vunpack.c.h.b16 %v1861
      %v2226 = vunpack.c.l.b16 %v1862
      %v2227 = vunpack.c.h.b16 %v1862
      %v2228 = vunpack.c.l.b16 %v1863
      %v2229 = vunpack.c.h.b16 %v1863
      %v2230 = vunpack.c.l.b16 %v1864
      %v2231 = vunpack.c.h.b16 %v1864
      %v2232 = vunpack.c.l.b16 %v1865
      %v2233 = vunpack.c.h.b16 %v1865
      %v2234 = vunpack.c.l.b16 %v1866
      %v2235 = vunpack.c.h.b16 %v1866
      %v2236 = vunpack.c.l.b16 %v1867
      %v2237 = vunpack.c.h.b16 %v1867
      %v2238 = vunpack.c.l.b16 %v1868
      %v2239 = vunpack.c.h.b16 %v1868
      %v2240 = vunpack.c.l.b16 %v1869
      %v2241 = vunpack.c.h.b16 %v1869
      %v2242 = vunpack.c.l.b16 %v1870
      %v2243 = vunpack.c.h.b16 %v1870
      %v2244 = vunpack.c.l.b16 %v1871
      %v2245 = vunpack.c.h.b16 %v1871
      %v2246 = vunpack.c.l.b16 %v1872
      %v2247 = vunpack.c.h.b16 %v1872
      %v2248 = vunpack.c.l.b16 %v1873
      %v2249 = vunpack.c.h.b16 %v1873
      %v2250 = vunpack.c.l.b16 %v1874
      %v2251 = vunpack.c.h.b16 %v1874
      %v2252 = vunpack.c.l.b16 %v1875
      %v2253 = vunpack.c.h.b16 %v1875
      %v2254 = vunpack.c.l.b16 %v1876
      %v2255 = vunpack.c.h.b16 %v1876
      %v2256 = vunpack.c.l.b16 %v1877
      %v2257 = vunpack.c.h.b16 %v1877
      %v2258 = vunpack.c.l.b16 %v1878
      %v2259 = vunpack.c.h.b16 %v1878
      %v2260 = vunpack.c.l.b16 %v1879
      %v2261 = vunpack.c.h.b16 %v1879
      %v2262 = vunpack.c.l.b16 %v1880
      %v2263 = vunpack.c.h.b16 %v1880
      %v2264 = vunpack.c.l.b16 %v1881
      %v2265 = vunpack.c.h.b16 %v1881
      %v2266 = vunpack.c.l.b16 %v1882
      %v2267 = vunpack.c.h.b16 %v1882
      %v2268 = vunpack.c.l.b16 %v1883
      %v2269 = vunpack.c.h.b16 %v1883
      %v2270 = vunpack.c.l.b16 %v1884
      %v2271 = vunpack.c.h.b16 %v1884
      %v2272 = vunpack.c.l.b16 %v1885
      %v2273 = vunpack.c.h.b16 %v1885
      %v2274 = vunpack.c.l.b16 %v1886
      %v2275 = vunpack.c.h.b16 %v1886
      %v2276 = vunpack.c.l.b16 %v1887
      %v2277 = vunpack.c.h.b16 %v1887
      %v2278 = vunpack.c.l.b16 %v1888
      %v2279 = vunpack.c.h.b16 %v1888
      %v2280 = vunpack.c.l.b16 %v1889
      %v2281 = vunpack.c.h.b16 %v1889
      %v2282 = vunpack.c.l.b16 %v1890
      %v2283 = vunpack.c.h.b16 %v1890
      %v2284 = vunpack.c.l.b16 %v1891
      %v2285 = vunpack.c.h.b16 %v1891
      %v2286 = vunpack.c.l.b16 %v1892
      %v2287 = vunpack.c.h.b16 %v1892
      %v2288 = vunpack.c.l.b16 %v1893
      %v2289 = vunpack.c.h.b16 %v1893
      %v2290 = vunpack.c.l.b16 %v1894
      %v2291 = vunpack.c.h.b16 %v1894
      %v2292 = vunpack.c.l.b16 %v1895
      %v2293 = vunpack.c.h.b16 %v1895
      %v2294 = vunpack.c.l.b16 %v1896
      %v2295 = vunpack.c.h.b16 %v1896
      %v2296 = vunpack.c.l.b16 %v1897
      %v2297 = vunpack.c.h.b16 %v1897
      %v2298 = vunpack.c.l.b16 %v1898
      %v2299 = vunpack.c.h.b16 %v1898
      %v2300 = vunpack.c.l.b16 %v1899
      %v2301 = vunpack.c.h.b16 %v1899
      %v2302 = vunpack.c.l.b16 %v1900
      %v2303 = vunpack.c.h.b16 %v1900
      %v2304 = vunpack.c.l.b16 %v1901
      %v2305 = vunpack.c.h.b16 %v1901
      %v2306 = vunpack.c.l.b16 %v1902
      %v2307 = vunpack.c.h.b16 %v1902
      %v2308 = vunpack.c.l.b16 %v1903
      %v2309 = vunpack.c.h.b16 %v1903
      %v2310 = vunpack.c.l.b16 %v1904
      %v2311 = vunpack.c.h.b16 %v1904
      %v2312 = vunpack.c.l.b16 %v1905
      %v2313 = vunpack.c.h.b16 %v1905
      %v2314 = vunpack.c.l.b16 %v1906
      %v2315 = vunpack.c.h.b16 %v1906
      %v2316 = vunpack.c.l.b16 %v1907
      %v2317 = vunpack.c.h.b16 %v1907
      %v2318 = vunpack.c.l.b16 %v1908
      %v2319 = vunpack.c.h.b16 %v1908
      %v2320 = vunpack.c.l.b16 %v1909
      %v2321 = vunpack.c.h.b16 %v1909
      %v2322 = vunpack.c.l.b16 %v1910
      %v2323 = vunpack.c.h.b16 %v1910
      %v2324 = vunpack.c.l.b16 %v1911
      %v2325 = vunpack.c.h.b16 %v1911
      %v2326 = vunpack.c.l.b16 %v1912
      %v2327 = vunpack.c.h.b16 %v1912
      %v2328 = vunpack.c.l.b16 %v1913
      %v2329 = vunpack.c.h.b16 %v1913
      %v2330 = vunpack.c.l.b16 %v1914
      %v2331 = vunpack.c.h.b16 %v1914
      %v2332 = vunpack.c.l.b16 %v1915
      %v2333 = vunpack.c.h.b16 %v1915
      %v2334 = vunpack.c.l.b16 %v1916
      %v2335 = vunpack.c.h.b16 %v1916
      %v2336 = vunpack.c.l.b16 %v1917
      %v2337 = vunpack.c.h.b16 %v1917
      %v2338 = vunpack.c.l.b16 %v1918
      %v2339 = vunpack.c.h.b16 %v1918
      %v2340 = vunpack.c.l.b16 %v1919
      %v2341 = vunpack.c.h.b16 %v1919
      %v2342 = vunpack.c.l.b16 %v1920
      %v2343 = vunpack.c.h.b16 %v1920
      %v2344 = vunpack.c.l.b16 %v1921
      %v2345 = vunpack.c.h.b16 %v1921
      %v2346 = vunpack.c.l.b16 %v1922
      %v2347 = vunpack.c.h.b16 %v1922
      %v2348 = vunpack.c.l.b16 %v1923
      %v2349 = vunpack.c.h.b16 %v1923
      %v2350 = vunpack.c.l.b16 %v1924
      %v2351 = vunpack.c.h.b16 %v1924
      %v2352 = vunpack.c.l.b16 %v1925
      %v2353 = vunpack.c.h.b16 %v1925
      %v2354 = vunpack.c.l.b16 %v1926
      %v2355 = vunpack.c.h.b16 %v1926
      %v2356 = vunpack.c.l.b16 %v1927
      %v2357 = vunpack.c.h.b16 %v1927
      %v2358 = vunpack.c.l.b16 %v1928
      %v2359 = vunpack.c.h.b16 %v1928
      %v2360 = vunpack.c.l.b16 %v1929
      %v2361 = vunpack.c.h.b16 %v1929
      %v2362 = vunpack.c.l.b16 %v1930
      %v2363 = vunpack.c.h.b16 %v1930
      %v2364 = vunpack.c.l.b16 %v1931
      %v2365 = vunpack.c.h.b16 %v1931
      %v2366 = vunpack.c.l.b16 %v1932
      %v2367 = vunpack.c.h.b16 %v1932
      %v2368 = vunpack.c.l.b16 %v1933
      %v2369 = vunpack.c.h.b16 %v1933
      %v2370 = vunpack.c.l.b16 %v1934
      %v2371 = vunpack.c.h.b16 %v1934
      %v2372 = vunpack.c.l.b16 %v1935
      %v2373 = vunpack.c.h.b16 %v1935
      %v2374 = vunpack.c.l.b16 %v1936
      %v2375 = vunpack.c.h.b16 %v1936
      %v2376 = vunpack.c.l.b16 %v1937
      %v2377 = vunpack.c.h.b16 %v1937
      %v2378 = vunpack.c.l.b16 %v1938
      %v2379 = vunpack.c.h.b16 %v1938
      %v2380 = vunpack.c.l.b16 %v1939
      %v2381 = vunpack.c.h.b16 %v1939
      %v2382 = vunpack.c.l.b16 %v1940
      %v2383 = vunpack.c.h.b16 %v1940
      %v2384 = vunpack.c.l.b16 %v1941
      %v2385 = vunpack.c.h.b16 %v1941
      %v2386 = vunpack.c.l.b16 %v1942
      %v2387 = vunpack.c.h.b16 %v1942
      %v2388 = vunpack.c.l.b16 %v1943
      %v2389 = vunpack.c.h.b16 %v1943
      %v2390 = vunpack.c.l.b16 %v1944
      %v2391 = vunpack.c.h.b16 %v1944
      %v2392 = vunpack.c.l.b16 %v1945
      %v2393 = vunpack.c.h.b16 %v1945
      %v2394 = vunpack.c.l.b16 %v1946
      %v2395 = vunpack.c.h.b16 %v1946
      %v2396 = vunpack.c.l.b16 %v1947
      %v2397 = vunpack.c.h.b16 %v1947
      %v2398 = vunpack.c.l.b16 %v1948
      %v2399 = vunpack.c.h.b16 %v1948
      %v2400 = vunpack.c.l.b16 %v1949
      %v2401 = vunpack.c.h.b16 %v1949
      %v2402 = vunpack.c.l.b16 %v1950
      %v2403 = vunpack.c.h.b16 %v1950
      %v2404 = vunpack.c.l.b16 %v1951
      %v2405 = vunpack.c.h.b16 %v1951
      %v2406 = vunpack.c.l.b16 %v1952
      %v2407 = vunpack.c.h.b16 %v1952
      %v2408 = vunpack.c.l.b16 %v1953
      %v2409 = vunpack.c.h.b16 %v1953
      %v2410 = vunpack.c.l.b16 %v1954
      %v2411 = vunpack.c.h.b16 %v1954
      %v2412 = vunpack.c.l.b16 %v1955
      %v2413 = vunpack.c.h.b16 %v1955
      %v2414 = vunpack.c.l.b16 %v1956
      %v2415 = vunpack.c.h.b16 %v1956
      %v2416 = vunpack.c.l.b16 %v1957
      %v2417 = vunpack.c.h.b16 %v1957
      %v2418 = vunpack.c.l.b16 %v1958
      %v2419 = vunpack.c.h.b16 %v1958
      %v2420 = vunpack.c.l.b16 %v1959
      %v2421 = vunpack.c.h.b16 %v1959
      %v2422 = vunpack.c.l.b16 %v1960
      %v2423 = vunpack.c.h.b16 %v1960
      %v2424 = vunpack.c.l.b16 %v1961
      %v2425 = vunpack.c.h.b16 %v1961
      %v2426 = vunpack.c.l.b16 %v1962
      %v2427 = vunpack.c.h.b16 %v1962
      %v2428 = vunpack.c.l.b16 %v1963
      %v2429 = vunpack.c.h.b16 %v1963
      %v2430 = vunpack.c.l.b16 %v1964
      %v2431 = vunpack.c.h.b16 %v1964
      %v2432 = vunpack.c.l.b16 %v1965
      %v2433 = vunpack.c.h.b16 %v1965
      %v2434 = vunpack.c.l.b16 %v1966
      %v2435 = vunpack.c.h.b16 %v1966
      %v2436 = vunpack.c.l.b16 %v1967
      %v2437 = vunpack.c.h.b16 %v1967
      %v2438 = vunpack.c.l.b16 %v1968
      %v2439 = vunpack.c.h.b16 %v1968
      %v2440 = vunpack.c.l.b16 %v1969
      %v2441 = vunpack.c.h.b16 %v1969
      %v2442 = vunpack.c.l.b16 %v1970
      %v2443 = vunpack.c.h.b16 %v1970
      %v2444 = vunpack.c.l.b16 %v1971
      %v2445 = vunpack.c.h.b16 %v1971
      %v2446 = vunpack.c.l.b16 %v1972
      %v2447 = vunpack.c.h.b16 %v1972
      %v2448 = vunpack.c.l.b16 %v1973
      %v2449 = vunpack.c.h.b16 %v1973
      %v2450 = vunpack.c.l.b16 %v1974
      %v2451 = vunpack.c.h.b16 %v1974
      %v2452 = vunpack.c.l.b16 %v1975
      %v2453 = vunpack.c.h.b16 %v1975
      %v2454 = vunpack.c.l.b16 %v1976
      %v2455 = vunpack.c.h.b16 %v1976
      %v2456 = vunpack.c.l.b16 %v1977
      %v2457 = vunpack.c.h.b16 %v1977
      %v2458 = vpack.c.b16 %v2148, %v2138
      %v2459 = vpack.c.b16 %v2149, %v2139
      %v2460 = vpack.c.b16 %v2150, %v2140
      %v2461 = vpack.c.b16 %v2151, %v2141
      %v2462 = vpack.c.b16 %v2152, %v2142
      %v2463 = vpack.c.b16 %v2153, %v2143
      %v2464 = vpack.c.b16 %v2154, %v2144
      %v2465 = vpack.c.b16 %v2155, %v2145
      %v2466 = vpack.c.b16 %v2156, %v2146
      %v2467 = vpack.c.b16 %v2157, %v2147
      %v2468 = vpack.c.b16 %v2168, %v2158
      %v2469 = vpack.c.b16 %v2169, %v2159
      %v2470 = vpack.c.b16 %v2170, %v2160
      %v2471 = vpack.c.b16 %v2171, %v2161
      %v2472 = vpack.c.b16 %v2172, %v2162
      %v2473 = vpack.c.b16 %v2173, %v2163
      %v2474 = vpack.c.b16 %v2174, %v2164
      %v2475 = vpack.c.b16 %v2175, %v2165
      %v2476 = vpack.c.b16 %v2176, %v2166
      %v2477 = vpack.c.b16 %v2177, %v2167
      %v2478 = vpack.c.b16 %v2188, %v2178
      %v2479 = vpack.c.b16 %v2189, %v2179
      %v2480 = vpack.c.b16 %v2190, %v2180
      %v2481 = vpack.c.b16 %v2191, %v2181
      %v2482 = vpack.c.b16 %v2192, %v2182
      %v2483 = vpack.c.b16 %v2193, %v2183
      %v2484 = vpack.c.b16 %v2194, %v2184
      %v2485 = vpack.c.b16 %v2195, %v2185
      %v2486 = vpack.c.b16 %v2196, %v2186
      %v2487 = vpack.c.b16 %v2197, %v2187
      %v2488 = vpack.c.b16 %v2208, %v2198
      %v2489 = vpack.c.b16 %v2209, %v2199
      %v2490 = vpack.c.b16 %v2210, %v2200
      %v2491 = vpack.c.b16 %v2211, %v2201
      %v2492 = vpack.c.b16 %v2212, %v2202
      %v2493 = vpack.c.b16 %v2213, %v2203
      %v2494 = vpack.c.b16 %v2214, %v2204
      %v2495 = vpack.c.b16 %v2215, %v2205
      %v2496 = vpack.c.b16 %v2216, %v2206
      %v2497 = vpack.c.b16 %v2217, %v2207
      %v2498 = vpack.c.b16 %v2228, %v2218
      %v2499 = vpack.c.b16 %v2229, %v2219
      %v2500 = vpack.c.b16 %v2230, %v2220
      %v2501 = vpack.c.b16 %v2231, %v2221
      %v2502 = vpack.c.b16 %v2232, %v2222
      %v2503 = vpack.c.b16 %v2233, %v2223
      %v2504 = vpack.c.b16 %v2234, %v2224
      %v2505 = vpack.c.b16 %v2235, %v2225
      %v2506 = vpack.c.b16 %v2236, %v2226
      %v2507 = vpack.c.b16 %v2237, %v2227
      %v2508 = vpack.c.b16 %v2248, %v2238
      %v2509 = vpack.c.b16 %v2249, %v2239
      %v2510 = vpack.c.b16 %v2250, %v2240
      %v2511 = vpack.c.b16 %v2251, %v2241
      %v2512 = vpack.c.b16 %v2252, %v2242
      %v2513 = vpack.c.b16 %v2253, %v2243
      %v2514 = vpack.c.b16 %v2254, %v2244
      %v2515 = vpack.c.b16 %v2255, %v2245
      %v2516 = vpack.c.b16 %v2256, %v2246
      %v2517 = vpack.c.b16 %v2257, %v2247
      %v2518 = vpack.c.b16 %v2268, %v2258
      %v2519 = vpack.c.b16 %v2269, %v2259
      %v2520 = vpack.c.b16 %v2270, %v2260
      %v2521 = vpack.c.b16 %v2271, %v2261
      %v2522 = vpack.c.b16 %v2272, %v2262
      %v2523 = vpack.c.b16 %v2273, %v2263
      %v2524 = vpack.c.b16 %v2274, %v2264
      %v2525 = vpack.c.b16 %v2275, %v2265
      %v2526 = vpack.c.b16 %v2276, %v2266
      %v2527 = vpack.c.b16 %v2277, %v2267
      %v2528 = vpack.c.b16 %v2288, %v2278
      %v2529 = vpack.c.b16 %v2289, %v2279
      %v2530 = vpack.c.b16 %v2290, %v2280
      %v2531 = vpack.c.b16 %v2291, %v2281
      %v2532 = vpack.c.b16 %v2292, %v2282
      %v2533 = vpack.c.b16 %v2293, %v2283
      %v2534 = vpack.c.b16 %v2294, %v2284
      %v2535 = vpack.c.b16 %v2295, %v2285
      %v2536 = vpack.c.b16 %v2296, %v2286
      %v2537 = vpack.c.b16 %v2297, %v2287
      %v2538 = vpack.c.b16 %v2308, %v2298
      %v2539 = vpack.c.b16 %v2309, %v2299
      %v2540 = vpack.c.b16 %v2310, %v2300
      %v2541 = vpack.c.b16 %v2311, %v2301
      %v2542 = vpack.c.b16 %v2312, %v2302
      %v2543 = vpack.c.b16 %v2313, %v2303
      %v2544 = vpack.c.b16 %v2314, %v2304
      %v2545 = vpack.c.b16 %v2315, %v2305
      %v2546 = vpack.c.b16 %v2316, %v2306
      %v2547 = vpack.c.b16 %v2317, %v2307
      %v2548 = vpack.c.b16 %v2328, %v2318
      %v2549 = vpack.c.b16 %v2329, %v2319
      %v2550 = vpack.c.b16 %v2330, %v2320
      %v2551 = vpack.c.b16 %v2331, %v2321
      %v2552 = vpack.c.b16 %v2332, %v2322
      %v2553 = vpack.c.b16 %v2333, %v2323
      %v2554 = vpack.c.b16 %v2334, %v2324
      %v2555 = vpack.c.b16 %v2335, %v2325
      %v2556 = vpack.c.b16 %v2336, %v2326
      %v2557 = vpack.c.b16 %v2337, %v2327
      %v2558 = vpack.c.b16 %v2348, %v2338
      %v2559 = vpack.c.b16 %v2349, %v2339
      %v2560 = vpack.c.b16 %v2350, %v2340
      %v2561 = vpack.c.b16 %v2351, %v2341
      %v2562 = vpack.c.b16 %v2352, %v2342
      %v2563 = vpack.c.b16 %v2353, %v2343
      %v2564 = vpack.c.b16 %v2354, %v2344
      %v2565 = vpack.c.b16 %v2355, %v2345
      %v2566 = vpack.c.b16 %v2356, %v2346
      %v2567 = vpack.c.b16 %v2357, %v2347
      %v2568 = vpack.c.b16 %v2368, %v2358
      %v2569 = vpack.c.b16 %v2369, %v2359
      %v2570 = vpack.c.b16 %v2370, %v2360
      %v2571 = vpack.c.b16 %v2371, %v2361
      %v2572 = vpack.c.b16 %v2372, %v2362
      %v2573 = vpack.c.b16 %v2373, %v2363
      %v2574 = vpack.c.b16 %v2374, %v2364
      %v2575 = vpack.c.b16 %v2375, %v2365
      %v2576 = vpack.c.b16 %v2376, %v2366
      %v2577 = vpack.c.b16 %v2377, %v2367
      %v2578 = vpack.c.b16 %v2388, %v2378
      %v2579 = vpack.c.b16 %v2389, %v2379
      %v2580 = vpack.c.b16 %v2390, %v2380
      %v2581 = vpack.c.b16 %v2391, %v2381
      %v2582 = vpack.c.b16 %v2392, %v2382
      %v2583 = vpack.c.b16 %v2393, %v2383
      %v2584 = vpack.c.b16 %v2394, %v2384
      %v2585 = vpack.c.b16 %v2395, %v2385
      %v2586 = vpack.c.b16 %v2396, %v2386
      %v2587 = vpack.c.b16 %v2397, %v2387
      %v2588 = vpack.c.b16 %v2408, %v2398
      %v2589 = vpack.c.b16 %v2409, %v2399
      %v2590 = vpack.c.b16 %v2410, %v2400
      %v2591 = vpack.c.b16 %v2411, %v2401
      %v2592 = vpack.c.b16 %v2412, %v2402
      %v2593 = vpack.c.b16 %v2413, %v2403
      %v2594 = vpack.c.b16 %v2414, %v2404
      %v2595 = vpack.c.b16 %v2415, %v2405
      %v2596 = vpack.c.b16 %v2416, %v2406
      %v2597 = vpack.c.b16 %v2417, %v2407
      %v2598 = vpack.c.b16 %v2428, %v2418
      %v2599 = vpack.c.b16 %v2429, %v2419
      %v2600 = vpack.c.b16 %v2430, %v2420
      %v2601 = vpack.c.b16 %v2431, %v2421
      %v2602 = vpack.c.b16 %v2432, %v2422
      %v2603 = vpack.c.b16 %v2433, %v2423
      %v2604 = vpack.c.b16 %v2434, %v2424
      %v2605 = vpack.c.b16 %v2435, %v2425
      %v2606 = vpack.c.b16 %v2436, %v2426
      %v2607 = vpack.c.b16 %v2437, %v2427
      %v2608 = vpack.c.b16 %v2448, %v2438
      %v2609 = vpack.c.b16 %v2449, %v2439
      %v2610 = vpack.c.b16 %v2450, %v2440
      %v2611 = vpack.c.b16 %v2451, %v2441
      %v2612 = vpack.c.b16 %v2452, %v2442
      %v2613 = vpack.c.b16 %v2453, %v2443
      %v2614 = vpack.c.b16 %v2454, %v2444
      %v2615 = vpack.c.b16 %v2455, %v2445
      %v2616 = vpack.c.b16 %v2456, %v2446
      %v2617 = vpack.c.b16 %v2457, %v2447
      %2778 = vmatpush.bf16.msra.mxu0 %v2528
      %2779 = vmatpush.bf16.msra.mxu0 %v2518
      %2780 = vmatpush.bf16.msra.mxu0 %v2508
      %2781 = vmatpush.bf16.msra.mxu0 %v2498
      %2782 = vmatpush.bf16.msra.mxu0 %v2488
      %2783 = vmatpush.bf16.msra.mxu0 %v2478
      %2784 = vmatpush.bf16.msra.mxu0 %v2468
      %2785 = vmatpush.bf16.msra.mxu0 %v2458
      %2786 = vmatmul.bf16.gmra.mxu0 %v1814
      %v2787 = vpop.f32.mrf.mxu0
      %v2788 = vadd.f32 0.0, %v2787
      %v2789 = vpop.f32.mrf.mxu0
      %v2790 = vadd.f32 0.0, %v2789
      %2791 = vmatmul.bf16.gmra.mxu0 %v1816
      %v2792 = vpop.f32.mrf.mxu0
      %v2793 = vadd.f32 0.0, %v2792
      %v2794 = vpop.f32.mrf.mxu0
      %v2795 = vadd.f32 0.0, %v2794
      %2796 = vdwg.mxu0
      %2797 = vmatpush.bf16.msra.mxu0 %v2608
      %2798 = vmatpush.bf16.msra.mxu0 %v2598
      %2799 = vmatpush.bf16.msra.mxu0 %v2588
      %2800 = vmatpush.bf16.msra.mxu0 %v2578
      %2801 = vmatpush.bf16.msra.mxu0 %v2568
      %2802 = vmatpush.bf16.msra.mxu0 %v2558
      %2803 = vmatpush.bf16.msra.mxu0 %v2548
      %2804 = vmatpush.bf16.msra.mxu0 %v2538
      %2805 = vmatmul.bf16.gmra.mxu0 %v1815
      %v2806 = vpop.f32.mrf.mxu0
      %v2807 = vadd.f32 %v2788, %v2806
      %v2808 = vpop.f32.mrf.mxu0
      %v2809 = vadd.f32 %v2790, %v2808
      %2810 = vmatmul.bf16.gmra.mxu0 %v1817
      %v2811 = vpop.f32.mrf.mxu0
      %v2812 = vadd.f32 %v2793, %v2811
      %v2813 = vpop.f32.mrf.mxu0
      %v2814 = vadd.f32 %v2795, %v2813
      %2815 = vdwg.mxu0
      %2816 = vmatpush.bf16.msra.mxu0 %v2529
      %2817 = vmatpush.bf16.msra.mxu0 %v2519
      %2818 = vmatpush.bf16.msra.mxu0 %v2509
      %2819 = vmatpush.bf16.msra.mxu0 %v2499
      %2820 = vmatpush.bf16.msra.mxu0 %v2489
      %2821 = vmatpush.bf16.msra.mxu0 %v2479
      %2822 = vmatpush.bf16.msra.mxu0 %v2469
      %2823 = vmatpush.bf16.msra.mxu0 %v2459
      %2824 = vmatmul.bf16.gmra.mxu0 %v1814
      %v2825 = vpop.f32.mrf.mxu0
      %v2826 = vadd.f32 0.0, %v2825
      %v2827 = vpop.f32.mrf.mxu0
      %v2828 = vadd.f32 0.0, %v2827
      %2829 = vmatmul.bf16.gmra.mxu0 %v1816
      %v2830 = vpop.f32.mrf.mxu0
      %v2831 = vadd.f32 0.0, %v2830
      %v2832 = vpop.f32.mrf.mxu0
      %v2833 = vadd.f32 0.0, %v2832
      %2834 = vdwg.mxu0
      %2835 = vmatpush.bf16.msra.mxu0 %v2609
      %2836 = vmatpush.bf16.msra.mxu0 %v2599
      %2837 = vmatpush.bf16.msra.mxu0 %v2589
      %2838 = vmatpush.bf16.msra.mxu0 %v2579
      %2839 = vmatpush.bf16.msra.mxu0 %v2569
      %2840 = vmatpush.bf16.msra.mxu0 %v2559
      %2841 = vmatpush.bf16.msra.mxu0 %v2549
      %2842 = vmatpush.bf16.msra.mxu0 %v2539
      %2843 = vmatmul.bf16.gmra.mxu0 %v1815
      %v2844 = vpop.f32.mrf.mxu0
      %v2845 = vadd.f32 %v2826, %v2844
      %v2846 = vpop.f32.mrf.mxu0
      %v2847 = vadd.f32 %v2828, %v2846
      %2848 = vmatmul.bf16.gmra.mxu0 %v1817
      %v2849 = vpop.f32.mrf.mxu0
      %v2850 = vadd.f32 %v2831, %v2849
      %v2851 = vpop.f32.mrf.mxu0
      %v2852 = vadd.f32 %v2833, %v2851
      %2853 = vdwg.mxu0
      %2854 = vmatpush.bf16.msra.mxu0 %v2530
      %2855 = vmatpush.bf16.msra.mxu0 %v2520
      %2856 = vmatpush.bf16.msra.mxu0 %v2510
      %2857 = vmatpush.bf16.msra.mxu0 %v2500
      %2858 = vmatpush.bf16.msra.mxu0 %v2490
      %2859 = vmatpush.bf16.msra.mxu0 %v2480
      %2860 = vmatpush.bf16.msra.mxu0 %v2470
      %2861 = vmatpush.bf16.msra.mxu0 %v2460
      %2862 = vmatmul.bf16.gmra.mxu0 %v1814
      %v2863 = vpop.f32.mrf.mxu0
      %v2864 = vadd.f32 0.0, %v2863
      %v2865 = vpop.f32.mrf.mxu0
      %v2866 = vadd.f32 0.0, %v2865
      %2867 = vmatmul.bf16.gmra.mxu0 %v1816
      %v2868 = vpop.f32.mrf.mxu0
      %v2869 = vadd.f32 0.0, %v2868
      %v2870 = vpop.f32.mrf.mxu0
      %v2871 = vadd.f32 0.0, %v2870
      %2872 = vdwg.mxu0
      %2873 = vmatpush.bf16.msra.mxu0 %v2610
      %2874 = vmatpush.bf16.msra.mxu0 %v2600
      %2875 = vmatpush.bf16.msra.mxu0 %v2590
      %2876 = vmatpush.bf16.msra.mxu0 %v2580
      %2877 = vmatpush.bf16.msra.mxu0 %v2570
      %2878 = vmatpush.bf16.msra.mxu0 %v2560
      %2879 = vmatpush.bf16.msra.mxu0 %v2550
      %2880 = vmatpush.bf16.msra.mxu0 %v2540
      %2881 = vmatmul.bf16.gmra.mxu0 %v1815
      %v2882 = vpop.f32.mrf.mxu0
      %v2883 = vadd.f32 %v2864, %v2882
      %v2884 = vpop.f32.mrf.mxu0
      %v2885 = vadd.f32 %v2866, %v2884
      %2886 = vmatmul.bf16.gmra.mxu0 %v1817
      %v2887 = vpop.f32.mrf.mxu0
      %v2888 = vadd.f32 %v2869, %v2887
      %v2889 = vpop.f32.mrf.mxu0
      %v2890 = vadd.f32 %v2871, %v2889
      %2891 = vdwg.mxu0
      %2892 = vmatpush.bf16.msra.mxu0 %v2531
      %2893 = vmatpush.bf16.msra.mxu0 %v2521
      %2894 = vmatpush.bf16.msra.mxu0 %v2511
      %2895 = vmatpush.bf16.msra.mxu0 %v2501
      %2896 = vmatpush.bf16.msra.mxu0 %v2491
      %2897 = vmatpush.bf16.msra.mxu0 %v2481
      %2898 = vmatpush.bf16.msra.mxu0 %v2471
      %2899 = vmatpush.bf16.msra.mxu0 %v2461
      %2900 = vmatmul.bf16.gmra.mxu0 %v1814
      %v2901 = vpop.f32.mrf.mxu0
      %v2902 = vadd.f32 0.0, %v2901
      %v2903 = vpop.f32.mrf.mxu0
      %v2904 = vadd.f32 0.0, %v2903
      %2905 = vmatmul.bf16.gmra.mxu0 %v1816
      %v2906 = vpop.f32.mrf.mxu0
      %v2907 = vadd.f32 0.0, %v2906
      %v2908 = vpop.f32.mrf.mxu0
      %v2909 = vadd.f32 0.0, %v2908
      %2910 = vdwg.mxu0
      %2911 = vmatpush.bf16.msra.mxu0 %v2611
      %2912 = vmatpush.bf16.msra.mxu0 %v2601
      %2913 = vmatpush.bf16.msra.mxu0 %v2591
      %2914 = vmatpush.bf16.msra.mxu0 %v2581
      %2915 = vmatpush.bf16.msra.mxu0 %v2571
      %2916 = vmatpush.bf16.msra.mxu0 %v2561
      %2917 = vmatpush.bf16.msra.mxu0 %v2551
      %2918 = vmatpush.bf16.msra.mxu0 %v2541
      %2919 = vmatmul.bf16.gmra.mxu0 %v1815
      %v2920 = vpop.f32.mrf.mxu0
      %v2921 = vadd.f32 %v2902, %v2920
      %v2922 = vpop.f32.mrf.mxu0
      %v2923 = vadd.f32 %v2904, %v2922
      %2924 = vmatmul.bf16.gmra.mxu0 %v1817
      %v2925 = vpop.f32.mrf.mxu0
      %v2926 = vadd.f32 %v2907, %v2925
      %v2927 = vpop.f32.mrf.mxu0
      %v2928 = vadd.f32 %v2909, %v2927
      %2929 = vdwg.mxu0
      %2930 = vmatpush.bf16.msra.mxu0 %v2532
      %2931 = vmatpush.bf16.msra.mxu0 %v2522
      %2932 = vmatpush.bf16.msra.mxu0 %v2512
      %2933 = vmatpush.bf16.msra.mxu0 %v2502
      %2934 = vmatpush.bf16.msra.mxu0 %v2492
      %2935 = vmatpush.bf16.msra.mxu0 %v2482
      %2936 = vmatpush.bf16.msra.mxu0 %v2472
      %2937 = vmatpush.bf16.msra.mxu0 %v2462
      %2938 = vmatmul.bf16.gmra.mxu0 %v1814
      %v2939 = vpop.f32.mrf.mxu0
      %v2940 = vadd.f32 0.0, %v2939
      %v2941 = vpop.f32.mrf.mxu0
      %v2942 = vadd.f32 0.0, %v2941
      %2943 = vmatmul.bf16.gmra.mxu0 %v1816
      %v2944 = vpop.f32.mrf.mxu0
      %v2945 = vadd.f32 0.0, %v2944
      %v2946 = vpop.f32.mrf.mxu0
      %v2947 = vadd.f32 0.0, %v2946
      %2948 = vdwg.mxu0
      %2949 = vmatpush.bf16.msra.mxu0 %v2612
      %2950 = vmatpush.bf16.msra.mxu0 %v2602
      %2951 = vmatpush.bf16.msra.mxu0 %v2592
      %2952 = vmatpush.bf16.msra.mxu0 %v2582
      %2953 = vmatpush.bf16.msra.mxu0 %v2572
      %2954 = vmatpush.bf16.msra.mxu0 %v2562
      %2955 = vmatpush.bf16.msra.mxu0 %v2552
      %2956 = vmatpush.bf16.msra.mxu0 %v2542
      %2957 = vmatmul.bf16.gmra.mxu0 %v1815
      %v2958 = vpop.f32.mrf.mxu0
      %v2959 = vadd.f32 %v2940, %v2958
      %v2960 = vpop.f32.mrf.mxu0
      %v2961 = vadd.f32 %v2942, %v2960
      %2962 = vmatmul.bf16.gmra.mxu0 %v1817
      %v2963 = vpop.f32.mrf.mxu0
      %v2964 = vadd.f32 %v2945, %v2963
      %v2965 = vpop.f32.mrf.mxu0
      %v2966 = vadd.f32 %v2947, %v2965
      %2967 = vdwg.mxu0
      %2968 = vmatpush.bf16.msra.mxu0 %v2533
      %2969 = vmatpush.bf16.msra.mxu0 %v2523
      %2970 = vmatpush.bf16.msra.mxu0 %v2513
      %2971 = vmatpush.bf16.msra.mxu0 %v2503
      %2972 = vmatpush.bf16.msra.mxu0 %v2493
      %2973 = vmatpush.bf16.msra.mxu0 %v2483
      %2974 = vmatpush.bf16.msra.mxu0 %v2473
      %2975 = vmatpush.bf16.msra.mxu0 %v2463
      %2976 = vmatmul.bf16.gmra.mxu0 %v1814
      %v2977 = vpop.f32.mrf.mxu0
      %v2978 = vadd.f32 0.0, %v2977
      %v2979 = vpop.f32.mrf.mxu0
      %v2980 = vadd.f32 0.0, %v2979
      %2981 = vmatmul.bf16.gmra.mxu0 %v1816
      %v2982 = vpop.f32.mrf.mxu0
      %v2983 = vadd.f32 0.0, %v2982
      %v2984 = vpop.f32.mrf.mxu0
      %v2985 = vadd.f32 0.0, %v2984
      %2986 = vdwg.mxu0
      %2987 = vmatpush.bf16.msra.mxu0 %v2613
      %2988 = vmatpush.bf16.msra.mxu0 %v2603
      %2989 = vmatpush.bf16.msra.mxu0 %v2593
      %2990 = vmatpush.bf16.msra.mxu0 %v2583
      %2991 = vmatpush.bf16.msra.mxu0 %v2573
      %2992 = vmatpush.bf16.msra.mxu0 %v2563
      %2993 = vmatpush.bf16.msra.mxu0 %v2553
      %2994 = vmatpush.bf16.msra.mxu0 %v2543
      %2995 = vmatmul.bf16.gmra.mxu0 %v1815
      %v2996 = vpop.f32.mrf.mxu0
      %v2997 = vadd.f32 %v2978, %v2996
      %v2998 = vpop.f32.mrf.mxu0
      %v2999 = vadd.f32 %v2980, %v2998
      %3000 = vmatmul.bf16.gmra.mxu0 %v1817
      %v3001 = vpop.f32.mrf.mxu0
      %v3002 = vadd.f32 %v2983, %v3001
      %v3003 = vpop.f32.mrf.mxu0
      %v3004 = vadd.f32 %v2985, %v3003
      %3005 = vdwg.mxu0
      %3006 = vmatpush.bf16.msra.mxu0 %v2534
      %3007 = vmatpush.bf16.msra.mxu0 %v2524
      %3008 = vmatpush.bf16.msra.mxu0 %v2514
      %3009 = vmatpush.bf16.msra.mxu0 %v2504
      %3010 = vmatpush.bf16.msra.mxu0 %v2494
      %3011 = vmatpush.bf16.msra.mxu0 %v2484
      %3012 = vmatpush.bf16.msra.mxu0 %v2474
      %3013 = vmatpush.bf16.msra.mxu0 %v2464
      %3014 = vmatmul.bf16.gmra.mxu0 %v1814
      %v3015 = vpop.f32.mrf.mxu0
      %v3016 = vadd.f32 0.0, %v3015
      %v3017 = vpop.f32.mrf.mxu0
      %v3018 = vadd.f32 0.0, %v3017
      %3019 = vmatmul.bf16.gmra.mxu0 %v1816
      %v3020 = vpop.f32.mrf.mxu0
      %v3021 = vadd.f32 0.0, %v3020
      %v3022 = vpop.f32.mrf.mxu0
      %v3023 = vadd.f32 0.0, %v3022
      %3024 = vdwg.mxu0
      %3025 = vmatpush.bf16.msra.mxu0 %v2614
      %3026 = vmatpush.bf16.msra.mxu0 %v2604
      %3027 = vmatpush.bf16.msra.mxu0 %v2594
      %3028 = vmatpush.bf16.msra.mxu0 %v2584
      %3029 = vmatpush.bf16.msra.mxu0 %v2574
      %3030 = vmatpush.bf16.msra.mxu0 %v2564
      %3031 = vmatpush.bf16.msra.mxu0 %v2554
      %3032 = vmatpush.bf16.msra.mxu0 %v2544
      %3033 = vmatmul.bf16.gmra.mxu0 %v1815
      %v3034 = vpop.f32.mrf.mxu0
      %v3035 = vadd.f32 %v3016, %v3034
      %v3036 = vpop.f32.mrf.mxu0
      %v3037 = vadd.f32 %v3018, %v3036
      %3038 = vmatmul.bf16.gmra.mxu0 %v1817
      %v3039 = vpop.f32.mrf.mxu0
      %v3040 = vadd.f32 %v3021, %v3039
      %v3041 = vpop.f32.mrf.mxu0
      %v3042 = vadd.f32 %v3023, %v3041
      %3043 = vdwg.mxu0
      %3044 = vmatpush.bf16.msra.mxu0 %v2535
      %3045 = vmatpush.bf16.msra.mxu0 %v2525
      %3046 = vmatpush.bf16.msra.mxu0 %v2515
      %3047 = vmatpush.bf16.msra.mxu0 %v2505
      %3048 = vmatpush.bf16.msra.mxu0 %v2495
      %3049 = vmatpush.bf16.msra.mxu0 %v2485
      %3050 = vmatpush.bf16.msra.mxu0 %v2475
      %3051 = vmatpush.bf16.msra.mxu0 %v2465
      %3052 = vmatmul.bf16.gmra.mxu0 %v1814
      %v3053 = vpop.f32.mrf.mxu0
      %v3054 = vadd.f32 0.0, %v3053
      %v3055 = vpop.f32.mrf.mxu0
      %v3056 = vadd.f32 0.0, %v3055
      %3057 = vmatmul.bf16.gmra.mxu0 %v1816
      %v3058 = vpop.f32.mrf.mxu0
      %v3059 = vadd.f32 0.0, %v3058
      %v3060 = vpop.f32.mrf.mxu0
      %v3061 = vadd.f32 0.0, %v3060
      %3062 = vdwg.mxu0
      %3063 = vmatpush.bf16.msra.mxu0 %v2615
      %3064 = vmatpush.bf16.msra.mxu0 %v2605
      %3065 = vmatpush.bf16.msra.mxu0 %v2595
      %3066 = vmatpush.bf16.msra.mxu0 %v2585
      %3067 = vmatpush.bf16.msra.mxu0 %v2575
      %3068 = vmatpush.bf16.msra.mxu0 %v2565
      %3069 = vmatpush.bf16.msra.mxu0 %v2555
      %3070 = vmatpush.bf16.msra.mxu0 %v2545
      %3071 = vmatmul.bf16.gmra.mxu0 %v1815
      %v3072 = vpop.f32.mrf.mxu0
      %v3073 = vadd.f32 %v3054, %v3072
      %v3074 = vpop.f32.mrf.mxu0
      %v3075 = vadd.f32 %v3056, %v3074
      %3076 = vmatmul.bf16.gmra.mxu0 %v1817
      %v3077 = vpop.f32.mrf.mxu0
      %v3078 = vadd.f32 %v3059, %v3077
      %v3079 = vpop.f32.mrf.mxu0
      %v3080 = vadd.f32 %v3061, %v3079
      %3081 = vdwg.mxu0
      %3082 = vmatpush.bf16.msra.mxu0 %v2536
      %3083 = vmatpush.bf16.msra.mxu0 %v2526
      %3084 = vmatpush.bf16.msra.mxu0 %v2516
      %3085 = vmatpush.bf16.msra.mxu0 %v2506
      %3086 = vmatpush.bf16.msra.mxu0 %v2496
      %3087 = vmatpush.bf16.msra.mxu0 %v2486
      %3088 = vmatpush.bf16.msra.mxu0 %v2476
      %3089 = vmatpush.bf16.msra.mxu0 %v2466
      %3090 = vmatmul.bf16.gmra.mxu0 %v1814
      %v3091 = vpop.f32.mrf.mxu0
      %v3092 = vadd.f32 0.0, %v3091
      %v3093 = vpop.f32.mrf.mxu0
      %v3094 = vadd.f32 0.0, %v3093
      %3095 = vmatmul.bf16.gmra.mxu0 %v1816
      %v3096 = vpop.f32.mrf.mxu0
      %v3097 = vadd.f32 0.0, %v3096
      %v3098 = vpop.f32.mrf.mxu0
      %v3099 = vadd.f32 0.0, %v3098
      %3100 = vdwg.mxu0
      %3101 = vmatpush.bf16.msra.mxu0 %v2616
      %3102 = vmatpush.bf16.msra.mxu0 %v2606
      %3103 = vmatpush.bf16.msra.mxu0 %v2596
      %3104 = vmatpush.bf16.msra.mxu0 %v2586
      %3105 = vmatpush.bf16.msra.mxu0 %v2576
      %3106 = vmatpush.bf16.msra.mxu0 %v2566
      %3107 = vmatpush.bf16.msra.mxu0 %v2556
      %3108 = vmatpush.bf16.msra.mxu0 %v2546
      %3109 = vmatmul.bf16.gmra.mxu0 %v1815
      %v3110 = vpop.f32.mrf.mxu0
      %v3111 = vadd.f32 %v3092, %v3110
      %v3112 = vpop.f32.mrf.mxu0
      %v3113 = vadd.f32 %v3094, %v3112
      %3114 = vmatmul.bf16.gmra.mxu0 %v1817
      %v3115 = vpop.f32.mrf.mxu0
      %v3116 = vadd.f32 %v3097, %v3115
      %v3117 = vpop.f32.mrf.mxu0
      %v3118 = vadd.f32 %v3099, %v3117
      %3119 = vdwg.mxu0
      %3120 = vmatpush.bf16.msra.mxu0 %v2537
      %3121 = vmatpush.bf16.msra.mxu0 %v2527
      %3122 = vmatpush.bf16.msra.mxu0 %v2517
      %3123 = vmatpush.bf16.msra.mxu0 %v2507
      %3124 = vmatpush.bf16.msra.mxu0 %v2497
      %3125 = vmatpush.bf16.msra.mxu0 %v2487
      %3126 = vmatpush.bf16.msra.mxu0 %v2477
      %3127 = vmatpush.bf16.msra.mxu0 %v2467
      %3128 = vmatmul.bf16.gmra.mxu0 %v1814
      %v3129 = vpop.f32.mrf.mxu0
      %v3130 = vadd.f32 0.0, %v3129
      %v3131 = vpop.f32.mrf.mxu0
      %v3132 = vadd.f32 0.0, %v3131
      %3133 = vmatmul.bf16.gmra.mxu0 %v1816
      %v3134 = vpop.f32.mrf.mxu0
      %v3135 = vadd.f32 0.0, %v3134
      %v3136 = vpop.f32.mrf.mxu0
      %v3137 = vadd.f32 0.0, %v3136
      %3138 = vdwg.mxu0
      %3139 = vmatpush.bf16.msra.mxu0 %v2617
      %3140 = vmatpush.bf16.msra.mxu0 %v2607
      %3141 = vmatpush.bf16.msra.mxu0 %v2597
      %3142 = vmatpush.bf16.msra.mxu0 %v2587
      %3143 = vmatpush.bf16.msra.mxu0 %v2577
      %3144 = vmatpush.bf16.msra.mxu0 %v2567
      %3145 = vmatpush.bf16.msra.mxu0 %v2557
      %3146 = vmatpush.bf16.msra.mxu0 %v2547
      %3147 = vmatmul.bf16.gmra.mxu0 %v1815
      %v3148 = vpop.f32.mrf.mxu0
      %v3149 = vadd.f32 %v3130, %v3148
      %v3150 = vpop.f32.mrf.mxu0
      %v3151 = vadd.f32 %v3132, %v3150
      %3152 = vmatmul.bf16.gmra.mxu0 %v1817
      %v3153 = vpop.f32.mrf.mxu0
      %v3154 = vadd.f32 %v3135, %v3153
      %v3155 = vpop.f32.mrf.mxu0
      %v3156 = vadd.f32 %v3137, %v3155
      %3157 = vdwg.mxu0
      %v3158 = vpack.c.bf16 %v2845, %v2807
      %v3159 = vpack.c.bf16 %v2921, %v2883
      %v3160 = vpack.c.bf16 %v2997, %v2959
      %v3161 = vpack.c.bf16 %v3073, %v3035
      %v3162 = vpack.c.bf16 %v3149, %v3111
      %v3163 = vpack.c.bf16 %v2847, %v2809
      %v3164 = vpack.c.bf16 %v2923, %v2885
      %v3165 = vpack.c.bf16 %v2999, %v2961
      %v3166 = vpack.c.bf16 %v3075, %v3037
      %v3167 = vpack.c.bf16 %v3151, %v3113
      %v3168 = vpack.c.bf16 %v2850, %v2812
      %v3169 = vpack.c.bf16 %v2926, %v2888
      %v3170 = vpack.c.bf16 %v3002, %v2964
      %v3171 = vpack.c.bf16 %v3078, %v3040
      %v3172 = vpack.c.bf16 %v3154, %v3116
      %v3173 = vpack.c.bf16 %v2852, %v2814
      %v3174 = vpack.c.bf16 %v2928, %v2890
      %v3175 = vpack.c.bf16 %v3004, %v2966
      %v3176 = vpack.c.bf16 %v3080, %v3042
      %v3177 = vpack.c.bf16 %v3156, %v3118
      %v3198 = vunpack.c.l.b16 %v3158
      %v3199 = vunpack.c.h.b16 %v3158
      %v3200 = vunpack.c.l.b16 %v3159
      %v3201 = vunpack.c.h.b16 %v3159
      %v3202 = vunpack.c.l.b16 %v3160
      %v3203 = vunpack.c.h.b16 %v3160
      %v3204 = vunpack.c.l.b16 %v3161
      %v3205 = vunpack.c.h.b16 %v3161
      %v3206 = vunpack.c.l.b16 %v3162
      %v3207 = vunpack.c.h.b16 %v3162
      %v3208 = vunpack.c.l.b16 %v3163
      %v3209 = vunpack.c.h.b16 %v3163
      %v3210 = vunpack.c.l.b16 %v3164
      %v3211 = vunpack.c.h.b16 %v3164
      %v3212 = vunpack.c.l.b16 %v3165
      %v3213 = vunpack.c.h.b16 %v3165
      %v3214 = vunpack.c.l.b16 %v3166
      %v3215 = vunpack.c.h.b16 %v3166
      %v3216 = vunpack.c.l.b16 %v3167
      %v3217 = vunpack.c.h.b16 %v3167
      %v3218 = vunpack.c.l.b16 %v3168
      %v3219 = vunpack.c.h.b16 %v3168
      %v3220 = vunpack.c.l.b16 %v3169
      %v3221 = vunpack.c.h.b16 %v3169
      %v3222 = vunpack.c.l.b16 %v3170
      %v3223 = vunpack.c.h.b16 %v3170
      %v3224 = vunpack.c.l.b16 %v3171
      %v3225 = vunpack.c.h.b16 %v3171
      %v3226 = vunpack.c.l.b16 %v3172
      %v3227 = vunpack.c.h.b16 %v3172
      %v3228 = vunpack.c.l.b16 %v3173
      %v3229 = vunpack.c.h.b16 %v3173
      %v3230 = vunpack.c.l.b16 %v3174
      %v3231 = vunpack.c.h.b16 %v3174
      %v3232 = vunpack.c.l.b16 %v3175
      %v3233 = vunpack.c.h.b16 %v3175
      %v3234 = vunpack.c.l.b16 %v3176
      %v3235 = vunpack.c.h.b16 %v3176
      %v3236 = vunpack.c.l.b16 %v3177
      %v3237 = vunpack.c.h.b16 %v3177
      %v3238 = vpack.c.b16 %v3208, %v3198
      %v3239 = vpack.c.b16 %v3209, %v3199
      %v3240 = vpack.c.b16 %v3210, %v3200
      %v3241 = vpack.c.b16 %v3211, %v3201
      %v3242 = vpack.c.b16 %v3212, %v3202
      %v3243 = vpack.c.b16 %v3213, %v3203
      %v3244 = vpack.c.b16 %v3214, %v3204
      %v3245 = vpack.c.b16 %v3215, %v3205
      %v3246 = vpack.c.b16 %v3216, %v3206
      %v3247 = vpack.c.b16 %v3217, %v3207
      %v3248 = vpack.c.b16 %v3228, %v3218
      %v3249 = vpack.c.b16 %v3229, %v3219
      %v3250 = vpack.c.b16 %v3230, %v3220
      %v3251 = vpack.c.b16 %v3231, %v3221
      %v3252 = vpack.c.b16 %v3232, %v3222
      %v3253 = vpack.c.b16 %v3233, %v3223
      %v3254 = vpack.c.b16 %v3234, %v3224
      %v3255 = vpack.c.b16 %v3235, %v3225
      %v3256 = vpack.c.b16 %v3236, %v3226
      %v3257 = vpack.c.b16 %v3237, %v3227
      %3258 = vrot.lane.b32.xlu0 %v3238, 1
      %v3259 = vpop.permute.xlu0 %3258
      %3260 = vrot.lane.b32.xlu0 %v3239, 1
      %v3261 = vpop.permute.xlu0 %3260
      %3262 = vrot.lane.b32.xlu0 %v3240, 1
      %v3263 = vpop.permute.xlu0 %3262
      %3264 = vrot.lane.b32.xlu0 %v3241, 1
      %v3265 = vpop.permute.xlu0 %3264
      %3266 = vrot.lane.b32.xlu0 %v3242, 1
      %v3267 = vpop.permute.xlu0 %3266
      %3268 = vrot.lane.b32.xlu0 %v3243, 1
      %v3269 = vpop.permute.xlu0 %3268
      %3270 = vrot.lane.b32.xlu0 %v3244, 1
      %v3271 = vpop.permute.xlu0 %3270
      %3272 = vrot.lane.b32.xlu0 %v3245, 1
      %v3273 = vpop.permute.xlu0 %3272
      %3274 = vrot.lane.b32.xlu0 %v3246, 1
      %v3275 = vpop.permute.xlu0 %3274
      %3276 = vrot.lane.b32.xlu0 %v3247, 1
      %v3277 = vpop.permute.xlu0 %3276
      %3278 = vrot.lane.b32.xlu0 %v3248, 1
      %v3279 = vpop.permute.xlu0 %3278
      %3280 = vrot.lane.b32.xlu0 %v3249, 1
      %v3281 = vpop.permute.xlu0 %3280
      %3282 = vrot.lane.b32.xlu0 %v3250, 1
      %v3283 = vpop.permute.xlu0 %3282
      %3284 = vrot.lane.b32.xlu0 %v3251, 1
      %v3285 = vpop.permute.xlu0 %3284
      %3286 = vrot.lane.b32.xlu0 %v3252, 1
      %v3287 = vpop.permute.xlu0 %3286
      %3288 = vrot.lane.b32.xlu0 %v3253, 1
      %v3289 = vpop.permute.xlu0 %3288
      %3290 = vrot.lane.b32.xlu0 %v3254, 1
      %v3291 = vpop.permute.xlu0 %3290
      %3292 = vrot.lane.b32.xlu0 %v3255, 1
      %v3293 = vpop.permute.xlu0 %3292
      %3294 = vrot.lane.b32.xlu0 %v3256, 1
      %v3295 = vpop.permute.xlu0 %3294
      %3296 = vrot.lane.b32.xlu0 %v3257, 1
      %v3297 = vpop.permute.xlu0 %3296
      %v3298 = vsel %vm636, %v3259, %v3261
      %v3299 = vsel %vm636, %v3261, %v3263
      %v3300 = vsel %vm636, %v3263, %v3265
      %v3301 = vsel %vm636, %v3265, %v3267
      %v3302 = vsel %vm636, %v3267, %v3269
      %v3303 = vsel %vm636, %v3269, %v3271
      %v3304 = vsel %vm636, %v3271, %v3273
      %v3305 = vsel %vm636, %v3273, %v3275
      %v3306 = vsel %vm636, %v3275, %v3277
      %v3307 = vsel %vm636, %v3279, %v3281
      %v3308 = vsel %vm636, %v3281, %v3283
      %v3309 = vsel %vm636, %v3283, %v3285
      %v3310 = vsel %vm636, %v3285, %v3287
      %v3311 = vsel %vm636, %v3287, %v3289
      %v3312 = vsel %vm636, %v3289, %v3291
      %v3313 = vsel %vm636, %v3291, %v3293
      %v3314 = vsel %vm636, %v3293, %v3295
      %v3315 = vsel %vm636, %v3295, %v3297
      %3316 = vrot.lane.b32.xlu0 %v3238, 2
      %v3317 = vpop.permute.xlu0 %3316
      %3318 = vrot.lane.b32.xlu0 %v3239, 2
      %v3319 = vpop.permute.xlu0 %3318
      %3320 = vrot.lane.b32.xlu0 %v3240, 2
      %v3321 = vpop.permute.xlu0 %3320
      %3322 = vrot.lane.b32.xlu0 %v3241, 2
      %v3323 = vpop.permute.xlu0 %3322
      %3324 = vrot.lane.b32.xlu0 %v3242, 2
      %v3325 = vpop.permute.xlu0 %3324
      %3326 = vrot.lane.b32.xlu0 %v3243, 2
      %v3327 = vpop.permute.xlu0 %3326
      %3328 = vrot.lane.b32.xlu0 %v3244, 2
      %v3329 = vpop.permute.xlu0 %3328
      %3330 = vrot.lane.b32.xlu0 %v3245, 2
      %v3331 = vpop.permute.xlu0 %3330
      %3332 = vrot.lane.b32.xlu0 %v3246, 2
      %v3333 = vpop.permute.xlu0 %3332
      %3334 = vrot.lane.b32.xlu0 %v3247, 2
      %v3335 = vpop.permute.xlu0 %3334
      %3336 = vrot.lane.b32.xlu0 %v3248, 2
      %v3337 = vpop.permute.xlu0 %3336
      %3338 = vrot.lane.b32.xlu0 %v3249, 2
      %v3339 = vpop.permute.xlu0 %3338
      %3340 = vrot.lane.b32.xlu0 %v3250, 2
      %v3341 = vpop.permute.xlu0 %3340
      %3342 = vrot.lane.b32.xlu0 %v3251, 2
      %v3343 = vpop.permute.xlu0 %3342
      %3344 = vrot.lane.b32.xlu0 %v3252, 2
      %v3345 = vpop.permute.xlu0 %3344
      %3346 = vrot.lane.b32.xlu0 %v3253, 2
      %v3347 = vpop.permute.xlu0 %3346
      %3348 = vrot.lane.b32.xlu0 %v3254, 2
      %v3349 = vpop.permute.xlu0 %3348
      %3350 = vrot.lane.b32.xlu0 %v3255, 2
      %v3351 = vpop.permute.xlu0 %3350
      %3352 = vrot.lane.b32.xlu0 %v3256, 2
      %v3353 = vpop.permute.xlu0 %3352
      %3354 = vrot.lane.b32.xlu0 %v3257, 2
      %v3355 = vpop.permute.xlu0 %3354
      %v3356 = vsel %vm669, %v3317, %v3319
      %v3357 = vsel %vm669, %v3319, %v3321
      %v3358 = vsel %vm669, %v3321, %v3323
      %v3359 = vsel %vm669, %v3323, %v3325
      %v3360 = vsel %vm669, %v3325, %v3327
      %v3361 = vsel %vm669, %v3327, %v3329
      %v3362 = vsel %vm669, %v3329, %v3331
      %v3363 = vsel %vm669, %v3331, %v3333
      %v3364 = vsel %vm669, %v3333, %v3335
      %v3365 = vsel %vm669, %v3337, %v3339
      %v3366 = vsel %vm669, %v3339, %v3341
      %v3367 = vsel %vm669, %v3341, %v3343
      %v3368 = vsel %vm669, %v3343, %v3345
      %v3369 = vsel %vm669, %v3345, %v3347
      %v3370 = vsel %vm669, %v3347, %v3349
      %v3371 = vsel %vm669, %v3349, %v3351
      %v3372 = vsel %vm669, %v3351, %v3353
      %v3373 = vsel %vm669, %v3353, %v3355
      %3374 = vrot.lane.b32.xlu0 %v3238, 3
      %v3375 = vpop.permute.xlu0 %3374
      %3376 = vrot.lane.b32.xlu0 %v3239, 3
      %v3377 = vpop.permute.xlu0 %3376
      %3378 = vrot.lane.b32.xlu0 %v3240, 3
      %v3379 = vpop.permute.xlu0 %3378
      %3380 = vrot.lane.b32.xlu0 %v3241, 3
      %v3381 = vpop.permute.xlu0 %3380
      %3382 = vrot.lane.b32.xlu0 %v3242, 3
      %v3383 = vpop.permute.xlu0 %3382
      %3384 = vrot.lane.b32.xlu0 %v3243, 3
      %v3385 = vpop.permute.xlu0 %3384
      %3386 = vrot.lane.b32.xlu0 %v3244, 3
      %v3387 = vpop.permute.xlu0 %3386
      %3388 = vrot.lane.b32.xlu0 %v3245, 3
      %v3389 = vpop.permute.xlu0 %3388
      %3390 = vrot.lane.b32.xlu0 %v3246, 3
      %v3391 = vpop.permute.xlu0 %3390
      %3392 = vrot.lane.b32.xlu0 %v3247, 3
      %v3393 = vpop.permute.xlu0 %3392
      %3394 = vrot.lane.b32.xlu0 %v3248, 3
      %v3395 = vpop.permute.xlu0 %3394
      %3396 = vrot.lane.b32.xlu0 %v3249, 3
      %v3397 = vpop.permute.xlu0 %3396
      %3398 = vrot.lane.b32.xlu0 %v3250, 3
      %v3399 = vpop.permute.xlu0 %3398
      %3400 = vrot.lane.b32.xlu0 %v3251, 3
      %v3401 = vpop.permute.xlu0 %3400
      %3402 = vrot.lane.b32.xlu0 %v3252, 3
      %v3403 = vpop.permute.xlu0 %3402
      %3404 = vrot.lane.b32.xlu0 %v3253, 3
      %v3405 = vpop.permute.xlu0 %3404
      %3406 = vrot.lane.b32.xlu0 %v3254, 3
      %v3407 = vpop.permute.xlu0 %3406
      %3408 = vrot.lane.b32.xlu0 %v3255, 3
      %v3409 = vpop.permute.xlu0 %3408
      %3410 = vrot.lane.b32.xlu0 %v3256, 3
      %v3411 = vpop.permute.xlu0 %3410
      %3412 = vrot.lane.b32.xlu0 %v3257, 3
      %v3413 = vpop.permute.xlu0 %3412
      %v3414 = vsel %vm702, %v3375, %v3377
      %v3415 = vsel %vm702, %v3377, %v3379
      %v3416 = vsel %vm702, %v3379, %v3381
      %v3417 = vsel %vm702, %v3381, %v3383
      %v3418 = vsel %vm702, %v3383, %v3385
      %v3419 = vsel %vm702, %v3385, %v3387
      %v3420 = vsel %vm702, %v3387, %v3389
      %v3421 = vsel %vm702, %v3389, %v3391
      %v3422 = vsel %vm702, %v3391, %v3393
      %v3423 = vsel %vm702, %v3395, %v3397
      %v3424 = vsel %vm702, %v3397, %v3399
      %v3425 = vsel %vm702, %v3399, %v3401
      %v3426 = vsel %vm702, %v3401, %v3403
      %v3427 = vsel %vm702, %v3403, %v3405
      %v3428 = vsel %vm702, %v3405, %v3407
      %v3429 = vsel %vm702, %v3407, %v3409
      %v3430 = vsel %vm702, %v3409, %v3411
      %v3431 = vsel %vm702, %v3411, %v3413
      %v3432 = vld [vmem:[%s5] sm:$0xf]
      %v3433 = vld [vmem:[%s5 + $0x4] sm:$0xf]
      %s3434 = scalar_lea.vmem %s5, 8
      %v3435 = vld [vmem:[%s3434] sm:$0xf]
      %v3436 = vld [vmem:[%s3434 + $0x4] sm:$0xf]
      %v3439 = vunpack.c.l.b16 %v3435
      %v3440 = vunpack.c.l.b16 %v3436
      %v3441 = vpack.c.b16 %v3440, %v3439
      %3443 = vrot.lane.b32.xlu0 %v3238, 57
      %v3444 = vpop.permute.xlu0 %3443
      %3445 = vrot.lane.b32.xlu0 %v3239, 57
      %v3446 = vpop.permute.xlu0 %3445
      %3447 = vrot.lane.b32.xlu0 %v3240, 57
      %v3448 = vpop.permute.xlu0 %3447
      %3449 = vrot.lane.b32.xlu0 %v3241, 57
      %v3450 = vpop.permute.xlu0 %3449
      %3451 = vrot.lane.b32.xlu0 %v3242, 57
      %v3452 = vpop.permute.xlu0 %3451
      %3453 = vrot.lane.b32.xlu0 %v3243, 57
      %v3454 = vpop.permute.xlu0 %3453
      %3455 = vrot.lane.b32.xlu0 %v3244, 57
      %v3456 = vpop.permute.xlu0 %3455
      %3457 = vrot.lane.b32.xlu0 %v3245, 57
      %v3458 = vpop.permute.xlu0 %3457
      %3459 = vrot.lane.b32.xlu0 %v3246, 57
      %v3460 = vpop.permute.xlu0 %3459
      %3461 = vrot.lane.b32.xlu0 %v3247, 57
      %v3462 = vpop.permute.xlu0 %3461
      %3463 = vrot.lane.b32.xlu0 %v3248, 57
      %v3464 = vpop.permute.xlu0 %3463
      %3465 = vrot.lane.b32.xlu0 %v3249, 57
      %v3466 = vpop.permute.xlu0 %3465
      %3467 = vrot.lane.b32.xlu0 %v3250, 57
      %v3468 = vpop.permute.xlu0 %3467
      %3469 = vrot.lane.b32.xlu0 %v3251, 57
      %v3470 = vpop.permute.xlu0 %3469
      %3471 = vrot.lane.b32.xlu0 %v3252, 57
      %v3472 = vpop.permute.xlu0 %3471
      %3473 = vrot.lane.b32.xlu0 %v3253, 57
      %v3474 = vpop.permute.xlu0 %3473
      %3475 = vrot.lane.b32.xlu0 %v3254, 57
      %v3476 = vpop.permute.xlu0 %3475
      %3477 = vrot.lane.b32.xlu0 %v3255, 57
      %v3478 = vpop.permute.xlu0 %3477
      %3479 = vrot.lane.b32.xlu0 %v3256, 57
      %v3480 = vpop.permute.xlu0 %3479
      %3481 = vrot.lane.b32.xlu0 %v3257, 57
      %v3482 = vpop.permute.xlu0 %3481
      %3483 = vrot.lane.b32.xlu0 %v3259, 57
      %v3484 = vpop.permute.xlu0 %3483
      %3485 = vrot.lane.b32.xlu0 %v3298, 57
      %v3486 = vpop.permute.xlu0 %3485
      %3487 = vrot.lane.b32.xlu0 %v3299, 57
      %v3488 = vpop.permute.xlu0 %3487
      %3489 = vrot.lane.b32.xlu0 %v3300, 57
      %v3490 = vpop.permute.xlu0 %3489
      %3491 = vrot.lane.b32.xlu0 %v3301, 57
      %v3492 = vpop.permute.xlu0 %3491
      %3493 = vrot.lane.b32.xlu0 %v3302, 57
      %v3494 = vpop.permute.xlu0 %3493
      %3495 = vrot.lane.b32.xlu0 %v3303, 57
      %v3496 = vpop.permute.xlu0 %3495
      %3497 = vrot.lane.b32.xlu0 %v3304, 57
      %v3498 = vpop.permute.xlu0 %3497
      %3499 = vrot.lane.b32.xlu0 %v3305, 57
      %v3500 = vpop.permute.xlu0 %3499
      %3501 = vrot.lane.b32.xlu0 %v3306, 57
      %v3502 = vpop.permute.xlu0 %3501
      %3503 = vrot.lane.b32.xlu0 %v3279, 57
      %v3504 = vpop.permute.xlu0 %3503
      %3505 = vrot.lane.b32.xlu0 %v3307, 57
      %v3506 = vpop.permute.xlu0 %3505
      %3507 = vrot.lane.b32.xlu0 %v3308, 57
      %v3508 = vpop.permute.xlu0 %3507
      %3509 = vrot.lane.b32.xlu0 %v3309, 57
      %v3510 = vpop.permute.xlu0 %3509
      %3511 = vrot.lane.b32.xlu0 %v3310, 57
      %v3512 = vpop.permute.xlu0 %3511
      %3513 = vrot.lane.b32.xlu0 %v3311, 57
      %v3514 = vpop.permute.xlu0 %3513
      %3515 = vrot.lane.b32.xlu0 %v3312, 57
      %v3516 = vpop.permute.xlu0 %3515
      %3517 = vrot.lane.b32.xlu0 %v3313, 57
      %v3518 = vpop.permute.xlu0 %3517
      %3519 = vrot.lane.b32.xlu0 %v3314, 57
      %v3520 = vpop.permute.xlu0 %3519
      %3521 = vrot.lane.b32.xlu0 %v3315, 57
      %v3522 = vpop.permute.xlu0 %3521
      %3523 = vrot.lane.b32.xlu0 %v3317, 57
      %v3524 = vpop.permute.xlu0 %3523
      %3525 = vrot.lane.b32.xlu0 %v3356, 57
      %v3526 = vpop.permute.xlu0 %3525
      %3527 = vrot.lane.b32.xlu0 %v3357, 57
      %v3528 = vpop.permute.xlu0 %3527
      %3529 = vrot.lane.b32.xlu0 %v3358, 57
      %v3530 = vpop.permute.xlu0 %3529
      %3531 = vrot.lane.b32.xlu0 %v3359, 57
      %v3532 = vpop.permute.xlu0 %3531
      %3533 = vrot.lane.b32.xlu0 %v3360, 57
      %v3534 = vpop.permute.xlu0 %3533
      %3535 = vrot.lane.b32.xlu0 %v3361, 57
      %v3536 = vpop.permute.xlu0 %3535
      %3537 = vrot.lane.b32.xlu0 %v3362, 57
      %v3538 = vpop.permute.xlu0 %3537
      %3539 = vrot.lane.b32.xlu0 %v3363, 57
      %v3540 = vpop.permute.xlu0 %3539
      %3541 = vrot.lane.b32.xlu0 %v3364, 57
      %v3542 = vpop.permute.xlu0 %3541
      %3543 = vrot.lane.b32.xlu0 %v3337, 57
      %v3544 = vpop.permute.xlu0 %3543
      %3545 = vrot.lane.b32.xlu0 %v3365, 57
      %v3546 = vpop.permute.xlu0 %3545
      %3547 = vrot.lane.b32.xlu0 %v3366, 57
      %v3548 = vpop.permute.xlu0 %3547
      %3549 = vrot.lane.b32.xlu0 %v3367, 57
      %v3550 = vpop.permute.xlu0 %3549
      %3551 = vrot.lane.b32.xlu0 %v3368, 57
      %v3552 = vpop.permute.xlu0 %3551
      %3553 = vrot.lane.b32.xlu0 %v3369, 57
      %v3554 = vpop.permute.xlu0 %3553
      %3555 = vrot.lane.b32.xlu0 %v3370, 57
      %v3556 = vpop.permute.xlu0 %3555
      %3557 = vrot.lane.b32.xlu0 %v3371, 57
      %v3558 = vpop.permute.xlu0 %3557
      %3559 = vrot.lane.b32.xlu0 %v3372, 57
      %v3560 = vpop.permute.xlu0 %3559
      %3561 = vrot.lane.b32.xlu0 %v3373, 57
      %v3562 = vpop.permute.xlu0 %3561
      %3563 = vrot.lane.b32.xlu0 %v3375, 57
      %v3564 = vpop.permute.xlu0 %3563
      %3565 = vrot.lane.b32.xlu0 %v3414, 57
      %v3566 = vpop.permute.xlu0 %3565
      %3567 = vrot.lane.b32.xlu0 %v3415, 57
      %v3568 = vpop.permute.xlu0 %3567
      %3569 = vrot.lane.b32.xlu0 %v3416, 57
      %v3570 = vpop.permute.xlu0 %3569
      %3571 = vrot.lane.b32.xlu0 %v3417, 57
      %v3572 = vpop.permute.xlu0 %3571
      %3573 = vrot.lane.b32.xlu0 %v3418, 57
      %v3574 = vpop.permute.xlu0 %3573
      %3575 = vrot.lane.b32.xlu0 %v3419, 57
      %v3576 = vpop.permute.xlu0 %3575
      %3577 = vrot.lane.b32.xlu0 %v3420, 57
      %v3578 = vpop.permute.xlu0 %3577
      %3579 = vrot.lane.b32.xlu0 %v3421, 57
      %v3580 = vpop.permute.xlu0 %3579
      %3581 = vrot.lane.b32.xlu0 %v3422, 57
      %v3582 = vpop.permute.xlu0 %3581
      %3583 = vrot.lane.b32.xlu0 %v3395, 57
      %v3584 = vpop.permute.xlu0 %3583
      %3585 = vrot.lane.b32.xlu0 %v3423, 57
      %v3586 = vpop.permute.xlu0 %3585
      %3587 = vrot.lane.b32.xlu0 %v3424, 57
      %v3588 = vpop.permute.xlu0 %3587
      %3589 = vrot.lane.b32.xlu0 %v3425, 57
      %v3590 = vpop.permute.xlu0 %3589
      %3591 = vrot.lane.b32.xlu0 %v3426, 57
      %v3592 = vpop.permute.xlu0 %3591
      %3593 = vrot.lane.b32.xlu0 %v3427, 57
      %v3594 = vpop.permute.xlu0 %3593
      %3595 = vrot.lane.b32.xlu0 %v3428, 57
      %v3596 = vpop.permute.xlu0 %3595
      %3597 = vrot.lane.b32.xlu0 %v3429, 57
      %v3598 = vpop.permute.xlu0 %3597
      %3599 = vrot.lane.b32.xlu0 %v3430, 57
      %v3600 = vpop.permute.xlu0 %3599
      %3601 = vrot.lane.b32.xlu0 %v3431, 57
      %v3602 = vpop.permute.xlu0 %3601
      %vm3603 = vcmask 465920
      %v3604 = vsel %vm3603, %v3444, %v3446
      %v3605 = vsel %vm3603, %v3446, %v3448
      %v3606 = vsel %vm3603, %v3448, %v3450
      %v3607 = vsel %vm3603, %v3450, %v3452
      %v3608 = vsel %vm3603, %v3452, %v3454
      %v3609 = vsel %vm3603, %v3454, %v3456
      %v3610 = vsel %vm3603, %v3456, %v3458
      %v3611 = vsel %vm3603, %v3458, %v3460
      %v3612 = vsel %vm3603, %v3460, %v3462
      %v3613 = vsel %vm3603, %v3464, %v3466
      %v3614 = vsel %vm3603, %v3466, %v3468
      %v3615 = vsel %vm3603, %v3468, %v3470
      %v3616 = vsel %vm3603, %v3470, %v3472
      %v3617 = vsel %vm3603, %v3472, %v3474
      %v3618 = vsel %vm3603, %v3474, %v3476
      %v3619 = vsel %vm3603, %v3476, %v3478
      %v3620 = vsel %vm3603, %v3478, %v3480
      %v3621 = vsel %vm3603, %v3480, %v3482
      %v3622 = vsel %vm3603, %v3484, %v3486
      %v3623 = vsel %vm3603, %v3486, %v3488
      %v3624 = vsel %vm3603, %v3488, %v3490
      %v3625 = vsel %vm3603, %v3490, %v3492
      %v3626 = vsel %vm3603, %v3492, %v3494
      %v3627 = vsel %vm3603, %v3494, %v3496
      %v3628 = vsel %vm3603, %v3496, %v3498
      %v3629 = vsel %vm3603, %v3498, %v3500
      %v3630 = vsel %vm3603, %v3500, %v3502
      %v3631 = vsel %vm3603, %v3504, %v3506
      %v3632 = vsel %vm3603, %v3506, %v3508
      %v3633 = vsel %vm3603, %v3508, %v3510
      %v3634 = vsel %vm3603, %v3510, %v3512
      %v3635 = vsel %vm3603, %v3512, %v3514
      %v3636 = vsel %vm3603, %v3514, %v3516
      %v3637 = vsel %vm3603, %v3516, %v3518
      %v3638 = vsel %vm3603, %v3518, %v3520
      %v3639 = vsel %vm3603, %v3520, %v3522
      %v3640 = vsel %vm3603, %v3524, %v3526
      %v3641 = vsel %vm3603, %v3526, %v3528
      %v3642 = vsel %vm3603, %v3528, %v3530
      %v3643 = vsel %vm3603, %v3530, %v3532
      %v3644 = vsel %vm3603, %v3532, %v3534
      %v3645 = vsel %vm3603, %v3534, %v3536
      %v3646 = vsel %vm3603, %v3536, %v3538
      %v3647 = vsel %vm3603, %v3538, %v3540
      %v3648 = vsel %vm3603, %v3540, %v3542
      %v3649 = vsel %vm3603, %v3544, %v3546
      %v3650 = vsel %vm3603, %v3546, %v3548
      %v3651 = vsel %vm3603, %v3548, %v3550
      %v3652 = vsel %vm3603, %v3550, %v3552
      %v3653 = vsel %vm3603, %v3552, %v3554
      %v3654 = vsel %vm3603, %v3554, %v3556
      %v3655 = vsel %vm3603, %v3556, %v3558
      %v3656 = vsel %vm3603, %v3558, %v3560
      %v3657 = vsel %vm3603, %v3560, %v3562
      %v3658 = vsel %vm3603, %v3564, %v3566
      %v3659 = vsel %vm3603, %v3566, %v3568
      %v3660 = vsel %vm3603, %v3568, %v3570
      %v3661 = vsel %vm3603, %v3570, %v3572
      %v3662 = vsel %vm3603, %v3572, %v3574
      %v3663 = vsel %vm3603, %v3574, %v3576
      %v3664 = vsel %vm3603, %v3576, %v3578
      %v3665 = vsel %vm3603, %v3578, %v3580
      %v3666 = vsel %vm3603, %v3580, %v3582
      %v3667 = vsel %vm3603, %v3584, %v3586
      %v3668 = vsel %vm3603, %v3586, %v3588
      %v3669 = vsel %vm3603, %v3588, %v3590
      %v3670 = vsel %vm3603, %v3590, %v3592
      %v3671 = vsel %vm3603, %v3592, %v3594
      %v3672 = vsel %vm3603, %v3594, %v3596
      %v3673 = vsel %vm3603, %v3596, %v3598
      %v3674 = vsel %vm3603, %v3598, %v3600
      %v3675 = vsel %vm3603, %v3600, %v3602
      %3756 = vmatpush.bf16.msra.mxu0 %v3667
      %3757 = vmatpush.bf16.msra.mxu0 %v3658
      %3758 = vmatpush.bf16.msra.mxu0 %v3649
      %3759 = vmatpush.bf16.msra.mxu0 %v3640
      %3760 = vmatpush.bf16.msra.mxu0 %v3631
      %3761 = vmatpush.bf16.msra.mxu0 %v3622
      %3762 = vmatpush.bf16.msra.mxu0 %v3613
      %3763 = vmatpush.bf16.msra.mxu0 %v3604
      %3764 = vmatmul.bf16.gmra.mxu0 %v3441
      %v3765 = vpop.f32.mrf.mxu0
      %v3766 = vadd.f32 0.0, %v3765
      %v3767 = vpop.f32.mrf.mxu0
      %v3768 = vadd.f32 0.0, %v3767
      %3769 = vdwg.mxu0
      %3770 = vmatpush.bf16.msra.mxu0 %v3668
      %3771 = vmatpush.bf16.msra.mxu0 %v3659
      %3772 = vmatpush.bf16.msra.mxu0 %v3650
      %3773 = vmatpush.bf16.msra.mxu0 %v3641
      %3774 = vmatpush.bf16.msra.mxu0 %v3632
      %3775 = vmatpush.bf16.msra.mxu0 %v3623
      %3776 = vmatpush.bf16.msra.mxu0 %v3614
      %3777 = vmatpush.bf16.msra.mxu0 %v3605
      %3778 = vmatmul.bf16.gmra.mxu0 %v3441
      %v3779 = vpop.f32.mrf.mxu0
      %v3780 = vadd.f32 0.0, %v3779
      %v3781 = vpop.f32.mrf.mxu0
      %v3782 = vadd.f32 0.0, %v3781
      %3783 = vdwg.mxu0
      %3784 = vmatpush.bf16.msra.mxu0 %v3669
      %3785 = vmatpush.bf16.msra.mxu0 %v3660
      %3786 = vmatpush.bf16.msra.mxu0 %v3651
      %3787 = vmatpush.bf16.msra.mxu0 %v3642
      %3788 = vmatpush.bf16.msra.mxu0 %v3633
      %3789 = vmatpush.bf16.msra.mxu0 %v3624
      %3790 = vmatpush.bf16.msra.mxu0 %v3615
      %3791 = vmatpush.bf16.msra.mxu0 %v3606
      %3792 = vmatmul.bf16.gmra.mxu0 %v3441
      %v3793 = vpop.f32.mrf.mxu0
      %v3794 = vadd.f32 0.0, %v3793
      %v3795 = vpop.f32.mrf.mxu0
      %v3796 = vadd.f32 0.0, %v3795
      %3797 = vdwg.mxu0
      %3798 = vmatpush.bf16.msra.mxu0 %v3670
      %3799 = vmatpush.bf16.msra.mxu0 %v3661
      %3800 = vmatpush.bf16.msra.mxu0 %v3652
      %3801 = vmatpush.bf16.msra.mxu0 %v3643
      %3802 = vmatpush.bf16.msra.mxu0 %v3634
      %3803 = vmatpush.bf16.msra.mxu0 %v3625
      %3804 = vmatpush.bf16.msra.mxu0 %v3616
      %3805 = vmatpush.bf16.msra.mxu0 %v3607
      %3806 = vmatmul.bf16.gmra.mxu0 %v3441
      %v3807 = vpop.f32.mrf.mxu0
      %v3808 = vadd.f32 0.0, %v3807
      %v3809 = vpop.f32.mrf.mxu0
      %v3810 = vadd.f32 0.0, %v3809
      %3811 = vdwg.mxu0
      %3812 = vmatpush.bf16.msra.mxu0 %v3671
      %3813 = vmatpush.bf16.msra.mxu0 %v3662
      %3814 = vmatpush.bf16.msra.mxu0 %v3653
      %3815 = vmatpush.bf16.msra.mxu0 %v3644
      %3816 = vmatpush.bf16.msra.mxu0 %v3635
      %3817 = vmatpush.bf16.msra.mxu0 %v3626
      %3818 = vmatpush.bf16.msra.mxu0 %v3617
      %3819 = vmatpush.bf16.msra.mxu0 %v3608
      %3820 = vmatmul.bf16.gmra.mxu0 %v3441
      %v3821 = vpop.f32.mrf.mxu0
      %v3822 = vadd.f32 0.0, %v3821
      %v3823 = vpop.f32.mrf.mxu0
      %v3824 = vadd.f32 0.0, %v3823
      %3825 = vdwg.mxu0
      %3826 = vmatpush.bf16.msra.mxu0 %v3672
      %3827 = vmatpush.bf16.msra.mxu0 %v3663
      %3828 = vmatpush.bf16.msra.mxu0 %v3654
      %3829 = vmatpush.bf16.msra.mxu0 %v3645
      %3830 = vmatpush.bf16.msra.mxu0 %v3636
      %3831 = vmatpush.bf16.msra.mxu0 %v3627
      %3832 = vmatpush.bf16.msra.mxu0 %v3618
      %3833 = vmatpush.bf16.msra.mxu0 %v3609
      %3834 = vmatmul.bf16.gmra.mxu0 %v3441
      %v3835 = vpop.f32.mrf.mxu0
      %v3836 = vadd.f32 0.0, %v3835
      %v3837 = vpop.f32.mrf.mxu0
      %v3838 = vadd.f32 0.0, %v3837
      %3839 = vdwg.mxu0
      %3840 = vmatpush.bf16.msra.mxu0 %v3673
      %3841 = vmatpush.bf16.msra.mxu0 %v3664
      %3842 = vmatpush.bf16.msra.mxu0 %v3655
      %3843 = vmatpush.bf16.msra.mxu0 %v3646
      %3844 = vmatpush.bf16.msra.mxu0 %v3637
      %3845 = vmatpush.bf16.msra.mxu0 %v3628
      %3846 = vmatpush.bf16.msra.mxu0 %v3619
      %3847 = vmatpush.bf16.msra.mxu0 %v3610
      %3848 = vmatmul.bf16.gmra.mxu0 %v3441
      %v3849 = vpop.f32.mrf.mxu0
      %v3850 = vadd.f32 0.0, %v3849
      %v3851 = vpop.f32.mrf.mxu0
      %v3852 = vadd.f32 0.0, %v3851
      %3853 = vdwg.mxu0
      %3854 = vmatpush.bf16.msra.mxu0 %v3674
      %3855 = vmatpush.bf16.msra.mxu0 %v3665
      %3856 = vmatpush.bf16.msra.mxu0 %v3656
      %3857 = vmatpush.bf16.msra.mxu0 %v3647
      %3858 = vmatpush.bf16.msra.mxu0 %v3638
      %3859 = vmatpush.bf16.msra.mxu0 %v3629
      %3860 = vmatpush.bf16.msra.mxu0 %v3620
      %3861 = vmatpush.bf16.msra.mxu0 %v3611
      %3862 = vmatmul.bf16.gmra.mxu0 %v3441
      %v3863 = vpop.f32.mrf.mxu0
      %v3864 = vadd.f32 0.0, %v3863
      %v3865 = vpop.f32.mrf.mxu0
      %v3866 = vadd.f32 0.0, %v3865
      %3867 = vdwg.mxu0
      %3868 = vmatpush.bf16.msra.mxu0 %v3675
      %3869 = vmatpush.bf16.msra.mxu0 %v3666
      %3870 = vmatpush.bf16.msra.mxu0 %v3657
      %3871 = vmatpush.bf16.msra.mxu0 %v3648
      %3872 = vmatpush.bf16.msra.mxu0 %v3639
      %3873 = vmatpush.bf16.msra.mxu0 %v3630
      %3874 = vmatpush.bf16.msra.mxu0 %v3621
      %3875 = vmatpush.bf16.msra.mxu0 %v3612
      %3876 = vmatmul.bf16.gmra.mxu0 %v3441
      %v3877 = vpop.f32.mrf.mxu0
      %v3878 = vadd.f32 0.0, %v3877
      %v3879 = vpop.f32.mrf.mxu0
      %v3880 = vadd.f32 0.0, %v3879
      %3881 = vdwg.mxu0
      %3882 = vmatpush.bf16.msra.mxu0 %v3602
      %3883 = vmatpush.bf16.msra.mxu0 %v3582
      %3884 = vmatpush.bf16.msra.mxu0 %v3562
      %3885 = vmatpush.bf16.msra.mxu0 %v3542
      %3886 = vmatpush.bf16.msra.mxu0 %v3522
      %3887 = vmatpush.bf16.msra.mxu0 %v3502
      %3888 = vmatpush.bf16.msra.mxu0 %v3482
      %3889 = vmatpush.bf16.msra.mxu0 %v3462
      %3890 = vmatmul.bf16.gmra.mxu0 %v3441
      %v3891 = vpop.f32.mrf.mxu0
      %v3892 = vadd.f32 0.0, %v3891
      %v3893 = vpop.f32.mrf.mxu0
      %v3894 = vadd.f32 0.0, %v3893
      %3895 = vdwg.mxu0
      %v3898 = vunpack.c.l.b16 %v3432
      %v3899 = vunpack.c.l.b16 %v3433
      %v3900 = vpack.c.b16 %v3899, %v3898
      %3902 = vrot.lane.b32.xlu0 %v3238, 23
      %v3903 = vpop.permute.xlu0 %3902
      %3904 = vrot.lane.b32.xlu0 %v3239, 23
      %v3905 = vpop.permute.xlu0 %3904
      %3906 = vrot.lane.b32.xlu0 %v3240, 23
      %v3907 = vpop.permute.xlu0 %3906
      %3908 = vrot.lane.b32.xlu0 %v3241, 23
      %v3909 = vpop.permute.xlu0 %3908
      %3910 = vrot.lane.b32.xlu0 %v3242, 23
      %v3911 = vpop.permute.xlu0 %3910
      %3912 = vrot.lane.b32.xlu0 %v3243, 23
      %v3913 = vpop.permute.xlu0 %3912
      %3914 = vrot.lane.b32.xlu0 %v3244, 23
      %v3915 = vpop.permute.xlu0 %3914
      %3916 = vrot.lane.b32.xlu0 %v3245, 23
      %v3917 = vpop.permute.xlu0 %3916
      %3918 = vrot.lane.b32.xlu0 %v3246, 23
      %v3919 = vpop.permute.xlu0 %3918
      %3920 = vrot.lane.b32.xlu0 %v3247, 23
      %v3921 = vpop.permute.xlu0 %3920
      %3922 = vrot.lane.b32.xlu0 %v3248, 23
      %v3923 = vpop.permute.xlu0 %3922
      %3924 = vrot.lane.b32.xlu0 %v3249, 23
      %v3925 = vpop.permute.xlu0 %3924
      %3926 = vrot.lane.b32.xlu0 %v3250, 23
      %v3927 = vpop.permute.xlu0 %3926
      %3928 = vrot.lane.b32.xlu0 %v3251, 23
      %v3929 = vpop.permute.xlu0 %3928
      %3930 = vrot.lane.b32.xlu0 %v3252, 23
      %v3931 = vpop.permute.xlu0 %3930
      %3932 = vrot.lane.b32.xlu0 %v3253, 23
      %v3933 = vpop.permute.xlu0 %3932
      %3934 = vrot.lane.b32.xlu0 %v3254, 23
      %v3935 = vpop.permute.xlu0 %3934
      %3936 = vrot.lane.b32.xlu0 %v3255, 23
      %v3937 = vpop.permute.xlu0 %3936
      %3938 = vrot.lane.b32.xlu0 %v3256, 23
      %v3939 = vpop.permute.xlu0 %3938
      %3940 = vrot.lane.b32.xlu0 %v3257, 23
      %v3941 = vpop.permute.xlu0 %3940
      %3942 = vrot.lane.b32.xlu0 %v3259, 23
      %v3943 = vpop.permute.xlu0 %3942
      %3944 = vrot.lane.b32.xlu0 %v3298, 23
      %v3945 = vpop.permute.xlu0 %3944
      %3946 = vrot.lane.b32.xlu0 %v3299, 23
      %v3947 = vpop.permute.xlu0 %3946
      %3948 = vrot.lane.b32.xlu0 %v3300, 23
      %v3949 = vpop.permute.xlu0 %3948
      %3950 = vrot.lane.b32.xlu0 %v3301, 23
      %v3951 = vpop.permute.xlu0 %3950
      %3952 = vrot.lane.b32.xlu0 %v3302, 23
      %v3953 = vpop.permute.xlu0 %3952
      %3954 = vrot.lane.b32.xlu0 %v3303, 23
      %v3955 = vpop.permute.xlu0 %3954
      %3956 = vrot.lane.b32.xlu0 %v3304, 23
      %v3957 = vpop.permute.xlu0 %3956
      %3958 = vrot.lane.b32.xlu0 %v3305, 23
      %v3959 = vpop.permute.xlu0 %3958
      %3960 = vrot.lane.b32.xlu0 %v3306, 23
      %v3961 = vpop.permute.xlu0 %3960
      %3962 = vrot.lane.b32.xlu0 %v3279, 23
      %v3963 = vpop.permute.xlu0 %3962
      %3964 = vrot.lane.b32.xlu0 %v3307, 23
      %v3965 = vpop.permute.xlu0 %3964
      %3966 = vrot.lane.b32.xlu0 %v3308, 23
      %v3967 = vpop.permute.xlu0 %3966
      %3968 = vrot.lane.b32.xlu0 %v3309, 23
      %v3969 = vpop.permute.xlu0 %3968
      %3970 = vrot.lane.b32.xlu0 %v3310, 23
      %v3971 = vpop.permute.xlu0 %3970
      %3972 = vrot.lane.b32.xlu0 %v3311, 23
      %v3973 = vpop.permute.xlu0 %3972
      %3974 = vrot.lane.b32.xlu0 %v3312, 23
      %v3975 = vpop.permute.xlu0 %3974
      %3976 = vrot.lane.b32.xlu0 %v3313, 23
      %v3977 = vpop.permute.xlu0 %3976
      %3978 = vrot.lane.b32.xlu0 %v3314, 23
      %v3979 = vpop.permute.xlu0 %3978
      %3980 = vrot.lane.b32.xlu0 %v3315, 23
      %v3981 = vpop.permute.xlu0 %3980
      %3982 = vrot.lane.b32.xlu0 %v3317, 23
      %v3983 = vpop.permute.xlu0 %3982
      %3984 = vrot.lane.b32.xlu0 %v3356, 23
      %v3985 = vpop.permute.xlu0 %3984
      %3986 = vrot.lane.b32.xlu0 %v3357, 23
      %v3987 = vpop.permute.xlu0 %3986
      %3988 = vrot.lane.b32.xlu0 %v3358, 23
      %v3989 = vpop.permute.xlu0 %3988
      %3990 = vrot.lane.b32.xlu0 %v3359, 23
      %v3991 = vpop.permute.xlu0 %3990
      %3992 = vrot.lane.b32.xlu0 %v3360, 23
      %v3993 = vpop.permute.xlu0 %3992
      %3994 = vrot.lane.b32.xlu0 %v3361, 23
      %v3995 = vpop.permute.xlu0 %3994
      %3996 = vrot.lane.b32.xlu0 %v3362, 23
      %v3997 = vpop.permute.xlu0 %3996
      %3998 = vrot.lane.b32.xlu0 %v3363, 23
      %v3999 = vpop.permute.xlu0 %3998
      %4000 = vrot.lane.b32.xlu0 %v3364, 23
      %v4001 = vpop.permute.xlu0 %4000
      %4002 = vrot.lane.b32.xlu0 %v3337, 23
      %v4003 = vpop.permute.xlu0 %4002
      %4004 = vrot.lane.b32.xlu0 %v3365, 23
      %v4005 = vpop.permute.xlu0 %4004
      %4006 = vrot.lane.b32.xlu0 %v3366, 23
      %v4007 = vpop.permute.xlu0 %4006
      %4008 = vrot.lane.b32.xlu0 %v3367, 23
      %v4009 = vpop.permute.xlu0 %4008
      %4010 = vrot.lane.b32.xlu0 %v3368, 23
      %v4011 = vpop.permute.xlu0 %4010
      %4012 = vrot.lane.b32.xlu0 %v3369, 23
      %v4013 = vpop.permute.xlu0 %4012
      %4014 = vrot.lane.b32.xlu0 %v3370, 23
      %v4015 = vpop.permute.xlu0 %4014
      %4016 = vrot.lane.b32.xlu0 %v3371, 23
      %v4017 = vpop.permute.xlu0 %4016
      %4018 = vrot.lane.b32.xlu0 %v3372, 23
      %v4019 = vpop.permute.xlu0 %4018
      %4020 = vrot.lane.b32.xlu0 %v3373, 23
      %v4021 = vpop.permute.xlu0 %4020
      %4022 = vrot.lane.b32.xlu0 %v3375, 23
      %v4023 = vpop.permute.xlu0 %4022
      %4024 = vrot.lane.b32.xlu0 %v3414, 23
      %v4025 = vpop.permute.xlu0 %4024
      %4026 = vrot.lane.b32.xlu0 %v3415, 23
      %v4027 = vpop.permute.xlu0 %4026
      %4028 = vrot.lane.b32.xlu0 %v3416, 23
      %v4029 = vpop.permute.xlu0 %4028
      %4030 = vrot.lane.b32.xlu0 %v3417, 23
      %v4031 = vpop.permute.xlu0 %4030
      %4032 = vrot.lane.b32.xlu0 %v3418, 23
      %v4033 = vpop.permute.xlu0 %4032
      %4034 = vrot.lane.b32.xlu0 %v3419, 23
      %v4035 = vpop.permute.xlu0 %4034
      %4036 = vrot.lane.b32.xlu0 %v3420, 23
      %v4037 = vpop.permute.xlu0 %4036
      %4038 = vrot.lane.b32.xlu0 %v3421, 23
      %v4039 = vpop.permute.xlu0 %4038
      %4040 = vrot.lane.b32.xlu0 %v3422, 23
      %v4041 = vpop.permute.xlu0 %4040
      %4042 = vrot.lane.b32.xlu0 %v3395, 23
      %v4043 = vpop.permute.xlu0 %4042
      %4044 = vrot.lane.b32.xlu0 %v3423, 23
      %v4045 = vpop.permute.xlu0 %4044
      %4046 = vrot.lane.b32.xlu0 %v3424, 23
      %v4047 = vpop.permute.xlu0 %4046
      %4048 = vrot.lane.b32.xlu0 %v3425, 23
      %v4049 = vpop.permute.xlu0 %4048
      %4050 = vrot.lane.b32.xlu0 %v3426, 23
      %v4051 = vpop.permute.xlu0 %4050
      %4052 = vrot.lane.b32.xlu0 %v3427, 23
      %v4053 = vpop.permute.xlu0 %4052
      %4054 = vrot.lane.b32.xlu0 %v3428, 23
      %v4055 = vpop.permute.xlu0 %4054
      %4056 = vrot.lane.b32.xlu0 %v3429, 23
      %v4057 = vpop.permute.xlu0 %4056
      %4058 = vrot.lane.b32.xlu0 %v3430, 23
      %v4059 = vpop.permute.xlu0 %4058
      %4060 = vrot.lane.b32.xlu0 %v3431, 23
      %v4061 = vpop.permute.xlu0 %4060
      %vm4062 = vcmask 187392
      %v4063 = vsel %vm4062, %v3903, %v3905
      %v4064 = vsel %vm4062, %v3905, %v3907
      %v4065 = vsel %vm4062, %v3907, %v3909
      %v4066 = vsel %vm4062, %v3909, %v3911
      %v4067 = vsel %vm4062, %v3911, %v3913
      %v4068 = vsel %vm4062, %v3913, %v3915
      %v4069 = vsel %vm4062, %v3915, %v3917
      %v4070 = vsel %vm4062, %v3917, %v3919
      %v4071 = vsel %vm4062, %v3919, %v3921
      %v4072 = vsel %vm4062, %v3923, %v3925
      %v4073 = vsel %vm4062, %v3925, %v3927
      %v4074 = vsel %vm4062, %v3927, %v3929
      %v4075 = vsel %vm4062, %v3929, %v3931
      %v4076 = vsel %vm4062, %v3931, %v3933
      %v4077 = vsel %vm4062, %v3933, %v3935
      %v4078 = vsel %vm4062, %v3935, %v3937
      %v4079 = vsel %vm4062, %v3937, %v3939
      %v4080 = vsel %vm4062, %v3939, %v3941
      %v4081 = vsel %vm4062, %v3943, %v3945
      %v4082 = vsel %vm4062, %v3945, %v3947
      %v4083 = vsel %vm4062, %v3947, %v3949
      %v4084 = vsel %vm4062, %v3949, %v3951
      %v4085 = vsel %vm4062, %v3951, %v3953
      %v4086 = vsel %vm4062, %v3953, %v3955
      %v4087 = vsel %vm4062, %v3955, %v3957
      %v4088 = vsel %vm4062, %v3957, %v3959
      %v4089 = vsel %vm4062, %v3959, %v3961
      %v4090 = vsel %vm4062, %v3963, %v3965
      %v4091 = vsel %vm4062, %v3965, %v3967
      %v4092 = vsel %vm4062, %v3967, %v3969
      %v4093 = vsel %vm4062, %v3969, %v3971
      %v4094 = vsel %vm4062, %v3971, %v3973
      %v4095 = vsel %vm4062, %v3973, %v3975
      %v4096 = vsel %vm4062, %v3975, %v3977
      %v4097 = vsel %vm4062, %v3977, %v3979
      %v4098 = vsel %vm4062, %v3979, %v3981
      %v4099 = vsel %vm4062, %v3983, %v3985
      %v4100 = vsel %vm4062, %v3985, %v3987
      %v4101 = vsel %vm4062, %v3987, %v3989
      %v4102 = vsel %vm4062, %v3989, %v3991
      %v4103 = vsel %vm4062, %v3991, %v3993
      %v4104 = vsel %vm4062, %v3993, %v3995
      %v4105 = vsel %vm4062, %v3995, %v3997
      %v4106 = vsel %vm4062, %v3997, %v3999
      %v4107 = vsel %vm4062, %v3999, %v4001
      %v4108 = vsel %vm4062, %v4003, %v4005
      %v4109 = vsel %vm4062, %v4005, %v4007
      %v4110 = vsel %vm4062, %v4007, %v4009
      %v4111 = vsel %vm4062, %v4009, %v4011
      %v4112 = vsel %vm4062, %v4011, %v4013
      %v4113 = vsel %vm4062, %v4013, %v4015
      %v4114 = vsel %vm4062, %v4015, %v4017
      %v4115 = vsel %vm4062, %v4017, %v4019
      %v4116 = vsel %vm4062, %v4019, %v4021
      %v4117 = vsel %vm4062, %v4023, %v4025
      %v4118 = vsel %vm4062, %v4025, %v4027
      %v4119 = vsel %vm4062, %v4027, %v4029
      %v4120 = vsel %vm4062, %v4029, %v4031
      %v4121 = vsel %vm4062, %v4031, %v4033
      %v4122 = vsel %vm4062, %v4033, %v4035
      %v4123 = vsel %vm4062, %v4035, %v4037
      %v4124 = vsel %vm4062, %v4037, %v4039
      %v4125 = vsel %vm4062, %v4039, %v4041
      %v4126 = vsel %vm4062, %v4043, %v4045
      %v4127 = vsel %vm4062, %v4045, %v4047
      %v4128 = vsel %vm4062, %v4047, %v4049
      %v4129 = vsel %vm4062, %v4049, %v4051
      %v4130 = vsel %vm4062, %v4051, %v4053
      %v4131 = vsel %vm4062, %v4053, %v4055
      %v4132 = vsel %vm4062, %v4055, %v4057
      %v4133 = vsel %vm4062, %v4057, %v4059
      %v4134 = vsel %vm4062, %v4059, %v4061
      %4215 = vmatpush.bf16.msra.mxu0 %v4126
      %4216 = vmatpush.bf16.msra.mxu0 %v4117
      %4217 = vmatpush.bf16.msra.mxu0 %v4108
      %4218 = vmatpush.bf16.msra.mxu0 %v4099
      %4219 = vmatpush.bf16.msra.mxu0 %v4090
      %4220 = vmatpush.bf16.msra.mxu0 %v4081
      %4221 = vmatpush.bf16.msra.mxu0 %v4072
      %4222 = vmatpush.bf16.msra.mxu0 %v4063
      %4223 = vmatmul.bf16.gmra.mxu0 %v3900
      %v4224 = vpop.f32.mrf.mxu0
      %v4225 = vadd.f32 %v3766, %v4224
      %v4226 = vpop.f32.mrf.mxu0
      %v4227 = vadd.f32 %v3768, %v4226
      %4228 = vdwg.mxu0
      %4229 = vmatpush.bf16.msra.mxu0 %v4127
      %4230 = vmatpush.bf16.msra.mxu0 %v4118
      %4231 = vmatpush.bf16.msra.mxu0 %v4109
      %4232 = vmatpush.bf16.msra.mxu0 %v4100
      %4233 = vmatpush.bf16.msra.mxu0 %v4091
      %4234 = vmatpush.bf16.msra.mxu0 %v4082
      %4235 = vmatpush.bf16.msra.mxu0 %v4073
      %4236 = vmatpush.bf16.msra.mxu0 %v4064
      %4237 = vmatmul.bf16.gmra.mxu0 %v3900
      %v4238 = vpop.f32.mrf.mxu0
      %v4239 = vadd.f32 %v3780, %v4238
      %v4240 = vpop.f32.mrf.mxu0
      %v4241 = vadd.f32 %v3782, %v4240
      %4242 = vdwg.mxu0
      %4243 = vmatpush.bf16.msra.mxu0 %v4128
      %4244 = vmatpush.bf16.msra.mxu0 %v4119
      %4245 = vmatpush.bf16.msra.mxu0 %v4110
      %4246 = vmatpush.bf16.msra.mxu0 %v4101
      %4247 = vmatpush.bf16.msra.mxu0 %v4092
      %4248 = vmatpush.bf16.msra.mxu0 %v4083
      %4249 = vmatpush.bf16.msra.mxu0 %v4074
      %4250 = vmatpush.bf16.msra.mxu0 %v4065
      %4251 = vmatmul.bf16.gmra.mxu0 %v3900
      %v4252 = vpop.f32.mrf.mxu0
      %v4253 = vadd.f32 %v3794, %v4252
      %v4254 = vpop.f32.mrf.mxu0
      %v4255 = vadd.f32 %v3796, %v4254
      %4256 = vdwg.mxu0
      %4257 = vmatpush.bf16.msra.mxu0 %v4129
      %4258 = vmatpush.bf16.msra.mxu0 %v4120
      %4259 = vmatpush.bf16.msra.mxu0 %v4111
      %4260 = vmatpush.bf16.msra.mxu0 %v4102
      %4261 = vmatpush.bf16.msra.mxu0 %v4093
      %4262 = vmatpush.bf16.msra.mxu0 %v4084
      %4263 = vmatpush.bf16.msra.mxu0 %v4075
      %4264 = vmatpush.bf16.msra.mxu0 %v4066
      %4265 = vmatmul.bf16.gmra.mxu0 %v3900
      %v4266 = vpop.f32.mrf.mxu0
      %v4267 = vadd.f32 %v3808, %v4266
      %v4268 = vpop.f32.mrf.mxu0
      %v4269 = vadd.f32 %v3810, %v4268
      %4270 = vdwg.mxu0
      %4271 = vmatpush.bf16.msra.mxu0 %v4130
      %4272 = vmatpush.bf16.msra.mxu0 %v4121
      %4273 = vmatpush.bf16.msra.mxu0 %v4112
      %4274 = vmatpush.bf16.msra.mxu0 %v4103
      %4275 = vmatpush.bf16.msra.mxu0 %v4094
      %4276 = vmatpush.bf16.msra.mxu0 %v4085
      %4277 = vmatpush.bf16.msra.mxu0 %v4076
      %4278 = vmatpush.bf16.msra.mxu0 %v4067
      %4279 = vmatmul.bf16.gmra.mxu0 %v3900
      %v4280 = vpop.f32.mrf.mxu0
      %v4281 = vadd.f32 %v3822, %v4280
      %v4282 = vpop.f32.mrf.mxu0
      %v4283 = vadd.f32 %v3824, %v4282
      %4284 = vdwg.mxu0
      %4285 = vmatpush.bf16.msra.mxu0 %v4131
      %4286 = vmatpush.bf16.msra.mxu0 %v4122
      %4287 = vmatpush.bf16.msra.mxu0 %v4113
      %4288 = vmatpush.bf16.msra.mxu0 %v4104
      %4289 = vmatpush.bf16.msra.mxu0 %v4095
      %4290 = vmatpush.bf16.msra.mxu0 %v4086
      %4291 = vmatpush.bf16.msra.mxu0 %v4077
      %4292 = vmatpush.bf16.msra.mxu0 %v4068
      %4293 = vmatmul.bf16.gmra.mxu0 %v3900
      %v4294 = vpop.f32.mrf.mxu0
      %v4295 = vadd.f32 %v3836, %v4294
      %v4296 = vpop.f32.mrf.mxu0
      %v4297 = vadd.f32 %v3838, %v4296
      %4298 = vdwg.mxu0
      %4299 = vmatpush.bf16.msra.mxu0 %v4132
      %4300 = vmatpush.bf16.msra.mxu0 %v4123
      %4301 = vmatpush.bf16.msra.mxu0 %v4114
      %4302 = vmatpush.bf16.msra.mxu0 %v4105
      %4303 = vmatpush.bf16.msra.mxu0 %v4096
      %4304 = vmatpush.bf16.msra.mxu0 %v4087
      %4305 = vmatpush.bf16.msra.mxu0 %v4078
      %4306 = vmatpush.bf16.msra.mxu0 %v4069
      %4307 = vmatmul.bf16.gmra.mxu0 %v3900
      %v4308 = vpop.f32.mrf.mxu0
      %v4309 = vadd.f32 %v3850, %v4308
      %v4310 = vpop.f32.mrf.mxu0
      %v4311 = vadd.f32 %v3852, %v4310
      %4312 = vdwg.mxu0
      %4313 = vmatpush.bf16.msra.mxu0 %v4133
      %4314 = vmatpush.bf16.msra.mxu0 %v4124
      %4315 = vmatpush.bf16.msra.mxu0 %v4115
      %4316 = vmatpush.bf16.msra.mxu0 %v4106
      %4317 = vmatpush.bf16.msra.mxu0 %v4097
      %4318 = vmatpush.bf16.msra.mxu0 %v4088
      %4319 = vmatpush.bf16.msra.mxu0 %v4079
      %4320 = vmatpush.bf16.msra.mxu0 %v4070
      %4321 = vmatmul.bf16.gmra.mxu0 %v3900
      %v4322 = vpop.f32.mrf.mxu0
      %v4323 = vadd.f32 %v3864, %v4322
      %v4324 = vpop.f32.mrf.mxu0
      %v4325 = vadd.f32 %v3866, %v4324
      %4326 = vdwg.mxu0
      %4327 = vmatpush.bf16.msra.mxu0 %v4134
      %4328 = vmatpush.bf16.msra.mxu0 %v4125
      %4329 = vmatpush.bf16.msra.mxu0 %v4116
      %4330 = vmatpush.bf16.msra.mxu0 %v4107
      %4331 = vmatpush.bf16.msra.mxu0 %v4098
      %4332 = vmatpush.bf16.msra.mxu0 %v4089
      %4333 = vmatpush.bf16.msra.mxu0 %v4080
      %4334 = vmatpush.bf16.msra.mxu0 %v4071
      %4335 = vmatmul.bf16.gmra.mxu0 %v3900
      %v4336 = vpop.f32.mrf.mxu0
      %v4337 = vadd.f32 %v3878, %v4336
      %v4338 = vpop.f32.mrf.mxu0
      %v4339 = vadd.f32 %v3880, %v4338
      %4340 = vdwg.mxu0
      %4341 = vmatpush.bf16.msra.mxu0 %v4061
      %4342 = vmatpush.bf16.msra.mxu0 %v4041
      %4343 = vmatpush.bf16.msra.mxu0 %v4021
      %4344 = vmatpush.bf16.msra.mxu0 %v4001
      %4345 = vmatpush.bf16.msra.mxu0 %v3981
      %4346 = vmatpush.bf16.msra.mxu0 %v3961
      %4347 = vmatpush.bf16.msra.mxu0 %v3941
      %4348 = vmatpush.bf16.msra.mxu0 %v3921
      %4349 = vmatmul.bf16.gmra.mxu0 %v3900
      %v4350 = vpop.f32.mrf.mxu0
      %v4351 = vadd.f32 %v3892, %v4350
      %v4352 = vpop.f32.mrf.mxu0
      %v4353 = vadd.f32 %v3894, %v4352
      %4354 = vdwg.mxu0
      %s4355 = scalar_lea.vmem %s5, 16
      %v4356 = vld [vmem:[%s4355] sm:$0xf]
      %v4357 = vld [vmem:[%s4355 + $0x4] sm:$0xf]
      %v4360 = vunpack.c.l.b16 %v4356
      %v4361 = vunpack.c.l.b16 %v4357
      %v4362 = vpack.c.b16 %v4361, %v4360
      %4364 = vrot.lane.b32.xlu0 %v3238, 91
      %v4365 = vpop.permute.xlu0 %4364
      %4366 = vrot.lane.b32.xlu0 %v3239, 91
      %v4367 = vpop.permute.xlu0 %4366
      %4368 = vrot.lane.b32.xlu0 %v3240, 91
      %v4369 = vpop.permute.xlu0 %4368
      %4370 = vrot.lane.b32.xlu0 %v3241, 91
      %v4371 = vpop.permute.xlu0 %4370
      %4372 = vrot.lane.b32.xlu0 %v3242, 91
      %v4373 = vpop.permute.xlu0 %4372
      %4374 = vrot.lane.b32.xlu0 %v3243, 91
      %v4375 = vpop.permute.xlu0 %4374
      %4376 = vrot.lane.b32.xlu0 %v3244, 91
      %v4377 = vpop.permute.xlu0 %4376
      %4378 = vrot.lane.b32.xlu0 %v3245, 91
      %v4379 = vpop.permute.xlu0 %4378
      %4380 = vrot.lane.b32.xlu0 %v3246, 91
      %v4381 = vpop.permute.xlu0 %4380
      %4382 = vrot.lane.b32.xlu0 %v3247, 91
      %v4383 = vpop.permute.xlu0 %4382
      %4384 = vrot.lane.b32.xlu0 %v3248, 91
      %v4385 = vpop.permute.xlu0 %4384
      %4386 = vrot.lane.b32.xlu0 %v3249, 91
      %v4387 = vpop.permute.xlu0 %4386
      %4388 = vrot.lane.b32.xlu0 %v3250, 91
      %v4389 = vpop.permute.xlu0 %4388
      %4390 = vrot.lane.b32.xlu0 %v3251, 91
      %v4391 = vpop.permute.xlu0 %4390
      %4392 = vrot.lane.b32.xlu0 %v3252, 91
      %v4393 = vpop.permute.xlu0 %4392
      %4394 = vrot.lane.b32.xlu0 %v3253, 91
      %v4395 = vpop.permute.xlu0 %4394
      %4396 = vrot.lane.b32.xlu0 %v3254, 91
      %v4397 = vpop.permute.xlu0 %4396
      %4398 = vrot.lane.b32.xlu0 %v3255, 91
      %v4399 = vpop.permute.xlu0 %4398
      %4400 = vrot.lane.b32.xlu0 %v3256, 91
      %v4401 = vpop.permute.xlu0 %4400
      %4402 = vrot.lane.b32.xlu0 %v3257, 91
      %v4403 = vpop.permute.xlu0 %4402
      %4404 = vrot.lane.b32.xlu0 %v3259, 91
      %v4405 = vpop.permute.xlu0 %4404
      %4406 = vrot.lane.b32.xlu0 %v3298, 91
      %v4407 = vpop.permute.xlu0 %4406
      %4408 = vrot.lane.b32.xlu0 %v3299, 91
      %v4409 = vpop.permute.xlu0 %4408
      %4410 = vrot.lane.b32.xlu0 %v3300, 91
      %v4411 = vpop.permute.xlu0 %4410
      %4412 = vrot.lane.b32.xlu0 %v3301, 91
      %v4413 = vpop.permute.xlu0 %4412
      %4414 = vrot.lane.b32.xlu0 %v3302, 91
      %v4415 = vpop.permute.xlu0 %4414
      %4416 = vrot.lane.b32.xlu0 %v3303, 91
      %v4417 = vpop.permute.xlu0 %4416
      %4418 = vrot.lane.b32.xlu0 %v3304, 91
      %v4419 = vpop.permute.xlu0 %4418
      %4420 = vrot.lane.b32.xlu0 %v3305, 91
      %v4421 = vpop.permute.xlu0 %4420
      %4422 = vrot.lane.b32.xlu0 %v3306, 91
      %v4423 = vpop.permute.xlu0 %4422
      %4424 = vrot.lane.b32.xlu0 %v3279, 91
      %v4425 = vpop.permute.xlu0 %4424
      %4426 = vrot.lane.b32.xlu0 %v3307, 91
      %v4427 = vpop.permute.xlu0 %4426
      %4428 = vrot.lane.b32.xlu0 %v3308, 91
      %v4429 = vpop.permute.xlu0 %4428
      %4430 = vrot.lane.b32.xlu0 %v3309, 91
      %v4431 = vpop.permute.xlu0 %4430
      %4432 = vrot.lane.b32.xlu0 %v3310, 91
      %v4433 = vpop.permute.xlu0 %4432
      %4434 = vrot.lane.b32.xlu0 %v3311, 91
      %v4435 = vpop.permute.xlu0 %4434
      %4436 = vrot.lane.b32.xlu0 %v3312, 91
      %v4437 = vpop.permute.xlu0 %4436
      %4438 = vrot.lane.b32.xlu0 %v3313, 91
      %v4439 = vpop.permute.xlu0 %4438
      %4440 = vrot.lane.b32.xlu0 %v3314, 91
      %v4441 = vpop.permute.xlu0 %4440
      %4442 = vrot.lane.b32.xlu0 %v3315, 91
      %v4443 = vpop.permute.xlu0 %4442
      %4444 = vrot.lane.b32.xlu0 %v3317, 91
      %v4445 = vpop.permute.xlu0 %4444
      %4446 = vrot.lane.b32.xlu0 %v3356, 91
      %v4447 = vpop.permute.xlu0 %4446
      %4448 = vrot.lane.b32.xlu0 %v3357, 91
      %v4449 = vpop.permute.xlu0 %4448
      %4450 = vrot.lane.b32.xlu0 %v3358, 91
      %v4451 = vpop.permute.xlu0 %4450
      %4452 = vrot.lane.b32.xlu0 %v3359, 91
      %v4453 = vpop.permute.xlu0 %4452
      %4454 = vrot.lane.b32.xlu0 %v3360, 91
      %v4455 = vpop.permute.xlu0 %4454
      %4456 = vrot.lane.b32.xlu0 %v3361, 91
      %v4457 = vpop.permute.xlu0 %4456
      %4458 = vrot.lane.b32.xlu0 %v3362, 91
      %v4459 = vpop.permute.xlu0 %4458
      %4460 = vrot.lane.b32.xlu0 %v3363, 91
      %v4461 = vpop.permute.xlu0 %4460
      %4462 = vrot.lane.b32.xlu0 %v3364, 91
      %v4463 = vpop.permute.xlu0 %4462
      %4464 = vrot.lane.b32.xlu0 %v3337, 91
      %v4465 = vpop.permute.xlu0 %4464
      %4466 = vrot.lane.b32.xlu0 %v3365, 91
      %v4467 = vpop.permute.xlu0 %4466
      %4468 = vrot.lane.b32.xlu0 %v3366, 91
      %v4469 = vpop.permute.xlu0 %4468
      %4470 = vrot.lane.b32.xlu0 %v3367, 91
      %v4471 = vpop.permute.xlu0 %4470
      %4472 = vrot.lane.b32.xlu0 %v3368, 91
      %v4473 = vpop.permute.xlu0 %4472
      %4474 = vrot.lane.b32.xlu0 %v3369, 91
      %v4475 = vpop.permute.xlu0 %4474
      %4476 = vrot.lane.b32.xlu0 %v3370, 91
      %v4477 = vpop.permute.xlu0 %4476
      %4478 = vrot.lane.b32.xlu0 %v3371, 91
      %v4479 = vpop.permute.xlu0 %4478
      %4480 = vrot.lane.b32.xlu0 %v3372, 91
      %v4481 = vpop.permute.xlu0 %4480
      %4482 = vrot.lane.b32.xlu0 %v3373, 91
      %v4483 = vpop.permute.xlu0 %4482
      %4484 = vrot.lane.b32.xlu0 %v3375, 91
      %v4485 = vpop.permute.xlu0 %4484
      %4486 = vrot.lane.b32.xlu0 %v3414, 91
      %v4487 = vpop.permute.xlu0 %4486
      %4488 = vrot.lane.b32.xlu0 %v3415, 91
      %v4489 = vpop.permute.xlu0 %4488
      %4490 = vrot.lane.b32.xlu0 %v3416, 91
      %v4491 = vpop.permute.xlu0 %4490
      %4492 = vrot.lane.b32.xlu0 %v3417, 91
      %v4493 = vpop.permute.xlu0 %4492
      %4494 = vrot.lane.b32.xlu0 %v3418, 91
      %v4495 = vpop.permute.xlu0 %4494
      %4496 = vrot.lane.b32.xlu0 %v3419, 91
      %v4497 = vpop.permute.xlu0 %4496
      %4498 = vrot.lane.b32.xlu0 %v3420, 91
      %v4499 = vpop.permute.xlu0 %4498
      %4500 = vrot.lane.b32.xlu0 %v3421, 91
      %v4501 = vpop.permute.xlu0 %4500
      %4502 = vrot.lane.b32.xlu0 %v3422, 91
      %v4503 = vpop.permute.xlu0 %4502
      %4504 = vrot.lane.b32.xlu0 %v3395, 91
      %v4505 = vpop.permute.xlu0 %4504
      %4506 = vrot.lane.b32.xlu0 %v3423, 91
      %v4507 = vpop.permute.xlu0 %4506
      %4508 = vrot.lane.b32.xlu0 %v3424, 91
      %v4509 = vpop.permute.xlu0 %4508
      %4510 = vrot.lane.b32.xlu0 %v3425, 91
      %v4511 = vpop.permute.xlu0 %4510
      %4512 = vrot.lane.b32.xlu0 %v3426, 91
      %v4513 = vpop.permute.xlu0 %4512
      %4514 = vrot.lane.b32.xlu0 %v3427, 91
      %v4515 = vpop.permute.xlu0 %4514
      %4516 = vrot.lane.b32.xlu0 %v3428, 91
      %v4517 = vpop.permute.xlu0 %4516
      %4518 = vrot.lane.b32.xlu0 %v3429, 91
      %v4519 = vpop.permute.xlu0 %4518
      %4520 = vrot.lane.b32.xlu0 %v3430, 91
      %v4521 = vpop.permute.xlu0 %4520
      %4522 = vrot.lane.b32.xlu0 %v3431, 91
      %v4523 = vpop.permute.xlu0 %4522
      %vm4524 = vcmask 744448
      %v4525 = vsel %vm4524, %v4365, %v4367
      %v4526 = vsel %vm4524, %v4367, %v4369
      %v4527 = vsel %vm4524, %v4369, %v4371
      %v4528 = vsel %vm4524, %v4371, %v4373
      %v4529 = vsel %vm4524, %v4373, %v4375
      %v4530 = vsel %vm4524, %v4375, %v4377
      %v4531 = vsel %vm4524, %v4377, %v4379
      %v4532 = vsel %vm4524, %v4379, %v4381
      %v4533 = vsel %vm4524, %v4381, %v4383
      %v4534 = vsel %vm4524, %v4385, %v4387
      %v4535 = vsel %vm4524, %v4387, %v4389
      %v4536 = vsel %vm4524, %v4389, %v4391
      %v4537 = vsel %vm4524, %v4391, %v4393
      %v4538 = vsel %vm4524, %v4393, %v4395
      %v4539 = vsel %vm4524, %v4395, %v4397
      %v4540 = vsel %vm4524, %v4397, %v4399
      %v4541 = vsel %vm4524, %v4399, %v4401
      %v4542 = vsel %vm4524, %v4401, %v4403
      %v4543 = vsel %vm4524, %v4405, %v4407
      %v4544 = vsel %vm4524, %v4407, %v4409
      %v4545 = vsel %vm4524, %v4409, %v4411
      %v4546 = vsel %vm4524, %v4411, %v4413
      %v4547 = vsel %vm4524, %v4413, %v4415
      %v4548 = vsel %vm4524, %v4415, %v4417
      %v4549 = vsel %vm4524, %v4417, %v4419
      %v4550 = vsel %vm4524, %v4419, %v4421
      %v4551 = vsel %vm4524, %v4421, %v4423
      %v4552 = vsel %vm4524, %v4425, %v4427
      %v4553 = vsel %vm4524, %v4427, %v4429
      %v4554 = vsel %vm4524, %v4429, %v4431
      %v4555 = vsel %vm4524, %v4431, %v4433
      %v4556 = vsel %vm4524, %v4433, %v4435
      %v4557 = vsel %vm4524, %v4435, %v4437
      %v4558 = vsel %vm4524, %v4437, %v4439
      %v4559 = vsel %vm4524, %v4439, %v4441
      %v4560 = vsel %vm4524, %v4441, %v4443
      %v4561 = vsel %vm4524, %v4445, %v4447
      %v4562 = vsel %vm4524, %v4447, %v4449
      %v4563 = vsel %vm4524, %v4449, %v4451
      %v4564 = vsel %vm4524, %v4451, %v4453
      %v4565 = vsel %vm4524, %v4453, %v4455
      %v4566 = vsel %vm4524, %v4455, %v4457
      %v4567 = vsel %vm4524, %v4457, %v4459
      %v4568 = vsel %vm4524, %v4459, %v4461
      %v4569 = vsel %vm4524, %v4461, %v4463
      %v4570 = vsel %vm4524, %v4465, %v4467
      %v4571 = vsel %vm4524, %v4467, %v4469
      %v4572 = vsel %vm4524, %v4469, %v4471
      %v4573 = vsel %vm4524, %v4471, %v4473
      %v4574 = vsel %vm4524, %v4473, %v4475
      %v4575 = vsel %vm4524, %v4475, %v4477
      %v4576 = vsel %vm4524, %v4477, %v4479
      %v4577 = vsel %vm4524, %v4479, %v4481
      %v4578 = vsel %vm4524, %v4481, %v4483
      %v4579 = vsel %vm4524, %v4485, %v4487
      %v4580 = vsel %vm4524, %v4487, %v4489
      %v4581 = vsel %vm4524, %v4489, %v4491
      %v4582 = vsel %vm4524, %v4491, %v4493
      %v4583 = vsel %vm4524, %v4493, %v4495
      %v4584 = vsel %vm4524, %v4495, %v4497
      %v4585 = vsel %vm4524, %v4497, %v4499
      %v4586 = vsel %vm4524, %v4499, %v4501
      %v4587 = vsel %vm4524, %v4501, %v4503
      %v4588 = vsel %vm4524, %v4505, %v4507
      %v4589 = vsel %vm4524, %v4507, %v4509
      %v4590 = vsel %vm4524, %v4509, %v4511
      %v4591 = vsel %vm4524, %v4511, %v4513
      %v4592 = vsel %vm4524, %v4513, %v4515
      %v4593 = vsel %vm4524, %v4515, %v4517
      %v4594 = vsel %vm4524, %v4517, %v4519
      %v4595 = vsel %vm4524, %v4519, %v4521
      %v4596 = vsel %vm4524, %v4521, %v4523
      %4677 = vmatpush.bf16.msra.mxu0 %v4588
      %4678 = vmatpush.bf16.msra.mxu0 %v4579
      %4679 = vmatpush.bf16.msra.mxu0 %v4570
      %4680 = vmatpush.bf16.msra.mxu0 %v4561
      %4681 = vmatpush.bf16.msra.mxu0 %v4552
      %4682 = vmatpush.bf16.msra.mxu0 %v4543
      %4683 = vmatpush.bf16.msra.mxu0 %v4534
      %4684 = vmatpush.bf16.msra.mxu0 %v4525
      %4685 = vmatmul.bf16.gmra.mxu0 %v4362
      %v4686 = vpop.f32.mrf.mxu0
      %v4687 = vadd.f32 0.0, %v4686
      %v4688 = vpop.f32.mrf.mxu0
      %v4689 = vadd.f32 0.0, %v4688
      %4690 = vdwg.mxu0
      %4691 = vmatpush.bf16.msra.mxu0 %v4589
      %4692 = vmatpush.bf16.msra.mxu0 %v4580
      %4693 = vmatpush.bf16.msra.mxu0 %v4571
      %4694 = vmatpush.bf16.msra.mxu0 %v4562
      %4695 = vmatpush.bf16.msra.mxu0 %v4553
      %4696 = vmatpush.bf16.msra.mxu0 %v4544
      %4697 = vmatpush.bf16.msra.mxu0 %v4535
      %4698 = vmatpush.bf16.msra.mxu0 %v4526
      %4699 = vmatmul.bf16.gmra.mxu0 %v4362
      %v4700 = vpop.f32.mrf.mxu0
      %v4701 = vadd.f32 0.0, %v4700
      %v4702 = vpop.f32.mrf.mxu0
      %v4703 = vadd.f32 0.0, %v4702
      %4704 = vdwg.mxu0
      %4705 = vmatpush.bf16.msra.mxu0 %v4590
      %4706 = vmatpush.bf16.msra.mxu0 %v4581
      %4707 = vmatpush.bf16.msra.mxu0 %v4572
      %4708 = vmatpush.bf16.msra.mxu0 %v4563
      %4709 = vmatpush.bf16.msra.mxu0 %v4554
      %4710 = vmatpush.bf16.msra.mxu0 %v4545
      %4711 = vmatpush.bf16.msra.mxu0 %v4536
      %4712 = vmatpush.bf16.msra.mxu0 %v4527
      %4713 = vmatmul.bf16.gmra.mxu0 %v4362
      %v4714 = vpop.f32.mrf.mxu0
      %v4715 = vadd.f32 0.0, %v4714
      %v4716 = vpop.f32.mrf.mxu0
      %v4717 = vadd.f32 0.0, %v4716
      %4718 = vdwg.mxu0
      %4719 = vmatpush.bf16.msra.mxu0 %v4591
      %4720 = vmatpush.bf16.msra.mxu0 %v4582
      %4721 = vmatpush.bf16.msra.mxu0 %v4573
      %4722 = vmatpush.bf16.msra.mxu0 %v4564
      %4723 = vmatpush.bf16.msra.mxu0 %v4555
      %4724 = vmatpush.bf16.msra.mxu0 %v4546
      %4725 = vmatpush.bf16.msra.mxu0 %v4537
      %4726 = vmatpush.bf16.msra.mxu0 %v4528
      %4727 = vmatmul.bf16.gmra.mxu0 %v4362
      %v4728 = vpop.f32.mrf.mxu0
      %v4729 = vadd.f32 0.0, %v4728
      %v4730 = vpop.f32.mrf.mxu0
      %v4731 = vadd.f32 0.0, %v4730
      %4732 = vdwg.mxu0
      %4733 = vmatpush.bf16.msra.mxu0 %v4592
      %4734 = vmatpush.bf16.msra.mxu0 %v4583
      %4735 = vmatpush.bf16.msra.mxu0 %v4574
      %4736 = vmatpush.bf16.msra.mxu0 %v4565
      %4737 = vmatpush.bf16.msra.mxu0 %v4556
      %4738 = vmatpush.bf16.msra.mxu0 %v4547
      %4739 = vmatpush.bf16.msra.mxu0 %v4538
      %4740 = vmatpush.bf16.msra.mxu0 %v4529
      %4741 = vmatmul.bf16.gmra.mxu0 %v4362
      %v4742 = vpop.f32.mrf.mxu0
      %v4743 = vadd.f32 0.0, %v4742
      %v4744 = vpop.f32.mrf.mxu0
      %v4745 = vadd.f32 0.0, %v4744
      %4746 = vdwg.mxu0
      %4747 = vmatpush.bf16.msra.mxu0 %v4593
      %4748 = vmatpush.bf16.msra.mxu0 %v4584
      %4749 = vmatpush.bf16.msra.mxu0 %v4575
      %4750 = vmatpush.bf16.msra.mxu0 %v4566
      %4751 = vmatpush.bf16.msra.mxu0 %v4557
      %4752 = vmatpush.bf16.msra.mxu0 %v4548
      %4753 = vmatpush.bf16.msra.mxu0 %v4539
      %4754 = vmatpush.bf16.msra.mxu0 %v4530
      %4755 = vmatmul.bf16.gmra.mxu0 %v4362
      %v4756 = vpop.f32.mrf.mxu0
      %v4757 = vadd.f32 0.0, %v4756
      %v4758 = vpop.f32.mrf.mxu0
      %v4759 = vadd.f32 0.0, %v4758
      %4760 = vdwg.mxu0
      %4761 = vmatpush.bf16.msra.mxu0 %v4594
      %4762 = vmatpush.bf16.msra.mxu0 %v4585
      %4763 = vmatpush.bf16.msra.mxu0 %v4576
      %4764 = vmatpush.bf16.msra.mxu0 %v4567
      %4765 = vmatpush.bf16.msra.mxu0 %v4558
      %4766 = vmatpush.bf16.msra.mxu0 %v4549
      %4767 = vmatpush.bf16.msra.mxu0 %v4540
      %4768 = vmatpush.bf16.msra.mxu0 %v4531
      %4769 = vmatmul.bf16.gmra.mxu0 %v4362
      %v4770 = vpop.f32.mrf.mxu0
      %v4771 = vadd.f32 0.0, %v4770
      %v4772 = vpop.f32.mrf.mxu0
      %v4773 = vadd.f32 0.0, %v4772
      %4774 = vdwg.mxu0
      %4775 = vmatpush.bf16.msra.mxu0 %v4595
      %4776 = vmatpush.bf16.msra.mxu0 %v4586
      %4777 = vmatpush.bf16.msra.mxu0 %v4577
      %4778 = vmatpush.bf16.msra.mxu0 %v4568
      %4779 = vmatpush.bf16.msra.mxu0 %v4559
      %4780 = vmatpush.bf16.msra.mxu0 %v4550
      %4781 = vmatpush.bf16.msra.mxu0 %v4541
      %4782 = vmatpush.bf16.msra.mxu0 %v4532
      %4783 = vmatmul.bf16.gmra.mxu0 %v4362
      %v4784 = vpop.f32.mrf.mxu0
      %v4785 = vadd.f32 0.0, %v4784
      %v4786 = vpop.f32.mrf.mxu0
      %v4787 = vadd.f32 0.0, %v4786
      %4788 = vdwg.mxu0
      %4789 = vmatpush.bf16.msra.mxu0 %v4596
      %4790 = vmatpush.bf16.msra.mxu0 %v4587
      %4791 = vmatpush.bf16.msra.mxu0 %v4578
      %4792 = vmatpush.bf16.msra.mxu0 %v4569
      %4793 = vmatpush.bf16.msra.mxu0 %v4560
      %4794 = vmatpush.bf16.msra.mxu0 %v4551
      %4795 = vmatpush.bf16.msra.mxu0 %v4542
      %4796 = vmatpush.bf16.msra.mxu0 %v4533
      %4797 = vmatmul.bf16.gmra.mxu0 %v4362
      %v4798 = vpop.f32.mrf.mxu0
      %v4799 = vadd.f32 0.0, %v4798
      %v4800 = vpop.f32.mrf.mxu0
      %v4801 = vadd.f32 0.0, %v4800
      %4802 = vdwg.mxu0
      %4803 = vmatpush.bf16.msra.mxu0 %v4523
      %4804 = vmatpush.bf16.msra.mxu0 %v4503
      %4805 = vmatpush.bf16.msra.mxu0 %v4483
      %4806 = vmatpush.bf16.msra.mxu0 %v4463
      %4807 = vmatpush.bf16.msra.mxu0 %v4443
      %4808 = vmatpush.bf16.msra.mxu0 %v4423
      %4809 = vmatpush.bf16.msra.mxu0 %v4403
      %4810 = vmatpush.bf16.msra.mxu0 %v4383
      %4811 = vmatmul.bf16.gmra.mxu0 %v4362
      %v4812 = vpop.f32.mrf.mxu0
      %v4813 = vadd.f32 0.0, %v4812
      %v4814 = vpop.f32.mrf.mxu0
      %v4815 = vadd.f32 0.0, %v4814
      %4816 = vdwg.mxu0
      %v4817 = vadd.f32 %v4225, %v4687
      %v4818 = vadd.f32 %v4239, %v4701
      %v4819 = vadd.f32 %v4253, %v4715
      %v4820 = vadd.f32 %v4267, %v4729
      %v4821 = vadd.f32 %v4281, %v4743
      %v4822 = vadd.f32 %v4295, %v4757
      %v4823 = vadd.f32 %v4309, %v4771
      %v4824 = vadd.f32 %v4323, %v4785
      %v4825 = vadd.f32 %v4337, %v4799
      %v4826 = vadd.f32 %v4351, %v4813
      %v4827 = vadd.f32 %v4227, %v4689
      %v4828 = vadd.f32 %v4241, %v4703
      %v4829 = vadd.f32 %v4255, %v4717
      %v4830 = vadd.f32 %v4269, %v4731
      %v4831 = vadd.f32 %v4283, %v4745
      %v4832 = vadd.f32 %v4297, %v4759
      %v4833 = vadd.f32 %v4311, %v4773
      %v4834 = vadd.f32 %v4325, %v4787
      %v4835 = vadd.f32 %v4339, %v4801
      %v4836 = vadd.f32 %v4353, %v4815
      %s4837 = scalar_lea.vmem %s5, 24
      %v4838 = vld [vmem:[%s4837] sm:$0xf]
      %v4839 = vld [vmem:[%s4837 + $0x4] sm:$0xf]
      %v4842 = vunpack.c.l.b16 %v4838
      %v4843 = vunpack.c.l.b16 %v4839
      %v4844 = vpack.c.b16 %v4843, %v4842
      %4846 = vrot.lane.b32.xlu0 %v3238, 125
      %v4847 = vpop.permute.xlu0 %4846
      %4848 = vrot.lane.b32.xlu0 %v3239, 125
      %v4849 = vpop.permute.xlu0 %4848
      %4850 = vrot.lane.b32.xlu0 %v3240, 125
      %v4851 = vpop.permute.xlu0 %4850
      %4852 = vrot.lane.b32.xlu0 %v3241, 125
      %v4853 = vpop.permute.xlu0 %4852
      %4854 = vrot.lane.b32.xlu0 %v3242, 125
      %v4855 = vpop.permute.xlu0 %4854
      %4856 = vrot.lane.b32.xlu0 %v3243, 125
      %v4857 = vpop.permute.xlu0 %4856
      %4858 = vrot.lane.b32.xlu0 %v3244, 125
      %v4859 = vpop.permute.xlu0 %4858
      %4860 = vrot.lane.b32.xlu0 %v3245, 125
      %v4861 = vpop.permute.xlu0 %4860
      %4862 = vrot.lane.b32.xlu0 %v3246, 125
      %v4863 = vpop.permute.xlu0 %4862
      %4864 = vrot.lane.b32.xlu0 %v3247, 125
      %v4865 = vpop.permute.xlu0 %4864
      %4866 = vrot.lane.b32.xlu0 %v3248, 125
      %v4867 = vpop.permute.xlu0 %4866
      %4868 = vrot.lane.b32.xlu0 %v3249, 125
      %v4869 = vpop.permute.xlu0 %4868
      %4870 = vrot.lane.b32.xlu0 %v3250, 125
      %v4871 = vpop.permute.xlu0 %4870
      %4872 = vrot.lane.b32.xlu0 %v3251, 125
      %v4873 = vpop.permute.xlu0 %4872
      %4874 = vrot.lane.b32.xlu0 %v3252, 125
      %v4875 = vpop.permute.xlu0 %4874
      %4876 = vrot.lane.b32.xlu0 %v3253, 125
      %v4877 = vpop.permute.xlu0 %4876
      %4878 = vrot.lane.b32.xlu0 %v3254, 125
      %v4879 = vpop.permute.xlu0 %4878
      %4880 = vrot.lane.b32.xlu0 %v3255, 125
      %v4881 = vpop.permute.xlu0 %4880
      %4882 = vrot.lane.b32.xlu0 %v3256, 125
      %v4883 = vpop.permute.xlu0 %4882
      %4884 = vrot.lane.b32.xlu0 %v3257, 125
      %v4885 = vpop.permute.xlu0 %4884
      %4886 = vrot.lane.b32.xlu0 %v3259, 125
      %v4887 = vpop.permute.xlu0 %4886
      %4888 = vrot.lane.b32.xlu0 %v3298, 125
      %v4889 = vpop.permute.xlu0 %4888
      %4890 = vrot.lane.b32.xlu0 %v3299, 125
      %v4891 = vpop.permute.xlu0 %4890
      %4892 = vrot.lane.b32.xlu0 %v3300, 125
      %v4893 = vpop.permute.xlu0 %4892
      %4894 = vrot.lane.b32.xlu0 %v3301, 125
      %v4895 = vpop.permute.xlu0 %4894
      %4896 = vrot.lane.b32.xlu0 %v3302, 125
      %v4897 = vpop.permute.xlu0 %4896
      %4898 = vrot.lane.b32.xlu0 %v3303, 125
      %v4899 = vpop.permute.xlu0 %4898
      %4900 = vrot.lane.b32.xlu0 %v3304, 125
      %v4901 = vpop.permute.xlu0 %4900
      %4902 = vrot.lane.b32.xlu0 %v3305, 125
      %v4903 = vpop.permute.xlu0 %4902
      %4904 = vrot.lane.b32.xlu0 %v3306, 125
      %v4905 = vpop.permute.xlu0 %4904
      %4906 = vrot.lane.b32.xlu0 %v3279, 125
      %v4907 = vpop.permute.xlu0 %4906
      %4908 = vrot.lane.b32.xlu0 %v3307, 125
      %v4909 = vpop.permute.xlu0 %4908
      %4910 = vrot.lane.b32.xlu0 %v3308, 125
      %v4911 = vpop.permute.xlu0 %4910
      %4912 = vrot.lane.b32.xlu0 %v3309, 125
      %v4913 = vpop.permute.xlu0 %4912
      %4914 = vrot.lane.b32.xlu0 %v3310, 125
      %v4915 = vpop.permute.xlu0 %4914
      %4916 = vrot.lane.b32.xlu0 %v3311, 125
      %v4917 = vpop.permute.xlu0 %4916
      %4918 = vrot.lane.b32.xlu0 %v3312, 125
      %v4919 = vpop.permute.xlu0 %4918
      %4920 = vrot.lane.b32.xlu0 %v3313, 125
      %v4921 = vpop.permute.xlu0 %4920
      %4922 = vrot.lane.b32.xlu0 %v3314, 125
      %v4923 = vpop.permute.xlu0 %4922
      %4924 = vrot.lane.b32.xlu0 %v3315, 125
      %v4925 = vpop.permute.xlu0 %4924
      %4926 = vrot.lane.b32.xlu0 %v3317, 125
      %v4927 = vpop.permute.xlu0 %4926
      %4928 = vrot.lane.b32.xlu0 %v3356, 125
      %v4929 = vpop.permute.xlu0 %4928
      %4930 = vrot.lane.b32.xlu0 %v3357, 125
      %v4931 = vpop.permute.xlu0 %4930
      %4932 = vrot.lane.b32.xlu0 %v3358, 125
      %v4933 = vpop.permute.xlu0 %4932
      %4934 = vrot.lane.b32.xlu0 %v3359, 125
      %v4935 = vpop.permute.xlu0 %4934
      %4936 = vrot.lane.b32.xlu0 %v3360, 125
      %v4937 = vpop.permute.xlu0 %4936
      %4938 = vrot.lane.b32.xlu0 %v3361, 125
      %v4939 = vpop.permute.xlu0 %4938
      %4940 = vrot.lane.b32.xlu0 %v3362, 125
      %v4941 = vpop.permute.xlu0 %4940
      %4942 = vrot.lane.b32.xlu0 %v3363, 125
      %v4943 = vpop.permute.xlu0 %4942
      %4944 = vrot.lane.b32.xlu0 %v3364, 125
      %v4945 = vpop.permute.xlu0 %4944
      %4946 = vrot.lane.b32.xlu0 %v3337, 125
      %v4947 = vpop.permute.xlu0 %4946
      %4948 = vrot.lane.b32.xlu0 %v3365, 125
      %v4949 = vpop.permute.xlu0 %4948
      %4950 = vrot.lane.b32.xlu0 %v3366, 125
      %v4951 = vpop.permute.xlu0 %4950
      %4952 = vrot.lane.b32.xlu0 %v3367, 125
      %v4953 = vpop.permute.xlu0 %4952
      %4954 = vrot.lane.b32.xlu0 %v3368, 125
      %v4955 = vpop.permute.xlu0 %4954
      %4956 = vrot.lane.b32.xlu0 %v3369, 125
      %v4957 = vpop.permute.xlu0 %4956
      %4958 = vrot.lane.b32.xlu0 %v3370, 125
      %v4959 = vpop.permute.xlu0 %4958
      %4960 = vrot.lane.b32.xlu0 %v3371, 125
      %v4961 = vpop.permute.xlu0 %4960
      %4962 = vrot.lane.b32.xlu0 %v3372, 125
      %v4963 = vpop.permute.xlu0 %4962
      %4964 = vrot.lane.b32.xlu0 %v3373, 125
      %v4965 = vpop.permute.xlu0 %4964
      %4966 = vrot.lane.b32.xlu0 %v3375, 125
      %v4967 = vpop.permute.xlu0 %4966
      %4968 = vrot.lane.b32.xlu0 %v3414, 125
      %v4969 = vpop.permute.xlu0 %4968
      %4970 = vrot.lane.b32.xlu0 %v3415, 125
      %v4971 = vpop.permute.xlu0 %4970
      %4972 = vrot.lane.b32.xlu0 %v3416, 125
      %v4973 = vpop.permute.xlu0 %4972
      %4974 = vrot.lane.b32.xlu0 %v3417, 125
      %v4975 = vpop.permute.xlu0 %4974
      %4976 = vrot.lane.b32.xlu0 %v3418, 125
      %v4977 = vpop.permute.xlu0 %4976
      %4978 = vrot.lane.b32.xlu0 %v3419, 125
      %v4979 = vpop.permute.xlu0 %4978
      %4980 = vrot.lane.b32.xlu0 %v3420, 125
      %v4981 = vpop.permute.xlu0 %4980
      %4982 = vrot.lane.b32.xlu0 %v3421, 125
      %v4983 = vpop.permute.xlu0 %4982
      %4984 = vrot.lane.b32.xlu0 %v3422, 125
      %v4985 = vpop.permute.xlu0 %4984
      %4986 = vrot.lane.b32.xlu0 %v3395, 125
      %v4987 = vpop.permute.xlu0 %4986
      %4988 = vrot.lane.b32.xlu0 %v3423, 125
      %v4989 = vpop.permute.xlu0 %4988
      %4990 = vrot.lane.b32.xlu0 %v3424, 125
      %v4991 = vpop.permute.xlu0 %4990
      %4992 = vrot.lane.b32.xlu0 %v3425, 125
      %v4993 = vpop.permute.xlu0 %4992
      %4994 = vrot.lane.b32.xlu0 %v3426, 125
      %v4995 = vpop.permute.xlu0 %4994
      %4996 = vrot.lane.b32.xlu0 %v3427, 125
      %v4997 = vpop.permute.xlu0 %4996
      %4998 = vrot.lane.b32.xlu0 %v3428, 125
      %v4999 = vpop.permute.xlu0 %4998
      %5000 = vrot.lane.b32.xlu0 %v3429, 125
      %v5001 = vpop.permute.xlu0 %5000
      %5002 = vrot.lane.b32.xlu0 %v3430, 125
      %v5003 = vpop.permute.xlu0 %5002
      %5004 = vrot.lane.b32.xlu0 %v3431, 125
      %v5005 = vpop.permute.xlu0 %5004
      %v5006 = vsel %vm1625, %v4847, %v4849
      %v5007 = vsel %vm1625, %v4849, %v4851
      %v5008 = vsel %vm1625, %v4851, %v4853
      %v5009 = vsel %vm1625, %v4853, %v4855
      %v5010 = vsel %vm1625, %v4855, %v4857
      %v5011 = vsel %vm1625, %v4857, %v4859
      %v5012 = vsel %vm1625, %v4859, %v4861
      %v5013 = vsel %vm1625, %v4861, %v4863
      %v5014 = vsel %vm1625, %v4863, %v4865
      %v5015 = vsel %vm1625, %v4867, %v4869
      %v5016 = vsel %vm1625, %v4869, %v4871
      %v5017 = vsel %vm1625, %v4871, %v4873
      %v5018 = vsel %vm1625, %v4873, %v4875
      %v5019 = vsel %vm1625, %v4875, %v4877
      %v5020 = vsel %vm1625, %v4877, %v4879
      %v5021 = vsel %vm1625, %v4879, %v4881
      %v5022 = vsel %vm1625, %v4881, %v4883
      %v5023 = vsel %vm1625, %v4883, %v4885
      %v5024 = vsel %vm1625, %v4887, %v4889
      %v5025 = vsel %vm1625, %v4889, %v4891
      %v5026 = vsel %vm1625, %v4891, %v4893
      %v5027 = vsel %vm1625, %v4893, %v4895
      %v5028 = vsel %vm1625, %v4895, %v4897
      %v5029 = vsel %vm1625, %v4897, %v4899
      %v5030 = vsel %vm1625, %v4899, %v4901
      %v5031 = vsel %vm1625, %v4901, %v4903
      %v5032 = vsel %vm1625, %v4903, %v4905
      %v5033 = vsel %vm1625, %v4907, %v4909
      %v5034 = vsel %vm1625, %v4909, %v4911
      %v5035 = vsel %vm1625, %v4911, %v4913
      %v5036 = vsel %vm1625, %v4913, %v4915
      %v5037 = vsel %vm1625, %v4915, %v4917
      %v5038 = vsel %vm1625, %v4917, %v4919
      %v5039 = vsel %vm1625, %v4919, %v4921
      %v5040 = vsel %vm1625, %v4921, %v4923
      %v5041 = vsel %vm1625, %v4923, %v4925
      %v5042 = vsel %vm1625, %v4927, %v4929
      %v5043 = vsel %vm1625, %v4929, %v4931
      %v5044 = vsel %vm1625, %v4931, %v4933
      %v5045 = vsel %vm1625, %v4933, %v4935
      %v5046 = vsel %vm1625, %v4935, %v4937
      %v5047 = vsel %vm1625, %v4937, %v4939
      %v5048 = vsel %vm1625, %v4939, %v4941
      %v5049 = vsel %vm1625, %v4941, %v4943
      %v5050 = vsel %vm1625, %v4943, %v4945
      %v5051 = vsel %vm1625, %v4947, %v4949
      %v5052 = vsel %vm1625, %v4949, %v4951
      %v5053 = vsel %vm1625, %v4951, %v4953
      %v5054 = vsel %vm1625, %v4953, %v4955
      %v5055 = vsel %vm1625, %v4955, %v4957
      %v5056 = vsel %vm1625, %v4957, %v4959
      %v5057 = vsel %vm1625, %v4959, %v4961
      %v5058 = vsel %vm1625, %v4961, %v4963
      %v5059 = vsel %vm1625, %v4963, %v4965
      %v5060 = vsel %vm1625, %v4967, %v4969
      %v5061 = vsel %vm1625, %v4969, %v4971
      %v5062 = vsel %vm1625, %v4971, %v4973
      %v5063 = vsel %vm1625, %v4973, %v4975
      %v5064 = vsel %vm1625, %v4975, %v4977
      %v5065 = vsel %vm1625, %v4977, %v4979
      %v5066 = vsel %vm1625, %v4979, %v4981
      %v5067 = vsel %vm1625, %v4981, %v4983
      %v5068 = vsel %vm1625, %v4983, %v4985
      %v5069 = vsel %vm1625, %v4987, %v4989
      %v5070 = vsel %vm1625, %v4989, %v4991
      %v5071 = vsel %vm1625, %v4991, %v4993
      %v5072 = vsel %vm1625, %v4993, %v4995
      %v5073 = vsel %vm1625, %v4995, %v4997
      %v5074 = vsel %vm1625, %v4997, %v4999
      %v5075 = vsel %vm1625, %v4999, %v5001
      %v5076 = vsel %vm1625, %v5001, %v5003
      %v5077 = vsel %vm1625, %v5003, %v5005
      %5158 = vmatpush.bf16.msra.mxu0 %v5069
      %5159 = vmatpush.bf16.msra.mxu0 %v5060
      %5160 = vmatpush.bf16.msra.mxu0 %v5051
      %5161 = vmatpush.bf16.msra.mxu0 %v5042
      %5162 = vmatpush.bf16.msra.mxu0 %v5033
      %5163 = vmatpush.bf16.msra.mxu0 %v5024
      %5164 = vmatpush.bf16.msra.mxu0 %v5015
      %5165 = vmatpush.bf16.msra.mxu0 %v5006
      %5166 = vmatmul.bf16.gmra.mxu0 %v4844
      %v5167 = vpop.f32.mrf.mxu0
      %v5168 = vadd.f32 0.0, %v5167
      %v5169 = vpop.f32.mrf.mxu0
      %v5170 = vadd.f32 0.0, %v5169
      %5171 = vdwg.mxu0
      %5172 = vmatpush.bf16.msra.mxu0 %v5070
      %5173 = vmatpush.bf16.msra.mxu0 %v5061
      %5174 = vmatpush.bf16.msra.mxu0 %v5052
      %5175 = vmatpush.bf16.msra.mxu0 %v5043
      %5176 = vmatpush.bf16.msra.mxu0 %v5034
      %5177 = vmatpush.bf16.msra.mxu0 %v5025
      %5178 = vmatpush.bf16.msra.mxu0 %v5016
      %5179 = vmatpush.bf16.msra.mxu0 %v5007
      %5180 = vmatmul.bf16.gmra.mxu0 %v4844
      %v5181 = vpop.f32.mrf.mxu0
      %v5182 = vadd.f32 0.0, %v5181
      %v5183 = vpop.f32.mrf.mxu0
      %v5184 = vadd.f32 0.0, %v5183
      %5185 = vdwg.mxu0
      %5186 = vmatpush.bf16.msra.mxu0 %v5071
      %5187 = vmatpush.bf16.msra.mxu0 %v5062
      %5188 = vmatpush.bf16.msra.mxu0 %v5053
      %5189 = vmatpush.bf16.msra.mxu0 %v5044
      %5190 = vmatpush.bf16.msra.mxu0 %v5035
      %5191 = vmatpush.bf16.msra.mxu0 %v5026
      %5192 = vmatpush.bf16.msra.mxu0 %v5017
      %5193 = vmatpush.bf16.msra.mxu0 %v5008
      %5194 = vmatmul.bf16.gmra.mxu0 %v4844
      %v5195 = vpop.f32.mrf.mxu0
      %v5196 = vadd.f32 0.0, %v5195
      %v5197 = vpop.f32.mrf.mxu0
      %v5198 = vadd.f32 0.0, %v5197
      %5199 = vdwg.mxu0
      %5200 = vmatpush.bf16.msra.mxu0 %v5072
      %5201 = vmatpush.bf16.msra.mxu0 %v5063
      %5202 = vmatpush.bf16.msra.mxu0 %v5054
      %5203 = vmatpush.bf16.msra.mxu0 %v5045
      %5204 = vmatpush.bf16.msra.mxu0 %v5036
      %5205 = vmatpush.bf16.msra.mxu0 %v5027
      %5206 = vmatpush.bf16.msra.mxu0 %v5018
      %5207 = vmatpush.bf16.msra.mxu0 %v5009
      %5208 = vmatmul.bf16.gmra.mxu0 %v4844
      %v5209 = vpop.f32.mrf.mxu0
      %v5210 = vadd.f32 0.0, %v5209
      %v5211 = vpop.f32.mrf.mxu0
      %v5212 = vadd.f32 0.0, %v5211
      %5213 = vdwg.mxu0
      %5214 = vmatpush.bf16.msra.mxu0 %v5073
      %5215 = vmatpush.bf16.msra.mxu0 %v5064
      %5216 = vmatpush.bf16.msra.mxu0 %v5055
      %5217 = vmatpush.bf16.msra.mxu0 %v5046
      %5218 = vmatpush.bf16.msra.mxu0 %v5037
      %5219 = vmatpush.bf16.msra.mxu0 %v5028
      %5220 = vmatpush.bf16.msra.mxu0 %v5019
      %5221 = vmatpush.bf16.msra.mxu0 %v5010
      %5222 = vmatmul.bf16.gmra.mxu0 %v4844
      %v5223 = vpop.f32.mrf.mxu0
      %v5224 = vadd.f32 0.0, %v5223
      %v5225 = vpop.f32.mrf.mxu0
      %v5226 = vadd.f32 0.0, %v5225
      %5227 = vdwg.mxu0
      %5228 = vmatpush.bf16.msra.mxu0 %v5074
      %5229 = vmatpush.bf16.msra.mxu0 %v5065
      %5230 = vmatpush.bf16.msra.mxu0 %v5056
      %5231 = vmatpush.bf16.msra.mxu0 %v5047
      %5232 = vmatpush.bf16.msra.mxu0 %v5038
      %5233 = vmatpush.bf16.msra.mxu0 %v5029
      %5234 = vmatpush.bf16.msra.mxu0 %v5020
      %5235 = vmatpush.bf16.msra.mxu0 %v5011
      %5236 = vmatmul.bf16.gmra.mxu0 %v4844
      %v5237 = vpop.f32.mrf.mxu0
      %v5238 = vadd.f32 0.0, %v5237
      %v5239 = vpop.f32.mrf.mxu0
      %v5240 = vadd.f32 0.0, %v5239
      %5241 = vdwg.mxu0
      %5242 = vmatpush.bf16.msra.mxu0 %v5075
      %5243 = vmatpush.bf16.msra.mxu0 %v5066
      %5244 = vmatpush.bf16.msra.mxu0 %v5057
      %5245 = vmatpush.bf16.msra.mxu0 %v5048
      %5246 = vmatpush.bf16.msra.mxu0 %v5039
      %5247 = vmatpush.bf16.msra.mxu0 %v5030
      %5248 = vmatpush.bf16.msra.mxu0 %v5021
      %5249 = vmatpush.bf16.msra.mxu0 %v5012
      %5250 = vmatmul.bf16.gmra.mxu0 %v4844
      %v5251 = vpop.f32.mrf.mxu0
      %v5252 = vadd.f32 0.0, %v5251
      %v5253 = vpop.f32.mrf.mxu0
      %v5254 = vadd.f32 0.0, %v5253
      %5255 = vdwg.mxu0
      %5256 = vmatpush.bf16.msra.mxu0 %v5076
      %5257 = vmatpush.bf16.msra.mxu0 %v5067
      %5258 = vmatpush.bf16.msra.mxu0 %v5058
      %5259 = vmatpush.bf16.msra.mxu0 %v5049
      %5260 = vmatpush.bf16.msra.mxu0 %v5040
      %5261 = vmatpush.bf16.msra.mxu0 %v5031
      %5262 = vmatpush.bf16.msra.mxu0 %v5022
      %5263 = vmatpush.bf16.msra.mxu0 %v5013
      %5264 = vmatmul.bf16.gmra.mxu0 %v4844
      %v5265 = vpop.f32.mrf.mxu0
      %v5266 = vadd.f32 0.0, %v5265
      %v5267 = vpop.f32.mrf.mxu0
      %v5268 = vadd.f32 0.0, %v5267
      %5269 = vdwg.mxu0
      %5270 = vmatpush.bf16.msra.mxu0 %v5077
      %5271 = vmatpush.bf16.msra.mxu0 %v5068
      %5272 = vmatpush.bf16.msra.mxu0 %v5059
      %5273 = vmatpush.bf16.msra.mxu0 %v5050
      %5274 = vmatpush.bf16.msra.mxu0 %v5041
      %5275 = vmatpush.bf16.msra.mxu0 %v5032
      %5276 = vmatpush.bf16.msra.mxu0 %v5023
      %5277 = vmatpush.bf16.msra.mxu0 %v5014
      %5278 = vmatmul.bf16.gmra.mxu0 %v4844
      %v5279 = vpop.f32.mrf.mxu0
      %v5280 = vadd.f32 0.0, %v5279
      %v5281 = vpop.f32.mrf.mxu0
      %v5282 = vadd.f32 0.0, %v5281
      %5283 = vdwg.mxu0
      %5284 = vmatpush.bf16.msra.mxu0 %v5005
      %5285 = vmatpush.bf16.msra.mxu0 %v4985
      %5286 = vmatpush.bf16.msra.mxu0 %v4965
      %5287 = vmatpush.bf16.msra.mxu0 %v4945
      %5288 = vmatpush.bf16.msra.mxu0 %v4925
      %5289 = vmatpush.bf16.msra.mxu0 %v4905
      %5290 = vmatpush.bf16.msra.mxu0 %v4885
      %5291 = vmatpush.bf16.msra.mxu0 %v4865
      %5292 = vmatmul.bf16.gmra.mxu0 %v4844
      %v5293 = vpop.f32.mrf.mxu0
      %v5294 = vadd.f32 0.0, %v5293
      %v5295 = vpop.f32.mrf.mxu0
      %v5296 = vadd.f32 0.0, %v5295
      %5297 = vdwg.mxu0
      %v5298 = vadd.f32 %v4817, %v5168
      %v5299 = vadd.f32 %v4818, %v5182
      %v5300 = vadd.f32 %v4819, %v5196
      %v5301 = vadd.f32 %v4820, %v5210
      %v5302 = vadd.f32 %v4821, %v5224
      %v5303 = vadd.f32 %v4822, %v5238
      %v5304 = vadd.f32 %v4823, %v5252
      %v5305 = vadd.f32 %v4824, %v5266
      %v5306 = vadd.f32 %v4825, %v5280
      %v5307 = vadd.f32 %v4826, %v5294
      %v5308 = vadd.f32 %v4827, %v5170
      %v5309 = vadd.f32 %v4828, %v5184
      %v5310 = vadd.f32 %v4829, %v5198
      %v5311 = vadd.f32 %v4830, %v5212
      %v5312 = vadd.f32 %v4831, %v5226
      %v5313 = vadd.f32 %v4832, %v5240
      %v5314 = vadd.f32 %v4833, %v5254
      %v5315 = vadd.f32 %v4834, %v5268
      %v5316 = vadd.f32 %v4835, %v5282
      %v5317 = vadd.f32 %v4836, %v5296
      %v5318 = vld [vmem:[%s6] sm:$0xff]
      %v5319 = vld [vmem:[%s6 + $0x8] sm:$0xff]
      %5321 = vset.pattern.permute.xlu0 0
      %5322 = vperm.xlu0 %5321, %v5318
      %v5323 = vpop.permute.xlu0 %5322
      %5326 = vset.pattern.permute.xlu0 0
      %5327 = vperm.xlu0 %5326, %v5319
      %v5328 = vpop.permute.xlu0 %5327
      %v5330 = vadd.f32 %v5298, %v5323
      %v5331 = vadd.f32 %v5299, %v5323
      %v5332 = vadd.f32 %v5300, %v5323
      %v5333 = vadd.f32 %v5301, %v5323
      %v5334 = vadd.f32 %v5302, %v5323
      %v5335 = vadd.f32 %v5303, %v5323
      %v5336 = vadd.f32 %v5304, %v5323
      %v5337 = vadd.f32 %v5305, %v5323
      %v5338 = vadd.f32 %v5306, %v5323
      %v5339 = vadd.f32 %v5307, %v5323
      %v5340 = vadd.f32 %v5308, %v5328
      %v5341 = vadd.f32 %v5309, %v5328
      %v5342 = vadd.f32 %v5310, %v5328
      %v5343 = vadd.f32 %v5311, %v5328
      %v5344 = vadd.f32 %v5312, %v5328
      %v5345 = vadd.f32 %v5313, %v5328
      %v5346 = vadd.f32 %v5314, %v5328
      %v5347 = vadd.f32 %v5315, %v5328
      %v5348 = vadd.f32 %v5316, %v5328
      %v5349 = vadd.f32 %v5317, %v5328
      %v5350 = vmax.f32 %v5330, 0.0
      %v5351 = vmax.f32 %v5331, 0.0
      %v5352 = vmax.f32 %v5332, 0.0
      %v5353 = vmax.f32 %v5333, 0.0
      %v5354 = vmax.f32 %v5334, 0.0
      %v5355 = vmax.f32 %v5335, 0.0
      %v5356 = vmax.f32 %v5336, 0.0
      %v5357 = vmax.f32 %v5337, 0.0
      %v5358 = vmax.f32 %v5338, 0.0
      %v5359 = vmax.f32 %v5339, 0.0
      %v5360 = vmax.f32 %v5340, 0.0
      %v5361 = vmax.f32 %v5341, 0.0
      %v5362 = vmax.f32 %v5342, 0.0
      %v5363 = vmax.f32 %v5343, 0.0
      %v5364 = vmax.f32 %v5344, 0.0
      %v5365 = vmax.f32 %v5345, 0.0
      %v5366 = vmax.f32 %v5346, 0.0
      %v5367 = vmax.f32 %v5347, 0.0
      %v5368 = vmax.f32 %v5348, 0.0
      %v5369 = vmax.f32 %v5349, 0.0
      %v5370 = vpack.c.bf16 %v5351, %v5350
      %v5371 = vpack.c.bf16 %v5353, %v5352
      %v5372 = vpack.c.bf16 %v5355, %v5354
      %v5373 = vpack.c.bf16 %v5357, %v5356
      %v5374 = vpack.c.bf16 %v5359, %v5358
      %v5375 = vpack.c.bf16 %v5361, %v5360
      %v5376 = vpack.c.bf16 %v5363, %v5362
      %v5377 = vpack.c.bf16 %v5365, %v5364
      %v5378 = vpack.c.bf16 %v5367, %v5366
      %v5379 = vpack.c.bf16 %v5369, %v5368
      %v5388 = vunpack.c.l.b16 %v5370
      %v5389 = vunpack.c.h.b16 %v5370
      %v5390 = vunpack.c.l.b16 %v5371
      %v5391 = vunpack.c.h.b16 %v5371
      %v5392 = vunpack.c.l.b16 %v5372
      %v5393 = vunpack.c.h.b16 %v5372
      %v5394 = vunpack.c.l.b16 %v5373
      %v5395 = vunpack.c.h.b16 %v5373
      %v5396 = vunpack.c.l.b16 %v5375
      %v5397 = vunpack.c.h.b16 %v5375
      %v5398 = vunpack.c.l.b16 %v5376
      %v5399 = vunpack.c.h.b16 %v5376
      %v5400 = vunpack.c.l.b16 %v5377
      %v5401 = vunpack.c.h.b16 %v5377
      %v5402 = vunpack.c.l.b16 %v5378
      %v5403 = vunpack.c.h.b16 %v5378
      %v5404 = vpack.c.b16 %v5396, %v5388
      %v5405 = vpack.c.b16 %v5397, %v5389
      %v5406 = vpack.c.b16 %v5398, %v5390
      %v5407 = vpack.c.b16 %v5399, %v5391
      %v5408 = vpack.c.b16 %v5400, %v5392
      %v5409 = vpack.c.b16 %v5401, %v5393
      %v5410 = vpack.c.b16 %v5402, %v5394
      %v5411 = vpack.c.b16 %v5403, %v5395
      %5420 = vrot.lane.b32.xlu0 %v5404, 127
      %v5421 = vpop.permute.xlu0 %5420
      %5422 = vrot.lane.b32.xlu0 %v5405, 127
      %v5423 = vpop.permute.xlu0 %5422
      %5424 = vrot.lane.b32.xlu0 %v5406, 127
      %v5425 = vpop.permute.xlu0 %5424
      %5426 = vrot.lane.b32.xlu0 %v5407, 127
      %v5427 = vpop.permute.xlu0 %5426
      %5428 = vrot.lane.b32.xlu0 %v5408, 127
      %v5429 = vpop.permute.xlu0 %5428
      %5430 = vrot.lane.b32.xlu0 %v5409, 127
      %v5431 = vpop.permute.xlu0 %5430
      %5432 = vrot.lane.b32.xlu0 %v5410, 127
      %v5433 = vpop.permute.xlu0 %5432
      %5434 = vrot.lane.b32.xlu0 %v5411, 127
      %v5435 = vpop.permute.xlu0 %5434
      %vm5436 = vcmask 1039360
      %v5437 = vsel %vm5436, %v5421, %v5423
      %v5438 = vsel %vm5436, %v5423, %v5425
      %v5439 = vsel %vm5436, %v5425, %v5427
      %v5440 = vsel %vm5436, %v5427, %v5429
      %v5441 = vsel %vm5436, %v5429, %v5431
      %v5442 = vsel %vm5436, %v5431, %v5433
      %v5443 = vsel %vm5436, %v5433, %v5435
      %5452 = vrot.lane.b32.xlu0 %v5404, 126
      %v5453 = vpop.permute.xlu0 %5452
      %5454 = vrot.lane.b32.xlu0 %v5405, 126
      %v5455 = vpop.permute.xlu0 %5454
      %5456 = vrot.lane.b32.xlu0 %v5406, 126
      %v5457 = vpop.permute.xlu0 %5456
      %5458 = vrot.lane.b32.xlu0 %v5407, 126
      %v5459 = vpop.permute.xlu0 %5458
      %5460 = vrot.lane.b32.xlu0 %v5408, 126
      %v5461 = vpop.permute.xlu0 %5460
      %5462 = vrot.lane.b32.xlu0 %v5409, 126
      %v5463 = vpop.permute.xlu0 %5462
      %5464 = vrot.lane.b32.xlu0 %v5410, 126
      %v5465 = vpop.permute.xlu0 %5464
      %5466 = vrot.lane.b32.xlu0 %v5411, 126
      %v5467 = vpop.permute.xlu0 %5466
      %vm5468 = vcmask 1031168
      %v5469 = vsel %vm5468, %v5453, %v5455
      %v5470 = vsel %vm5468, %v5455, %v5457
      %v5471 = vsel %vm5468, %v5457, %v5459
      %v5472 = vsel %vm5468, %v5459, %v5461
      %v5473 = vsel %vm5468, %v5461, %v5463
      %v5474 = vsel %vm5468, %v5463, %v5465
      %v5475 = vsel %vm5468, %v5465, %v5467
      %5484 = vrot.lane.b32.xlu0 %v5404, 125
      %v5485 = vpop.permute.xlu0 %5484
      %5486 = vrot.lane.b32.xlu0 %v5405, 125
      %v5487 = vpop.permute.xlu0 %5486
      %5488 = vrot.lane.b32.xlu0 %v5406, 125
      %v5489 = vpop.permute.xlu0 %5488
      %5490 = vrot.lane.b32.xlu0 %v5407, 125
      %v5491 = vpop.permute.xlu0 %5490
      %5492 = vrot.lane.b32.xlu0 %v5408, 125
      %v5493 = vpop.permute.xlu0 %5492
      %5494 = vrot.lane.b32.xlu0 %v5409, 125
      %v5495 = vpop.permute.xlu0 %5494
      %5496 = vrot.lane.b32.xlu0 %v5410, 125
      %v5497 = vpop.permute.xlu0 %5496
      %5498 = vrot.lane.b32.xlu0 %v5411, 125
      %v5499 = vpop.permute.xlu0 %5498
      %v5500 = vsel %vm1625, %v5485, %v5487
      %v5501 = vsel %vm1625, %v5487, %v5489
      %v5502 = vsel %vm1625, %v5489, %v5491
      %v5503 = vsel %vm1625, %v5491, %v5493
      %v5504 = vsel %vm1625, %v5493, %v5495
      %v5505 = vsel %vm1625, %v5495, %v5497
      %v5506 = vsel %vm1625, %v5497, %v5499
      %5515 = vrot.lane.b32.xlu0 %v5404, 124
      %v5516 = vpop.permute.xlu0 %5515
      %5517 = vrot.lane.b32.xlu0 %v5405, 124
      %v5518 = vpop.permute.xlu0 %5517
      %5519 = vrot.lane.b32.xlu0 %v5406, 124
      %v5520 = vpop.permute.xlu0 %5519
      %5521 = vrot.lane.b32.xlu0 %v5407, 124
      %v5522 = vpop.permute.xlu0 %5521
      %5523 = vrot.lane.b32.xlu0 %v5408, 124
      %v5524 = vpop.permute.xlu0 %5523
      %5525 = vrot.lane.b32.xlu0 %v5409, 124
      %v5526 = vpop.permute.xlu0 %5525
      %5527 = vrot.lane.b32.xlu0 %v5410, 124
      %v5528 = vpop.permute.xlu0 %5527
      %5529 = vrot.lane.b32.xlu0 %v5411, 124
      %v5530 = vpop.permute.xlu0 %5529
      %vm5531 = vcmask 1014784
      %v5532 = vsel %vm5531, %v5516, %v5518
      %v5533 = vsel %vm5531, %v5518, %v5520
      %v5534 = vsel %vm5531, %v5520, %v5522
      %v5535 = vsel %vm5531, %v5522, %v5524
      %v5536 = vsel %vm5531, %v5524, %v5526
      %v5537 = vsel %vm5531, %v5526, %v5528
      %v5538 = vsel %vm5531, %v5528, %v5530
      %5547 = vrot.lane.b32.xlu0 %v5404, 123
      %v5548 = vpop.permute.xlu0 %5547
      %5549 = vrot.lane.b32.xlu0 %v5405, 123
      %v5550 = vpop.permute.xlu0 %5549
      %5551 = vrot.lane.b32.xlu0 %v5406, 123
      %v5552 = vpop.permute.xlu0 %5551
      %5553 = vrot.lane.b32.xlu0 %v5407, 123
      %v5554 = vpop.permute.xlu0 %5553
      %5555 = vrot.lane.b32.xlu0 %v5408, 123
      %v5556 = vpop.permute.xlu0 %5555
      %5557 = vrot.lane.b32.xlu0 %v5409, 123
      %v5558 = vpop.permute.xlu0 %5557
      %5559 = vrot.lane.b32.xlu0 %v5410, 123
      %v5560 = vpop.permute.xlu0 %5559
      %5561 = vrot.lane.b32.xlu0 %v5411, 123
      %v5562 = vpop.permute.xlu0 %5561
      %vm5563 = vcmask 1006592
      %v5564 = vsel %vm5563, %v5548, %v5550
      %v5565 = vsel %vm5563, %v5550, %v5552
      %v5566 = vsel %vm5563, %v5552, %v5554
      %v5567 = vsel %vm5563, %v5554, %v5556
      %v5568 = vsel %vm5563, %v5556, %v5558
      %v5569 = vsel %vm5563, %v5558, %v5560
      %v5570 = vsel %vm5563, %v5560, %v5562
      %5579 = vrot.lane.b32.xlu0 %v5404, 122
      %v5580 = vpop.permute.xlu0 %5579
      %5581 = vrot.lane.b32.xlu0 %v5405, 122
      %v5582 = vpop.permute.xlu0 %5581
      %5583 = vrot.lane.b32.xlu0 %v5406, 122
      %v5584 = vpop.permute.xlu0 %5583
      %5585 = vrot.lane.b32.xlu0 %v5407, 122
      %v5586 = vpop.permute.xlu0 %5585
      %5587 = vrot.lane.b32.xlu0 %v5408, 122
      %v5588 = vpop.permute.xlu0 %5587
      %5589 = vrot.lane.b32.xlu0 %v5409, 122
      %v5590 = vpop.permute.xlu0 %5589
      %5591 = vrot.lane.b32.xlu0 %v5410, 122
      %v5592 = vpop.permute.xlu0 %5591
      %5593 = vrot.lane.b32.xlu0 %v5411, 122
      %v5594 = vpop.permute.xlu0 %5593
      %vm5595 = vcmask 998400
      %v5596 = vsel %vm5595, %v5580, %v5582
      %v5597 = vsel %vm5595, %v5582, %v5584
      %v5598 = vsel %vm5595, %v5584, %v5586
      %v5599 = vsel %vm5595, %v5586, %v5588
      %v5600 = vsel %vm5595, %v5588, %v5590
      %v5601 = vsel %vm5595, %v5590, %v5592
      %v5602 = vsel %vm5595, %v5592, %v5594
      %v5611 = vld [vmem:[%s7] sm:$0xf]
      %s5612 = scalar_lea.vmem %s7, 4
      %v5613 = vld [vmem:[%s5612] sm:$0xf]
      %5614 = vrot.lane.b32.xlu0 %v5404, 94
      %v5615 = vpop.permute.xlu0 %5614
      %5616 = vrot.lane.b32.xlu0 %v5405, 94
      %v5617 = vpop.permute.xlu0 %5616
      %5618 = vrot.lane.b32.xlu0 %v5406, 94
      %v5619 = vpop.permute.xlu0 %5618
      %5620 = vrot.lane.b32.xlu0 %v5407, 94
      %v5621 = vpop.permute.xlu0 %5620
      %5622 = vrot.lane.b32.xlu0 %v5408, 94
      %v5623 = vpop.permute.xlu0 %5622
      %5624 = vrot.lane.b32.xlu0 %v5409, 94
      %v5625 = vpop.permute.xlu0 %5624
      %5626 = vrot.lane.b32.xlu0 %v5410, 94
      %v5627 = vpop.permute.xlu0 %5626
      %5628 = vrot.lane.b32.xlu0 %v5411, 94
      %v5629 = vpop.permute.xlu0 %5628
      %5630 = vrot.lane.b32.xlu0 %v5437, 94
      %v5631 = vpop.permute.xlu0 %5630
      %5632 = vrot.lane.b32.xlu0 %v5438, 94
      %v5633 = vpop.permute.xlu0 %5632
      %5634 = vrot.lane.b32.xlu0 %v5439, 94
      %v5635 = vpop.permute.xlu0 %5634
      %5636 = vrot.lane.b32.xlu0 %v5440, 94
      %v5637 = vpop.permute.xlu0 %5636
      %5638 = vrot.lane.b32.xlu0 %v5441, 94
      %v5639 = vpop.permute.xlu0 %5638
      %5640 = vrot.lane.b32.xlu0 %v5442, 94
      %v5641 = vpop.permute.xlu0 %5640
      %5642 = vrot.lane.b32.xlu0 %v5443, 94
      %v5643 = vpop.permute.xlu0 %5642
      %5644 = vrot.lane.b32.xlu0 %v5435, 94
      %v5645 = vpop.permute.xlu0 %5644
      %5646 = vrot.lane.b32.xlu0 %v5469, 94
      %v5647 = vpop.permute.xlu0 %5646
      %5648 = vrot.lane.b32.xlu0 %v5470, 94
      %v5649 = vpop.permute.xlu0 %5648
      %5650 = vrot.lane.b32.xlu0 %v5471, 94
      %v5651 = vpop.permute.xlu0 %5650
      %5652 = vrot.lane.b32.xlu0 %v5472, 94
      %v5653 = vpop.permute.xlu0 %5652
      %5654 = vrot.lane.b32.xlu0 %v5473, 94
      %v5655 = vpop.permute.xlu0 %5654
      %5656 = vrot.lane.b32.xlu0 %v5474, 94
      %v5657 = vpop.permute.xlu0 %5656
      %5658 = vrot.lane.b32.xlu0 %v5475, 94
      %v5659 = vpop.permute.xlu0 %5658
      %5660 = vrot.lane.b32.xlu0 %v5467, 94
      %v5661 = vpop.permute.xlu0 %5660
      %5662 = vrot.lane.b32.xlu0 %v5500, 94
      %v5663 = vpop.permute.xlu0 %5662
      %5664 = vrot.lane.b32.xlu0 %v5501, 94
      %v5665 = vpop.permute.xlu0 %5664
      %5666 = vrot.lane.b32.xlu0 %v5502, 94
      %v5667 = vpop.permute.xlu0 %5666
      %5668 = vrot.lane.b32.xlu0 %v5503, 94
      %v5669 = vpop.permute.xlu0 %5668
      %5670 = vrot.lane.b32.xlu0 %v5504, 94
      %v5671 = vpop.permute.xlu0 %5670
      %5672 = vrot.lane.b32.xlu0 %v5505, 94
      %v5673 = vpop.permute.xlu0 %5672
      %5674 = vrot.lane.b32.xlu0 %v5506, 94
      %v5675 = vpop.permute.xlu0 %5674
      %5676 = vrot.lane.b32.xlu0 %v5499, 94
      %v5677 = vpop.permute.xlu0 %5676
      %5678 = vrot.lane.b32.xlu0 %v5532, 94
      %v5679 = vpop.permute.xlu0 %5678
      %5680 = vrot.lane.b32.xlu0 %v5533, 94
      %v5681 = vpop.permute.xlu0 %5680
      %5682 = vrot.lane.b32.xlu0 %v5534, 94
      %v5683 = vpop.permute.xlu0 %5682
      %5684 = vrot.lane.b32.xlu0 %v5535, 94
      %v5685 = vpop.permute.xlu0 %5684
      %5686 = vrot.lane.b32.xlu0 %v5536, 94
      %v5687 = vpop.permute.xlu0 %5686
      %5688 = vrot.lane.b32.xlu0 %v5537, 94
      %v5689 = vpop.permute.xlu0 %5688
      %5690 = vrot.lane.b32.xlu0 %v5538, 94
      %v5691 = vpop.permute.xlu0 %5690
      %5692 = vrot.lane.b32.xlu0 %v5530, 94
      %v5693 = vpop.permute.xlu0 %5692
      %5694 = vrot.lane.b32.xlu0 %v5564, 94
      %v5695 = vpop.permute.xlu0 %5694
      %5696 = vrot.lane.b32.xlu0 %v5565, 94
      %v5697 = vpop.permute.xlu0 %5696
      %5698 = vrot.lane.b32.xlu0 %v5566, 94
      %v5699 = vpop.permute.xlu0 %5698
      %5700 = vrot.lane.b32.xlu0 %v5567, 94
      %v5701 = vpop.permute.xlu0 %5700
      %5702 = vrot.lane.b32.xlu0 %v5568, 94
      %v5703 = vpop.permute.xlu0 %5702
      %5704 = vrot.lane.b32.xlu0 %v5569, 94
      %v5705 = vpop.permute.xlu0 %5704
      %5706 = vrot.lane.b32.xlu0 %v5570, 94
      %v5707 = vpop.permute.xlu0 %5706
      %5708 = vrot.lane.b32.xlu0 %v5562, 94
      %v5709 = vpop.permute.xlu0 %5708
      %5710 = vrot.lane.b32.xlu0 %v5596, 94
      %v5711 = vpop.permute.xlu0 %5710
      %5712 = vrot.lane.b32.xlu0 %v5597, 94
      %v5713 = vpop.permute.xlu0 %5712
      %5714 = vrot.lane.b32.xlu0 %v5598, 94
      %v5715 = vpop.permute.xlu0 %5714
      %5716 = vrot.lane.b32.xlu0 %v5599, 94
      %v5717 = vpop.permute.xlu0 %5716
      %5718 = vrot.lane.b32.xlu0 %v5600, 94
      %v5719 = vpop.permute.xlu0 %5718
      %5720 = vrot.lane.b32.xlu0 %v5601, 94
      %v5721 = vpop.permute.xlu0 %5720
      %5722 = vrot.lane.b32.xlu0 %v5602, 94
      %v5723 = vpop.permute.xlu0 %5722
      %5724 = vrot.lane.b32.xlu0 %v5594, 94
      %v5725 = vpop.permute.xlu0 %5724
      %vm5726 = vcmask 769024
      %v5727 = vsel %vm5726, %v5615, %v5617
      %v5728 = vsel %vm5726, %v5617, %v5619
      %v5729 = vsel %vm5726, %v5619, %v5621
      %v5730 = vsel %vm5726, %v5621, %v5623
      %v5731 = vsel %vm5726, %v5623, %v5625
      %v5732 = vsel %vm5726, %v5625, %v5627
      %v5733 = vsel %vm5726, %v5627, %v5629
      %v5734 = vsel %vm5726, %v5631, %v5633
      %v5735 = vsel %vm5726, %v5633, %v5635
      %v5736 = vsel %vm5726, %v5635, %v5637
      %v5737 = vsel %vm5726, %v5637, %v5639
      %v5738 = vsel %vm5726, %v5639, %v5641
      %v5739 = vsel %vm5726, %v5641, %v5643
      %v5740 = vsel %vm5726, %v5643, %v5645
      %v5741 = vsel %vm5726, %v5647, %v5649
      %v5742 = vsel %vm5726, %v5649, %v5651
      %v5743 = vsel %vm5726, %v5651, %v5653
      %v5744 = vsel %vm5726, %v5653, %v5655
      %v5745 = vsel %vm5726, %v5655, %v5657
      %v5746 = vsel %vm5726, %v5657, %v5659
      %v5747 = vsel %vm5726, %v5659, %v5661
      %v5748 = vsel %vm5726, %v5663, %v5665
      %v5749 = vsel %vm5726, %v5665, %v5667
      %v5750 = vsel %vm5726, %v5667, %v5669
      %v5751 = vsel %vm5726, %v5669, %v5671
      %v5752 = vsel %vm5726, %v5671, %v5673
      %v5753 = vsel %vm5726, %v5673, %v5675
      %v5754 = vsel %vm5726, %v5675, %v5677
      %v5755 = vsel %vm5726, %v5679, %v5681
      %v5756 = vsel %vm5726, %v5681, %v5683
      %v5757 = vsel %vm5726, %v5683, %v5685
      %v5758 = vsel %vm5726, %v5685, %v5687
      %v5759 = vsel %vm5726, %v5687, %v5689
      %v5760 = vsel %vm5726, %v5689, %v5691
      %v5761 = vsel %vm5726, %v5691, %v5693
      %v5762 = vsel %vm5726, %v5695, %v5697
      %v5763 = vsel %vm5726, %v5697, %v5699
      %v5764 = vsel %vm5726, %v5699, %v5701
      %v5765 = vsel %vm5726, %v5701, %v5703
      %v5766 = vsel %vm5726, %v5703, %v5705
      %v5767 = vsel %vm5726, %v5705, %v5707
      %v5768 = vsel %vm5726, %v5707, %v5709
      %v5769 = vsel %vm5726, %v5711, %v5713
      %v5770 = vsel %vm5726, %v5713, %v5715
      %v5771 = vsel %vm5726, %v5715, %v5717
      %v5772 = vsel %vm5726, %v5717, %v5719
      %v5773 = vsel %vm5726, %v5719, %v5721
      %v5774 = vsel %vm5726, %v5721, %v5723
      %v5775 = vsel %vm5726, %v5723, %v5725
      %vm5832 = vcmask 916480
      %v5834 = vsel %vm5832, %v5613, 0
      %5836 = vmatpush.bf16.msra.mxu0 0
      %5837 = vmatpush.bf16.msra.mxu0 %v5769
      %5838 = vmatpush.bf16.msra.mxu0 %v5762
      %5839 = vmatpush.bf16.msra.mxu0 %v5755
      %5840 = vmatpush.bf16.msra.mxu0 %v5748
      %5841 = vmatpush.bf16.msra.mxu0 %v5741
      %5842 = vmatpush.bf16.msra.mxu0 %v5734
      %5843 = vmatpush.bf16.msra.mxu0 %v5727
      %5844 = vmatmul.bf16.gmra.mxu0 %v5834
      %v5845 = vpop.f32.mrf.mxu0
      %v5846 = vadd.f32 0.0, %v5845
      %v5847 = vpop.f32.mrf.mxu0
      %5848 = vdwg.mxu0
      %5849 = vmatpush.bf16.msra.mxu0 0
      %5850 = vmatpush.bf16.msra.mxu0 %v5770
      %5851 = vmatpush.bf16.msra.mxu0 %v5763
      %5852 = vmatpush.bf16.msra.mxu0 %v5756
      %5853 = vmatpush.bf16.msra.mxu0 %v5749
      %5854 = vmatpush.bf16.msra.mxu0 %v5742
      %5855 = vmatpush.bf16.msra.mxu0 %v5735
      %5856 = vmatpush.bf16.msra.mxu0 %v5728
      %5857 = vmatmul.bf16.gmra.mxu0 %v5834
      %v5858 = vpop.f32.mrf.mxu0
      %v5859 = vadd.f32 0.0, %v5858
      %v5860 = vpop.f32.mrf.mxu0
      %5861 = vdwg.mxu0
      %5862 = vmatpush.bf16.msra.mxu0 0
      %5863 = vmatpush.bf16.msra.mxu0 %v5771
      %5864 = vmatpush.bf16.msra.mxu0 %v5764
      %5865 = vmatpush.bf16.msra.mxu0 %v5757
      %5866 = vmatpush.bf16.msra.mxu0 %v5750
      %5867 = vmatpush.bf16.msra.mxu0 %v5743
      %5868 = vmatpush.bf16.msra.mxu0 %v5736
      %5869 = vmatpush.bf16.msra.mxu0 %v5729
      %5870 = vmatmul.bf16.gmra.mxu0 %v5834
      %v5871 = vpop.f32.mrf.mxu0
      %v5872 = vadd.f32 0.0, %v5871
      %v5873 = vpop.f32.mrf.mxu0
      %5874 = vdwg.mxu0
      %5875 = vmatpush.bf16.msra.mxu0 0
      %5876 = vmatpush.bf16.msra.mxu0 %v5772
      %5877 = vmatpush.bf16.msra.mxu0 %v5765
      %5878 = vmatpush.bf16.msra.mxu0 %v5758
      %5879 = vmatpush.bf16.msra.mxu0 %v5751
      %5880 = vmatpush.bf16.msra.mxu0 %v5744
      %5881 = vmatpush.bf16.msra.mxu0 %v5737
      %5882 = vmatpush.bf16.msra.mxu0 %v5730
      %5883 = vmatmul.bf16.gmra.mxu0 %v5834
      %v5884 = vpop.f32.mrf.mxu0
      %v5885 = vadd.f32 0.0, %v5884
      %v5886 = vpop.f32.mrf.mxu0
      %5887 = vdwg.mxu0
      %5888 = vmatpush.bf16.msra.mxu0 0
      %5889 = vmatpush.bf16.msra.mxu0 %v5773
      %5890 = vmatpush.bf16.msra.mxu0 %v5766
      %5891 = vmatpush.bf16.msra.mxu0 %v5759
      %5892 = vmatpush.bf16.msra.mxu0 %v5752
      %5893 = vmatpush.bf16.msra.mxu0 %v5745
      %5894 = vmatpush.bf16.msra.mxu0 %v5738
      %5895 = vmatpush.bf16.msra.mxu0 %v5731
      %5896 = vmatmul.bf16.gmra.mxu0 %v5834
      %v5897 = vpop.f32.mrf.mxu0
      %v5898 = vadd.f32 0.0, %v5897
      %v5899 = vpop.f32.mrf.mxu0
      %5900 = vdwg.mxu0
      %5901 = vmatpush.bf16.msra.mxu0 0
      %5902 = vmatpush.bf16.msra.mxu0 %v5774
      %5903 = vmatpush.bf16.msra.mxu0 %v5767
      %5904 = vmatpush.bf16.msra.mxu0 %v5760
      %5905 = vmatpush.bf16.msra.mxu0 %v5753
      %5906 = vmatpush.bf16.msra.mxu0 %v5746
      %5907 = vmatpush.bf16.msra.mxu0 %v5739
      %5908 = vmatpush.bf16.msra.mxu0 %v5732
      %5909 = vmatmul.bf16.gmra.mxu0 %v5834
      %v5910 = vpop.f32.mrf.mxu0
      %v5911 = vadd.f32 0.0, %v5910
      %v5912 = vpop.f32.mrf.mxu0
      %5913 = vdwg.mxu0
      %5914 = vmatpush.bf16.msra.mxu0 0
      %5915 = vmatpush.bf16.msra.mxu0 %v5775
      %5916 = vmatpush.bf16.msra.mxu0 %v5768
      %5917 = vmatpush.bf16.msra.mxu0 %v5761
      %5918 = vmatpush.bf16.msra.mxu0 %v5754
      %5919 = vmatpush.bf16.msra.mxu0 %v5747
      %5920 = vmatpush.bf16.msra.mxu0 %v5740
      %5921 = vmatpush.bf16.msra.mxu0 %v5733
      %5922 = vmatmul.bf16.gmra.mxu0 %v5834
      %v5923 = vpop.f32.mrf.mxu0
      %v5924 = vadd.f32 0.0, %v5923
      %v5925 = vpop.f32.mrf.mxu0
      %5926 = vdwg.mxu0
      %5927 = vmatpush.bf16.msra.mxu0 0
      %5928 = vmatpush.bf16.msra.mxu0 %v5725
      %5929 = vmatpush.bf16.msra.mxu0 %v5709
      %5930 = vmatpush.bf16.msra.mxu0 %v5693
      %5931 = vmatpush.bf16.msra.mxu0 %v5677
      %5932 = vmatpush.bf16.msra.mxu0 %v5661
      %5933 = vmatpush.bf16.msra.mxu0 %v5645
      %5934 = vmatpush.bf16.msra.mxu0 %v5629
      %5935 = vmatmul.bf16.gmra.mxu0 %v5834
      %v5936 = vpop.f32.mrf.mxu0
      %v5937 = vadd.f32 0.0, %v5936
      %v5938 = vpop.f32.mrf.mxu0
      %5939 = vdwg.mxu0
      %v5941 = vsel %vm5832, %v5611, 0
      %5943 = vmatpush.bf16.msra.mxu0 0
      %5944 = vmatpush.bf16.msra.mxu0 %v5596
      %5945 = vmatpush.bf16.msra.mxu0 %v5564
      %5946 = vmatpush.bf16.msra.mxu0 %v5532
      %5947 = vmatpush.bf16.msra.mxu0 %v5500
      %5948 = vmatpush.bf16.msra.mxu0 %v5469
      %5949 = vmatpush.bf16.msra.mxu0 %v5437
      %5950 = vmatpush.bf16.msra.mxu0 %v5404
      %5951 = vmatmul.bf16.gmra.mxu0 %v5941
      %v5952 = vpop.f32.mrf.mxu0
      %v5953 = vadd.f32 %v5846, %v5952
      %v5954 = vpop.f32.mrf.mxu0
      %5955 = vdwg.mxu0
      %5956 = vmatpush.bf16.msra.mxu0 0
      %5957 = vmatpush.bf16.msra.mxu0 %v5597
      %5958 = vmatpush.bf16.msra.mxu0 %v5565
      %5959 = vmatpush.bf16.msra.mxu0 %v5533
      %5960 = vmatpush.bf16.msra.mxu0 %v5501
      %5961 = vmatpush.bf16.msra.mxu0 %v5470
      %5962 = vmatpush.bf16.msra.mxu0 %v5438
      %5963 = vmatpush.bf16.msra.mxu0 %v5405
      %5964 = vmatmul.bf16.gmra.mxu0 %v5941
      %v5965 = vpop.f32.mrf.mxu0
      %v5966 = vadd.f32 %v5859, %v5965
      %v5967 = vpop.f32.mrf.mxu0
      %5968 = vdwg.mxu0
      %5969 = vmatpush.bf16.msra.mxu0 0
      %5970 = vmatpush.bf16.msra.mxu0 %v5598
      %5971 = vmatpush.bf16.msra.mxu0 %v5566
      %5972 = vmatpush.bf16.msra.mxu0 %v5534
      %5973 = vmatpush.bf16.msra.mxu0 %v5502
      %5974 = vmatpush.bf16.msra.mxu0 %v5471
      %5975 = vmatpush.bf16.msra.mxu0 %v5439
      %5976 = vmatpush.bf16.msra.mxu0 %v5406
      %5977 = vmatmul.bf16.gmra.mxu0 %v5941
      %v5978 = vpop.f32.mrf.mxu0
      %v5979 = vadd.f32 %v5872, %v5978
      %v5980 = vpop.f32.mrf.mxu0
      %5981 = vdwg.mxu0
      %5982 = vmatpush.bf16.msra.mxu0 0
      %5983 = vmatpush.bf16.msra.mxu0 %v5599
      %5984 = vmatpush.bf16.msra.mxu0 %v5567
      %5985 = vmatpush.bf16.msra.mxu0 %v5535
      %5986 = vmatpush.bf16.msra.mxu0 %v5503
      %5987 = vmatpush.bf16.msra.mxu0 %v5472
      %5988 = vmatpush.bf16.msra.mxu0 %v5440
      %5989 = vmatpush.bf16.msra.mxu0 %v5407
      %5990 = vmatmul.bf16.gmra.mxu0 %v5941
      %v5991 = vpop.f32.mrf.mxu0
      %v5992 = vadd.f32 %v5885, %v5991
      %v5993 = vpop.f32.mrf.mxu0
      %5994 = vdwg.mxu0
      %5995 = vmatpush.bf16.msra.mxu0 0
      %5996 = vmatpush.bf16.msra.mxu0 %v5600
      %5997 = vmatpush.bf16.msra.mxu0 %v5568
      %5998 = vmatpush.bf16.msra.mxu0 %v5536
      %5999 = vmatpush.bf16.msra.mxu0 %v5504
      %6000 = vmatpush.bf16.msra.mxu0 %v5473
      %6001 = vmatpush.bf16.msra.mxu0 %v5441
      %6002 = vmatpush.bf16.msra.mxu0 %v5408
      %6003 = vmatmul.bf16.gmra.mxu0 %v5941
      %v6004 = vpop.f32.mrf.mxu0
      %v6005 = vadd.f32 %v5898, %v6004
      %v6006 = vpop.f32.mrf.mxu0
      %6007 = vdwg.mxu0
      %6008 = vmatpush.bf16.msra.mxu0 0
      %6009 = vmatpush.bf16.msra.mxu0 %v5601
      %6010 = vmatpush.bf16.msra.mxu0 %v5569
      %6011 = vmatpush.bf16.msra.mxu0 %v5537
      %6012 = vmatpush.bf16.msra.mxu0 %v5505
      %6013 = vmatpush.bf16.msra.mxu0 %v5474
      %6014 = vmatpush.bf16.msra.mxu0 %v5442
      %6015 = vmatpush.bf16.msra.mxu0 %v5409
      %6016 = vmatmul.bf16.gmra.mxu0 %v5941
      %v6017 = vpop.f32.mrf.mxu0
      %v6018 = vadd.f32 %v5911, %v6017
      %v6019 = vpop.f32.mrf.mxu0
      %6020 = vdwg.mxu0
      %6021 = vmatpush.bf16.msra.mxu0 0
      %6022 = vmatpush.bf16.msra.mxu0 %v5602
      %6023 = vmatpush.bf16.msra.mxu0 %v5570
      %6024 = vmatpush.bf16.msra.mxu0 %v5538
      %6025 = vmatpush.bf16.msra.mxu0 %v5506
      %6026 = vmatpush.bf16.msra.mxu0 %v5475
      %6027 = vmatpush.bf16.msra.mxu0 %v5443
      %6028 = vmatpush.bf16.msra.mxu0 %v5410
      %6029 = vmatmul.bf16.gmra.mxu0 %v5941
      %v6030 = vpop.f32.mrf.mxu0
      %v6031 = vadd.f32 %v5924, %v6030
      %v6032 = vpop.f32.mrf.mxu0
      %6033 = vdwg.mxu0
      %6034 = vmatpush.bf16.msra.mxu0 0
      %6035 = vmatpush.bf16.msra.mxu0 %v5594
      %6036 = vmatpush.bf16.msra.mxu0 %v5562
      %6037 = vmatpush.bf16.msra.mxu0 %v5530
      %6038 = vmatpush.bf16.msra.mxu0 %v5499
      %6039 = vmatpush.bf16.msra.mxu0 %v5467
      %6040 = vmatpush.bf16.msra.mxu0 %v5435
      %6041 = vmatpush.bf16.msra.mxu0 %v5411
      %6042 = vmatmul.bf16.gmra.mxu0 %v5941
      %v6043 = vpop.f32.mrf.mxu0
      %v6044 = vadd.f32 %v5937, %v6043
      %v6045 = vpop.f32.mrf.mxu0
      %6046 = vdwg.mxu0
      %v6049 = vunpack.c.l.b16 %v5374
      %v6050 = vunpack.c.l.b16 %v5379
      %v6051 = vpack.c.b16 %v6050, %v6049
      %6052 = vrot.lane.b32.xlu0 %v6051, 123
      %v6053 = vpop.permute.xlu0 %6052
      %v6054 = vsel %vm5563, %v5562, %v6053
      %6055 = vrot.lane.b32.xlu0 %v6051, 122
      %v6056 = vpop.permute.xlu0 %6055
      %v6057 = vsel %vm5595, %v5594, %v6056
      %s6058 = scalar_lea.vmem %s7, 8
      %v6059 = vld [vmem:[%s6058] sm:$0xf]
      %6060 = vrot.lane.b32.xlu0 %v5404, 60
      %v6061 = vpop.permute.xlu0 %6060
      %6062 = vrot.lane.b32.xlu0 %v5405, 60
      %v6063 = vpop.permute.xlu0 %6062
      %6064 = vrot.lane.b32.xlu0 %v5406, 60
      %v6065 = vpop.permute.xlu0 %6064
      %6066 = vrot.lane.b32.xlu0 %v5407, 60
      %v6067 = vpop.permute.xlu0 %6066
      %6068 = vrot.lane.b32.xlu0 %v5408, 60
      %v6069 = vpop.permute.xlu0 %6068
      %6070 = vrot.lane.b32.xlu0 %v5409, 60
      %v6071 = vpop.permute.xlu0 %6070
      %6072 = vrot.lane.b32.xlu0 %v5410, 60
      %v6073 = vpop.permute.xlu0 %6072
      %6074 = vrot.lane.b32.xlu0 %v5411, 60
      %v6075 = vpop.permute.xlu0 %6074
      %6076 = vrot.lane.b32.xlu0 %v5437, 60
      %v6077 = vpop.permute.xlu0 %6076
      %6078 = vrot.lane.b32.xlu0 %v5438, 60
      %v6079 = vpop.permute.xlu0 %6078
      %6080 = vrot.lane.b32.xlu0 %v5439, 60
      %v6081 = vpop.permute.xlu0 %6080
      %6082 = vrot.lane.b32.xlu0 %v5440, 60
      %v6083 = vpop.permute.xlu0 %6082
      %6084 = vrot.lane.b32.xlu0 %v5441, 60
      %v6085 = vpop.permute.xlu0 %6084
      %6086 = vrot.lane.b32.xlu0 %v5442, 60
      %v6087 = vpop.permute.xlu0 %6086
      %6088 = vrot.lane.b32.xlu0 %v5443, 60
      %v6089 = vpop.permute.xlu0 %6088
      %6090 = vrot.lane.b32.xlu0 %v5435, 60
      %v6091 = vpop.permute.xlu0 %6090
      %6092 = vrot.lane.b32.xlu0 %v5469, 60
      %v6093 = vpop.permute.xlu0 %6092
      %6094 = vrot.lane.b32.xlu0 %v5470, 60
      %v6095 = vpop.permute.xlu0 %6094
      %6096 = vrot.lane.b32.xlu0 %v5471, 60
      %v6097 = vpop.permute.xlu0 %6096
      %6098 = vrot.lane.b32.xlu0 %v5472, 60
      %v6099 = vpop.permute.xlu0 %6098
      %6100 = vrot.lane.b32.xlu0 %v5473, 60
      %v6101 = vpop.permute.xlu0 %6100
      %6102 = vrot.lane.b32.xlu0 %v5474, 60
      %v6103 = vpop.permute.xlu0 %6102
      %6104 = vrot.lane.b32.xlu0 %v5475, 60
      %v6105 = vpop.permute.xlu0 %6104
      %6106 = vrot.lane.b32.xlu0 %v5467, 60
      %v6107 = vpop.permute.xlu0 %6106
      %6108 = vrot.lane.b32.xlu0 %v5500, 60
      %v6109 = vpop.permute.xlu0 %6108
      %6110 = vrot.lane.b32.xlu0 %v5501, 60
      %v6111 = vpop.permute.xlu0 %6110
      %6112 = vrot.lane.b32.xlu0 %v5502, 60
      %v6113 = vpop.permute.xlu0 %6112
      %6114 = vrot.lane.b32.xlu0 %v5503, 60
      %v6115 = vpop.permute.xlu0 %6114
      %6116 = vrot.lane.b32.xlu0 %v5504, 60
      %v6117 = vpop.permute.xlu0 %6116
      %6118 = vrot.lane.b32.xlu0 %v5505, 60
      %v6119 = vpop.permute.xlu0 %6118
      %6120 = vrot.lane.b32.xlu0 %v5506, 60
      %v6121 = vpop.permute.xlu0 %6120
      %6122 = vrot.lane.b32.xlu0 %v5499, 60
      %v6123 = vpop.permute.xlu0 %6122
      %6124 = vrot.lane.b32.xlu0 %v5532, 60
      %v6125 = vpop.permute.xlu0 %6124
      %6126 = vrot.lane.b32.xlu0 %v5533, 60
      %v6127 = vpop.permute.xlu0 %6126
      %6128 = vrot.lane.b32.xlu0 %v5534, 60
      %v6129 = vpop.permute.xlu0 %6128
      %6130 = vrot.lane.b32.xlu0 %v5535, 60
      %v6131 = vpop.permute.xlu0 %6130
      %6132 = vrot.lane.b32.xlu0 %v5536, 60
      %v6133 = vpop.permute.xlu0 %6132
      %6134 = vrot.lane.b32.xlu0 %v5537, 60
      %v6135 = vpop.permute.xlu0 %6134
      %6136 = vrot.lane.b32.xlu0 %v5538, 60
      %v6137 = vpop.permute.xlu0 %6136
      %6138 = vrot.lane.b32.xlu0 %v5530, 60
      %v6139 = vpop.permute.xlu0 %6138
      %6140 = vrot.lane.b32.xlu0 %v5564, 60
      %v6141 = vpop.permute.xlu0 %6140
      %6142 = vrot.lane.b32.xlu0 %v5565, 60
      %v6143 = vpop.permute.xlu0 %6142
      %6144 = vrot.lane.b32.xlu0 %v5566, 60
      %v6145 = vpop.permute.xlu0 %6144
      %6146 = vrot.lane.b32.xlu0 %v5567, 60
      %v6147 = vpop.permute.xlu0 %6146
      %6148 = vrot.lane.b32.xlu0 %v5568, 60
      %v6149 = vpop.permute.xlu0 %6148
      %6150 = vrot.lane.b32.xlu0 %v5569, 60
      %v6151 = vpop.permute.xlu0 %6150
      %6152 = vrot.lane.b32.xlu0 %v5570, 60
      %v6153 = vpop.permute.xlu0 %6152
      %6154 = vrot.lane.b32.xlu0 %v6054, 60
      %v6155 = vpop.permute.xlu0 %6154
      %6156 = vrot.lane.b32.xlu0 %v5596, 60
      %v6157 = vpop.permute.xlu0 %6156
      %6158 = vrot.lane.b32.xlu0 %v5597, 60
      %v6159 = vpop.permute.xlu0 %6158
      %6160 = vrot.lane.b32.xlu0 %v5598, 60
      %v6161 = vpop.permute.xlu0 %6160
      %6162 = vrot.lane.b32.xlu0 %v5599, 60
      %v6163 = vpop.permute.xlu0 %6162
      %6164 = vrot.lane.b32.xlu0 %v5600, 60
      %v6165 = vpop.permute.xlu0 %6164
      %6166 = vrot.lane.b32.xlu0 %v5601, 60
      %v6167 = vpop.permute.xlu0 %6166
      %6168 = vrot.lane.b32.xlu0 %v5602, 60
      %v6169 = vpop.permute.xlu0 %6168
      %6170 = vrot.lane.b32.xlu0 %v6057, 60
      %v6171 = vpop.permute.xlu0 %6170
      %vm6172 = vcmask 490496
      %v6173 = vsel %vm6172, %v6061, %v6063
      %v6174 = vsel %vm6172, %v6063, %v6065
      %v6175 = vsel %vm6172, %v6065, %v6067
      %v6176 = vsel %vm6172, %v6067, %v6069
      %v6177 = vsel %vm6172, %v6069, %v6071
      %v6178 = vsel %vm6172, %v6071, %v6073
      %v6179 = vsel %vm6172, %v6073, %v6075
      %v6180 = vsel %vm6172, %v6077, %v6079
      %v6181 = vsel %vm6172, %v6079, %v6081
      %v6182 = vsel %vm6172, %v6081, %v6083
      %v6183 = vsel %vm6172, %v6083, %v6085
      %v6184 = vsel %vm6172, %v6085, %v6087
      %v6185 = vsel %vm6172, %v6087, %v6089
      %v6186 = vsel %vm6172, %v6089, %v6091
      %v6187 = vsel %vm6172, %v6093, %v6095
      %v6188 = vsel %vm6172, %v6095, %v6097
      %v6189 = vsel %vm6172, %v6097, %v6099
      %v6190 = vsel %vm6172, %v6099, %v6101
      %v6191 = vsel %vm6172, %v6101, %v6103
      %v6192 = vsel %vm6172, %v6103, %v6105
      %v6193 = vsel %vm6172, %v6105, %v6107
      %v6194 = vsel %vm6172, %v6109, %v6111
      %v6195 = vsel %vm6172, %v6111, %v6113
      %v6196 = vsel %vm6172, %v6113, %v6115
      %v6197 = vsel %vm6172, %v6115, %v6117
      %v6198 = vsel %vm6172, %v6117, %v6119
      %v6199 = vsel %vm6172, %v6119, %v6121
      %v6200 = vsel %vm6172, %v6121, %v6123
      %v6201 = vsel %vm6172, %v6125, %v6127
      %v6202 = vsel %vm6172, %v6127, %v6129
      %v6203 = vsel %vm6172, %v6129, %v6131
      %v6204 = vsel %vm6172, %v6131, %v6133
      %v6205 = vsel %vm6172, %v6133, %v6135
      %v6206 = vsel %vm6172, %v6135, %v6137
      %v6207 = vsel %vm6172, %v6137, %v6139
      %v6208 = vsel %vm6172, %v6141, %v6143
      %v6209 = vsel %vm6172, %v6143, %v6145
      %v6210 = vsel %vm6172, %v6145, %v6147
      %v6211 = vsel %vm6172, %v6147, %v6149
      %v6212 = vsel %vm6172, %v6149, %v6151
      %v6213 = vsel %vm6172, %v6151, %v6153
      %v6214 = vsel %vm6172, %v6153, %v6155
      %v6215 = vsel %vm6172, %v6157, %v6159
      %v6216 = vsel %vm6172, %v6159, %v6161
      %v6217 = vsel %vm6172, %v6161, %v6163
      %v6218 = vsel %vm6172, %v6163, %v6165
      %v6219 = vsel %vm6172, %v6165, %v6167
      %v6220 = vsel %vm6172, %v6167, %v6169
      %v6221 = vsel %vm6172, %v6169, %v6171
      %v6279 = vsel %vm5832, %v6059, 0
      %6281 = vmatpush.bf16.msra.mxu0 0
      %6282 = vmatpush.bf16.msra.mxu0 %v6215
      %6283 = vmatpush.bf16.msra.mxu0 %v6208
      %6284 = vmatpush.bf16.msra.mxu0 %v6201
      %6285 = vmatpush.bf16.msra.mxu0 %v6194
      %6286 = vmatpush.bf16.msra.mxu0 %v6187
      %6287 = vmatpush.bf16.msra.mxu0 %v6180
      %6288 = vmatpush.bf16.msra.mxu0 %v6173
      %6289 = vmatmul.bf16.gmra.mxu0 %v6279
      %v6290 = vpop.f32.mrf.mxu0
      %v6291 = vadd.f32 0.0, %v6290
      %v6292 = vpop.f32.mrf.mxu0
      %6293 = vdwg.mxu0
      %6294 = vmatpush.bf16.msra.mxu0 0
      %6295 = vmatpush.bf16.msra.mxu0 %v6216
      %6296 = vmatpush.bf16.msra.mxu0 %v6209
      %6297 = vmatpush.bf16.msra.mxu0 %v6202
      %6298 = vmatpush.bf16.msra.mxu0 %v6195
      %6299 = vmatpush.bf16.msra.mxu0 %v6188
      %6300 = vmatpush.bf16.msra.mxu0 %v6181
      %6301 = vmatpush.bf16.msra.mxu0 %v6174
      %6302 = vmatmul.bf16.gmra.mxu0 %v6279
      %v6303 = vpop.f32.mrf.mxu0
      %v6304 = vadd.f32 0.0, %v6303
      %v6305 = vpop.f32.mrf.mxu0
      %6306 = vdwg.mxu0
      %6307 = vmatpush.bf16.msra.mxu0 0
      %6308 = vmatpush.bf16.msra.mxu0 %v6217
      %6309 = vmatpush.bf16.msra.mxu0 %v6210
      %6310 = vmatpush.bf16.msra.mxu0 %v6203
      %6311 = vmatpush.bf16.msra.mxu0 %v6196
      %6312 = vmatpush.bf16.msra.mxu0 %v6189
      %6313 = vmatpush.bf16.msra.mxu0 %v6182
      %6314 = vmatpush.bf16.msra.mxu0 %v6175
      %6315 = vmatmul.bf16.gmra.mxu0 %v6279
      %v6316 = vpop.f32.mrf.mxu0
      %v6317 = vadd.f32 0.0, %v6316
      %v6318 = vpop.f32.mrf.mxu0
      %6319 = vdwg.mxu0
      %6320 = vmatpush.bf16.msra.mxu0 0
      %6321 = vmatpush.bf16.msra.mxu0 %v6218
      %6322 = vmatpush.bf16.msra.mxu0 %v6211
      %6323 = vmatpush.bf16.msra.mxu0 %v6204
      %6324 = vmatpush.bf16.msra.mxu0 %v6197
      %6325 = vmatpush.bf16.msra.mxu0 %v6190
      %6326 = vmatpush.bf16.msra.mxu0 %v6183
      %6327 = vmatpush.bf16.msra.mxu0 %v6176
      %6328 = vmatmul.bf16.gmra.mxu0 %v6279
      %v6329 = vpop.f32.mrf.mxu0
      %v6330 = vadd.f32 0.0, %v6329
      %v6331 = vpop.f32.mrf.mxu0
      %6332 = vdwg.mxu0
      %6333 = vmatpush.bf16.msra.mxu0 0
      %6334 = vmatpush.bf16.msra.mxu0 %v6219
      %6335 = vmatpush.bf16.msra.mxu0 %v6212
      %6336 = vmatpush.bf16.msra.mxu0 %v6205
      %6337 = vmatpush.bf16.msra.mxu0 %v6198
      %6338 = vmatpush.bf16.msra.mxu0 %v6191
      %6339 = vmatpush.bf16.msra.mxu0 %v6184
      %6340 = vmatpush.bf16.msra.mxu0 %v6177
      %6341 = vmatmul.bf16.gmra.mxu0 %v6279
      %v6342 = vpop.f32.mrf.mxu0
      %v6343 = vadd.f32 0.0, %v6342
      %v6344 = vpop.f32.mrf.mxu0
      %6345 = vdwg.mxu0
      %6346 = vmatpush.bf16.msra.mxu0 0
      %6347 = vmatpush.bf16.msra.mxu0 %v6220
      %6348 = vmatpush.bf16.msra.mxu0 %v6213
      %6349 = vmatpush.bf16.msra.mxu0 %v6206
      %6350 = vmatpush.bf16.msra.mxu0 %v6199
      %6351 = vmatpush.bf16.msra.mxu0 %v6192
      %6352 = vmatpush.bf16.msra.mxu0 %v6185
      %6353 = vmatpush.bf16.msra.mxu0 %v6178
      %6354 = vmatmul.bf16.gmra.mxu0 %v6279
      %v6355 = vpop.f32.mrf.mxu0
      %v6356 = vadd.f32 0.0, %v6355
      %v6357 = vpop.f32.mrf.mxu0
      %6358 = vdwg.mxu0
      %6359 = vmatpush.bf16.msra.mxu0 0
      %6360 = vmatpush.bf16.msra.mxu0 %v6221
      %6361 = vmatpush.bf16.msra.mxu0 %v6214
      %6362 = vmatpush.bf16.msra.mxu0 %v6207
      %6363 = vmatpush.bf16.msra.mxu0 %v6200
      %6364 = vmatpush.bf16.msra.mxu0 %v6193
      %6365 = vmatpush.bf16.msra.mxu0 %v6186
      %6366 = vmatpush.bf16.msra.mxu0 %v6179
      %6367 = vmatmul.bf16.gmra.mxu0 %v6279
      %v6368 = vpop.f32.mrf.mxu0
      %v6369 = vadd.f32 0.0, %v6368
      %v6370 = vpop.f32.mrf.mxu0
      %6371 = vdwg.mxu0
      %6372 = vmatpush.bf16.msra.mxu0 0
      %6373 = vmatpush.bf16.msra.mxu0 %v6171
      %6374 = vmatpush.bf16.msra.mxu0 %v6155
      %6375 = vmatpush.bf16.msra.mxu0 %v6139
      %6376 = vmatpush.bf16.msra.mxu0 %v6123
      %6377 = vmatpush.bf16.msra.mxu0 %v6107
      %6378 = vmatpush.bf16.msra.mxu0 %v6091
      %6379 = vmatpush.bf16.msra.mxu0 %v6075
      %6380 = vmatmul.bf16.gmra.mxu0 %v6279
      %v6381 = vpop.f32.mrf.mxu0
      %v6382 = vadd.f32 0.0, %v6381
      %v6383 = vpop.f32.mrf.mxu0
      %6384 = vdwg.mxu0
      %v6385 = vadd.f32 %v5953, %v6291
      %v6386 = vadd.f32 %v5966, %v6304
      %v6387 = vadd.f32 %v5979, %v6317
      %v6388 = vadd.f32 %v5992, %v6330
      %v6389 = vadd.f32 %v6005, %v6343
      %v6390 = vadd.f32 %v6018, %v6356
      %v6391 = vadd.f32 %v6031, %v6369
      %v6392 = vadd.f32 %v6044, %v6382
      %6393 = vrot.lane.b32.xlu0 %v6051, 127
      %v6394 = vpop.permute.xlu0 %6393
      %v6395 = vsel %vm5436, %v5435, %v6394
      %6396 = vrot.lane.b32.xlu0 %v6051, 126
      %v6397 = vpop.permute.xlu0 %6396
      %v6398 = vsel %vm5468, %v5467, %v6397
      %6399 = vrot.lane.b32.xlu0 %v6051, 125
      %v6400 = vpop.permute.xlu0 %6399
      %v6401 = vsel %vm1625, %v5499, %v6400
      %6402 = vrot.lane.b32.xlu0 %v6051, 124
      %v6403 = vpop.permute.xlu0 %6402
      %v6404 = vsel %vm5531, %v5530, %v6403
      %s6405 = scalar_lea.vmem %s7, 12
      %v6406 = vld [vmem:[%s6405] sm:$0xf]
      %6407 = vrot.lane.b32.xlu0 %v5404, 26
      %v6408 = vpop.permute.xlu0 %6407
      %6409 = vrot.lane.b32.xlu0 %v5405, 26
      %v6410 = vpop.permute.xlu0 %6409
      %6411 = vrot.lane.b32.xlu0 %v5406, 26
      %v6412 = vpop.permute.xlu0 %6411
      %6413 = vrot.lane.b32.xlu0 %v5407, 26
      %v6414 = vpop.permute.xlu0 %6413
      %6415 = vrot.lane.b32.xlu0 %v5408, 26
      %v6416 = vpop.permute.xlu0 %6415
      %6417 = vrot.lane.b32.xlu0 %v5409, 26
      %v6418 = vpop.permute.xlu0 %6417
      %6419 = vrot.lane.b32.xlu0 %v5410, 26
      %v6420 = vpop.permute.xlu0 %6419
      %6421 = vrot.lane.b32.xlu0 %v5411, 26
      %v6422 = vpop.permute.xlu0 %6421
      %6423 = vrot.lane.b32.xlu0 %v6051, 26
      %v6424 = vpop.permute.xlu0 %6423
      %6425 = vrot.lane.b32.xlu0 %v5437, 26
      %v6426 = vpop.permute.xlu0 %6425
      %6427 = vrot.lane.b32.xlu0 %v5438, 26
      %v6428 = vpop.permute.xlu0 %6427
      %6429 = vrot.lane.b32.xlu0 %v5439, 26
      %v6430 = vpop.permute.xlu0 %6429
      %6431 = vrot.lane.b32.xlu0 %v5440, 26
      %v6432 = vpop.permute.xlu0 %6431
      %6433 = vrot.lane.b32.xlu0 %v5441, 26
      %v6434 = vpop.permute.xlu0 %6433
      %6435 = vrot.lane.b32.xlu0 %v5442, 26
      %v6436 = vpop.permute.xlu0 %6435
      %6437 = vrot.lane.b32.xlu0 %v5443, 26
      %v6438 = vpop.permute.xlu0 %6437
      %6439 = vrot.lane.b32.xlu0 %v6395, 26
      %v6440 = vpop.permute.xlu0 %6439
      %6441 = vrot.lane.b32.xlu0 %v6394, 26
      %v6442 = vpop.permute.xlu0 %6441
      %6443 = vrot.lane.b32.xlu0 %v5469, 26
      %v6444 = vpop.permute.xlu0 %6443
      %6445 = vrot.lane.b32.xlu0 %v5470, 26
      %v6446 = vpop.permute.xlu0 %6445
      %6447 = vrot.lane.b32.xlu0 %v5471, 26
      %v6448 = vpop.permute.xlu0 %6447
      %6449 = vrot.lane.b32.xlu0 %v5472, 26
      %v6450 = vpop.permute.xlu0 %6449
      %6451 = vrot.lane.b32.xlu0 %v5473, 26
      %v6452 = vpop.permute.xlu0 %6451
      %6453 = vrot.lane.b32.xlu0 %v5474, 26
      %v6454 = vpop.permute.xlu0 %6453
      %6455 = vrot.lane.b32.xlu0 %v5475, 26
      %v6456 = vpop.permute.xlu0 %6455
      %6457 = vrot.lane.b32.xlu0 %v6398, 26
      %v6458 = vpop.permute.xlu0 %6457
      %6459 = vrot.lane.b32.xlu0 %v6397, 26
      %v6460 = vpop.permute.xlu0 %6459
      %6461 = vrot.lane.b32.xlu0 %v5500, 26
      %v6462 = vpop.permute.xlu0 %6461
      %6463 = vrot.lane.b32.xlu0 %v5501, 26
      %v6464 = vpop.permute.xlu0 %6463
      %6465 = vrot.lane.b32.xlu0 %v5502, 26
      %v6466 = vpop.permute.xlu0 %6465
      %6467 = vrot.lane.b32.xlu0 %v5503, 26
      %v6468 = vpop.permute.xlu0 %6467
      %6469 = vrot.lane.b32.xlu0 %v5504, 26
      %v6470 = vpop.permute.xlu0 %6469
      %6471 = vrot.lane.b32.xlu0 %v5505, 26
      %v6472 = vpop.permute.xlu0 %6471
      %6473 = vrot.lane.b32.xlu0 %v5506, 26
      %v6474 = vpop.permute.xlu0 %6473
      %6475 = vrot.lane.b32.xlu0 %v6401, 26
      %v6476 = vpop.permute.xlu0 %6475
      %6477 = vrot.lane.b32.xlu0 %v6400, 26
      %v6478 = vpop.permute.xlu0 %6477
      %6479 = vrot.lane.b32.xlu0 %v5532, 26
      %v6480 = vpop.permute.xlu0 %6479
      %6481 = vrot.lane.b32.xlu0 %v5533, 26
      %v6482 = vpop.permute.xlu0 %6481
      %6483 = vrot.lane.b32.xlu0 %v5534, 26
      %v6484 = vpop.permute.xlu0 %6483
      %6485 = vrot.lane.b32.xlu0 %v5535, 26
      %v6486 = vpop.permute.xlu0 %6485
      %6487 = vrot.lane.b32.xlu0 %v5536, 26
      %v6488 = vpop.permute.xlu0 %6487
      %6489 = vrot.lane.b32.xlu0 %v5537, 26
      %v6490 = vpop.permute.xlu0 %6489
      %6491 = vrot.lane.b32.xlu0 %v5538, 26
      %v6492 = vpop.permute.xlu0 %6491
      %6493 = vrot.lane.b32.xlu0 %v6404, 26
      %v6494 = vpop.permute.xlu0 %6493
      %6495 = vrot.lane.b32.xlu0 %v6403, 26
      %v6496 = vpop.permute.xlu0 %6495
      %6497 = vrot.lane.b32.xlu0 %v5564, 26
      %v6498 = vpop.permute.xlu0 %6497
      %6499 = vrot.lane.b32.xlu0 %v5565, 26
      %v6500 = vpop.permute.xlu0 %6499
      %6501 = vrot.lane.b32.xlu0 %v5566, 26
      %v6502 = vpop.permute.xlu0 %6501
      %6503 = vrot.lane.b32.xlu0 %v5567, 26
      %v6504 = vpop.permute.xlu0 %6503
      %6505 = vrot.lane.b32.xlu0 %v5568, 26
      %v6506 = vpop.permute.xlu0 %6505
      %6507 = vrot.lane.b32.xlu0 %v5569, 26
      %v6508 = vpop.permute.xlu0 %6507
      %6509 = vrot.lane.b32.xlu0 %v5570, 26
      %v6510 = vpop.permute.xlu0 %6509
      %6511 = vrot.lane.b32.xlu0 %v6054, 26
      %v6512 = vpop.permute.xlu0 %6511
      %6513 = vrot.lane.b32.xlu0 %v6053, 26
      %v6514 = vpop.permute.xlu0 %6513
      %6515 = vrot.lane.b32.xlu0 %v5596, 26
      %v6516 = vpop.permute.xlu0 %6515
      %6517 = vrot.lane.b32.xlu0 %v5597, 26
      %v6518 = vpop.permute.xlu0 %6517
      %6519 = vrot.lane.b32.xlu0 %v5598, 26
      %v6520 = vpop.permute.xlu0 %6519
      %6521 = vrot.lane.b32.xlu0 %v5599, 26
      %v6522 = vpop.permute.xlu0 %6521
      %6523 = vrot.lane.b32.xlu0 %v5600, 26
      %v6524 = vpop.permute.xlu0 %6523
      %6525 = vrot.lane.b32.xlu0 %v5601, 26
      %v6526 = vpop.permute.xlu0 %6525
      %6527 = vrot.lane.b32.xlu0 %v5602, 26
      %v6528 = vpop.permute.xlu0 %6527
      %6529 = vrot.lane.b32.xlu0 %v6057, 26
      %v6530 = vpop.permute.xlu0 %6529
      %6531 = vrot.lane.b32.xlu0 %v6056, 26
      %v6532 = vpop.permute.xlu0 %6531
      %vm6533 = vcmask 211968
      %v6534 = vsel %vm6533, %v6408, %v6410
      %v6535 = vsel %vm6533, %v6410, %v6412
      %v6536 = vsel %vm6533, %v6412, %v6414
      %v6537 = vsel %vm6533, %v6414, %v6416
      %v6538 = vsel %vm6533, %v6416, %v6418
      %v6539 = vsel %vm6533, %v6418, %v6420
      %v6540 = vsel %vm6533, %v6420, %v6422
      %v6541 = vsel %vm6533, %v6422, %v6424
      %v6542 = vsel %vm6533, %v6426, %v6428
      %v6543 = vsel %vm6533, %v6428, %v6430
      %v6544 = vsel %vm6533, %v6430, %v6432
      %v6545 = vsel %vm6533, %v6432, %v6434
      %v6546 = vsel %vm6533, %v6434, %v6436
      %v6547 = vsel %vm6533, %v6436, %v6438
      %v6548 = vsel %vm6533, %v6438, %v6440
      %v6549 = vsel %vm6533, %v6440, %v6442
      %v6550 = vsel %vm6533, %v6444, %v6446
      %v6551 = vsel %vm6533, %v6446, %v6448
      %v6552 = vsel %vm6533, %v6448, %v6450
      %v6553 = vsel %vm6533, %v6450, %v6452
      %v6554 = vsel %vm6533, %v6452, %v6454
      %v6555 = vsel %vm6533, %v6454, %v6456
      %v6556 = vsel %vm6533, %v6456, %v6458
      %v6557 = vsel %vm6533, %v6458, %v6460
      %v6558 = vsel %vm6533, %v6462, %v6464
      %v6559 = vsel %vm6533, %v6464, %v6466
      %v6560 = vsel %vm6533, %v6466, %v6468
      %v6561 = vsel %vm6533, %v6468, %v6470
      %v6562 = vsel %vm6533, %v6470, %v6472
      %v6563 = vsel %vm6533, %v6472, %v6474
      %v6564 = vsel %vm6533, %v6474, %v6476
      %v6565 = vsel %vm6533, %v6476, %v6478
      %v6566 = vsel %vm6533, %v6480, %v6482
      %v6567 = vsel %vm6533, %v6482, %v6484
      %v6568 = vsel %vm6533, %v6484, %v6486
      %v6569 = vsel %vm6533, %v6486, %v6488
      %v6570 = vsel %vm6533, %v6488, %v6490
      %v6571 = vsel %vm6533, %v6490, %v6492
      %v6572 = vsel %vm6533, %v6492, %v6494
      %v6573 = vsel %vm6533, %v6494, %v6496
      %v6574 = vsel %vm6533, %v6498, %v6500
      %v6575 = vsel %vm6533, %v6500, %v6502
      %v6576 = vsel %vm6533, %v6502, %v6504
      %v6577 = vsel %vm6533, %v6504, %v6506
      %v6578 = vsel %vm6533, %v6506, %v6508
      %v6579 = vsel %vm6533, %v6508, %v6510
      %v6580 = vsel %vm6533, %v6510, %v6512
      %v6581 = vsel %vm6533, %v6512, %v6514
      %v6582 = vsel %vm6533, %v6516, %v6518
      %v6583 = vsel %vm6533, %v6518, %v6520
      %v6584 = vsel %vm6533, %v6520, %v6522
      %v6585 = vsel %vm6533, %v6522, %v6524
      %v6586 = vsel %vm6533, %v6524, %v6526
      %v6587 = vsel %vm6533, %v6526, %v6528
      %v6588 = vsel %vm6533, %v6528, %v6530
      %v6589 = vsel %vm6533, %v6530, %v6532
      %v6647 = vsel %vm5832, %v6406, 0
      %6649 = vmatpush.bf16.msra.mxu0 0
      %6650 = vmatpush.bf16.msra.mxu0 %v6582
      %6651 = vmatpush.bf16.msra.mxu0 %v6574
      %6652 = vmatpush.bf16.msra.mxu0 %v6566
      %6653 = vmatpush.bf16.msra.mxu0 %v6558
      %6654 = vmatpush.bf16.msra.mxu0 %v6550
      %6655 = vmatpush.bf16.msra.mxu0 %v6542
      %6656 = vmatpush.bf16.msra.mxu0 %v6534
      %6657 = vmatmul.bf16.gmra.mxu0 %v6647
      %v6658 = vpop.f32.mrf.mxu0
      %v6659 = vadd.f32 0.0, %v6658
      %v6660 = vpop.f32.mrf.mxu0
      %6661 = vdwg.mxu0
      %6662 = vmatpush.bf16.msra.mxu0 0
      %6663 = vmatpush.bf16.msra.mxu0 %v6583
      %6664 = vmatpush.bf16.msra.mxu0 %v6575
      %6665 = vmatpush.bf16.msra.mxu0 %v6567
      %6666 = vmatpush.bf16.msra.mxu0 %v6559
      %6667 = vmatpush.bf16.msra.mxu0 %v6551
      %6668 = vmatpush.bf16.msra.mxu0 %v6543
      %6669 = vmatpush.bf16.msra.mxu0 %v6535
      %6670 = vmatmul.bf16.gmra.mxu0 %v6647
      %v6671 = vpop.f32.mrf.mxu0
      %v6672 = vadd.f32 0.0, %v6671
      %v6673 = vpop.f32.mrf.mxu0
      %6674 = vdwg.mxu0
      %6675 = vmatpush.bf16.msra.mxu0 0
      %6676 = vmatpush.bf16.msra.mxu0 %v6584
      %6677 = vmatpush.bf16.msra.mxu0 %v6576
      %6678 = vmatpush.bf16.msra.mxu0 %v6568
      %6679 = vmatpush.bf16.msra.mxu0 %v6560
      %6680 = vmatpush.bf16.msra.mxu0 %v6552
      %6681 = vmatpush.bf16.msra.mxu0 %v6544
      %6682 = vmatpush.bf16.msra.mxu0 %v6536
      %6683 = vmatmul.bf16.gmra.mxu0 %v6647
      %v6684 = vpop.f32.mrf.mxu0
      %v6685 = vadd.f32 0.0, %v6684
      %v6686 = vpop.f32.mrf.mxu0
      %6687 = vdwg.mxu0
      %6688 = vmatpush.bf16.msra.mxu0 0
      %6689 = vmatpush.bf16.msra.mxu0 %v6585
      %6690 = vmatpush.bf16.msra.mxu0 %v6577
      %6691 = vmatpush.bf16.msra.mxu0 %v6569
      %6692 = vmatpush.bf16.msra.mxu0 %v6561
      %6693 = vmatpush.bf16.msra.mxu0 %v6553
      %6694 = vmatpush.bf16.msra.mxu0 %v6545
      %6695 = vmatpush.bf16.msra.mxu0 %v6537
      %6696 = vmatmul.bf16.gmra.mxu0 %v6647
      %v6697 = vpop.f32.mrf.mxu0
      %v6698 = vadd.f32 0.0, %v6697
      %v6699 = vpop.f32.mrf.mxu0
      %6700 = vdwg.mxu0
      %6701 = vmatpush.bf16.msra.mxu0 0
      %6702 = vmatpush.bf16.msra.mxu0 %v6586
      %6703 = vmatpush.bf16.msra.mxu0 %v6578
      %6704 = vmatpush.bf16.msra.mxu0 %v6570
      %6705 = vmatpush.bf16.msra.mxu0 %v6562
      %6706 = vmatpush.bf16.msra.mxu0 %v6554
      %6707 = vmatpush.bf16.msra.mxu0 %v6546
      %6708 = vmatpush.bf16.msra.mxu0 %v6538
      %6709 = vmatmul.bf16.gmra.mxu0 %v6647
      %v6710 = vpop.f32.mrf.mxu0
      %v6711 = vadd.f32 0.0, %v6710
      %v6712 = vpop.f32.mrf.mxu0
      %6713 = vdwg.mxu0
      %6714 = vmatpush.bf16.msra.mxu0 0
      %6715 = vmatpush.bf16.msra.mxu0 %v6587
      %6716 = vmatpush.bf16.msra.mxu0 %v6579
      %6717 = vmatpush.bf16.msra.mxu0 %v6571
      %6718 = vmatpush.bf16.msra.mxu0 %v6563
      %6719 = vmatpush.bf16.msra.mxu0 %v6555
      %6720 = vmatpush.bf16.msra.mxu0 %v6547
      %6721 = vmatpush.bf16.msra.mxu0 %v6539
      %6722 = vmatmul.bf16.gmra.mxu0 %v6647
      %v6723 = vpop.f32.mrf.mxu0
      %v6724 = vadd.f32 0.0, %v6723
      %v6725 = vpop.f32.mrf.mxu0
      %6726 = vdwg.mxu0
      %6727 = vmatpush.bf16.msra.mxu0 0
      %6728 = vmatpush.bf16.msra.mxu0 %v6588
      %6729 = vmatpush.bf16.msra.mxu0 %v6580
      %6730 = vmatpush.bf16.msra.mxu0 %v6572
      %6731 = vmatpush.bf16.msra.mxu0 %v6564
      %6732 = vmatpush.bf16.msra.mxu0 %v6556
      %6733 = vmatpush.bf16.msra.mxu0 %v6548
      %6734 = vmatpush.bf16.msra.mxu0 %v6540
      %6735 = vmatmul.bf16.gmra.mxu0 %v6647
      %v6736 = vpop.f32.mrf.mxu0
      %v6737 = vadd.f32 0.0, %v6736
      %v6738 = vpop.f32.mrf.mxu0
      %6739 = vdwg.mxu0
      %6740 = vmatpush.bf16.msra.mxu0 0
      %6741 = vmatpush.bf16.msra.mxu0 %v6589
      %6742 = vmatpush.bf16.msra.mxu0 %v6581
      %6743 = vmatpush.bf16.msra.mxu0 %v6573
      %6744 = vmatpush.bf16.msra.mxu0 %v6565
      %6745 = vmatpush.bf16.msra.mxu0 %v6557
      %6746 = vmatpush.bf16.msra.mxu0 %v6549
      %6747 = vmatpush.bf16.msra.mxu0 %v6541
      %6748 = vmatmul.bf16.gmra.mxu0 %v6647
      %v6749 = vpop.f32.mrf.mxu0
      %v6750 = vadd.f32 0.0, %v6749
      %v6751 = vpop.f32.mrf.mxu0
      %6752 = vdwg.mxu0
      %v6753 = vadd.f32 %v6385, %v6659
      %v6754 = vadd.f32 %v6386, %v6672
      %v6755 = vadd.f32 %v6387, %v6685
      %v6756 = vadd.f32 %v6388, %v6698
      %v6757 = vadd.f32 %v6389, %v6711
      %v6758 = vadd.f32 %v6390, %v6724
      %v6759 = vadd.f32 %v6391, %v6737
      %v6760 = vadd.f32 %v6392, %v6750
      %6761 = vrot.lane.b32.xlu0 %v5405, 120
      %v6762 = vpop.permute.xlu0 %6761
      %6763 = vrot.lane.b32.xlu0 %v5406, 120
      %v6764 = vpop.permute.xlu0 %6763
      %6765 = vrot.lane.b32.xlu0 %v5407, 120
      %v6766 = vpop.permute.xlu0 %6765
      %6767 = vrot.lane.b32.xlu0 %v5408, 120
      %v6768 = vpop.permute.xlu0 %6767
      %6769 = vrot.lane.b32.xlu0 %v5409, 120
      %v6770 = vpop.permute.xlu0 %6769
      %6771 = vrot.lane.b32.xlu0 %v5410, 120
      %v6772 = vpop.permute.xlu0 %6771
      %6773 = vrot.lane.b32.xlu0 %v5411, 120
      %v6774 = vpop.permute.xlu0 %6773
      %6775 = vrot.lane.b32.xlu0 %v6051, 120
      %v6776 = vpop.permute.xlu0 %6775
      %vm6777 = vcmask 982016
      %v6778 = vsel %vm6777, %v6762, %v6764
      %v6779 = vsel %vm6777, %v6764, %v6766
      %v6780 = vsel %vm6777, %v6766, %v6768
      %v6781 = vsel %vm6777, %v6768, %v6770
      %v6782 = vsel %vm6777, %v6770, %v6772
      %v6783 = vsel %vm6777, %v6772, %v6774
      %v6784 = vsel %vm6777, %v6774, %v6776
      %6793 = vrot.lane.b32.xlu0 %v5405, 119
      %v6794 = vpop.permute.xlu0 %6793
      %6795 = vrot.lane.b32.xlu0 %v5406, 119
      %v6796 = vpop.permute.xlu0 %6795
      %6797 = vrot.lane.b32.xlu0 %v5407, 119
      %v6798 = vpop.permute.xlu0 %6797
      %6799 = vrot.lane.b32.xlu0 %v5408, 119
      %v6800 = vpop.permute.xlu0 %6799
      %6801 = vrot.lane.b32.xlu0 %v5409, 119
      %v6802 = vpop.permute.xlu0 %6801
      %6803 = vrot.lane.b32.xlu0 %v5410, 119
      %v6804 = vpop.permute.xlu0 %6803
      %6805 = vrot.lane.b32.xlu0 %v5411, 119
      %v6806 = vpop.permute.xlu0 %6805
      %6807 = vrot.lane.b32.xlu0 %v6051, 119
      %v6808 = vpop.permute.xlu0 %6807
      %vm6809 = vcmask 973824
      %v6810 = vsel %vm6809, %v6794, %v6796
      %v6811 = vsel %vm6809, %v6796, %v6798
      %v6812 = vsel %vm6809, %v6798, %v6800
      %v6813 = vsel %vm6809, %v6800, %v6802
      %v6814 = vsel %vm6809, %v6802, %v6804
      %v6815 = vsel %vm6809, %v6804, %v6806
      %v6816 = vsel %vm6809, %v6806, %v6808
      %6825 = vrot.lane.b32.xlu0 %v5405, 118
      %v6826 = vpop.permute.xlu0 %6825
      %6827 = vrot.lane.b32.xlu0 %v5406, 118
      %v6828 = vpop.permute.xlu0 %6827
      %6829 = vrot.lane.b32.xlu0 %v5407, 118
      %v6830 = vpop.permute.xlu0 %6829
      %6831 = vrot.lane.b32.xlu0 %v5408, 118
      %v6832 = vpop.permute.xlu0 %6831
      %6833 = vrot.lane.b32.xlu0 %v5409, 118
      %v6834 = vpop.permute.xlu0 %6833
      %6835 = vrot.lane.b32.xlu0 %v5410, 118
      %v6836 = vpop.permute.xlu0 %6835
      %6837 = vrot.lane.b32.xlu0 %v5411, 118
      %v6838 = vpop.permute.xlu0 %6837
      %6839 = vrot.lane.b32.xlu0 %v6051, 118
      %v6840 = vpop.permute.xlu0 %6839
      %vm6841 = vcmask 965632
      %v6842 = vsel %vm6841, %v6826, %v6828
      %v6843 = vsel %vm6841, %v6828, %v6830
      %v6844 = vsel %vm6841, %v6830, %v6832
      %v6845 = vsel %vm6841, %v6832, %v6834
      %v6846 = vsel %vm6841, %v6834, %v6836
      %v6847 = vsel %vm6841, %v6836, %v6838
      %v6848 = vsel %vm6841, %v6838, %v6840
      %6857 = vrot.lane.b32.xlu0 %v5405, 117
      %v6858 = vpop.permute.xlu0 %6857
      %6859 = vrot.lane.b32.xlu0 %v5406, 117
      %v6860 = vpop.permute.xlu0 %6859
      %6861 = vrot.lane.b32.xlu0 %v5407, 117
      %v6862 = vpop.permute.xlu0 %6861
      %6863 = vrot.lane.b32.xlu0 %v5408, 117
      %v6864 = vpop.permute.xlu0 %6863
      %6865 = vrot.lane.b32.xlu0 %v5409, 117
      %v6866 = vpop.permute.xlu0 %6865
      %6867 = vrot.lane.b32.xlu0 %v5410, 117
      %v6868 = vpop.permute.xlu0 %6867
      %6869 = vrot.lane.b32.xlu0 %v5411, 117
      %v6870 = vpop.permute.xlu0 %6869
      %6871 = vrot.lane.b32.xlu0 %v6051, 117
      %v6872 = vpop.permute.xlu0 %6871
      %vm6873 = vcmask 957440
      %v6874 = vsel %vm6873, %v6858, %v6860
      %v6875 = vsel %vm6873, %v6860, %v6862
      %v6876 = vsel %vm6873, %v6862, %v6864
      %v6877 = vsel %vm6873, %v6864, %v6866
      %v6878 = vsel %vm6873, %v6866, %v6868
      %v6879 = vsel %vm6873, %v6868, %v6870
      %v6880 = vsel %vm6873, %v6870, %v6872
      %6889 = vrot.lane.b32.xlu0 %v5405, 116
      %v6890 = vpop.permute.xlu0 %6889
      %6891 = vrot.lane.b32.xlu0 %v5406, 116
      %v6892 = vpop.permute.xlu0 %6891
      %6893 = vrot.lane.b32.xlu0 %v5407, 116
      %v6894 = vpop.permute.xlu0 %6893
      %6895 = vrot.lane.b32.xlu0 %v5408, 116
      %v6896 = vpop.permute.xlu0 %6895
      %6897 = vrot.lane.b32.xlu0 %v5409, 116
      %v6898 = vpop.permute.xlu0 %6897
      %6899 = vrot.lane.b32.xlu0 %v5410, 116
      %v6900 = vpop.permute.xlu0 %6899
      %6901 = vrot.lane.b32.xlu0 %v5411, 116
      %v6902 = vpop.permute.xlu0 %6901
      %6903 = vrot.lane.b32.xlu0 %v6051, 116
      %v6904 = vpop.permute.xlu0 %6903
      %vm6905 = vcmask 949248
      %v6906 = vsel %vm6905, %v6890, %v6892
      %v6907 = vsel %vm6905, %v6892, %v6894
      %v6908 = vsel %vm6905, %v6894, %v6896
      %v6909 = vsel %vm6905, %v6896, %v6898
      %v6910 = vsel %vm6905, %v6898, %v6900
      %v6911 = vsel %vm6905, %v6900, %v6902
      %v6912 = vsel %vm6905, %v6902, %v6904
      %6921 = vrot.lane.b32.xlu0 %v5405, 115
      %v6922 = vpop.permute.xlu0 %6921
      %6923 = vrot.lane.b32.xlu0 %v5406, 115
      %v6924 = vpop.permute.xlu0 %6923
      %6925 = vrot.lane.b32.xlu0 %v5407, 115
      %v6926 = vpop.permute.xlu0 %6925
      %6927 = vrot.lane.b32.xlu0 %v5408, 115
      %v6928 = vpop.permute.xlu0 %6927
      %6929 = vrot.lane.b32.xlu0 %v5409, 115
      %v6930 = vpop.permute.xlu0 %6929
      %6931 = vrot.lane.b32.xlu0 %v5410, 115
      %v6932 = vpop.permute.xlu0 %6931
      %6933 = vrot.lane.b32.xlu0 %v5411, 115
      %v6934 = vpop.permute.xlu0 %6933
      %6935 = vrot.lane.b32.xlu0 %v6051, 115
      %v6936 = vpop.permute.xlu0 %6935
      %vm6937 = vcmask 941056
      %v6938 = vsel %vm6937, %v6922, %v6924
      %v6939 = vsel %vm6937, %v6924, %v6926
      %v6940 = vsel %vm6937, %v6926, %v6928
      %v6941 = vsel %vm6937, %v6928, %v6930
      %v6942 = vsel %vm6937, %v6930, %v6932
      %v6943 = vsel %vm6937, %v6932, %v6934
      %v6944 = vsel %vm6937, %v6934, %v6936
      %6953 = vrot.lane.b32.xlu0 %v5405, 114
      %v6954 = vpop.permute.xlu0 %6953
      %6955 = vrot.lane.b32.xlu0 %v5406, 114
      %v6956 = vpop.permute.xlu0 %6955
      %6957 = vrot.lane.b32.xlu0 %v5407, 114
      %v6958 = vpop.permute.xlu0 %6957
      %6959 = vrot.lane.b32.xlu0 %v5408, 114
      %v6960 = vpop.permute.xlu0 %6959
      %6961 = vrot.lane.b32.xlu0 %v5409, 114
      %v6962 = vpop.permute.xlu0 %6961
      %6963 = vrot.lane.b32.xlu0 %v5410, 114
      %v6964 = vpop.permute.xlu0 %6963
      %6965 = vrot.lane.b32.xlu0 %v5411, 114
      %v6966 = vpop.permute.xlu0 %6965
      %6967 = vrot.lane.b32.xlu0 %v6051, 114
      %v6968 = vpop.permute.xlu0 %6967
      %vm6969 = vcmask 932864
      %v6970 = vsel %vm6969, %v6954, %v6956
      %v6971 = vsel %vm6969, %v6956, %v6958
      %v6972 = vsel %vm6969, %v6958, %v6960
      %v6973 = vsel %vm6969, %v6960, %v6962
      %v6974 = vsel %vm6969, %v6962, %v6964
      %v6975 = vsel %vm6969, %v6964, %v6966
      %v6976 = vsel %vm6969, %v6966, %v6968
      %s6985 = scalar_lea.vmem %s7, 16
      %v6986 = vld [vmem:[%s6985] sm:$0xf]
      %v6988 = vsel %vm5832, %v6986, 0
      %6990 = vmatpush.bf16.msra.mxu0 0
      %6991 = vmatpush.bf16.msra.mxu0 %v6970
      %6992 = vmatpush.bf16.msra.mxu0 %v6938
      %6993 = vmatpush.bf16.msra.mxu0 %v6906
      %6994 = vmatpush.bf16.msra.mxu0 %v6874
      %6995 = vmatpush.bf16.msra.mxu0 %v6842
      %6996 = vmatpush.bf16.msra.mxu0 %v6810
      %6997 = vmatpush.bf16.msra.mxu0 %v6778
      %6998 = vmatmul.bf16.gmra.mxu0 %v6988
      %v6999 = vpop.f32.mrf.mxu0
      %v7000 = vadd.f32 0.0, %v6999
      %v7001 = vpop.f32.mrf.mxu0
      %7002 = vdwg.mxu0
      %7003 = vmatpush.bf16.msra.mxu0 0
      %7004 = vmatpush.bf16.msra.mxu0 %v6971
      %7005 = vmatpush.bf16.msra.mxu0 %v6939
      %7006 = vmatpush.bf16.msra.mxu0 %v6907
      %7007 = vmatpush.bf16.msra.mxu0 %v6875
      %7008 = vmatpush.bf16.msra.mxu0 %v6843
      %7009 = vmatpush.bf16.msra.mxu0 %v6811
      %7010 = vmatpush.bf16.msra.mxu0 %v6779
      %7011 = vmatmul.bf16.gmra.mxu0 %v6988
      %v7012 = vpop.f32.mrf.mxu0
      %v7013 = vadd.f32 0.0, %v7012
      %v7014 = vpop.f32.mrf.mxu0
      %7015 = vdwg.mxu0
      %7016 = vmatpush.bf16.msra.mxu0 0
      %7017 = vmatpush.bf16.msra.mxu0 %v6972
      %7018 = vmatpush.bf16.msra.mxu0 %v6940
      %7019 = vmatpush.bf16.msra.mxu0 %v6908
      %7020 = vmatpush.bf16.msra.mxu0 %v6876
      %7021 = vmatpush.bf16.msra.mxu0 %v6844
      %7022 = vmatpush.bf16.msra.mxu0 %v6812
      %7023 = vmatpush.bf16.msra.mxu0 %v6780
      %7024 = vmatmul.bf16.gmra.mxu0 %v6988
      %v7025 = vpop.f32.mrf.mxu0
      %v7026 = vadd.f32 0.0, %v7025
      %v7027 = vpop.f32.mrf.mxu0
      %7028 = vdwg.mxu0
      %7029 = vmatpush.bf16.msra.mxu0 0
      %7030 = vmatpush.bf16.msra.mxu0 %v6973
      %7031 = vmatpush.bf16.msra.mxu0 %v6941
      %7032 = vmatpush.bf16.msra.mxu0 %v6909
      %7033 = vmatpush.bf16.msra.mxu0 %v6877
      %7034 = vmatpush.bf16.msra.mxu0 %v6845
      %7035 = vmatpush.bf16.msra.mxu0 %v6813
      %7036 = vmatpush.bf16.msra.mxu0 %v6781
      %7037 = vmatmul.bf16.gmra.mxu0 %v6988
      %v7038 = vpop.f32.mrf.mxu0
      %v7039 = vadd.f32 0.0, %v7038
      %v7040 = vpop.f32.mrf.mxu0
      %7041 = vdwg.mxu0
      %7042 = vmatpush.bf16.msra.mxu0 0
      %7043 = vmatpush.bf16.msra.mxu0 %v6974
      %7044 = vmatpush.bf16.msra.mxu0 %v6942
      %7045 = vmatpush.bf16.msra.mxu0 %v6910
      %7046 = vmatpush.bf16.msra.mxu0 %v6878
      %7047 = vmatpush.bf16.msra.mxu0 %v6846
      %7048 = vmatpush.bf16.msra.mxu0 %v6814
      %7049 = vmatpush.bf16.msra.mxu0 %v6782
      %7050 = vmatmul.bf16.gmra.mxu0 %v6988
      %v7051 = vpop.f32.mrf.mxu0
      %v7052 = vadd.f32 0.0, %v7051
      %v7053 = vpop.f32.mrf.mxu0
      %7054 = vdwg.mxu0
      %7055 = vmatpush.bf16.msra.mxu0 0
      %7056 = vmatpush.bf16.msra.mxu0 %v6975
      %7057 = vmatpush.bf16.msra.mxu0 %v6943
      %7058 = vmatpush.bf16.msra.mxu0 %v6911
      %7059 = vmatpush.bf16.msra.mxu0 %v6879
      %7060 = vmatpush.bf16.msra.mxu0 %v6847
      %7061 = vmatpush.bf16.msra.mxu0 %v6815
      %7062 = vmatpush.bf16.msra.mxu0 %v6783
      %7063 = vmatmul.bf16.gmra.mxu0 %v6988
      %v7064 = vpop.f32.mrf.mxu0
      %v7065 = vadd.f32 0.0, %v7064
      %v7066 = vpop.f32.mrf.mxu0
      %7067 = vdwg.mxu0
      %7068 = vmatpush.bf16.msra.mxu0 0
      %7069 = vmatpush.bf16.msra.mxu0 %v6976
      %7070 = vmatpush.bf16.msra.mxu0 %v6944
      %7071 = vmatpush.bf16.msra.mxu0 %v6912
      %7072 = vmatpush.bf16.msra.mxu0 %v6880
      %7073 = vmatpush.bf16.msra.mxu0 %v6848
      %7074 = vmatpush.bf16.msra.mxu0 %v6816
      %7075 = vmatpush.bf16.msra.mxu0 %v6784
      %7076 = vmatmul.bf16.gmra.mxu0 %v6988
      %v7077 = vpop.f32.mrf.mxu0
      %v7078 = vadd.f32 0.0, %v7077
      %v7079 = vpop.f32.mrf.mxu0
      %7080 = vdwg.mxu0
      %7081 = vmatpush.bf16.msra.mxu0 0
      %7082 = vmatpush.bf16.msra.mxu0 %v6968
      %7083 = vmatpush.bf16.msra.mxu0 %v6936
      %7084 = vmatpush.bf16.msra.mxu0 %v6904
      %7085 = vmatpush.bf16.msra.mxu0 %v6872
      %7086 = vmatpush.bf16.msra.mxu0 %v6840
      %7087 = vmatpush.bf16.msra.mxu0 %v6808
      %7088 = vmatpush.bf16.msra.mxu0 %v6776
      %7089 = vmatmul.bf16.gmra.mxu0 %v6988
      %v7090 = vpop.f32.mrf.mxu0
      %v7091 = vadd.f32 0.0, %v7090
      %v7092 = vpop.f32.mrf.mxu0
      %7093 = vdwg.mxu0
      %v7094 = vadd.f32 %v6753, %v7000
      %v7095 = vadd.f32 %v6754, %v7013
      %v7096 = vadd.f32 %v6755, %v7026
      %v7097 = vadd.f32 %v6756, %v7039
      %v7098 = vadd.f32 %v6757, %v7052
      %v7099 = vadd.f32 %v6758, %v7065
      %v7100 = vadd.f32 %v6759, %v7078
      %v7101 = vadd.f32 %v6760, %v7091
      %7102 = vrot.lane.b32.xlu0 %v5405, 86
      %v7103 = vpop.permute.xlu0 %7102
      %7104 = vrot.lane.b32.xlu0 %v5406, 86
      %v7105 = vpop.permute.xlu0 %7104
      %7106 = vrot.lane.b32.xlu0 %v5407, 86
      %v7107 = vpop.permute.xlu0 %7106
      %7108 = vrot.lane.b32.xlu0 %v5408, 86
      %v7109 = vpop.permute.xlu0 %7108
      %7110 = vrot.lane.b32.xlu0 %v5409, 86
      %v7111 = vpop.permute.xlu0 %7110
      %7112 = vrot.lane.b32.xlu0 %v5410, 86
      %v7113 = vpop.permute.xlu0 %7112
      %7114 = vrot.lane.b32.xlu0 %v5411, 86
      %v7115 = vpop.permute.xlu0 %7114
      %7116 = vrot.lane.b32.xlu0 %v6051, 86
      %v7117 = vpop.permute.xlu0 %7116
      %vm7118 = vcmask 703488
      %v7119 = vsel %vm7118, %v7103, %v7105
      %v7120 = vsel %vm7118, %v7105, %v7107
      %v7121 = vsel %vm7118, %v7107, %v7109
      %v7122 = vsel %vm7118, %v7109, %v7111
      %v7123 = vsel %vm7118, %v7111, %v7113
      %v7124 = vsel %vm7118, %v7113, %v7115
      %v7125 = vsel %vm7118, %v7115, %v7117
      %7134 = vrot.lane.b32.xlu0 %v5405, 85
      %v7135 = vpop.permute.xlu0 %7134
      %7136 = vrot.lane.b32.xlu0 %v5406, 85
      %v7137 = vpop.permute.xlu0 %7136
      %7138 = vrot.lane.b32.xlu0 %v5407, 85
      %v7139 = vpop.permute.xlu0 %7138
      %7140 = vrot.lane.b32.xlu0 %v5408, 85
      %v7141 = vpop.permute.xlu0 %7140
      %7142 = vrot.lane.b32.xlu0 %v5409, 85
      %v7143 = vpop.permute.xlu0 %7142
      %7144 = vrot.lane.b32.xlu0 %v5410, 85
      %v7145 = vpop.permute.xlu0 %7144
      %7146 = vrot.lane.b32.xlu0 %v5411, 85
      %v7147 = vpop.permute.xlu0 %7146
      %7148 = vrot.lane.b32.xlu0 %v6051, 85
      %v7149 = vpop.permute.xlu0 %7148
      %vm7150 = vcmask 695296
      %v7151 = vsel %vm7150, %v7135, %v7137
      %v7152 = vsel %vm7150, %v7137, %v7139
      %v7153 = vsel %vm7150, %v7139, %v7141
      %v7154 = vsel %vm7150, %v7141, %v7143
      %v7155 = vsel %vm7150, %v7143, %v7145
      %v7156 = vsel %vm7150, %v7145, %v7147
      %v7157 = vsel %vm7150, %v7147, %v7149
      %7166 = vrot.lane.b32.xlu0 %v5405, 84
      %v7167 = vpop.permute.xlu0 %7166
      %7168 = vrot.lane.b32.xlu0 %v5406, 84
      %v7169 = vpop.permute.xlu0 %7168
      %7170 = vrot.lane.b32.xlu0 %v5407, 84
      %v7171 = vpop.permute.xlu0 %7170
      %7172 = vrot.lane.b32.xlu0 %v5408, 84
      %v7173 = vpop.permute.xlu0 %7172
      %7174 = vrot.lane.b32.xlu0 %v5409, 84
      %v7175 = vpop.permute.xlu0 %7174
      %7176 = vrot.lane.b32.xlu0 %v5410, 84
      %v7177 = vpop.permute.xlu0 %7176
      %7178 = vrot.lane.b32.xlu0 %v5411, 84
      %v7179 = vpop.permute.xlu0 %7178
      %7180 = vrot.lane.b32.xlu0 %v6051, 84
      %v7181 = vpop.permute.xlu0 %7180
      %vm7182 = vcmask 687104
      %v7183 = vsel %vm7182, %v7167, %v7169
      %v7184 = vsel %vm7182, %v7169, %v7171
      %v7185 = vsel %vm7182, %v7171, %v7173
      %v7186 = vsel %vm7182, %v7173, %v7175
      %v7187 = vsel %vm7182, %v7175, %v7177
      %v7188 = vsel %vm7182, %v7177, %v7179
      %v7189 = vsel %vm7182, %v7179, %v7181
      %7198 = vrot.lane.b32.xlu0 %v5405, 83
      %v7199 = vpop.permute.xlu0 %7198
      %7200 = vrot.lane.b32.xlu0 %v5406, 83
      %v7201 = vpop.permute.xlu0 %7200
      %7202 = vrot.lane.b32.xlu0 %v5407, 83
      %v7203 = vpop.permute.xlu0 %7202
      %7204 = vrot.lane.b32.xlu0 %v5408, 83
      %v7205 = vpop.permute.xlu0 %7204
      %7206 = vrot.lane.b32.xlu0 %v5409, 83
      %v7207 = vpop.permute.xlu0 %7206
      %7208 = vrot.lane.b32.xlu0 %v5410, 83
      %v7209 = vpop.permute.xlu0 %7208
      %7210 = vrot.lane.b32.xlu0 %v5411, 83
      %v7211 = vpop.permute.xlu0 %7210
      %7212 = vrot.lane.b32.xlu0 %v6051, 83
      %v7213 = vpop.permute.xlu0 %7212
      %vm7214 = vcmask 678912
      %v7215 = vsel %vm7214, %v7199, %v7201
      %v7216 = vsel %vm7214, %v7201, %v7203
      %v7217 = vsel %vm7214, %v7203, %v7205
      %v7218 = vsel %vm7214, %v7205, %v7207
      %v7219 = vsel %vm7214, %v7207, %v7209
      %v7220 = vsel %vm7214, %v7209, %v7211
      %v7221 = vsel %vm7214, %v7211, %v7213
      %7230 = vrot.lane.b32.xlu0 %v5405, 82
      %v7231 = vpop.permute.xlu0 %7230
      %7232 = vrot.lane.b32.xlu0 %v5406, 82
      %v7233 = vpop.permute.xlu0 %7232
      %7234 = vrot.lane.b32.xlu0 %v5407, 82
      %v7235 = vpop.permute.xlu0 %7234
      %7236 = vrot.lane.b32.xlu0 %v5408, 82
      %v7237 = vpop.permute.xlu0 %7236
      %7238 = vrot.lane.b32.xlu0 %v5409, 82
      %v7239 = vpop.permute.xlu0 %7238
      %7240 = vrot.lane.b32.xlu0 %v5410, 82
      %v7241 = vpop.permute.xlu0 %7240
      %7242 = vrot.lane.b32.xlu0 %v5411, 82
      %v7243 = vpop.permute.xlu0 %7242
      %7244 = vrot.lane.b32.xlu0 %v6051, 82
      %v7245 = vpop.permute.xlu0 %7244
      %vm7246 = vcmask 670720
      %v7247 = vsel %vm7246, %v7231, %v7233
      %v7248 = vsel %vm7246, %v7233, %v7235
      %v7249 = vsel %vm7246, %v7235, %v7237
      %v7250 = vsel %vm7246, %v7237, %v7239
      %v7251 = vsel %vm7246, %v7239, %v7241
      %v7252 = vsel %vm7246, %v7241, %v7243
      %v7253 = vsel %vm7246, %v7243, %v7245
      %7262 = vrot.lane.b32.xlu0 %v5405, 81
      %v7263 = vpop.permute.xlu0 %7262
      %7264 = vrot.lane.b32.xlu0 %v5406, 81
      %v7265 = vpop.permute.xlu0 %7264
      %7266 = vrot.lane.b32.xlu0 %v5407, 81
      %v7267 = vpop.permute.xlu0 %7266
      %7268 = vrot.lane.b32.xlu0 %v5408, 81
      %v7269 = vpop.permute.xlu0 %7268
      %7270 = vrot.lane.b32.xlu0 %v5409, 81
      %v7271 = vpop.permute.xlu0 %7270
      %7272 = vrot.lane.b32.xlu0 %v5410, 81
      %v7273 = vpop.permute.xlu0 %7272
      %7274 = vrot.lane.b32.xlu0 %v5411, 81
      %v7275 = vpop.permute.xlu0 %7274
      %7276 = vrot.lane.b32.xlu0 %v6051, 81
      %v7277 = vpop.permute.xlu0 %7276
      %vm7278 = vcmask 662528
      %v7279 = vsel %vm7278, %v7263, %v7265
      %v7280 = vsel %vm7278, %v7265, %v7267
      %v7281 = vsel %vm7278, %v7267, %v7269
      %v7282 = vsel %vm7278, %v7269, %v7271
      %v7283 = vsel %vm7278, %v7271, %v7273
      %v7284 = vsel %vm7278, %v7273, %v7275
      %v7285 = vsel %vm7278, %v7275, %v7277
      %7294 = vrot.lane.b32.xlu0 %v5405, 80
      %v7295 = vpop.permute.xlu0 %7294
      %7296 = vrot.lane.b32.xlu0 %v5406, 80
      %v7297 = vpop.permute.xlu0 %7296
      %7298 = vrot.lane.b32.xlu0 %v5407, 80
      %v7299 = vpop.permute.xlu0 %7298
      %7300 = vrot.lane.b32.xlu0 %v5408, 80
      %v7301 = vpop.permute.xlu0 %7300
      %7302 = vrot.lane.b32.xlu0 %v5409, 80
      %v7303 = vpop.permute.xlu0 %7302
      %7304 = vrot.lane.b32.xlu0 %v5410, 80
      %v7305 = vpop.permute.xlu0 %7304
      %7306 = vrot.lane.b32.xlu0 %v5411, 80
      %v7307 = vpop.permute.xlu0 %7306
      %7308 = vrot.lane.b32.xlu0 %v6051, 80
      %v7309 = vpop.permute.xlu0 %7308
      %vm7310 = vcmask 654336
      %v7311 = vsel %vm7310, %v7295, %v7297
      %v7312 = vsel %vm7310, %v7297, %v7299
      %v7313 = vsel %vm7310, %v7299, %v7301
      %v7314 = vsel %vm7310, %v7301, %v7303
      %v7315 = vsel %vm7310, %v7303, %v7305
      %v7316 = vsel %vm7310, %v7305, %v7307
      %v7317 = vsel %vm7310, %v7307, %v7309
      %s7326 = scalar_lea.vmem %s7, 20
      %v7327 = vld [vmem:[%s7326] sm:$0xf]
      %v7329 = vsel %vm5832, %v7327, 0
      %7331 = vmatpush.bf16.msra.mxu0 0
      %7332 = vmatpush.bf16.msra.mxu0 %v7311
      %7333 = vmatpush.bf16.msra.mxu0 %v7279
      %7334 = vmatpush.bf16.msra.mxu0 %v7247
      %7335 = vmatpush.bf16.msra.mxu0 %v7215
      %7336 = vmatpush.bf16.msra.mxu0 %v7183
      %7337 = vmatpush.bf16.msra.mxu0 %v7151
      %7338 = vmatpush.bf16.msra.mxu0 %v7119
      %7339 = vmatmul.bf16.gmra.mxu0 %v7329
      %v7340 = vpop.f32.mrf.mxu0
      %v7341 = vadd.f32 0.0, %v7340
      %v7342 = vpop.f32.mrf.mxu0
      %7343 = vdwg.mxu0
      %7344 = vmatpush.bf16.msra.mxu0 0
      %7345 = vmatpush.bf16.msra.mxu0 %v7312
      %7346 = vmatpush.bf16.msra.mxu0 %v7280
      %7347 = vmatpush.bf16.msra.mxu0 %v7248
      %7348 = vmatpush.bf16.msra.mxu0 %v7216
      %7349 = vmatpush.bf16.msra.mxu0 %v7184
      %7350 = vmatpush.bf16.msra.mxu0 %v7152
      %7351 = vmatpush.bf16.msra.mxu0 %v7120
      %7352 = vmatmul.bf16.gmra.mxu0 %v7329
      %v7353 = vpop.f32.mrf.mxu0
      %v7354 = vadd.f32 0.0, %v7353
      %v7355 = vpop.f32.mrf.mxu0
      %7356 = vdwg.mxu0
      %7357 = vmatpush.bf16.msra.mxu0 0
      %7358 = vmatpush.bf16.msra.mxu0 %v7313
      %7359 = vmatpush.bf16.msra.mxu0 %v7281
      %7360 = vmatpush.bf16.msra.mxu0 %v7249
      %7361 = vmatpush.bf16.msra.mxu0 %v7217
      %7362 = vmatpush.bf16.msra.mxu0 %v7185
      %7363 = vmatpush.bf16.msra.mxu0 %v7153
      %7364 = vmatpush.bf16.msra.mxu0 %v7121
      %7365 = vmatmul.bf16.gmra.mxu0 %v7329
      %v7366 = vpop.f32.mrf.mxu0
      %v7367 = vadd.f32 0.0, %v7366
      %v7368 = vpop.f32.mrf.mxu0
      %7369 = vdwg.mxu0
      %7370 = vmatpush.bf16.msra.mxu0 0
      %7371 = vmatpush.bf16.msra.mxu0 %v7314
      %7372 = vmatpush.bf16.msra.mxu0 %v7282
      %7373 = vmatpush.bf16.msra.mxu0 %v7250
      %7374 = vmatpush.bf16.msra.mxu0 %v7218
      %7375 = vmatpush.bf16.msra.mxu0 %v7186
      %7376 = vmatpush.bf16.msra.mxu0 %v7154
      %7377 = vmatpush.bf16.msra.mxu0 %v7122
      %7378 = vmatmul.bf16.gmra.mxu0 %v7329
      %v7379 = vpop.f32.mrf.mxu0
      %v7380 = vadd.f32 0.0, %v7379
      %v7381 = vpop.f32.mrf.mxu0
      %7382 = vdwg.mxu0
      %7383 = vmatpush.bf16.msra.mxu0 0
      %7384 = vmatpush.bf16.msra.mxu0 %v7315
      %7385 = vmatpush.bf16.msra.mxu0 %v7283
      %7386 = vmatpush.bf16.msra.mxu0 %v7251
      %7387 = vmatpush.bf16.msra.mxu0 %v7219
      %7388 = vmatpush.bf16.msra.mxu0 %v7187
      %7389 = vmatpush.bf16.msra.mxu0 %v7155
      %7390 = vmatpush.bf16.msra.mxu0 %v7123
      %7391 = vmatmul.bf16.gmra.mxu0 %v7329
      %v7392 = vpop.f32.mrf.mxu0
      %v7393 = vadd.f32 0.0, %v7392
      %v7394 = vpop.f32.mrf.mxu0
      %7395 = vdwg.mxu0
      %7396 = vmatpush.bf16.msra.mxu0 0
      %7397 = vmatpush.bf16.msra.mxu0 %v7316
      %7398 = vmatpush.bf16.msra.mxu0 %v7284
      %7399 = vmatpush.bf16.msra.mxu0 %v7252
      %7400 = vmatpush.bf16.msra.mxu0 %v7220
      %7401 = vmatpush.bf16.msra.mxu0 %v7188
      %7402 = vmatpush.bf16.msra.mxu0 %v7156
      %7403 = vmatpush.bf16.msra.mxu0 %v7124
      %7404 = vmatmul.bf16.gmra.mxu0 %v7329
      %v7405 = vpop.f32.mrf.mxu0
      %v7406 = vadd.f32 0.0, %v7405
      %v7407 = vpop.f32.mrf.mxu0
      %7408 = vdwg.mxu0
      %7409 = vmatpush.bf16.msra.mxu0 0
      %7410 = vmatpush.bf16.msra.mxu0 %v7317
      %7411 = vmatpush.bf16.msra.mxu0 %v7285
      %7412 = vmatpush.bf16.msra.mxu0 %v7253
      %7413 = vmatpush.bf16.msra.mxu0 %v7221
      %7414 = vmatpush.bf16.msra.mxu0 %v7189
      %7415 = vmatpush.bf16.msra.mxu0 %v7157
      %7416 = vmatpush.bf16.msra.mxu0 %v7125
      %7417 = vmatmul.bf16.gmra.mxu0 %v7329
      %v7418 = vpop.f32.mrf.mxu0
      %v7419 = vadd.f32 0.0, %v7418
      %v7420 = vpop.f32.mrf.mxu0
      %7421 = vdwg.mxu0
      %7422 = vmatpush.bf16.msra.mxu0 0
      %7423 = vmatpush.bf16.msra.mxu0 %v7309
      %7424 = vmatpush.bf16.msra.mxu0 %v7277
      %7425 = vmatpush.bf16.msra.mxu0 %v7245
      %7426 = vmatpush.bf16.msra.mxu0 %v7213
      %7427 = vmatpush.bf16.msra.mxu0 %v7181
      %7428 = vmatpush.bf16.msra.mxu0 %v7149
      %7429 = vmatpush.bf16.msra.mxu0 %v7117
      %7430 = vmatmul.bf16.gmra.mxu0 %v7329
      %v7431 = vpop.f32.mrf.mxu0
      %v7432 = vadd.f32 0.0, %v7431
      %v7433 = vpop.f32.mrf.mxu0
      %7434 = vdwg.mxu0
      %v7435 = vadd.f32 %v7094, %v7341
      %v7436 = vadd.f32 %v7095, %v7354
      %v7437 = vadd.f32 %v7096, %v7367
      %v7438 = vadd.f32 %v7097, %v7380
      %v7439 = vadd.f32 %v7098, %v7393
      %v7440 = vadd.f32 %v7099, %v7406
      %v7441 = vadd.f32 %v7100, %v7419
      %v7442 = vadd.f32 %v7101, %v7432
      %v7443 = vunpack.c.h.b16 %v5374
      %v7444 = vunpack.c.h.b16 %v5379
      %v7445 = vpack.c.b16 %v7444, %v7443
      %7446 = vrot.lane.b32.xlu0 %v5405, 52
      %v7447 = vpop.permute.xlu0 %7446
      %7448 = vrot.lane.b32.xlu0 %v5406, 52
      %v7449 = vpop.permute.xlu0 %7448
      %7450 = vrot.lane.b32.xlu0 %v5407, 52
      %v7451 = vpop.permute.xlu0 %7450
      %7452 = vrot.lane.b32.xlu0 %v5408, 52
      %v7453 = vpop.permute.xlu0 %7452
      %7454 = vrot.lane.b32.xlu0 %v5409, 52
      %v7455 = vpop.permute.xlu0 %7454
      %7456 = vrot.lane.b32.xlu0 %v5410, 52
      %v7457 = vpop.permute.xlu0 %7456
      %7458 = vrot.lane.b32.xlu0 %v5411, 52
      %v7459 = vpop.permute.xlu0 %7458
      %7460 = vrot.lane.b32.xlu0 %v6051, 52
      %v7461 = vpop.permute.xlu0 %7460
      %7462 = vrot.lane.b32.xlu0 %v7445, 52
      %v7463 = vpop.permute.xlu0 %7462
      %vm7464 = vcmask 424960
      %v7465 = vsel %vm7464, %v7447, %v7449
      %v7466 = vsel %vm7464, %v7449, %v7451
      %v7467 = vsel %vm7464, %v7451, %v7453
      %v7468 = vsel %vm7464, %v7453, %v7455
      %v7469 = vsel %vm7464, %v7455, %v7457
      %v7470 = vsel %vm7464, %v7457, %v7459
      %v7471 = vsel %vm7464, %v7459, %v7461
      %v7472 = vsel %vm7464, %v7461, %v7463
      %7481 = vrot.lane.b32.xlu0 %v5405, 51
      %v7482 = vpop.permute.xlu0 %7481
      %7483 = vrot.lane.b32.xlu0 %v5406, 51
      %v7484 = vpop.permute.xlu0 %7483
      %7485 = vrot.lane.b32.xlu0 %v5407, 51
      %v7486 = vpop.permute.xlu0 %7485
      %7487 = vrot.lane.b32.xlu0 %v5408, 51
      %v7488 = vpop.permute.xlu0 %7487
      %7489 = vrot.lane.b32.xlu0 %v5409, 51
      %v7490 = vpop.permute.xlu0 %7489
      %7491 = vrot.lane.b32.xlu0 %v5410, 51
      %v7492 = vpop.permute.xlu0 %7491
      %7493 = vrot.lane.b32.xlu0 %v5411, 51
      %v7494 = vpop.permute.xlu0 %7493
      %7495 = vrot.lane.b32.xlu0 %v6051, 51
      %v7496 = vpop.permute.xlu0 %7495
      %7497 = vrot.lane.b32.xlu0 %v7445, 51
      %v7498 = vpop.permute.xlu0 %7497
      %vm7499 = vcmask 416768
      %v7500 = vsel %vm7499, %v7482, %v7484
      %v7501 = vsel %vm7499, %v7484, %v7486
      %v7502 = vsel %vm7499, %v7486, %v7488
      %v7503 = vsel %vm7499, %v7488, %v7490
      %v7504 = vsel %vm7499, %v7490, %v7492
      %v7505 = vsel %vm7499, %v7492, %v7494
      %v7506 = vsel %vm7499, %v7494, %v7496
      %v7507 = vsel %vm7499, %v7496, %v7498
      %7516 = vrot.lane.b32.xlu0 %v5405, 50
      %v7517 = vpop.permute.xlu0 %7516
      %7518 = vrot.lane.b32.xlu0 %v5406, 50
      %v7519 = vpop.permute.xlu0 %7518
      %7520 = vrot.lane.b32.xlu0 %v5407, 50
      %v7521 = vpop.permute.xlu0 %7520
      %7522 = vrot.lane.b32.xlu0 %v5408, 50
      %v7523 = vpop.permute.xlu0 %7522
      %7524 = vrot.lane.b32.xlu0 %v5409, 50
      %v7525 = vpop.permute.xlu0 %7524
      %7526 = vrot.lane.b32.xlu0 %v5410, 50
      %v7527 = vpop.permute.xlu0 %7526
      %7528 = vrot.lane.b32.xlu0 %v5411, 50
      %v7529 = vpop.permute.xlu0 %7528
      %7530 = vrot.lane.b32.xlu0 %v6051, 50
      %v7531 = vpop.permute.xlu0 %7530
      %7532 = vrot.lane.b32.xlu0 %v7445, 50
      %v7533 = vpop.permute.xlu0 %7532
      %vm7534 = vcmask 408576
      %v7535 = vsel %vm7534, %v7517, %v7519
      %v7536 = vsel %vm7534, %v7519, %v7521
      %v7537 = vsel %vm7534, %v7521, %v7523
      %v7538 = vsel %vm7534, %v7523, %v7525
      %v7539 = vsel %vm7534, %v7525, %v7527
      %v7540 = vsel %vm7534, %v7527, %v7529
      %v7541 = vsel %vm7534, %v7529, %v7531
      %v7542 = vsel %vm7534, %v7531, %v7533
      %7551 = vrot.lane.b32.xlu0 %v5405, 49
      %v7552 = vpop.permute.xlu0 %7551
      %7553 = vrot.lane.b32.xlu0 %v5406, 49
      %v7554 = vpop.permute.xlu0 %7553
      %7555 = vrot.lane.b32.xlu0 %v5407, 49
      %v7556 = vpop.permute.xlu0 %7555
      %7557 = vrot.lane.b32.xlu0 %v5408, 49
      %v7558 = vpop.permute.xlu0 %7557
      %7559 = vrot.lane.b32.xlu0 %v5409, 49
      %v7560 = vpop.permute.xlu0 %7559
      %7561 = vrot.lane.b32.xlu0 %v5410, 49
      %v7562 = vpop.permute.xlu0 %7561
      %7563 = vrot.lane.b32.xlu0 %v5411, 49
      %v7564 = vpop.permute.xlu0 %7563
      %7565 = vrot.lane.b32.xlu0 %v6051, 49
      %v7566 = vpop.permute.xlu0 %7565
      %7567 = vrot.lane.b32.xlu0 %v7445, 49
      %v7568 = vpop.permute.xlu0 %7567
      %vm7569 = vcmask 400384
      %v7570 = vsel %vm7569, %v7552, %v7554
      %v7571 = vsel %vm7569, %v7554, %v7556
      %v7572 = vsel %vm7569, %v7556, %v7558
      %v7573 = vsel %vm7569, %v7558, %v7560
      %v7574 = vsel %vm7569, %v7560, %v7562
      %v7575 = vsel %vm7569, %v7562, %v7564
      %v7576 = vsel %vm7569, %v7564, %v7566
      %v7577 = vsel %vm7569, %v7566, %v7568
      %7586 = vrot.lane.b32.xlu0 %v5405, 48
      %v7587 = vpop.permute.xlu0 %7586
      %7588 = vrot.lane.b32.xlu0 %v5406, 48
      %v7589 = vpop.permute.xlu0 %7588
      %7590 = vrot.lane.b32.xlu0 %v5407, 48
      %v7591 = vpop.permute.xlu0 %7590
      %7592 = vrot.lane.b32.xlu0 %v5408, 48
      %v7593 = vpop.permute.xlu0 %7592
      %7594 = vrot.lane.b32.xlu0 %v5409, 48
      %v7595 = vpop.permute.xlu0 %7594
      %7596 = vrot.lane.b32.xlu0 %v5410, 48
      %v7597 = vpop.permute.xlu0 %7596
      %7598 = vrot.lane.b32.xlu0 %v5411, 48
      %v7599 = vpop.permute.xlu0 %7598
      %7600 = vrot.lane.b32.xlu0 %v6051, 48
      %v7601 = vpop.permute.xlu0 %7600
      %7602 = vrot.lane.b32.xlu0 %v7445, 48
      %v7603 = vpop.permute.xlu0 %7602
      %vm7604 = vcmask 392192
      %v7605 = vsel %vm7604, %v7587, %v7589
      %v7606 = vsel %vm7604, %v7589, %v7591
      %v7607 = vsel %vm7604, %v7591, %v7593
      %v7608 = vsel %vm7604, %v7593, %v7595
      %v7609 = vsel %vm7604, %v7595, %v7597
      %v7610 = vsel %vm7604, %v7597, %v7599
      %v7611 = vsel %vm7604, %v7599, %v7601
      %v7612 = vsel %vm7604, %v7601, %v7603
      %7621 = vrot.lane.b32.xlu0 %v5405, 47
      %v7622 = vpop.permute.xlu0 %7621
      %7623 = vrot.lane.b32.xlu0 %v5406, 47
      %v7624 = vpop.permute.xlu0 %7623
      %7625 = vrot.lane.b32.xlu0 %v5407, 47
      %v7626 = vpop.permute.xlu0 %7625
      %7627 = vrot.lane.b32.xlu0 %v5408, 47
      %v7628 = vpop.permute.xlu0 %7627
      %7629 = vrot.lane.b32.xlu0 %v5409, 47
      %v7630 = vpop.permute.xlu0 %7629
      %7631 = vrot.lane.b32.xlu0 %v5410, 47
      %v7632 = vpop.permute.xlu0 %7631
      %7633 = vrot.lane.b32.xlu0 %v5411, 47
      %v7634 = vpop.permute.xlu0 %7633
      %7635 = vrot.lane.b32.xlu0 %v6051, 47
      %v7636 = vpop.permute.xlu0 %7635
      %7637 = vrot.lane.b32.xlu0 %v7445, 47
      %v7638 = vpop.permute.xlu0 %7637
      %vm7639 = vcmask 384000
      %v7640 = vsel %vm7639, %v7622, %v7624
      %v7641 = vsel %vm7639, %v7624, %v7626
      %v7642 = vsel %vm7639, %v7626, %v7628
      %v7643 = vsel %vm7639, %v7628, %v7630
      %v7644 = vsel %vm7639, %v7630, %v7632
      %v7645 = vsel %vm7639, %v7632, %v7634
      %v7646 = vsel %vm7639, %v7634, %v7636
      %v7647 = vsel %vm7639, %v7636, %v7638
      %7656 = vrot.lane.b32.xlu0 %v5405, 46
      %v7657 = vpop.permute.xlu0 %7656
      %7658 = vrot.lane.b32.xlu0 %v5406, 46
      %v7659 = vpop.permute.xlu0 %7658
      %7660 = vrot.lane.b32.xlu0 %v5407, 46
      %v7661 = vpop.permute.xlu0 %7660
      %7662 = vrot.lane.b32.xlu0 %v5408, 46
      %v7663 = vpop.permute.xlu0 %7662
      %7664 = vrot.lane.b32.xlu0 %v5409, 46
      %v7665 = vpop.permute.xlu0 %7664
      %7666 = vrot.lane.b32.xlu0 %v5410, 46
      %v7667 = vpop.permute.xlu0 %7666
      %7668 = vrot.lane.b32.xlu0 %v5411, 46
      %v7669 = vpop.permute.xlu0 %7668
      %7670 = vrot.lane.b32.xlu0 %v6051, 46
      %v7671 = vpop.permute.xlu0 %7670
      %7672 = vrot.lane.b32.xlu0 %v7445, 46
      %v7673 = vpop.permute.xlu0 %7672
      %vm7674 = vcmask 375808
      %v7675 = vsel %vm7674, %v7657, %v7659
      %v7676 = vsel %vm7674, %v7659, %v7661
      %v7677 = vsel %vm7674, %v7661, %v7663
      %v7678 = vsel %vm7674, %v7663, %v7665
      %v7679 = vsel %vm7674, %v7665, %v7667
      %v7680 = vsel %vm7674, %v7667, %v7669
      %v7681 = vsel %vm7674, %v7669, %v7671
      %v7682 = vsel %vm7674, %v7671, %v7673
      %s7691 = scalar_lea.vmem %s7, 24
      %v7692 = vld [vmem:[%s7691] sm:$0xf]
      %v7694 = vsel %vm5832, %v7692, 0
      %7696 = vmatpush.bf16.msra.mxu0 0
      %7697 = vmatpush.bf16.msra.mxu0 %v7675
      %7698 = vmatpush.bf16.msra.mxu0 %v7640
      %7699 = vmatpush.bf16.msra.mxu0 %v7605
      %7700 = vmatpush.bf16.msra.mxu0 %v7570
      %7701 = vmatpush.bf16.msra.mxu0 %v7535
      %7702 = vmatpush.bf16.msra.mxu0 %v7500
      %7703 = vmatpush.bf16.msra.mxu0 %v7465
      %7704 = vmatmul.bf16.gmra.mxu0 %v7694
      %v7705 = vpop.f32.mrf.mxu0
      %v7706 = vadd.f32 0.0, %v7705
      %v7707 = vpop.f32.mrf.mxu0
      %7708 = vdwg.mxu0
      %7709 = vmatpush.bf16.msra.mxu0 0
      %7710 = vmatpush.bf16.msra.mxu0 %v7676
      %7711 = vmatpush.bf16.msra.mxu0 %v7641
      %7712 = vmatpush.bf16.msra.mxu0 %v7606
      %7713 = vmatpush.bf16.msra.mxu0 %v7571
      %7714 = vmatpush.bf16.msra.mxu0 %v7536
      %7715 = vmatpush.bf16.msra.mxu0 %v7501
      %7716 = vmatpush.bf16.msra.mxu0 %v7466
      %7717 = vmatmul.bf16.gmra.mxu0 %v7694
      %v7718 = vpop.f32.mrf.mxu0
      %v7719 = vadd.f32 0.0, %v7718
      %v7720 = vpop.f32.mrf.mxu0
      %7721 = vdwg.mxu0
      %7722 = vmatpush.bf16.msra.mxu0 0
      %7723 = vmatpush.bf16.msra.mxu0 %v7677
      %7724 = vmatpush.bf16.msra.mxu0 %v7642
      %7725 = vmatpush.bf16.msra.mxu0 %v7607
      %7726 = vmatpush.bf16.msra.mxu0 %v7572
      %7727 = vmatpush.bf16.msra.mxu0 %v7537
      %7728 = vmatpush.bf16.msra.mxu0 %v7502
      %7729 = vmatpush.bf16.msra.mxu0 %v7467
      %7730 = vmatmul.bf16.gmra.mxu0 %v7694
      %v7731 = vpop.f32.mrf.mxu0
      %v7732 = vadd.f32 0.0, %v7731
      %v7733 = vpop.f32.mrf.mxu0
      %7734 = vdwg.mxu0
      %7735 = vmatpush.bf16.msra.mxu0 0
      %7736 = vmatpush.bf16.msra.mxu0 %v7678
      %7737 = vmatpush.bf16.msra.mxu0 %v7643
      %7738 = vmatpush.bf16.msra.mxu0 %v7608
      %7739 = vmatpush.bf16.msra.mxu0 %v7573
      %7740 = vmatpush.bf16.msra.mxu0 %v7538
      %7741 = vmatpush.bf16.msra.mxu0 %v7503
      %7742 = vmatpush.bf16.msra.mxu0 %v7468
      %7743 = vmatmul.bf16.gmra.mxu0 %v7694
      %v7744 = vpop.f32.mrf.mxu0
      %v7745 = vadd.f32 0.0, %v7744
      %v7746 = vpop.f32.mrf.mxu0
      %7747 = vdwg.mxu0
      %7748 = vmatpush.bf16.msra.mxu0 0
      %7749 = vmatpush.bf16.msra.mxu0 %v7679
      %7750 = vmatpush.bf16.msra.mxu0 %v7644
      %7751 = vmatpush.bf16.msra.mxu0 %v7609
      %7752 = vmatpush.bf16.msra.mxu0 %v7574
      %7753 = vmatpush.bf16.msra.mxu0 %v7539
      %7754 = vmatpush.bf16.msra.mxu0 %v7504
      %7755 = vmatpush.bf16.msra.mxu0 %v7469
      %7756 = vmatmul.bf16.gmra.mxu0 %v7694
      %v7757 = vpop.f32.mrf.mxu0
      %v7758 = vadd.f32 0.0, %v7757
      %v7759 = vpop.f32.mrf.mxu0
      %7760 = vdwg.mxu0
      %7761 = vmatpush.bf16.msra.mxu0 0
      %7762 = vmatpush.bf16.msra.mxu0 %v7680
      %7763 = vmatpush.bf16.msra.mxu0 %v7645
      %7764 = vmatpush.bf16.msra.mxu0 %v7610
      %7765 = vmatpush.bf16.msra.mxu0 %v7575
      %7766 = vmatpush.bf16.msra.mxu0 %v7540
      %7767 = vmatpush.bf16.msra.mxu0 %v7505
      %7768 = vmatpush.bf16.msra.mxu0 %v7470
      %7769 = vmatmul.bf16.gmra.mxu0 %v7694
      %v7770 = vpop.f32.mrf.mxu0
      %v7771 = vadd.f32 0.0, %v7770
      %v7772 = vpop.f32.mrf.mxu0
      %7773 = vdwg.mxu0
      %7774 = vmatpush.bf16.msra.mxu0 0
      %7775 = vmatpush.bf16.msra.mxu0 %v7681
      %7776 = vmatpush.bf16.msra.mxu0 %v7646
      %7777 = vmatpush.bf16.msra.mxu0 %v7611
      %7778 = vmatpush.bf16.msra.mxu0 %v7576
      %7779 = vmatpush.bf16.msra.mxu0 %v7541
      %7780 = vmatpush.bf16.msra.mxu0 %v7506
      %7781 = vmatpush.bf16.msra.mxu0 %v7471
      %7782 = vmatmul.bf16.gmra.mxu0 %v7694
      %v7783 = vpop.f32.mrf.mxu0
      %v7784 = vadd.f32 0.0, %v7783
      %v7785 = vpop.f32.mrf.mxu0
      %7786 = vdwg.mxu0
      %7787 = vmatpush.bf16.msra.mxu0 0
      %7788 = vmatpush.bf16.msra.mxu0 %v7682
      %7789 = vmatpush.bf16.msra.mxu0 %v7647
      %7790 = vmatpush.bf16.msra.mxu0 %v7612
      %7791 = vmatpush.bf16.msra.mxu0 %v7577
      %7792 = vmatpush.bf16.msra.mxu0 %v7542
      %7793 = vmatpush.bf16.msra.mxu0 %v7507
      %7794 = vmatpush.bf16.msra.mxu0 %v7472
      %7795 = vmatmul.bf16.gmra.mxu0 %v7694
      %v7796 = vpop.f32.mrf.mxu0
      %v7797 = vadd.f32 0.0, %v7796
      %v7798 = vpop.f32.mrf.mxu0
      %7799 = vdwg.mxu0
      %v7800 = vadd.f32 %v7435, %v7706
      %v7801 = vadd.f32 %v7436, %v7719
      %v7802 = vadd.f32 %v7437, %v7732
      %v7803 = vadd.f32 %v7438, %v7745
      %v7804 = vadd.f32 %v7439, %v7758
      %v7805 = vadd.f32 %v7440, %v7771
      %v7806 = vadd.f32 %v7441, %v7784
      %v7807 = vadd.f32 %v7442, %v7797
      %v7808 = vld [vmem:[%s8] sm:$0xff]
      %7810 = vset.pattern.permute.xlu0 0
      %7811 = vperm.xlu0 %7810, %v7808
      %v7812 = vpop.permute.xlu0 %7811
      %v7814 = vadd.f32 %v7800, %v7812
      %v7815 = vadd.f32 %v7801, %v7812
      %v7816 = vadd.f32 %v7802, %v7812
      %v7817 = vadd.f32 %v7803, %v7812
      %v7818 = vadd.f32 %v7804, %v7812
      %v7819 = vadd.f32 %v7805, %v7812
      %v7820 = vadd.f32 %v7806, %v7812
      %v7821 = vadd.f32 %v7807, %v7812
      %7822 = vst [vmem:[%s332] sm:$0xff] %v7814
      %7823 = vst [vmem:[%s332 + $0x8] sm:$0xff] %v7815
      %7824 = vst [vmem:[%s332 + $0x10] sm:$0xff] %v7816
      %7825 = vst [vmem:[%s332 + $0x18] sm:$0xff] %v7817
      %7826 = vst [vmem:[%s332 + $0x20] sm:$0xff] %v7818
      %7827 = vst [vmem:[%s332 + $0x28] sm:$0xff] %v7819
      %7828 = vst [vmem:[%s332 + $0x30] sm:$0xff] %v7820
      %vm7829 = vcmask 457728
      %7830 = vst.msk [vmem:[%s332 + $0x38] sm:$0xff] %vm7829, %v7821
      %p7831 = scmp.lt.s32.totalorder %s20, 1
      %s7832 = scalar_select %p7831, %s20, 1
      %s7833 = smul.addr %s7832, 8
      %s7834 = smul.addr %s7833, 8
      %s7835 = scalar_lea.vmem %s9, %s7834
      // Predicated region
      $region57: #{generator_forward.3} parent=55 // pred_check
        %p7836 = pneg %p232
      $region58: #{generator_forward.3} parent=55 // pred_check_branch
        %7838 = sbr.rel (%p7836) target = $region60
      $region59: #{generator_forward.3} parent=55 // pred_region
        _
      $region60: #{generator_forward.3} parent=55 // pred_fallthru
        _
    $region56: #{generator_forward.3} parent=5 // pred_fallthru
      _
    %p7839 = scmp.le.s32.totalorder 2, %s15
    // Predicated region
    $region61: #{generator_forward.3} parent=5 // pred_check
      %p7840 = pneg %p7839
    $region62: #{generator_forward.3} parent=5 // pred_check_branch
      %7842 = sbr.rel (%p7840) target = $region64
    $region63: #{generator_forward.3} parent=5 // pred_region
      %s7843 = ssub.s32 %s15, 2
      // Predicated region
      $region65: #{generator_forward.3} parent=63 // pred_check
        %p7844 = pneg %p238
      $region66: #{generator_forward.3} parent=63 // pred_check_branch
        %7846 = sbr.rel (%p7844) target = $region68
      $region67: #{generator_forward.3} parent=63 // pred_region
        %p7847 = scmp.lt.s32.totalorder %s21, 1
        %s7848 = scalar_select %p7847, %s21, 1
        %s7849 = smul.addr %s7848, 8
        %s7850 = smul.addr %s7849, 8
        %s7851 = scalar_lea.vmem %s9, %s7850
      $region68: #{generator_forward.3} parent=63 // pred_fallthru
        _
    $region64: #{generator_forward.3} parent=5 // pred_fallthru
      _
  $region6: #{generator_forward.3} parent=0 // loop_footer
    %s19 = sadd.s32 1, %s15
  $region7: #{generator_forward.3} parent=0 // loop_footer_branch
    %14 = sbr.rel target = $region3
  $region8: #{generator_forward.3} parent=0 // loop_exit
    _

</llo_original>
